<compile_context>
chip_gen: v6e
topology: v6e:2x2x1
jax: 0.10.0
libtpu: 0.0.40
codegen_flags: <defaults>
</compile_context>

<pallas_src>
import functools

import jax
import jax.numpy as jnp
from jax.experimental import pallas as pl
from jax.experimental.pallas import tpu as pltpu


def _downsample_kernel(x_ref, w_ref, o_ref, *, cin, cout, height, width):
    # x_ref: (1, cin, H, W) VMEM     w_ref: (cout*cin*9,) SMEM     o_ref: (1, cout, 4, Ho, Wo) VMEM
    ho, wo = height // 2, width // 2
    f32 = jnp.float32

    # 0/1 selection matrices implementing zero-padded, stride-2 sampling:
    #   R[s][h, r] = 1  iff  r == 2*h + (s - 1)     (row pick,  shape (ho, height))
    #   C[t][r, w] = 1  iff  r == 2*w + (t - 1)     (col pick,  shape (width, wo))
    # Out-of-range rows/cols match nothing -> implicit zero padding.
    row_out = jax.lax.broadcasted_iota(jnp.int32, (ho, height), 0)
    row_in = jax.lax.broadcasted_iota(jnp.int32, (ho, height), 1)
    col_in = jax.lax.broadcasted_iota(jnp.int32, (width, wo), 0)
    col_out = jax.lax.broadcasted_iota(jnp.int32, (width, wo), 1)
    one, zero = jnp.float32(1.0), jnp.float32(0.0)
    R = [jnp.where(row_in == 2 * row_out + (s - 1), one, zero) for s in range(4)]
    C = [jnp.where(col_in == 2 * col_out + (t - 1), one, zero) for t in range(4)]

    # G[ci][s][t][h, w] = x[ci, 2h + (s-1), 2w + (t-1)]   (zero outside the image)
    G = []
    for ci in range(cin):
        img = x_ref[0, ci].astype(f32)                                  # (H, W)
        rows = [jnp.dot(R[s], img, preferred_element_type=f32) for s in range(4)]  # (Ho, W)
        G.append([[jnp.dot(rows[s], C[t], preferred_element_type=f32)   # (Ho, Wo)
                   for t in range(4)] for s in range(4)])

    # y[co, i*2+j, h, w] = sum_{ci,ky,kx} W[co,ci,ky,kx] * x[ci, 2h+i+ky-1, 2w+j+kx-1]
    for co in range(cout):
        acc = [jnp.zeros((ho, wo), f32) for _ in range(4)]
        for ci in range(cin):
            for ky in range(3):
                for kx in range(3):
                    wv = w_ref[((co * cin + ci) * 3 + ky) * 3 + kx]      # scalar from SMEM
                    for i in range(2):
                        for j in range(2):
                            acc[i * 2 + j] = acc[i * 2 + j] + G[ci][i + ky][j + kx] * wv
        for k in range(4):
            o_ref[0, co, k] = acc[k].astype(o_ref.dtype)


def downsample_nchw(x, weight):
    """Conv2d(cin -> cout, 3x3, stride 1, pad 1, no bias) + PixelUnshuffle(2), NCHW in/out."""
    b, cin, height, width = x.shape
    cout, cin_w, kh, kw = weight.shape
    assert cin_w == cin and (kh, kw) == (3, 3)
    assert height % 2 == 0 and width % 2 == 0
    ho, wo = height // 2, width // 2

    w_flat = weight.reshape(-1).astype(jnp.float32)  # (cout*cin*9,) scalars -> SMEM

    kernel = functools.partial(
        _downsample_kernel, cin=cin, cout=cout, height=height, width=width)

    out5 = pl.pallas_call(
        kernel,
        out_shape=jax.ShapeDtypeStruct((b, cout, 4, ho, wo), x.dtype),
        grid=(b,),
        in_specs=[
            pl.BlockSpec((1, cin, height, width), lambda n: (n, 0, 0, 0)),
            pl.BlockSpec(memory_space=pltpu.MemorySpace.SMEM),
        ],
        out_specs=pl.BlockSpec((1, cout, 4, ho, wo), lambda n: (n, 0, 0, 0, 0)),
        compiler_params=pltpu.CompilerParams(
            dimension_semantics=("parallel",)),
    )(x, w_flat)

    # Free (row-major) reshape: channel index becomes co*4 + i*2 + j, exactly matching
    # nn.PixelUnshuffle(2). No extra HBM pass.
    return out5.reshape(b, cout * 4, ho, wo)


if __name__ == "__main__":
    key = jax.random.PRNGKey(0)
    k_x, k_w = jax.random.split(key, 2)

    B, n_feat, H, W = 2, 4, 16, 16
    Cout = n_feat // 2
    x = jax.random.normal(k_x, (B, n_feat, H, W), dtype=jnp.float32)
    weight = 0.1 * jax.random.normal(k_w, (Cout, n_feat, 3, 3), dtype=jnp.float32)

    out = jax.block_until_ready(downsample_nchw(x, weight))
    assert out.shape == (B, 2 * n_feat, H // 2, W // 2), out.shape

    # Pure-JAX reference: conv3x3 (stride 1, pad 1, no bias) then PixelUnshuffle(2).
    conv = jax.lax.conv_general_dilated(
        x, weight, window_strides=(1, 1), padding=((1, 1), (1, 1)),
        dimension_numbers=("NCHW", "OIHW", "NCHW"),
        precision=jax.lax.Precision.HIGHEST)
    Ho, Wo = H // 2, W // 2
    ref = (conv.reshape(B, Cout, Ho, 2, Wo, 2)
               .transpose(0, 1, 3, 5, 2, 4)
               .reshape(B, Cout * 4, Ho, Wo))

    assert jnp.allclose(out, ref, atol=5e-3, rtol=5e-3), (
        "mismatch vs reference: max abs err = "
        f"{float(jnp.max(jnp.abs(out - ref)))}")

    print("KERNEL_OK")
</pallas_src>

<mosaic_0001>
module attributes {stable_mosaic.version = 11 : i64} {
  func.func @_downsample_kernel(%arg0: i32, %arg1: memref<1x4x16x16xf32, #tpu.memory_space<vmem>>, %arg2: memref<72xf32, #tpu.memory_space<smem>>, %arg3: memref<1x2x4x8x8xf32, #tpu.memory_space<vmem>>) attributes {dimension_semantics = [#tpu.dimension_semantics<parallel>], iteration_bounds = array<i64: 2>, scalar_prefetch = 0 : i64, scratch_operands = 0 : i64, tpu.core_type = #tpu.core_type<tc>, window_params = [{transform_indices = @transform_0, window_bounds = array<i64: 1, 4, 16, 16>}, {transform_indices = @transform_1, window_bounds = array<i64: 72>}, {transform_indices = @transform_2, window_bounds = array<i64: 1, 2, 4, 8, 8>}]} {
    %0 = tpu.iota {dimensions = array<i32: 0>} : vector<8x16xi32>
    %1 = tpu.iota {dimensions = array<i32: 1>} : vector<8x16xi32>
    %2 = tpu.iota {dimensions = array<i32: 0>} : vector<16x8xi32>
    %3 = tpu.iota {dimensions = array<i32: 1>} : vector<16x8xi32>
    %c2_i32 = arith.constant 2 : i32
    %4 = vector.broadcast %c2_i32 : i32 to vector<8x16xi32>
    %5 = arith.muli %4, %0 : vector<8x16xi32>
    %c-1_i32 = arith.constant -1 : i32
    %6 = vector.broadcast %c-1_i32 : i32 to vector<8x16xi32>
    %7 = arith.addi %5, %6 : vector<8x16xi32>
    %8 = arith.cmpi eq, %1, %7 : vector<8x16xi32>
    %cst = arith.constant 1.000000e+00 : f32
    %cst_0 = arith.constant 0.000000e+00 : f32
    %9 = vector.broadcast %cst : f32 to vector<8x16xf32>
    %10 = vector.broadcast %cst_0 : f32 to vector<8x16xf32>
    %11 = arith.select %8, %9, %10 : vector<8x16xi1>, vector<8x16xf32>
    %c2_i32_1 = arith.constant 2 : i32
    %12 = vector.broadcast %c2_i32_1 : i32 to vector<8x16xi32>
    %13 = arith.muli %12, %0 : vector<8x16xi32>
    %c0_i32 = arith.constant 0 : i32
    %14 = vector.broadcast %c0_i32 : i32 to vector<8x16xi32>
    %15 = arith.addi %13, %14 : vector<8x16xi32>
    %16 = arith.cmpi eq, %1, %15 : vector<8x16xi32>
    %cst_2 = arith.constant 1.000000e+00 : f32
    %cst_3 = arith.constant 0.000000e+00 : f32
    %17 = vector.broadcast %cst_2 : f32 to vector<8x16xf32>
    %18 = vector.broadcast %cst_3 : f32 to vector<8x16xf32>
    %19 = arith.select %16, %17, %18 : vector<8x16xi1>, vector<8x16xf32>
    %c2_i32_4 = arith.constant 2 : i32
    %20 = vector.broadcast %c2_i32_4 : i32 to vector<8x16xi32>
    %21 = arith.muli %20, %0 : vector<8x16xi32>
    %c1_i32 = arith.constant 1 : i32
    %22 = vector.broadcast %c1_i32 : i32 to vector<8x16xi32>
    %23 = arith.addi %21, %22 : vector<8x16xi32>
    %24 = arith.cmpi eq, %1, %23 : vector<8x16xi32>
    %cst_5 = arith.constant 1.000000e+00 : f32
    %cst_6 = arith.constant 0.000000e+00 : f32
    %25 = vector.broadcast %cst_5 : f32 to vector<8x16xf32>
    %26 = vector.broadcast %cst_6 : f32 to vector<8x16xf32>
    %27 = arith.select %24, %25, %26 : vector<8x16xi1>, vector<8x16xf32>
    %c2_i32_7 = arith.constant 2 : i32
    %28 = vector.broadcast %c2_i32_7 : i32 to vector<8x16xi32>
    %29 = arith.muli %28, %0 : vector<8x16xi32>
    %c2_i32_8 = arith.constant 2 : i32
    %30 = vector.broadcast %c2_i32_8 : i32 to vector<8x16xi32>
    %31 = arith.addi %29, %30 : vector<8x16xi32>
    %32 = arith.cmpi eq, %1, %31 : vector<8x16xi32>
    %cst_9 = arith.constant 1.000000e+00 : f32
    %cst_10 = arith.constant 0.000000e+00 : f32
    %33 = vector.broadcast %cst_9 : f32 to vector<8x16xf32>
    %34 = vector.broadcast %cst_10 : f32 to vector<8x16xf32>
    %35 = arith.select %32, %33, %34 : vector<8x16xi1>, vector<8x16xf32>
    %c2_i32_11 = arith.constant 2 : i32
    %36 = vector.broadcast %c2_i32_11 : i32 to vector<16x8xi32>
    %37 = arith.muli %36, %3 : vector<16x8xi32>
    %c-1_i32_12 = arith.constant -1 : i32
    %38 = vector.broadcast %c-1_i32_12 : i32 to vector<16x8xi32>
    %39 = arith.addi %37, %38 : vector<16x8xi32>
    %40 = arith.cmpi eq, %2, %39 : vector<16x8xi32>
    %cst_13 = arith.constant 1.000000e+00 : f32
    %cst_14 = arith.constant 0.000000e+00 : f32
    %41 = vector.broadcast %cst_13 : f32 to vector<16x8xf32>
    %42 = vector.broadcast %cst_14 : f32 to vector<16x8xf32>
    %43 = arith.select %40, %41, %42 : vector<16x8xi1>, vector<16x8xf32>
    %c2_i32_15 = arith.constant 2 : i32
    %44 = vector.broadcast %c2_i32_15 : i32 to vector<16x8xi32>
    %45 = arith.muli %44, %3 : vector<16x8xi32>
    %c0_i32_16 = arith.constant 0 : i32
    %46 = vector.broadcast %c0_i32_16 : i32 to vector<16x8xi32>
    %47 = arith.addi %45, %46 : vector<16x8xi32>
    %48 = arith.cmpi eq, %2, %47 : vector<16x8xi32>
    %cst_17 = arith.constant 1.000000e+00 : f32
    %cst_18 = arith.constant 0.000000e+00 : f32
    %49 = vector.broadcast %cst_17 : f32 to vector<16x8xf32>
    %50 = vector.broadcast %cst_18 : f32 to vector<16x8xf32>
    %51 = arith.select %48, %49, %50 : vector<16x8xi1>, vector<16x8xf32>
    %c2_i32_19 = arith.constant 2 : i32
    %52 = vector.broadcast %c2_i32_19 : i32 to vector<16x8xi32>
    %53 = arith.muli %52, %3 : vector<16x8xi32>
    %c1_i32_20 = arith.constant 1 : i32
    %54 = vector.broadcast %c1_i32_20 : i32 to vector<16x8xi32>
    %55 = arith.addi %53, %54 : vector<16x8xi32>
    %56 = arith.cmpi eq, %2, %55 : vector<16x8xi32>
    %cst_21 = arith.constant 1.000000e+00 : f32
    %cst_22 = arith.constant 0.000000e+00 : f32
    %57 = vector.broadcast %cst_21 : f32 to vector<16x8xf32>
    %58 = vector.broadcast %cst_22 : f32 to vector<16x8xf32>
    %59 = arith.select %56, %57, %58 : vector<16x8xi1>, vector<16x8xf32>
    %c2_i32_23 = arith.constant 2 : i32
    %60 = vector.broadcast %c2_i32_23 : i32 to vector<16x8xi32>
    %61 = arith.muli %60, %3 : vector<16x8xi32>
    %c2_i32_24 = arith.constant 2 : i32
    %62 = vector.broadcast %c2_i32_24 : i32 to vector<16x8xi32>
    %63 = arith.addi %61, %62 : vector<16x8xi32>
    %64 = arith.cmpi eq, %2, %63 : vector<16x8xi32>
    %cst_25 = arith.constant 1.000000e+00 : f32
    %cst_26 = arith.constant 0.000000e+00 : f32
    %65 = vector.broadcast %cst_25 : f32 to vector<16x8xf32>
    %66 = vector.broadcast %cst_26 : f32 to vector<16x8xf32>
    %67 = arith.select %64, %65, %66 : vector<16x8xi1>, vector<16x8xf32>
    %c0 = arith.constant 0 : index
    %c0_27 = arith.constant 0 : index
    %c0_28 = arith.constant 0 : index
    %c0_29 = arith.constant 0 : index
    %68 = vector.load %arg1[%c0, %c0_27, %c0_28, %c0_29] : memref<1x4x16x16xf32, #tpu.memory_space<vmem>>, vector<1x1x16x16xf32>
    %69 = vector.shape_cast %68 : vector<1x1x16x16xf32> to vector<16x16xf32>
    %cst_30 = arith.constant dense<0.000000e+00> : vector<8x16xf32>
    %70 = tpu.matmul %11, %69, %cst_30 {dimension_numbers = #tpu.dot_dimension_numbers<[1], [0], [0], [1], [0, 0, 1, 1], [], []>} : vector<8x16xf32>, vector<16x16xf32>, vector<8x16xf32> -> vector<8x16xf32>
    %cst_31 = arith.constant dense<0.000000e+00> : vector<8x16xf32>
    %71 = tpu.matmul %19, %69, %cst_31 {dimension_numbers = #tpu.dot_dimension_numbers<[1], [0], [0], [1], [0, 0, 1, 1], [], []>} : vector<8x16xf32>, vector<16x16xf32>, vector<8x16xf32> -> vector<8x16xf32>
    %cst_32 = arith.constant dense<0.000000e+00> : vector<8x16xf32>
    %72 = tpu.matmul %27, %69, %cst_32 {dimension_numbers = #tpu.dot_dimension_numbers<[1], [0], [0], [1], [0, 0, 1, 1], [], []>} : vector<8x16xf32>, vector<16x16xf32>, vector<8x16xf32> -> vector<8x16xf32>
    %cst_33 = arith.constant dense<0.000000e+00> : vector<8x16xf32>
    %73 = tpu.matmul %35, %69, %cst_33 {dimension_numbers = #tpu.dot_dimension_numbers<[1], [0], [0], [1], [0, 0, 1, 1], [], []>} : vector<8x16xf32>, vector<16x16xf32>, vector<8x16xf32> -> vector<8x16xf32>
    %cst_34 = arith.constant dense<0.000000e+00> : vector<8x8xf32>
    %74 = tpu.matmul %70, %43, %cst_34 {dimension_numbers = #tpu.dot_dimension_numbers<[1], [0], [0], [1], [0, 0, 1, 1], [], []>} : vector<8x16xf32>, vector<16x8xf32>, vector<8x8xf32> -> vector<8x8xf32>
    %cst_35 = arith.constant dense<0.000000e+00> : vector<8x8xf32>
    %75 = tpu.matmul %70, %51, %cst_35 {dimension_numbers = #tpu.dot_dimension_numbers<[1], [0], [0], [1], [0, 0, 1, 1], [], []>} : vector<8x16xf32>, vector<16x8xf32>, vector<8x8xf32> -> vector<8x8xf32>
    %cst_36 = arith.constant dense<0.000000e+00> : vector<8x8xf32>
    %76 = tpu.matmul %70, %59, %cst_36 {dimension_numbers = #tpu.dot_dimension_numbers<[1], [0], [0], [1], [0, 0, 1, 1], [], []>} : vector<8x16xf32>, vector<16x8xf32>, vector<8x8xf32> -> vector<8x8xf32>
    %cst_37 = arith.constant dense<0.000000e+00> : vector<8x8xf32>
    %77 = tpu.matmul %70, %67, %cst_37 {dimension_numbers = #tpu.dot_dimension_numbers<[1], [0], [0], [1], [0, 0, 1, 1], [], []>} : vector<8x16xf32>, vector<16x8xf32>, vector<8x8xf32> -> vector<8x8xf32>
    %cst_38 = arith.constant dense<0.000000e+00> : vector<8x8xf32>
    %78 = tpu.matmul %71, %43, %cst_38 {dimension_numbers = #tpu.dot_dimension_numbers<[1], [0], [0], [1], [0, 0, 1, 1], [], []>} : vector<8x16xf32>, vector<16x8xf32>, vector<8x8xf32> -> vector<8x8xf32>
    %cst_39 = arith.constant dense<0.000000e+00> : vector<8x8xf32>
    %79 = tpu.matmul %71, %51, %cst_39 {dimension_numbers = #tpu.dot_dimension_numbers<[1], [0], [0], [1], [0, 0, 1, 1], [], []>} : vector<8x16xf32>, vector<16x8xf32>, vector<8x8xf32> -> vector<8x8xf32>
    %cst_40 = arith.constant dense<0.000000e+00> : vector<8x8xf32>
    %80 = tpu.matmul %71, %59, %cst_40 {dimension_numbers = #tpu.dot_dimension_numbers<[1], [0], [0], [1], [0, 0, 1, 1], [], []>} : vector<8x16xf32>, vector<16x8xf32>, vector<8x8xf32> -> vector<8x8xf32>
    %cst_41 = arith.constant dense<0.000000e+00> : vector<8x8xf32>
    %81 = tpu.matmul %71, %67, %cst_41 {dimension_numbers = #tpu.dot_dimension_numbers<[1], [0], [0], [1], [0, 0, 1, 1], [], []>} : vector<8x16xf32>, vector<16x8xf32>, vector<8x8xf32> -> vector<8x8xf32>
    %cst_42 = arith.constant dense<0.000000e+00> : vector<8x8xf32>
    %82 = tpu.matmul %72, %43, %cst_42 {dimension_numbers = #tpu.dot_dimension_numbers<[1], [0], [0], [1], [0, 0, 1, 1], [], []>} : vector<8x16xf32>, vector<16x8xf32>, vector<8x8xf32> -> vector<8x8xf32>
    %cst_43 = arith.constant dense<0.000000e+00> : vector<8x8xf32>
    %83 = tpu.matmul %72, %51, %cst_43 {dimension_numbers = #tpu.dot_dimension_numbers<[1], [0], [0], [1], [0, 0, 1, 1], [], []>} : vector<8x16xf32>, vector<16x8xf32>, vector<8x8xf32> -> vector<8x8xf32>
    %cst_44 = arith.constant dense<0.000000e+00> : vector<8x8xf32>
    %84 = tpu.matmul %72, %59, %cst_44 {dimension_numbers = #tpu.dot_dimension_numbers<[1], [0], [0], [1], [0, 0, 1, 1], [], []>} : vector<8x16xf32>, vector<16x8xf32>, vector<8x8xf32> -> vector<8x8xf32>
    %cst_45 = arith.constant dense<0.000000e+00> : vector<8x8xf32>
    %85 = tpu.matmul %72, %67, %cst_45 {dimension_numbers = #tpu.dot_dimension_numbers<[1], [0], [0], [1], [0, 0, 1, 1], [], []>} : vector<8x16xf32>, vector<16x8xf32>, vector<8x8xf32> -> vector<8x8xf32>
    %cst_46 = arith.constant dense<0.000000e+00> : vector<8x8xf32>
    %86 = tpu.matmul %73, %43, %cst_46 {dimension_numbers = #tpu.dot_dimension_numbers<[1], [0], [0], [1], [0, 0, 1, 1], [], []>} : vector<8x16xf32>, vector<16x8xf32>, vector<8x8xf32> -> vector<8x8xf32>
    %cst_47 = arith.constant dense<0.000000e+00> : vector<8x8xf32>
    %87 = tpu.matmul %73, %51, %cst_47 {dimension_numbers = #tpu.dot_dimension_numbers<[1], [0], [0], [1], [0, 0, 1, 1], [], []>} : vector<8x16xf32>, vector<16x8xf32>, vector<8x8xf32> -> vector<8x8xf32>
    %cst_48 = arith.constant dense<0.000000e+00> : vector<8x8xf32>
    %88 = tpu.matmul %73, %59, %cst_48 {dimension_numbers = #tpu.dot_dimension_numbers<[1], [0], [0], [1], [0, 0, 1, 1], [], []>} : vector<8x16xf32>, vector<16x8xf32>, vector<8x8xf32> -> vector<8x8xf32>
    %cst_49 = arith.constant dense<0.000000e+00> : vector<8x8xf32>
    %89 = tpu.matmul %73, %67, %cst_49 {dimension_numbers = #tpu.dot_dimension_numbers<[1], [0], [0], [1], [0, 0, 1, 1], [], []>} : vector<8x16xf32>, vector<16x8xf32>, vector<8x8xf32> -> vector<8x8xf32>
    %c0_50 = arith.constant 0 : index
    %c1 = arith.constant 1 : index
    %c0_51 = arith.constant 0 : index
    %c0_52 = arith.constant 0 : index
    %90 = vector.load %arg1[%c0_50, %c1, %c0_51, %c0_52] : memref<1x4x16x16xf32, #tpu.memory_space<vmem>>, vector<1x1x16x16xf32>
    %91 = vector.shape_cast %90 : vector<1x1x16x16xf32> to vector<16x16xf32>
    %cst_53 = arith.constant dense<0.000000e+00> : vector<8x16xf32>
    %92 = tpu.matmul %11, %91, %cst_53 {dimension_numbers = #tpu.dot_dimension_numbers<[1], [0], [0], [1], [0, 0, 1, 1], [], []>} : vector<8x16xf32>, vector<16x16xf32>, vector<8x16xf32> -> vector<8x16xf32>
    %cst_54 = arith.constant dense<0.000000e+00> : vector<8x16xf32>
    %93 = tpu.matmul %19, %91, %cst_54 {dimension_numbers = #tpu.dot_dimension_numbers<[1], [0], [0], [1], [0, 0, 1, 1], [], []>} : vector<8x16xf32>, vector<16x16xf32>, vector<8x16xf32> -> vector<8x16xf32>
    %cst_55 = arith.constant dense<0.000000e+00> : vector<8x16xf32>
    %94 = tpu.matmul %27, %91, %cst_55 {dimension_numbers = #tpu.dot_dimension_numbers<[1], [0], [0], [1], [0, 0, 1, 1], [], []>} : vector<8x16xf32>, vector<16x16xf32>, vector<8x16xf32> -> vector<8x16xf32>
    %cst_56 = arith.constant dense<0.000000e+00> : vector<8x16xf32>
    %95 = tpu.matmul %35, %91, %cst_56 {dimension_numbers = #tpu.dot_dimension_numbers<[1], [0], [0], [1], [0, 0, 1, 1], [], []>} : vector<8x16xf32>, vector<16x16xf32>, vector<8x16xf32> -> vector<8x16xf32>
    %cst_57 = arith.constant dense<0.000000e+00> : vector<8x8xf32>
    %96 = tpu.matmul %92, %43, %cst_57 {dimension_numbers = #tpu.dot_dimension_numbers<[1], [0], [0], [1], [0, 0, 1, 1], [], []>} : vector<8x16xf32>, vector<16x8xf32>, vector<8x8xf32> -> vector<8x8xf32>
    %cst_58 = arith.constant dense<0.000000e+00> : vector<8x8xf32>
    %97 = tpu.matmul %92, %51, %cst_58 {dimension_numbers = #tpu.dot_dimension_numbers<[1], [0], [0], [1], [0, 0, 1, 1], [], []>} : vector<8x16xf32>, vector<16x8xf32>, vector<8x8xf32> -> vector<8x8xf32>
    %cst_59 = arith.constant dense<0.000000e+00> : vector<8x8xf32>
    %98 = tpu.matmul %92, %59, %cst_59 {dimension_numbers = #tpu.dot_dimension_numbers<[1], [0], [0], [1], [0, 0, 1, 1], [], []>} : vector<8x16xf32>, vector<16x8xf32>, vector<8x8xf32> -> vector<8x8xf32>
    %cst_60 = arith.constant dense<0.000000e+00> : vector<8x8xf32>
    %99 = tpu.matmul %92, %67, %cst_60 {dimension_numbers = #tpu.dot_dimension_numbers<[1], [0], [0], [1], [0, 0, 1, 1], [], []>} : vector<8x16xf32>, vector<16x8xf32>, vector<8x8xf32> -> vector<8x8xf32>
    %cst_61 = arith.constant dense<0.000000e+00> : vector<8x8xf32>
    %100 = tpu.matmul %93, %43, %cst_61 {dimension_numbers = #tpu.dot_dimension_numbers<[1], [0], [0], [1], [0, 0, 1, 1], [], []>} : vector<8x16xf32>, vector<16x8xf32>, vector<8x8xf32> -> vector<8x8xf32>
    %cst_62 = arith.constant dense<0.000000e+00> : vector<8x8xf32>
    %101 = tpu.matmul %93, %51, %cst_62 {dimension_numbers = #tpu.dot_dimension_numbers<[1], [0], [0], [1], [0, 0, 1, 1], [], []>} : vector<8x16xf32>, vector<16x8xf32>, vector<8x8xf32> -> vector<8x8xf32>
    %cst_63 = arith.constant dense<0.000000e+00> : vector<8x8xf32>
    %102 = tpu.matmul %93, %59, %cst_63 {dimension_numbers = #tpu.dot_dimension_numbers<[1], [0], [0], [1], [0, 0, 1, 1], [], []>} : vector<8x16xf32>, vector<16x8xf32>, vector<8x8xf32> -> vector<8x8xf32>
    %cst_64 = arith.constant dense<0.000000e+00> : vector<8x8xf32>
    %103 = tpu.matmul %93, %67, %cst_64 {dimension_numbers = #tpu.dot_dimension_numbers<[1], [0], [0], [1], [0, 0, 1, 1], [], []>} : vector<8x16xf32>, vector<16x8xf32>, vector<8x8xf32> -> vector<8x8xf32>
    %cst_65 = arith.constant dense<0.000000e+00> : vector<8x8xf32>
    %104 = tpu.matmul %94, %43, %cst_65 {dimension_numbers = #tpu.dot_dimension_numbers<[1], [0], [0], [1], [0, 0, 1, 1], [], []>} : vector<8x16xf32>, vector<16x8xf32>, vector<8x8xf32> -> vector<8x8xf32>
    %cst_66 = arith.constant dense<0.000000e+00> : vector<8x8xf32>
    %105 = tpu.matmul %94, %51, %cst_66 {dimension_numbers = #tpu.dot_dimension_numbers<[1], [0], [0], [1], [0, 0, 1, 1], [], []>} : vector<8x16xf32>, vector<16x8xf32>, vector<8x8xf32> -> vector<8x8xf32>
    %cst_67 = arith.constant dense<0.000000e+00> : vector<8x8xf32>
    %106 = tpu.matmul %94, %59, %cst_67 {dimension_numbers = #tpu.dot_dimension_numbers<[1], [0], [0], [1], [0, 0, 1, 1], [], []>} : vector<8x16xf32>, vector<16x8xf32>, vector<8x8xf32> -> vector<8x8xf32>
    %cst_68 = arith.constant dense<0.000000e+00> : vector<8x8xf32>
    %107 = tpu.matmul %94, %67, %cst_68 {dimension_numbers = #tpu.dot_dimension_numbers<[1], [0], [0], [1], [0, 0, 1, 1], [], []>} : vector<8x16xf32>, vector<16x8xf32>, vector<8x8xf32> -> vector<8x8xf32>
    %cst_69 = arith.constant dense<0.000000e+00> : vector<8x8xf32>
    %108 = tpu.matmul %95, %43, %cst_69 {dimension_numbers = #tpu.dot_dimension_numbers<[1], [0], [0], [1], [0, 0, 1, 1], [], []>} : vector<8x16xf32>, vector<16x8xf32>, vector<8x8xf32> -> vector<8x8xf32>
    %cst_70 = arith.constant dense<0.000000e+00> : vector<8x8xf32>
    %109 = tpu.matmul %95, %51, %cst_70 {dimension_numbers = #tpu.dot_dimension_numbers<[1], [0], [0], [1], [0, 0, 1, 1], [], []>} : vector<8x16xf32>, vector<16x8xf32>, vector<8x8xf32> -> vector<8x8xf32>
    %cst_71 = arith.constant dense<0.000000e+00> : vector<8x8xf32>
    %110 = tpu.matmul %95, %59, %cst_71 {dimension_numbers = #tpu.dot_dimension_numbers<[1], [0], [0], [1], [0, 0, 1, 1], [], []>} : vector<8x16xf32>, vector<16x8xf32>, vector<8x8xf32> -> vector<8x8xf32>
    %cst_72 = arith.constant dense<0.000000e+00> : vector<8x8xf32>
    %111 = tpu.matmul %95, %67, %cst_72 {dimension_numbers = #tpu.dot_dimension_numbers<[1], [0], [0], [1], [0, 0, 1, 1], [], []>} : vector<8x16xf32>, vector<16x8xf32>, vector<8x8xf32> -> vector<8x8xf32>
    %c0_73 = arith.constant 0 : index
    %c2 = arith.constant 2 : index
    %c0_74 = arith.constant 0 : index
    %c0_75 = arith.constant 0 : index
    %112 = vector.load %arg1[%c0_73, %c2, %c0_74, %c0_75] : memref<1x4x16x16xf32, #tpu.memory_space<vmem>>, vector<1x1x16x16xf32>
    %113 = vector.shape_cast %112 : vector<1x1x16x16xf32> to vector<16x16xf32>
    %cst_76 = arith.constant dense<0.000000e+00> : vector<8x16xf32>
    %114 = tpu.matmul %11, %113, %cst_76 {dimension_numbers = #tpu.dot_dimension_numbers<[1], [0], [0], [1], [0, 0, 1, 1], [], []>} : vector<8x16xf32>, vector<16x16xf32>, vector<8x16xf32> -> vector<8x16xf32>
    %cst_77 = arith.constant dense<0.000000e+00> : vector<8x16xf32>
    %115 = tpu.matmul %19, %113, %cst_77 {dimension_numbers = #tpu.dot_dimension_numbers<[1], [0], [0], [1], [0, 0, 1, 1], [], []>} : vector<8x16xf32>, vector<16x16xf32>, vector<8x16xf32> -> vector<8x16xf32>
    %cst_78 = arith.constant dense<0.000000e+00> : vector<8x16xf32>
    %116 = tpu.matmul %27, %113, %cst_78 {dimension_numbers = #tpu.dot_dimension_numbers<[1], [0], [0], [1], [0, 0, 1, 1], [], []>} : vector<8x16xf32>, vector<16x16xf32>, vector<8x16xf32> -> vector<8x16xf32>
    %cst_79 = arith.constant dense<0.000000e+00> : vector<8x16xf32>
    %117 = tpu.matmul %35, %113, %cst_79 {dimension_numbers = #tpu.dot_dimension_numbers<[1], [0], [0], [1], [0, 0, 1, 1], [], []>} : vector<8x16xf32>, vector<16x16xf32>, vector<8x16xf32> -> vector<8x16xf32>
    %cst_80 = arith.constant dense<0.000000e+00> : vector<8x8xf32>
    %118 = tpu.matmul %114, %43, %cst_80 {dimension_numbers = #tpu.dot_dimension_numbers<[1], [0], [0], [1], [0, 0, 1, 1], [], []>} : vector<8x16xf32>, vector<16x8xf32>, vector<8x8xf32> -> vector<8x8xf32>
    %cst_81 = arith.constant dense<0.000000e+00> : vector<8x8xf32>
    %119 = tpu.matmul %114, %51, %cst_81 {dimension_numbers = #tpu.dot_dimension_numbers<[1], [0], [0], [1], [0, 0, 1, 1], [], []>} : vector<8x16xf32>, vector<16x8xf32>, vector<8x8xf32> -> vector<8x8xf32>
    %cst_82 = arith.constant dense<0.000000e+00> : vector<8x8xf32>
    %120 = tpu.matmul %114, %59, %cst_82 {dimension_numbers = #tpu.dot_dimension_numbers<[1], [0], [0], [1], [0, 0, 1, 1], [], []>} : vector<8x16xf32>, vector<16x8xf32>, vector<8x8xf32> -> vector<8x8xf32>
    %cst_83 = arith.constant dense<0.000000e+00> : vector<8x8xf32>
    %121 = tpu.matmul %114, %67, %cst_83 {dimension_numbers = #tpu.dot_dimension_numbers<[1], [0], [0], [1], [0, 0, 1, 1], [], []>} : vector<8x16xf32>, vector<16x8xf32>, vector<8x8xf32> -> vector<8x8xf32>
    %cst_84 = arith.constant dense<0.000000e+00> : vector<8x8xf32>
    %122 = tpu.matmul %115, %43, %cst_84 {dimension_numbers = #tpu.dot_dimension_numbers<[1], [0], [0], [1], [0, 0, 1, 1], [], []>} : vector<8x16xf32>, vector<16x8xf32>, vector<8x8xf32> -> vector<8x8xf32>
    %cst_85 = arith.constant dense<0.000000e+00> : vector<8x8xf32>
    %123 = tpu.matmul %115, %51, %cst_85 {dimension_numbers = #tpu.dot_dimension_numbers<[1], [0], [0], [1], [0, 0, 1, 1], [], []>} : vector<8x16xf32>, vector<16x8xf32>, vector<8x8xf32> -> vector<8x8xf32>
    %cst_86 = arith.constant dense<0.000000e+00> : vector<8x8xf32>
    %124 = tpu.matmul %115, %59, %cst_86 {dimension_numbers = #tpu.dot_dimension_numbers<[1], [0], [0], [1], [0, 0, 1, 1], [], []>} : vector<8x16xf32>, vector<16x8xf32>, vector<8x8xf32> -> vector<8x8xf32>
    %cst_87 = arith.constant dense<0.000000e+00> : vector<8x8xf32>
    %125 = tpu.matmul %115, %67, %cst_87 {dimension_numbers = #tpu.dot_dimension_numbers<[1], [0], [0], [1], [0, 0, 1, 1], [], []>} : vector<8x16xf32>, vector<16x8xf32>, vector<8x8xf32> -> vector<8x8xf32>
    %cst_88 = arith.constant dense<0.000000e+00> : vector<8x8xf32>
    %126 = tpu.matmul %116, %43, %cst_88 {dimension_numbers = #tpu.dot_dimension_numbers<[1], [0], [0], [1], [0, 0, 1, 1], [], []>} : vector<8x16xf32>, vector<16x8xf32>, vector<8x8xf32> -> vector<8x8xf32>
    %cst_89 = arith.constant dense<0.000000e+00> : vector<8x8xf32>
    %127 = tpu.matmul %116, %51, %cst_89 {dimension_numbers = #tpu.dot_dimension_numbers<[1], [0], [0], [1], [0, 0, 1, 1], [], []>} : vector<8x16xf32>, vector<16x8xf32>, vector<8x8xf32> -> vector<8x8xf32>
    %cst_90 = arith.constant dense<0.000000e+00> : vector<8x8xf32>
    %128 = tpu.matmul %116, %59, %cst_90 {dimension_numbers = #tpu.dot_dimension_numbers<[1], [0], [0], [1], [0, 0, 1, 1], [], []>} : vector<8x16xf32>, vector<16x8xf32>, vector<8x8xf32> -> vector<8x8xf32>
    %cst_91 = arith.constant dense<0.000000e+00> : vector<8x8xf32>
    %129 = tpu.matmul %116, %67, %cst_91 {dimension_numbers = #tpu.dot_dimension_numbers<[1], [0], [0], [1], [0, 0, 1, 1], [], []>} : vector<8x16xf32>, vector<16x8xf32>, vector<8x8xf32> -> vector<8x8xf32>
    %cst_92 = arith.constant dense<0.000000e+00> : vector<8x8xf32>
    %130 = tpu.matmul %117, %43, %cst_92 {dimension_numbers = #tpu.dot_dimension_numbers<[1], [0], [0], [1], [0, 0, 1, 1], [], []>} : vector<8x16xf32>, vector<16x8xf32>, vector<8x8xf32> -> vector<8x8xf32>
    %cst_93 = arith.constant dense<0.000000e+00> : vector<8x8xf32>
    %131 = tpu.matmul %117, %51, %cst_93 {dimension_numbers = #tpu.dot_dimension_numbers<[1], [0], [0], [1], [0, 0, 1, 1], [], []>} : vector<8x16xf32>, vector<16x8xf32>, vector<8x8xf32> -> vector<8x8xf32>
    %cst_94 = arith.constant dense<0.000000e+00> : vector<8x8xf32>
    %132 = tpu.matmul %117, %59, %cst_94 {dimension_numbers = #tpu.dot_dimension_numbers<[1], [0], [0], [1], [0, 0, 1, 1], [], []>} : vector<8x16xf32>, vector<16x8xf32>, vector<8x8xf32> -> vector<8x8xf32>
    %cst_95 = arith.constant dense<0.000000e+00> : vector<8x8xf32>
    %133 = tpu.matmul %117, %67, %cst_95 {dimension_numbers = #tpu.dot_dimension_numbers<[1], [0], [0], [1], [0, 0, 1, 1], [], []>} : vector<8x16xf32>, vector<16x8xf32>, vector<8x8xf32> -> vector<8x8xf32>
    %c0_96 = arith.constant 0 : index
    %c3 = arith.constant 3 : index
    %c0_97 = arith.constant 0 : index
    %c0_98 = arith.constant 0 : index
    %134 = vector.load %arg1[%c0_96, %c3, %c0_97, %c0_98] : memref<1x4x16x16xf32, #tpu.memory_space<vmem>>, vector<1x1x16x16xf32>
    %135 = vector.shape_cast %134 : vector<1x1x16x16xf32> to vector<16x16xf32>
    %cst_99 = arith.constant dense<0.000000e+00> : vector<8x16xf32>
    %136 = tpu.matmul %11, %135, %cst_99 {dimension_numbers = #tpu.dot_dimension_numbers<[1], [0], [0], [1], [0, 0, 1, 1], [], []>} : vector<8x16xf32>, vector<16x16xf32>, vector<8x16xf32> -> vector<8x16xf32>
    %cst_100 = arith.constant dense<0.000000e+00> : vector<8x16xf32>
    %137 = tpu.matmul %19, %135, %cst_100 {dimension_numbers = #tpu.dot_dimension_numbers<[1], [0], [0], [1], [0, 0, 1, 1], [], []>} : vector<8x16xf32>, vector<16x16xf32>, vector<8x16xf32> -> vector<8x16xf32>
    %cst_101 = arith.constant dense<0.000000e+00> : vector<8x16xf32>
    %138 = tpu.matmul %27, %135, %cst_101 {dimension_numbers = #tpu.dot_dimension_numbers<[1], [0], [0], [1], [0, 0, 1, 1], [], []>} : vector<8x16xf32>, vector<16x16xf32>, vector<8x16xf32> -> vector<8x16xf32>
    %cst_102 = arith.constant dense<0.000000e+00> : vector<8x16xf32>
    %139 = tpu.matmul %35, %135, %cst_102 {dimension_numbers = #tpu.dot_dimension_numbers<[1], [0], [0], [1], [0, 0, 1, 1], [], []>} : vector<8x16xf32>, vector<16x16xf32>, vector<8x16xf32> -> vector<8x16xf32>
    %cst_103 = arith.constant dense<0.000000e+00> : vector<8x8xf32>
    %140 = tpu.matmul %136, %43, %cst_103 {dimension_numbers = #tpu.dot_dimension_numbers<[1], [0], [0], [1], [0, 0, 1, 1], [], []>} : vector<8x16xf32>, vector<16x8xf32>, vector<8x8xf32> -> vector<8x8xf32>
    %cst_104 = arith.constant dense<0.000000e+00> : vector<8x8xf32>
    %141 = tpu.matmul %136, %51, %cst_104 {dimension_numbers = #tpu.dot_dimension_numbers<[1], [0], [0], [1], [0, 0, 1, 1], [], []>} : vector<8x16xf32>, vector<16x8xf32>, vector<8x8xf32> -> vector<8x8xf32>
    %cst_105 = arith.constant dense<0.000000e+00> : vector<8x8xf32>
    %142 = tpu.matmul %136, %59, %cst_105 {dimension_numbers = #tpu.dot_dimension_numbers<[1], [0], [0], [1], [0, 0, 1, 1], [], []>} : vector<8x16xf32>, vector<16x8xf32>, vector<8x8xf32> -> vector<8x8xf32>
    %cst_106 = arith.constant dense<0.000000e+00> : vector<8x8xf32>
    %143 = tpu.matmul %136, %67, %cst_106 {dimension_numbers = #tpu.dot_dimension_numbers<[1], [0], [0], [1], [0, 0, 1, 1], [], []>} : vector<8x16xf32>, vector<16x8xf32>, vector<8x8xf32> -> vector<8x8xf32>
    %cst_107 = arith.constant dense<0.000000e+00> : vector<8x8xf32>
    %144 = tpu.matmul %137, %43, %cst_107 {dimension_numbers = #tpu.dot_dimension_numbers<[1], [0], [0], [1], [0, 0, 1, 1], [], []>} : vector<8x16xf32>, vector<16x8xf32>, vector<8x8xf32> -> vector<8x8xf32>
    %cst_108 = arith.constant dense<0.000000e+00> : vector<8x8xf32>
    %145 = tpu.matmul %137, %51, %cst_108 {dimension_numbers = #tpu.dot_dimension_numbers<[1], [0], [0], [1], [0, 0, 1, 1], [], []>} : vector<8x16xf32>, vector<16x8xf32>, vector<8x8xf32> -> vector<8x8xf32>
    %cst_109 = arith.constant dense<0.000000e+00> : vector<8x8xf32>
    %146 = tpu.matmul %137, %59, %cst_109 {dimension_numbers = #tpu.dot_dimension_numbers<[1], [0], [0], [1], [0, 0, 1, 1], [], []>} : vector<8x16xf32>, vector<16x8xf32>, vector<8x8xf32> -> vector<8x8xf32>
    %cst_110 = arith.constant dense<0.000000e+00> : vector<8x8xf32>
    %147 = tpu.matmul %137, %67, %cst_110 {dimension_numbers = #tpu.dot_dimension_numbers<[1], [0], [0], [1], [0, 0, 1, 1], [], []>} : vector<8x16xf32>, vector<16x8xf32>, vector<8x8xf32> -> vector<8x8xf32>
    %cst_111 = arith.constant dense<0.000000e+00> : vector<8x8xf32>
    %148 = tpu.matmul %138, %43, %cst_111 {dimension_numbers = #tpu.dot_dimension_numbers<[1], [0], [0], [1], [0, 0, 1, 1], [], []>} : vector<8x16xf32>, vector<16x8xf32>, vector<8x8xf32> -> vector<8x8xf32>
    %cst_112 = arith.constant dense<0.000000e+00> : vector<8x8xf32>
    %149 = tpu.matmul %138, %51, %cst_112 {dimension_numbers = #tpu.dot_dimension_numbers<[1], [0], [0], [1], [0, 0, 1, 1], [], []>} : vector<8x16xf32>, vector<16x8xf32>, vector<8x8xf32> -> vector<8x8xf32>
    %cst_113 = arith.constant dense<0.000000e+00> : vector<8x8xf32>
    %150 = tpu.matmul %138, %59, %cst_113 {dimension_numbers = #tpu.dot_dimension_numbers<[1], [0], [0], [1], [0, 0, 1, 1], [], []>} : vector<8x16xf32>, vector<16x8xf32>, vector<8x8xf32> -> vector<8x8xf32>
    %cst_114 = arith.constant dense<0.000000e+00> : vector<8x8xf32>
    %151 = tpu.matmul %138, %67, %cst_114 {dimension_numbers = #tpu.dot_dimension_numbers<[1], [0], [0], [1], [0, 0, 1, 1], [], []>} : vector<8x16xf32>, vector<16x8xf32>, vector<8x8xf32> -> vector<8x8xf32>
    %cst_115 = arith.constant dense<0.000000e+00> : vector<8x8xf32>
    %152 = tpu.matmul %139, %43, %cst_115 {dimension_numbers = #tpu.dot_dimension_numbers<[1], [0], [0], [1], [0, 0, 1, 1], [], []>} : vector<8x16xf32>, vector<16x8xf32>, vector<8x8xf32> -> vector<8x8xf32>
    %cst_116 = arith.constant dense<0.000000e+00> : vector<8x8xf32>
    %153 = tpu.matmul %139, %51, %cst_116 {dimension_numbers = #tpu.dot_dimension_numbers<[1], [0], [0], [1], [0, 0, 1, 1], [], []>} : vector<8x16xf32>, vector<16x8xf32>, vector<8x8xf32> -> vector<8x8xf32>
    %cst_117 = arith.constant dense<0.000000e+00> : vector<8x8xf32>
    %154 = tpu.matmul %139, %59, %cst_117 {dimension_numbers = #tpu.dot_dimension_numbers<[1], [0], [0], [1], [0, 0, 1, 1], [], []>} : vector<8x16xf32>, vector<16x8xf32>, vector<8x8xf32> -> vector<8x8xf32>
    %cst_118 = arith.constant dense<0.000000e+00> : vector<8x8xf32>
    %155 = tpu.matmul %139, %67, %cst_118 {dimension_numbers = #tpu.dot_dimension_numbers<[1], [0], [0], [1], [0, 0, 1, 1], [], []>} : vector<8x16xf32>, vector<16x8xf32>, vector<8x8xf32> -> vector<8x8xf32>
    %cst_119 = arith.constant 0.000000e+00 : f32
    %156 = vector.broadcast %cst_119 : f32 to vector<8x8xf32>
    %cst_120 = arith.constant 0.000000e+00 : f32
    %157 = vector.broadcast %cst_120 : f32 to vector<8x8xf32>
    %cst_121 = arith.constant 0.000000e+00 : f32
    %158 = vector.broadcast %cst_121 : f32 to vector<8x8xf32>
    %cst_122 = arith.constant 0.000000e+00 : f32
    %159 = vector.broadcast %cst_122 : f32 to vector<8x8xf32>
    %c0_123 = arith.constant 0 : index
    %160 = memref.load %arg2[%c0_123] : memref<72xf32, #tpu.memory_space<smem>>
    %161 = vector.broadcast %160 : f32 to vector<8x8xf32>
    %162 = arith.mulf %74, %161 : vector<8x8xf32>
    %163 = arith.addf %156, %162 : vector<8x8xf32>
    %164 = vector.broadcast %160 : f32 to vector<8x8xf32>
    %165 = arith.mulf %75, %164 : vector<8x8xf32>
    %166 = arith.addf %157, %165 : vector<8x8xf32>
    %167 = vector.broadcast %160 : f32 to vector<8x8xf32>
    %168 = arith.mulf %78, %167 : vector<8x8xf32>
    %169 = arith.addf %158, %168 : vector<8x8xf32>
    %170 = vector.broadcast %160 : f32 to vector<8x8xf32>
    %171 = arith.mulf %79, %170 : vector<8x8xf32>
    %172 = arith.addf %159, %171 : vector<8x8xf32>
    %c1_124 = arith.constant 1 : index
    %173 = memref.load %arg2[%c1_124] : memref<72xf32, #tpu.memory_space<smem>>
    %174 = vector.broadcast %173 : f32 to vector<8x8xf32>
    %175 = arith.mulf %75, %174 : vector<8x8xf32>
    %176 = arith.addf %163, %175 : vector<8x8xf32>
    %177 = vector.broadcast %173 : f32 to vector<8x8xf32>
    %178 = arith.mulf %76, %177 : vector<8x8xf32>
    %179 = arith.addf %166, %178 : vector<8x8xf32>
    %180 = vector.broadcast %173 : f32 to vector<8x8xf32>
    %181 = arith.mulf %79, %180 : vector<8x8xf32>
    %182 = arith.addf %169, %181 : vector<8x8xf32>
    %183 = vector.broadcast %173 : f32 to vector<8x8xf32>
    %184 = arith.mulf %80, %183 : vector<8x8xf32>
    %185 = arith.addf %172, %184 : vector<8x8xf32>
    %c2_125 = arith.constant 2 : index
    %186 = memref.load %arg2[%c2_125] : memref<72xf32, #tpu.memory_space<smem>>
    %187 = vector.broadcast %186 : f32 to vector<8x8xf32>
    %188 = arith.mulf %76, %187 : vector<8x8xf32>
    %189 = arith.addf %176, %188 : vector<8x8xf32>
    %190 = vector.broadcast %186 : f32 to vector<8x8xf32>
    %191 = arith.mulf %77, %190 : vector<8x8xf32>
    %192 = arith.addf %179, %191 : vector<8x8xf32>
    %193 = vector.broadcast %186 : f32 to vector<8x8xf32>
    %194 = arith.mulf %80, %193 : vector<8x8xf32>
    %195 = arith.addf %182, %194 : vector<8x8xf32>
    %196 = vector.broadcast %186 : f32 to vector<8x8xf32>
    %197 = arith.mulf %81, %196 : vector<8x8xf32>
    %198 = arith.addf %185, %197 : vector<8x8xf32>
    %c3_126 = arith.constant 3 : index
    %199 = memref.load %arg2[%c3_126] : memref<72xf32, #tpu.memory_space<smem>>
    %200 = vector.broadcast %199 : f32 to vector<8x8xf32>
    %201 = arith.mulf %78, %200 : vector<8x8xf32>
    %202 = arith.addf %189, %201 : vector<8x8xf32>
    %203 = vector.broadcast %199 : f32 to vector<8x8xf32>
    %204 = arith.mulf %79, %203 : vector<8x8xf32>
    %205 = arith.addf %192, %204 : vector<8x8xf32>
    %206 = vector.broadcast %199 : f32 to vector<8x8xf32>
    %207 = arith.mulf %82, %206 : vector<8x8xf32>
    %208 = arith.addf %195, %207 : vector<8x8xf32>
    %209 = vector.broadcast %199 : f32 to vector<8x8xf32>
    %210 = arith.mulf %83, %209 : vector<8x8xf32>
    %211 = arith.addf %198, %210 : vector<8x8xf32>
    %c4 = arith.constant 4 : index
    %212 = memref.load %arg2[%c4] : memref<72xf32, #tpu.memory_space<smem>>
    %213 = vector.broadcast %212 : f32 to vector<8x8xf32>
    %214 = arith.mulf %79, %213 : vector<8x8xf32>
    %215 = arith.addf %202, %214 : vector<8x8xf32>
    %216 = vector.broadcast %212 : f32 to vector<8x8xf32>
    %217 = arith.mulf %80, %216 : vector<8x8xf32>
    %218 = arith.addf %205, %217 : vector<8x8xf32>
    %219 = vector.broadcast %212 : f32 to vector<8x8xf32>
    %220 = arith.mulf %83, %219 : vector<8x8xf32>
    %221 = arith.addf %208, %220 : vector<8x8xf32>
    %222 = vector.broadcast %212 : f32 to vector<8x8xf32>
    %223 = arith.mulf %84, %222 : vector<8x8xf32>
    %224 = arith.addf %211, %223 : vector<8x8xf32>
    %c5 = arith.constant 5 : index
    %225 = memref.load %arg2[%c5] : memref<72xf32, #tpu.memory_space<smem>>
    %226 = vector.broadcast %225 : f32 to vector<8x8xf32>
    %227 = arith.mulf %80, %226 : vector<8x8xf32>
    %228 = arith.addf %215, %227 : vector<8x8xf32>
    %229 = vector.broadcast %225 : f32 to vector<8x8xf32>
    %230 = arith.mulf %81, %229 : vector<8x8xf32>
    %231 = arith.addf %218, %230 : vector<8x8xf32>
    %232 = vector.broadcast %225 : f32 to vector<8x8xf32>
    %233 = arith.mulf %84, %232 : vector<8x8xf32>
    %234 = arith.addf %221, %233 : vector<8x8xf32>
    %235 = vector.broadcast %225 : f32 to vector<8x8xf32>
    %236 = arith.mulf %85, %235 : vector<8x8xf32>
    %237 = arith.addf %224, %236 : vector<8x8xf32>
    %c6 = arith.constant 6 : index
    %238 = memref.load %arg2[%c6] : memref<72xf32, #tpu.memory_space<smem>>
    %239 = vector.broadcast %238 : f32 to vector<8x8xf32>
    %240 = arith.mulf %82, %239 : vector<8x8xf32>
    %241 = arith.addf %228, %240 : vector<8x8xf32>
    %242 = vector.broadcast %238 : f32 to vector<8x8xf32>
    %243 = arith.mulf %83, %242 : vector<8x8xf32>
    %244 = arith.addf %231, %243 : vector<8x8xf32>
    %245 = vector.broadcast %238 : f32 to vector<8x8xf32>
    %246 = arith.mulf %86, %245 : vector<8x8xf32>
    %247 = arith.addf %234, %246 : vector<8x8xf32>
    %248 = vector.broadcast %238 : f32 to vector<8x8xf32>
    %249 = arith.mulf %87, %248 : vector<8x8xf32>
    %250 = arith.addf %237, %249 : vector<8x8xf32>
    %c7 = arith.constant 7 : index
    %251 = memref.load %arg2[%c7] : memref<72xf32, #tpu.memory_space<smem>>
    %252 = vector.broadcast %251 : f32 to vector<8x8xf32>
    %253 = arith.mulf %83, %252 : vector<8x8xf32>
    %254 = arith.addf %241, %253 : vector<8x8xf32>
    %255 = vector.broadcast %251 : f32 to vector<8x8xf32>
    %256 = arith.mulf %84, %255 : vector<8x8xf32>
    %257 = arith.addf %244, %256 : vector<8x8xf32>
    %258 = vector.broadcast %251 : f32 to vector<8x8xf32>
    %259 = arith.mulf %87, %258 : vector<8x8xf32>
    %260 = arith.addf %247, %259 : vector<8x8xf32>
    %261 = vector.broadcast %251 : f32 to vector<8x8xf32>
    %262 = arith.mulf %88, %261 : vector<8x8xf32>
    %263 = arith.addf %250, %262 : vector<8x8xf32>
    %c8 = arith.constant 8 : index
    %264 = memref.load %arg2[%c8] : memref<72xf32, #tpu.memory_space<smem>>
    %265 = vector.broadcast %264 : f32 to vector<8x8xf32>
    %266 = arith.mulf %84, %265 : vector<8x8xf32>
    %267 = arith.addf %254, %266 : vector<8x8xf32>
    %268 = vector.broadcast %264 : f32 to vector<8x8xf32>
    %269 = arith.mulf %85, %268 : vector<8x8xf32>
    %270 = arith.addf %257, %269 : vector<8x8xf32>
    %271 = vector.broadcast %264 : f32 to vector<8x8xf32>
    %272 = arith.mulf %88, %271 : vector<8x8xf32>
    %273 = arith.addf %260, %272 : vector<8x8xf32>
    %274 = vector.broadcast %264 : f32 to vector<8x8xf32>
    %275 = arith.mulf %89, %274 : vector<8x8xf32>
    %276 = arith.addf %263, %275 : vector<8x8xf32>
    %c9 = arith.constant 9 : index
    %277 = memref.load %arg2[%c9] : memref<72xf32, #tpu.memory_space<smem>>
    %278 = vector.broadcast %277 : f32 to vector<8x8xf32>
    %279 = arith.mulf %96, %278 : vector<8x8xf32>
    %280 = arith.addf %267, %279 : vector<8x8xf32>
    %281 = vector.broadcast %277 : f32 to vector<8x8xf32>
    %282 = arith.mulf %97, %281 : vector<8x8xf32>
    %283 = arith.addf %270, %282 : vector<8x8xf32>
    %284 = vector.broadcast %277 : f32 to vector<8x8xf32>
    %285 = arith.mulf %100, %284 : vector<8x8xf32>
    %286 = arith.addf %273, %285 : vector<8x8xf32>
    %287 = vector.broadcast %277 : f32 to vector<8x8xf32>
    %288 = arith.mulf %101, %287 : vector<8x8xf32>
    %289 = arith.addf %276, %288 : vector<8x8xf32>
    %c10 = arith.constant 10 : index
    %290 = memref.load %arg2[%c10] : memref<72xf32, #tpu.memory_space<smem>>
    %291 = vector.broadcast %290 : f32 to vector<8x8xf32>
    %292 = arith.mulf %97, %291 : vector<8x8xf32>
    %293 = arith.addf %280, %292 : vector<8x8xf32>
    %294 = vector.broadcast %290 : f32 to vector<8x8xf32>
    %295 = arith.mulf %98, %294 : vector<8x8xf32>
    %296 = arith.addf %283, %295 : vector<8x8xf32>
    %297 = vector.broadcast %290 : f32 to vector<8x8xf32>
    %298 = arith.mulf %101, %297 : vector<8x8xf32>
    %299 = arith.addf %286, %298 : vector<8x8xf32>
    %300 = vector.broadcast %290 : f32 to vector<8x8xf32>
    %301 = arith.mulf %102, %300 : vector<8x8xf32>
    %302 = arith.addf %289, %301 : vector<8x8xf32>
    %c11 = arith.constant 11 : index
    %303 = memref.load %arg2[%c11] : memref<72xf32, #tpu.memory_space<smem>>
    %304 = vector.broadcast %303 : f32 to vector<8x8xf32>
    %305 = arith.mulf %98, %304 : vector<8x8xf32>
    %306 = arith.addf %293, %305 : vector<8x8xf32>
    %307 = vector.broadcast %303 : f32 to vector<8x8xf32>
    %308 = arith.mulf %99, %307 : vector<8x8xf32>
    %309 = arith.addf %296, %308 : vector<8x8xf32>
    %310 = vector.broadcast %303 : f32 to vector<8x8xf32>
    %311 = arith.mulf %102, %310 : vector<8x8xf32>
    %312 = arith.addf %299, %311 : vector<8x8xf32>
    %313 = vector.broadcast %303 : f32 to vector<8x8xf32>
    %314 = arith.mulf %103, %313 : vector<8x8xf32>
    %315 = arith.addf %302, %314 : vector<8x8xf32>
    %c12 = arith.constant 12 : index
    %316 = memref.load %arg2[%c12] : memref<72xf32, #tpu.memory_space<smem>>
    %317 = vector.broadcast %316 : f32 to vector<8x8xf32>
    %318 = arith.mulf %100, %317 : vector<8x8xf32>
    %319 = arith.addf %306, %318 : vector<8x8xf32>
    %320 = vector.broadcast %316 : f32 to vector<8x8xf32>
    %321 = arith.mulf %101, %320 : vector<8x8xf32>
    %322 = arith.addf %309, %321 : vector<8x8xf32>
    %323 = vector.broadcast %316 : f32 to vector<8x8xf32>
    %324 = arith.mulf %104, %323 : vector<8x8xf32>
    %325 = arith.addf %312, %324 : vector<8x8xf32>
    %326 = vector.broadcast %316 : f32 to vector<8x8xf32>
    %327 = arith.mulf %105, %326 : vector<8x8xf32>
    %328 = arith.addf %315, %327 : vector<8x8xf32>
    %c13 = arith.constant 13 : index
    %329 = memref.load %arg2[%c13] : memref<72xf32, #tpu.memory_space<smem>>
    %330 = vector.broadcast %329 : f32 to vector<8x8xf32>
    %331 = arith.mulf %101, %330 : vector<8x8xf32>
    %332 = arith.addf %319, %331 : vector<8x8xf32>
    %333 = vector.broadcast %329 : f32 to vector<8x8xf32>
    %334 = arith.mulf %102, %333 : vector<8x8xf32>
    %335 = arith.addf %322, %334 : vector<8x8xf32>
    %336 = vector.broadcast %329 : f32 to vector<8x8xf32>
    %337 = arith.mulf %105, %336 : vector<8x8xf32>
    %338 = arith.addf %325, %337 : vector<8x8xf32>
    %339 = vector.broadcast %329 : f32 to vector<8x8xf32>
    %340 = arith.mulf %106, %339 : vector<8x8xf32>
    %341 = arith.addf %328, %340 : vector<8x8xf32>
    %c14 = arith.constant 14 : index
    %342 = memref.load %arg2[%c14] : memref<72xf32, #tpu.memory_space<smem>>
    %343 = vector.broadcast %342 : f32 to vector<8x8xf32>
    %344 = arith.mulf %102, %343 : vector<8x8xf32>
    %345 = arith.addf %332, %344 : vector<8x8xf32>
    %346 = vector.broadcast %342 : f32 to vector<8x8xf32>
    %347 = arith.mulf %103, %346 : vector<8x8xf32>
    %348 = arith.addf %335, %347 : vector<8x8xf32>
    %349 = vector.broadcast %342 : f32 to vector<8x8xf32>
    %350 = arith.mulf %106, %349 : vector<8x8xf32>
    %351 = arith.addf %338, %350 : vector<8x8xf32>
    %352 = vector.broadcast %342 : f32 to vector<8x8xf32>
    %353 = arith.mulf %107, %352 : vector<8x8xf32>
    %354 = arith.addf %341, %353 : vector<8x8xf32>
    %c15 = arith.constant 15 : index
    %355 = memref.load %arg2[%c15] : memref<72xf32, #tpu.memory_space<smem>>
    %356 = vector.broadcast %355 : f32 to vector<8x8xf32>
    %357 = arith.mulf %104, %356 : vector<8x8xf32>
    %358 = arith.addf %345, %357 : vector<8x8xf32>
    %359 = vector.broadcast %355 : f32 to vector<8x8xf32>
    %360 = arith.mulf %105, %359 : vector<8x8xf32>
    %361 = arith.addf %348, %360 : vector<8x8xf32>
    %362 = vector.broadcast %355 : f32 to vector<8x8xf32>
    %363 = arith.mulf %108, %362 : vector<8x8xf32>
    %364 = arith.addf %351, %363 : vector<8x8xf32>
    %365 = vector.broadcast %355 : f32 to vector<8x8xf32>
    %366 = arith.mulf %109, %365 : vector<8x8xf32>
    %367 = arith.addf %354, %366 : vector<8x8xf32>
    %c16 = arith.constant 16 : index
    %368 = memref.load %arg2[%c16] : memref<72xf32, #tpu.memory_space<smem>>
    %369 = vector.broadcast %368 : f32 to vector<8x8xf32>
    %370 = arith.mulf %105, %369 : vector<8x8xf32>
    %371 = arith.addf %358, %370 : vector<8x8xf32>
    %372 = vector.broadcast %368 : f32 to vector<8x8xf32>
    %373 = arith.mulf %106, %372 : vector<8x8xf32>
    %374 = arith.addf %361, %373 : vector<8x8xf32>
    %375 = vector.broadcast %368 : f32 to vector<8x8xf32>
    %376 = arith.mulf %109, %375 : vector<8x8xf32>
    %377 = arith.addf %364, %376 : vector<8x8xf32>
    %378 = vector.broadcast %368 : f32 to vector<8x8xf32>
    %379 = arith.mulf %110, %378 : vector<8x8xf32>
    %380 = arith.addf %367, %379 : vector<8x8xf32>
    %c17 = arith.constant 17 : index
    %381 = memref.load %arg2[%c17] : memref<72xf32, #tpu.memory_space<smem>>
    %382 = vector.broadcast %381 : f32 to vector<8x8xf32>
    %383 = arith.mulf %106, %382 : vector<8x8xf32>
    %384 = arith.addf %371, %383 : vector<8x8xf32>
    %385 = vector.broadcast %381 : f32 to vector<8x8xf32>
    %386 = arith.mulf %107, %385 : vector<8x8xf32>
    %387 = arith.addf %374, %386 : vector<8x8xf32>
    %388 = vector.broadcast %381 : f32 to vector<8x8xf32>
    %389 = arith.mulf %110, %388 : vector<8x8xf32>
    %390 = arith.addf %377, %389 : vector<8x8xf32>
    %391 = vector.broadcast %381 : f32 to vector<8x8xf32>
    %392 = arith.mulf %111, %391 : vector<8x8xf32>
    %393 = arith.addf %380, %392 : vector<8x8xf32>
    %c18 = arith.constant 18 : index
    %394 = memref.load %arg2[%c18] : memref<72xf32, #tpu.memory_space<smem>>
    %395 = vector.broadcast %394 : f32 to vector<8x8xf32>
    %396 = arith.mulf %118, %395 : vector<8x8xf32>
    %397 = arith.addf %384, %396 : vector<8x8xf32>
    %398 = vector.broadcast %394 : f32 to vector<8x8xf32>
    %399 = arith.mulf %119, %398 : vector<8x8xf32>
    %400 = arith.addf %387, %399 : vector<8x8xf32>
    %401 = vector.broadcast %394 : f32 to vector<8x8xf32>
    %402 = arith.mulf %122, %401 : vector<8x8xf32>
    %403 = arith.addf %390, %402 : vector<8x8xf32>
    %404 = vector.broadcast %394 : f32 to vector<8x8xf32>
    %405 = arith.mulf %123, %404 : vector<8x8xf32>
    %406 = arith.addf %393, %405 : vector<8x8xf32>
    %c19 = arith.constant 19 : index
    %407 = memref.load %arg2[%c19] : memref<72xf32, #tpu.memory_space<smem>>
    %408 = vector.broadcast %407 : f32 to vector<8x8xf32>
    %409 = arith.mulf %119, %408 : vector<8x8xf32>
    %410 = arith.addf %397, %409 : vector<8x8xf32>
    %411 = vector.broadcast %407 : f32 to vector<8x8xf32>
    %412 = arith.mulf %120, %411 : vector<8x8xf32>
    %413 = arith.addf %400, %412 : vector<8x8xf32>
    %414 = vector.broadcast %407 : f32 to vector<8x8xf32>
    %415 = arith.mulf %123, %414 : vector<8x8xf32>
    %416 = arith.addf %403, %415 : vector<8x8xf32>
    %417 = vector.broadcast %407 : f32 to vector<8x8xf32>
    %418 = arith.mulf %124, %417 : vector<8x8xf32>
    %419 = arith.addf %406, %418 : vector<8x8xf32>
    %c20 = arith.constant 20 : index
    %420 = memref.load %arg2[%c20] : memref<72xf32, #tpu.memory_space<smem>>
    %421 = vector.broadcast %420 : f32 to vector<8x8xf32>
    %422 = arith.mulf %120, %421 : vector<8x8xf32>
    %423 = arith.addf %410, %422 : vector<8x8xf32>
    %424 = vector.broadcast %420 : f32 to vector<8x8xf32>
    %425 = arith.mulf %121, %424 : vector<8x8xf32>
    %426 = arith.addf %413, %425 : vector<8x8xf32>
    %427 = vector.broadcast %420 : f32 to vector<8x8xf32>
    %428 = arith.mulf %124, %427 : vector<8x8xf32>
    %429 = arith.addf %416, %428 : vector<8x8xf32>
    %430 = vector.broadcast %420 : f32 to vector<8x8xf32>
    %431 = arith.mulf %125, %430 : vector<8x8xf32>
    %432 = arith.addf %419, %431 : vector<8x8xf32>
    %c21 = arith.constant 21 : index
    %433 = memref.load %arg2[%c21] : memref<72xf32, #tpu.memory_space<smem>>
    %434 = vector.broadcast %433 : f32 to vector<8x8xf32>
    %435 = arith.mulf %122, %434 : vector<8x8xf32>
    %436 = arith.addf %423, %435 : vector<8x8xf32>
    %437 = vector.broadcast %433 : f32 to vector<8x8xf32>
    %438 = arith.mulf %123, %437 : vector<8x8xf32>
    %439 = arith.addf %426, %438 : vector<8x8xf32>
    %440 = vector.broadcast %433 : f32 to vector<8x8xf32>
    %441 = arith.mulf %126, %440 : vector<8x8xf32>
    %442 = arith.addf %429, %441 : vector<8x8xf32>
    %443 = vector.broadcast %433 : f32 to vector<8x8xf32>
    %444 = arith.mulf %127, %443 : vector<8x8xf32>
    %445 = arith.addf %432, %444 : vector<8x8xf32>
    %c22 = arith.constant 22 : index
    %446 = memref.load %arg2[%c22] : memref<72xf32, #tpu.memory_space<smem>>
    %447 = vector.broadcast %446 : f32 to vector<8x8xf32>
    %448 = arith.mulf %123, %447 : vector<8x8xf32>
    %449 = arith.addf %436, %448 : vector<8x8xf32>
    %450 = vector.broadcast %446 : f32 to vector<8x8xf32>
    %451 = arith.mulf %124, %450 : vector<8x8xf32>
    %452 = arith.addf %439, %451 : vector<8x8xf32>
    %453 = vector.broadcast %446 : f32 to vector<8x8xf32>
    %454 = arith.mulf %127, %453 : vector<8x8xf32>
    %455 = arith.addf %442, %454 : vector<8x8xf32>
    %456 = vector.broadcast %446 : f32 to vector<8x8xf32>
    %457 = arith.mulf %128, %456 : vector<8x8xf32>
    %458 = arith.addf %445, %457 : vector<8x8xf32>
    %c23 = arith.constant 23 : index
    %459 = memref.load %arg2[%c23] : memref<72xf32, #tpu.memory_space<smem>>
    %460 = vector.broadcast %459 : f32 to vector<8x8xf32>
    %461 = arith.mulf %124, %460 : vector<8x8xf32>
    %462 = arith.addf %449, %461 : vector<8x8xf32>
    %463 = vector.broadcast %459 : f32 to vector<8x8xf32>
    %464 = arith.mulf %125, %463 : vector<8x8xf32>
    %465 = arith.addf %452, %464 : vector<8x8xf32>
    %466 = vector.broadcast %459 : f32 to vector<8x8xf32>
    %467 = arith.mulf %128, %466 : vector<8x8xf32>
    %468 = arith.addf %455, %467 : vector<8x8xf32>
    %469 = vector.broadcast %459 : f32 to vector<8x8xf32>
    %470 = arith.mulf %129, %469 : vector<8x8xf32>
    %471 = arith.addf %458, %470 : vector<8x8xf32>
    %c24 = arith.constant 24 : index
    %472 = memref.load %arg2[%c24] : memref<72xf32, #tpu.memory_space<smem>>
    %473 = vector.broadcast %472 : f32 to vector<8x8xf32>
    %474 = arith.mulf %126, %473 : vector<8x8xf32>
    %475 = arith.addf %462, %474 : vector<8x8xf32>
    %476 = vector.broadcast %472 : f32 to vector<8x8xf32>
    %477 = arith.mulf %127, %476 : vector<8x8xf32>
    %478 = arith.addf %465, %477 : vector<8x8xf32>
    %479 = vector.broadcast %472 : f32 to vector<8x8xf32>
    %480 = arith.mulf %130, %479 : vector<8x8xf32>
    %481 = arith.addf %468, %480 : vector<8x8xf32>
    %482 = vector.broadcast %472 : f32 to vector<8x8xf32>
    %483 = arith.mulf %131, %482 : vector<8x8xf32>
    %484 = arith.addf %471, %483 : vector<8x8xf32>
    %c25 = arith.constant 25 : index
    %485 = memref.load %arg2[%c25] : memref<72xf32, #tpu.memory_space<smem>>
    %486 = vector.broadcast %485 : f32 to vector<8x8xf32>
    %487 = arith.mulf %127, %486 : vector<8x8xf32>
    %488 = arith.addf %475, %487 : vector<8x8xf32>
    %489 = vector.broadcast %485 : f32 to vector<8x8xf32>
    %490 = arith.mulf %128, %489 : vector<8x8xf32>
    %491 = arith.addf %478, %490 : vector<8x8xf32>
    %492 = vector.broadcast %485 : f32 to vector<8x8xf32>
    %493 = arith.mulf %131, %492 : vector<8x8xf32>
    %494 = arith.addf %481, %493 : vector<8x8xf32>
    %495 = vector.broadcast %485 : f32 to vector<8x8xf32>
    %496 = arith.mulf %132, %495 : vector<8x8xf32>
    %497 = arith.addf %484, %496 : vector<8x8xf32>
    %c26 = arith.constant 26 : index
    %498 = memref.load %arg2[%c26] : memref<72xf32, #tpu.memory_space<smem>>
    %499 = vector.broadcast %498 : f32 to vector<8x8xf32>
    %500 = arith.mulf %128, %499 : vector<8x8xf32>
    %501 = arith.addf %488, %500 : vector<8x8xf32>
    %502 = vector.broadcast %498 : f32 to vector<8x8xf32>
    %503 = arith.mulf %129, %502 : vector<8x8xf32>
    %504 = arith.addf %491, %503 : vector<8x8xf32>
    %505 = vector.broadcast %498 : f32 to vector<8x8xf32>
    %506 = arith.mulf %132, %505 : vector<8x8xf32>
    %507 = arith.addf %494, %506 : vector<8x8xf32>
    %508 = vector.broadcast %498 : f32 to vector<8x8xf32>
    %509 = arith.mulf %133, %508 : vector<8x8xf32>
    %510 = arith.addf %497, %509 : vector<8x8xf32>
    %c27 = arith.constant 27 : index
    %511 = memref.load %arg2[%c27] : memref<72xf32, #tpu.memory_space<smem>>
    %512 = vector.broadcast %511 : f32 to vector<8x8xf32>
    %513 = arith.mulf %140, %512 : vector<8x8xf32>
    %514 = arith.addf %501, %513 : vector<8x8xf32>
    %515 = vector.broadcast %511 : f32 to vector<8x8xf32>
    %516 = arith.mulf %141, %515 : vector<8x8xf32>
    %517 = arith.addf %504, %516 : vector<8x8xf32>
    %518 = vector.broadcast %511 : f32 to vector<8x8xf32>
    %519 = arith.mulf %144, %518 : vector<8x8xf32>
    %520 = arith.addf %507, %519 : vector<8x8xf32>
    %521 = vector.broadcast %511 : f32 to vector<8x8xf32>
    %522 = arith.mulf %145, %521 : vector<8x8xf32>
    %523 = arith.addf %510, %522 : vector<8x8xf32>
    %c28 = arith.constant 28 : index
    %524 = memref.load %arg2[%c28] : memref<72xf32, #tpu.memory_space<smem>>
    %525 = vector.broadcast %524 : f32 to vector<8x8xf32>
    %526 = arith.mulf %141, %525 : vector<8x8xf32>
    %527 = arith.addf %514, %526 : vector<8x8xf32>
    %528 = vector.broadcast %524 : f32 to vector<8x8xf32>
    %529 = arith.mulf %142, %528 : vector<8x8xf32>
    %530 = arith.addf %517, %529 : vector<8x8xf32>
    %531 = vector.broadcast %524 : f32 to vector<8x8xf32>
    %532 = arith.mulf %145, %531 : vector<8x8xf32>
    %533 = arith.addf %520, %532 : vector<8x8xf32>
    %534 = vector.broadcast %524 : f32 to vector<8x8xf32>
    %535 = arith.mulf %146, %534 : vector<8x8xf32>
    %536 = arith.addf %523, %535 : vector<8x8xf32>
    %c29 = arith.constant 29 : index
    %537 = memref.load %arg2[%c29] : memref<72xf32, #tpu.memory_space<smem>>
    %538 = vector.broadcast %537 : f32 to vector<8x8xf32>
    %539 = arith.mulf %142, %538 : vector<8x8xf32>
    %540 = arith.addf %527, %539 : vector<8x8xf32>
    %541 = vector.broadcast %537 : f32 to vector<8x8xf32>
    %542 = arith.mulf %143, %541 : vector<8x8xf32>
    %543 = arith.addf %530, %542 : vector<8x8xf32>
    %544 = vector.broadcast %537 : f32 to vector<8x8xf32>
    %545 = arith.mulf %146, %544 : vector<8x8xf32>
    %546 = arith.addf %533, %545 : vector<8x8xf32>
    %547 = vector.broadcast %537 : f32 to vector<8x8xf32>
    %548 = arith.mulf %147, %547 : vector<8x8xf32>
    %549 = arith.addf %536, %548 : vector<8x8xf32>
    %c30 = arith.constant 30 : index
    %550 = memref.load %arg2[%c30] : memref<72xf32, #tpu.memory_space<smem>>
    %551 = vector.broadcast %550 : f32 to vector<8x8xf32>
    %552 = arith.mulf %144, %551 : vector<8x8xf32>
    %553 = arith.addf %540, %552 : vector<8x8xf32>
    %554 = vector.broadcast %550 : f32 to vector<8x8xf32>
    %555 = arith.mulf %145, %554 : vector<8x8xf32>
    %556 = arith.addf %543, %555 : vector<8x8xf32>
    %557 = vector.broadcast %550 : f32 to vector<8x8xf32>
    %558 = arith.mulf %148, %557 : vector<8x8xf32>
    %559 = arith.addf %546, %558 : vector<8x8xf32>
    %560 = vector.broadcast %550 : f32 to vector<8x8xf32>
    %561 = arith.mulf %149, %560 : vector<8x8xf32>
    %562 = arith.addf %549, %561 : vector<8x8xf32>
    %c31 = arith.constant 31 : index
    %563 = memref.load %arg2[%c31] : memref<72xf32, #tpu.memory_space<smem>>
    %564 = vector.broadcast %563 : f32 to vector<8x8xf32>
    %565 = arith.mulf %145, %564 : vector<8x8xf32>
    %566 = arith.addf %553, %565 : vector<8x8xf32>
    %567 = vector.broadcast %563 : f32 to vector<8x8xf32>
    %568 = arith.mulf %146, %567 : vector<8x8xf32>
    %569 = arith.addf %556, %568 : vector<8x8xf32>
    %570 = vector.broadcast %563 : f32 to vector<8x8xf32>
    %571 = arith.mulf %149, %570 : vector<8x8xf32>
    %572 = arith.addf %559, %571 : vector<8x8xf32>
    %573 = vector.broadcast %563 : f32 to vector<8x8xf32>
    %574 = arith.mulf %150, %573 : vector<8x8xf32>
    %575 = arith.addf %562, %574 : vector<8x8xf32>
    %c32 = arith.constant 32 : index
    %576 = memref.load %arg2[%c32] : memref<72xf32, #tpu.memory_space<smem>>
    %577 = vector.broadcast %576 : f32 to vector<8x8xf32>
    %578 = arith.mulf %146, %577 : vector<8x8xf32>
    %579 = arith.addf %566, %578 : vector<8x8xf32>
    %580 = vector.broadcast %576 : f32 to vector<8x8xf32>
    %581 = arith.mulf %147, %580 : vector<8x8xf32>
    %582 = arith.addf %569, %581 : vector<8x8xf32>
    %583 = vector.broadcast %576 : f32 to vector<8x8xf32>
    %584 = arith.mulf %150, %583 : vector<8x8xf32>
    %585 = arith.addf %572, %584 : vector<8x8xf32>
    %586 = vector.broadcast %576 : f32 to vector<8x8xf32>
    %587 = arith.mulf %151, %586 : vector<8x8xf32>
    %588 = arith.addf %575, %587 : vector<8x8xf32>
    %c33 = arith.constant 33 : index
    %589 = memref.load %arg2[%c33] : memref<72xf32, #tpu.memory_space<smem>>
    %590 = vector.broadcast %589 : f32 to vector<8x8xf32>
    %591 = arith.mulf %148, %590 : vector<8x8xf32>
    %592 = arith.addf %579, %591 : vector<8x8xf32>
    %593 = vector.broadcast %589 : f32 to vector<8x8xf32>
    %594 = arith.mulf %149, %593 : vector<8x8xf32>
    %595 = arith.addf %582, %594 : vector<8x8xf32>
    %596 = vector.broadcast %589 : f32 to vector<8x8xf32>
    %597 = arith.mulf %152, %596 : vector<8x8xf32>
    %598 = arith.addf %585, %597 : vector<8x8xf32>
    %599 = vector.broadcast %589 : f32 to vector<8x8xf32>
    %600 = arith.mulf %153, %599 : vector<8x8xf32>
    %601 = arith.addf %588, %600 : vector<8x8xf32>
    %c34 = arith.constant 34 : index
    %602 = memref.load %arg2[%c34] : memref<72xf32, #tpu.memory_space<smem>>
    %603 = vector.broadcast %602 : f32 to vector<8x8xf32>
    %604 = arith.mulf %149, %603 : vector<8x8xf32>
    %605 = arith.addf %592, %604 : vector<8x8xf32>
    %606 = vector.broadcast %602 : f32 to vector<8x8xf32>
    %607 = arith.mulf %150, %606 : vector<8x8xf32>
    %608 = arith.addf %595, %607 : vector<8x8xf32>
    %609 = vector.broadcast %602 : f32 to vector<8x8xf32>
    %610 = arith.mulf %153, %609 : vector<8x8xf32>
    %611 = arith.addf %598, %610 : vector<8x8xf32>
    %612 = vector.broadcast %602 : f32 to vector<8x8xf32>
    %613 = arith.mulf %154, %612 : vector<8x8xf32>
    %614 = arith.addf %601, %613 : vector<8x8xf32>
    %c35 = arith.constant 35 : index
    %615 = memref.load %arg2[%c35] : memref<72xf32, #tpu.memory_space<smem>>
    %616 = vector.broadcast %615 : f32 to vector<8x8xf32>
    %617 = arith.mulf %150, %616 : vector<8x8xf32>
    %618 = arith.addf %605, %617 : vector<8x8xf32>
    %619 = vector.broadcast %615 : f32 to vector<8x8xf32>
    %620 = arith.mulf %151, %619 : vector<8x8xf32>
    %621 = arith.addf %608, %620 : vector<8x8xf32>
    %622 = vector.broadcast %615 : f32 to vector<8x8xf32>
    %623 = arith.mulf %154, %622 : vector<8x8xf32>
    %624 = arith.addf %611, %623 : vector<8x8xf32>
    %625 = vector.broadcast %615 : f32 to vector<8x8xf32>
    %626 = arith.mulf %155, %625 : vector<8x8xf32>
    %627 = arith.addf %614, %626 : vector<8x8xf32>
    %c0_127 = arith.constant 0 : index
    %c0_128 = arith.constant 0 : index
    %c0_129 = arith.constant 0 : index
    %c0_130 = arith.constant 0 : index
    %c0_131 = arith.constant 0 : index
    %628 = vector.load %arg3[%c0_127, %c0_128, %c0_129, %c0_130, %c0_131] : memref<1x2x4x8x8xf32, #tpu.memory_space<vmem>>, vector<1x1x1x8x8xf32>
    %629 = vector.shape_cast %628 : vector<1x1x1x8x8xf32> to vector<8x8xf32>
    %630 = vector.shape_cast %618 : vector<8x8xf32> to vector<1x1x1x8x8xf32>
    tpu.vector_store %arg3[%c0_127, %c0_128, %c0_129, %c0_130, %c0_131], %630 {strides = array<i32>} : memref<1x2x4x8x8xf32, #tpu.memory_space<vmem>>, vector<1x1x1x8x8xf32>,
    %c0_132 = arith.constant 0 : index
    %c0_133 = arith.constant 0 : index
    %c1_134 = arith.constant 1 : index
    %c0_135 = arith.constant 0 : index
    %c0_136 = arith.constant 0 : index
    %631 = vector.load %arg3[%c0_132, %c0_133, %c1_134, %c0_135, %c0_136] : memref<1x2x4x8x8xf32, #tpu.memory_space<vmem>>, vector<1x1x1x8x8xf32>
    %632 = vector.shape_cast %631 : vector<1x1x1x8x8xf32> to vector<8x8xf32>
    %633 = vector.shape_cast %621 : vector<8x8xf32> to vector<1x1x1x8x8xf32>
    tpu.vector_store %arg3[%c0_132, %c0_133, %c1_134, %c0_135, %c0_136], %633 {strides = array<i32>} : memref<1x2x4x8x8xf32, #tpu.memory_space<vmem>>, vector<1x1x1x8x8xf32>,
    %c0_137 = arith.constant 0 : index
    %c0_138 = arith.constant 0 : index
    %c2_139 = arith.constant 2 : index
    %c0_140 = arith.constant 0 : index
    %c0_141 = arith.constant 0 : index
    %634 = vector.load %arg3[%c0_137, %c0_138, %c2_139, %c0_140, %c0_141] : memref<1x2x4x8x8xf32, #tpu.memory_space<vmem>>, vector<1x1x1x8x8xf32>
    %635 = vector.shape_cast %634 : vector<1x1x1x8x8xf32> to vector<8x8xf32>
    %636 = vector.shape_cast %624 : vector<8x8xf32> to vector<1x1x1x8x8xf32>
    tpu.vector_store %arg3[%c0_137, %c0_138, %c2_139, %c0_140, %c0_141], %636 {strides = array<i32>} : memref<1x2x4x8x8xf32, #tpu.memory_space<vmem>>, vector<1x1x1x8x8xf32>,
    %c0_142 = arith.constant 0 : index
    %c0_143 = arith.constant 0 : index
    %c3_144 = arith.constant 3 : index
    %c0_145 = arith.constant 0 : index
    %c0_146 = arith.constant 0 : index
    %637 = vector.load %arg3[%c0_142, %c0_143, %c3_144, %c0_145, %c0_146] : memref<1x2x4x8x8xf32, #tpu.memory_space<vmem>>, vector<1x1x1x8x8xf32>
    %638 = vector.shape_cast %637 : vector<1x1x1x8x8xf32> to vector<8x8xf32>
    %639 = vector.shape_cast %627 : vector<8x8xf32> to vector<1x1x1x8x8xf32>
    tpu.vector_store %arg3[%c0_142, %c0_143, %c3_144, %c0_145, %c0_146], %639 {strides = array<i32>} : memref<1x2x4x8x8xf32, #tpu.memory_space<vmem>>, vector<1x1x1x8x8xf32>,
    %cst_147 = arith.constant 0.000000e+00 : f32
    %640 = vector.broadcast %cst_147 : f32 to vector<8x8xf32>
    %cst_148 = arith.constant 0.000000e+00 : f32
    %641 = vector.broadcast %cst_148 : f32 to vector<8x8xf32>
    %cst_149 = arith.constant 0.000000e+00 : f32
    %642 = vector.broadcast %cst_149 : f32 to vector<8x8xf32>
    %cst_150 = arith.constant 0.000000e+00 : f32
    %643 = vector.broadcast %cst_150 : f32 to vector<8x8xf32>
    %c36 = arith.constant 36 : index
    %644 = memref.load %arg2[%c36] : memref<72xf32, #tpu.memory_space<smem>>
    %645 = vector.broadcast %644 : f32 to vector<8x8xf32>
    %646 = arith.mulf %74, %645 : vector<8x8xf32>
    %647 = arith.addf %640, %646 : vector<8x8xf32>
    %648 = vector.broadcast %644 : f32 to vector<8x8xf32>
    %649 = arith.mulf %75, %648 : vector<8x8xf32>
    %650 = arith.addf %641, %649 : vector<8x8xf32>
    %651 = vector.broadcast %644 : f32 to vector<8x8xf32>
    %652 = arith.mulf %78, %651 : vector<8x8xf32>
    %653 = arith.addf %642, %652 : vector<8x8xf32>
    %654 = vector.broadcast %644 : f32 to vector<8x8xf32>
    %655 = arith.mulf %79, %654 : vector<8x8xf32>
    %656 = arith.addf %643, %655 : vector<8x8xf32>
    %c37 = arith.constant 37 : index
    %657 = memref.load %arg2[%c37] : memref<72xf32, #tpu.memory_space<smem>>
    %658 = vector.broadcast %657 : f32 to vector<8x8xf32>
    %659 = arith.mulf %75, %658 : vector<8x8xf32>
    %660 = arith.addf %647, %659 : vector<8x8xf32>
    %661 = vector.broadcast %657 : f32 to vector<8x8xf32>
    %662 = arith.mulf %76, %661 : vector<8x8xf32>
    %663 = arith.addf %650, %662 : vector<8x8xf32>
    %664 = vector.broadcast %657 : f32 to vector<8x8xf32>
    %665 = arith.mulf %79, %664 : vector<8x8xf32>
    %666 = arith.addf %653, %665 : vector<8x8xf32>
    %667 = vector.broadcast %657 : f32 to vector<8x8xf32>
    %668 = arith.mulf %80, %667 : vector<8x8xf32>
    %669 = arith.addf %656, %668 : vector<8x8xf32>
    %c38 = arith.constant 38 : index
    %670 = memref.load %arg2[%c38] : memref<72xf32, #tpu.memory_space<smem>>
    %671 = vector.broadcast %670 : f32 to vector<8x8xf32>
    %672 = arith.mulf %76, %671 : vector<8x8xf32>
    %673 = arith.addf %660, %672 : vector<8x8xf32>
    %674 = vector.broadcast %670 : f32 to vector<8x8xf32>
    %675 = arith.mulf %77, %674 : vector<8x8xf32>
    %676 = arith.addf %663, %675 : vector<8x8xf32>
    %677 = vector.broadcast %670 : f32 to vector<8x8xf32>
    %678 = arith.mulf %80, %677 : vector<8x8xf32>
    %679 = arith.addf %666, %678 : vector<8x8xf32>
    %680 = vector.broadcast %670 : f32 to vector<8x8xf32>
    %681 = arith.mulf %81, %680 : vector<8x8xf32>
    %682 = arith.addf %669, %681 : vector<8x8xf32>
    %c39 = arith.constant 39 : index
    %683 = memref.load %arg2[%c39] : memref<72xf32, #tpu.memory_space<smem>>
    %684 = vector.broadcast %683 : f32 to vector<8x8xf32>
    %685 = arith.mulf %78, %684 : vector<8x8xf32>
    %686 = arith.addf %673, %685 : vector<8x8xf32>
    %687 = vector.broadcast %683 : f32 to vector<8x8xf32>
    %688 = arith.mulf %79, %687 : vector<8x8xf32>
    %689 = arith.addf %676, %688 : vector<8x8xf32>
    %690 = vector.broadcast %683 : f32 to vector<8x8xf32>
    %691 = arith.mulf %82, %690 : vector<8x8xf32>
    %692 = arith.addf %679, %691 : vector<8x8xf32>
    %693 = vector.broadcast %683 : f32 to vector<8x8xf32>
    %694 = arith.mulf %83, %693 : vector<8x8xf32>
    %695 = arith.addf %682, %694 : vector<8x8xf32>
    %c40 = arith.constant 40 : index
    %696 = memref.load %arg2[%c40] : memref<72xf32, #tpu.memory_space<smem>>
    %697 = vector.broadcast %696 : f32 to vector<8x8xf32>
    %698 = arith.mulf %79, %697 : vector<8x8xf32>
    %699 = arith.addf %686, %698 : vector<8x8xf32>
    %700 = vector.broadcast %696 : f32 to vector<8x8xf32>
    %701 = arith.mulf %80, %700 : vector<8x8xf32>
    %702 = arith.addf %689, %701 : vector<8x8xf32>
    %703 = vector.broadcast %696 : f32 to vector<8x8xf32>
    %704 = arith.mulf %83, %703 : vector<8x8xf32>
    %705 = arith.addf %692, %704 : vector<8x8xf32>
    %706 = vector.broadcast %696 : f32 to vector<8x8xf32>
    %707 = arith.mulf %84, %706 : vector<8x8xf32>
    %708 = arith.addf %695, %707 : vector<8x8xf32>
    %c41 = arith.constant 41 : index
    %709 = memref.load %arg2[%c41] : memref<72xf32, #tpu.memory_space<smem>>
    %710 = vector.broadcast %709 : f32 to vector<8x8xf32>
    %711 = arith.mulf %80, %710 : vector<8x8xf32>
    %712 = arith.addf %699, %711 : vector<8x8xf32>
    %713 = vector.broadcast %709 : f32 to vector<8x8xf32>
    %714 = arith.mulf %81, %713 : vector<8x8xf32>
    %715 = arith.addf %702, %714 : vector<8x8xf32>
    %716 = vector.broadcast %709 : f32 to vector<8x8xf32>
    %717 = arith.mulf %84, %716 : vector<8x8xf32>
    %718 = arith.addf %705, %717 : vector<8x8xf32>
    %719 = vector.broadcast %709 : f32 to vector<8x8xf32>
    %720 = arith.mulf %85, %719 : vector<8x8xf32>
    %721 = arith.addf %708, %720 : vector<8x8xf32>
    %c42 = arith.constant 42 : index
    %722 = memref.load %arg2[%c42] : memref<72xf32, #tpu.memory_space<smem>>
    %723 = vector.broadcast %722 : f32 to vector<8x8xf32>
    %724 = arith.mulf %82, %723 : vector<8x8xf32>
    %725 = arith.addf %712, %724 : vector<8x8xf32>
    %726 = vector.broadcast %722 : f32 to vector<8x8xf32>
    %727 = arith.mulf %83, %726 : vector<8x8xf32>
    %728 = arith.addf %715, %727 : vector<8x8xf32>
    %729 = vector.broadcast %722 : f32 to vector<8x8xf32>
    %730 = arith.mulf %86, %729 : vector<8x8xf32>
    %731 = arith.addf %718, %730 : vector<8x8xf32>
    %732 = vector.broadcast %722 : f32 to vector<8x8xf32>
    %733 = arith.mulf %87, %732 : vector<8x8xf32>
    %734 = arith.addf %721, %733 : vector<8x8xf32>
    %c43 = arith.constant 43 : index
    %735 = memref.load %arg2[%c43] : memref<72xf32, #tpu.memory_space<smem>>
    %736 = vector.broadcast %735 : f32 to vector<8x8xf32>
    %737 = arith.mulf %83, %736 : vector<8x8xf32>
    %738 = arith.addf %725, %737 : vector<8x8xf32>
    %739 = vector.broadcast %735 : f32 to vector<8x8xf32>
    %740 = arith.mulf %84, %739 : vector<8x8xf32>
    %741 = arith.addf %728, %740 : vector<8x8xf32>
    %742 = vector.broadcast %735 : f32 to vector<8x8xf32>
    %743 = arith.mulf %87, %742 : vector<8x8xf32>
    %744 = arith.addf %731, %743 : vector<8x8xf32>
    %745 = vector.broadcast %735 : f32 to vector<8x8xf32>
    %746 = arith.mulf %88, %745 : vector<8x8xf32>
    %747 = arith.addf %734, %746 : vector<8x8xf32>
    %c44 = arith.constant 44 : index
    %748 = memref.load %arg2[%c44] : memref<72xf32, #tpu.memory_space<smem>>
    %749 = vector.broadcast %748 : f32 to vector<8x8xf32>
    %750 = arith.mulf %84, %749 : vector<8x8xf32>
    %751 = arith.addf %738, %750 : vector<8x8xf32>
    %752 = vector.broadcast %748 : f32 to vector<8x8xf32>
    %753 = arith.mulf %85, %752 : vector<8x8xf32>
    %754 = arith.addf %741, %753 : vector<8x8xf32>
    %755 = vector.broadcast %748 : f32 to vector<8x8xf32>
    %756 = arith.mulf %88, %755 : vector<8x8xf32>
    %757 = arith.addf %744, %756 : vector<8x8xf32>
    %758 = vector.broadcast %748 : f32 to vector<8x8xf32>
    %759 = arith.mulf %89, %758 : vector<8x8xf32>
    %760 = arith.addf %747, %759 : vector<8x8xf32>
    %c45 = arith.constant 45 : index
    %761 = memref.load %arg2[%c45] : memref<72xf32, #tpu.memory_space<smem>>
    %762 = vector.broadcast %761 : f32 to vector<8x8xf32>
    %763 = arith.mulf %96, %762 : vector<8x8xf32>
    %764 = arith.addf %751, %763 : vector<8x8xf32>
    %765 = vector.broadcast %761 : f32 to vector<8x8xf32>
    %766 = arith.mulf %97, %765 : vector<8x8xf32>
    %767 = arith.addf %754, %766 : vector<8x8xf32>
    %768 = vector.broadcast %761 : f32 to vector<8x8xf32>
    %769 = arith.mulf %100, %768 : vector<8x8xf32>
    %770 = arith.addf %757, %769 : vector<8x8xf32>
    %771 = vector.broadcast %761 : f32 to vector<8x8xf32>
    %772 = arith.mulf %101, %771 : vector<8x8xf32>
    %773 = arith.addf %760, %772 : vector<8x8xf32>
    %c46 = arith.constant 46 : index
    %774 = memref.load %arg2[%c46] : memref<72xf32, #tpu.memory_space<smem>>
    %775 = vector.broadcast %774 : f32 to vector<8x8xf32>
    %776 = arith.mulf %97, %775 : vector<8x8xf32>
    %777 = arith.addf %764, %776 : vector<8x8xf32>
    %778 = vector.broadcast %774 : f32 to vector<8x8xf32>
    %779 = arith.mulf %98, %778 : vector<8x8xf32>
    %780 = arith.addf %767, %779 : vector<8x8xf32>
    %781 = vector.broadcast %774 : f32 to vector<8x8xf32>
    %782 = arith.mulf %101, %781 : vector<8x8xf32>
    %783 = arith.addf %770, %782 : vector<8x8xf32>
    %784 = vector.broadcast %774 : f32 to vector<8x8xf32>
    %785 = arith.mulf %102, %784 : vector<8x8xf32>
    %786 = arith.addf %773, %785 : vector<8x8xf32>
    %c47 = arith.constant 47 : index
    %787 = memref.load %arg2[%c47] : memref<72xf32, #tpu.memory_space<smem>>
    %788 = vector.broadcast %787 : f32 to vector<8x8xf32>
    %789 = arith.mulf %98, %788 : vector<8x8xf32>
    %790 = arith.addf %777, %789 : vector<8x8xf32>
    %791 = vector.broadcast %787 : f32 to vector<8x8xf32>
    %792 = arith.mulf %99, %791 : vector<8x8xf32>
    %793 = arith.addf %780, %792 : vector<8x8xf32>
    %794 = vector.broadcast %787 : f32 to vector<8x8xf32>
    %795 = arith.mulf %102, %794 : vector<8x8xf32>
    %796 = arith.addf %783, %795 : vector<8x8xf32>
    %797 = vector.broadcast %787 : f32 to vector<8x8xf32>
    %798 = arith.mulf %103, %797 : vector<8x8xf32>
    %799 = arith.addf %786, %798 : vector<8x8xf32>
    %c48 = arith.constant 48 : index
    %800 = memref.load %arg2[%c48] : memref<72xf32, #tpu.memory_space<smem>>
    %801 = vector.broadcast %800 : f32 to vector<8x8xf32>
    %802 = arith.mulf %100, %801 : vector<8x8xf32>
    %803 = arith.addf %790, %802 : vector<8x8xf32>
    %804 = vector.broadcast %800 : f32 to vector<8x8xf32>
    %805 = arith.mulf %101, %804 : vector<8x8xf32>
    %806 = arith.addf %793, %805 : vector<8x8xf32>
    %807 = vector.broadcast %800 : f32 to vector<8x8xf32>
    %808 = arith.mulf %104, %807 : vector<8x8xf32>
    %809 = arith.addf %796, %808 : vector<8x8xf32>
    %810 = vector.broadcast %800 : f32 to vector<8x8xf32>
    %811 = arith.mulf %105, %810 : vector<8x8xf32>
    %812 = arith.addf %799, %811 : vector<8x8xf32>
    %c49 = arith.constant 49 : index
    %813 = memref.load %arg2[%c49] : memref<72xf32, #tpu.memory_space<smem>>
    %814 = vector.broadcast %813 : f32 to vector<8x8xf32>
    %815 = arith.mulf %101, %814 : vector<8x8xf32>
    %816 = arith.addf %803, %815 : vector<8x8xf32>
    %817 = vector.broadcast %813 : f32 to vector<8x8xf32>
    %818 = arith.mulf %102, %817 : vector<8x8xf32>
    %819 = arith.addf %806, %818 : vector<8x8xf32>
    %820 = vector.broadcast %813 : f32 to vector<8x8xf32>
    %821 = arith.mulf %105, %820 : vector<8x8xf32>
    %822 = arith.addf %809, %821 : vector<8x8xf32>
    %823 = vector.broadcast %813 : f32 to vector<8x8xf32>
    %824 = arith.mulf %106, %823 : vector<8x8xf32>
    %825 = arith.addf %812, %824 : vector<8x8xf32>
    %c50 = arith.constant 50 : index
    %826 = memref.load %arg2[%c50] : memref<72xf32, #tpu.memory_space<smem>>
    %827 = vector.broadcast %826 : f32 to vector<8x8xf32>
    %828 = arith.mulf %102, %827 : vector<8x8xf32>
    %829 = arith.addf %816, %828 : vector<8x8xf32>
    %830 = vector.broadcast %826 : f32 to vector<8x8xf32>
    %831 = arith.mulf %103, %830 : vector<8x8xf32>
    %832 = arith.addf %819, %831 : vector<8x8xf32>
    %833 = vector.broadcast %826 : f32 to vector<8x8xf32>
    %834 = arith.mulf %106, %833 : vector<8x8xf32>
    %835 = arith.addf %822, %834 : vector<8x8xf32>
    %836 = vector.broadcast %826 : f32 to vector<8x8xf32>
    %837 = arith.mulf %107, %836 : vector<8x8xf32>
    %838 = arith.addf %825, %837 : vector<8x8xf32>
    %c51 = arith.constant 51 : index
    %839 = memref.load %arg2[%c51] : memref<72xf32, #tpu.memory_space<smem>>
    %840 = vector.broadcast %839 : f32 to vector<8x8xf32>
    %841 = arith.mulf %104, %840 : vector<8x8xf32>
    %842 = arith.addf %829, %841 : vector<8x8xf32>
    %843 = vector.broadcast %839 : f32 to vector<8x8xf32>
    %844 = arith.mulf %105, %843 : vector<8x8xf32>
    %845 = arith.addf %832, %844 : vector<8x8xf32>
    %846 = vector.broadcast %839 : f32 to vector<8x8xf32>
    %847 = arith.mulf %108, %846 : vector<8x8xf32>
    %848 = arith.addf %835, %847 : vector<8x8xf32>
    %849 = vector.broadcast %839 : f32 to vector<8x8xf32>
    %850 = arith.mulf %109, %849 : vector<8x8xf32>
    %851 = arith.addf %838, %850 : vector<8x8xf32>
    %c52 = arith.constant 52 : index
    %852 = memref.load %arg2[%c52] : memref<72xf32, #tpu.memory_space<smem>>
    %853 = vector.broadcast %852 : f32 to vector<8x8xf32>
    %854 = arith.mulf %105, %853 : vector<8x8xf32>
    %855 = arith.addf %842, %854 : vector<8x8xf32>
    %856 = vector.broadcast %852 : f32 to vector<8x8xf32>
    %857 = arith.mulf %106, %856 : vector<8x8xf32>
    %858 = arith.addf %845, %857 : vector<8x8xf32>
    %859 = vector.broadcast %852 : f32 to vector<8x8xf32>
    %860 = arith.mulf %109, %859 : vector<8x8xf32>
    %861 = arith.addf %848, %860 : vector<8x8xf32>
    %862 = vector.broadcast %852 : f32 to vector<8x8xf32>
    %863 = arith.mulf %110, %862 : vector<8x8xf32>
    %864 = arith.addf %851, %863 : vector<8x8xf32>
    %c53 = arith.constant 53 : index
    %865 = memref.load %arg2[%c53] : memref<72xf32, #tpu.memory_space<smem>>
    %866 = vector.broadcast %865 : f32 to vector<8x8xf32>
    %867 = arith.mulf %106, %866 : vector<8x8xf32>
    %868 = arith.addf %855, %867 : vector<8x8xf32>
    %869 = vector.broadcast %865 : f32 to vector<8x8xf32>
    %870 = arith.mulf %107, %869 : vector<8x8xf32>
    %871 = arith.addf %858, %870 : vector<8x8xf32>
    %872 = vector.broadcast %865 : f32 to vector<8x8xf32>
    %873 = arith.mulf %110, %872 : vector<8x8xf32>
    %874 = arith.addf %861, %873 : vector<8x8xf32>
    %875 = vector.broadcast %865 : f32 to vector<8x8xf32>
    %876 = arith.mulf %111, %875 : vector<8x8xf32>
    %877 = arith.addf %864, %876 : vector<8x8xf32>
    %c54 = arith.constant 54 : index
    %878 = memref.load %arg2[%c54] : memref<72xf32, #tpu.memory_space<smem>>
    %879 = vector.broadcast %878 : f32 to vector<8x8xf32>
    %880 = arith.mulf %118, %879 : vector<8x8xf32>
    %881 = arith.addf %868, %880 : vector<8x8xf32>
    %882 = vector.broadcast %878 : f32 to vector<8x8xf32>
    %883 = arith.mulf %119, %882 : vector<8x8xf32>
    %884 = arith.addf %871, %883 : vector<8x8xf32>
    %885 = vector.broadcast %878 : f32 to vector<8x8xf32>
    %886 = arith.mulf %122, %885 : vector<8x8xf32>
    %887 = arith.addf %874, %886 : vector<8x8xf32>
    %888 = vector.broadcast %878 : f32 to vector<8x8xf32>
    %889 = arith.mulf %123, %888 : vector<8x8xf32>
    %890 = arith.addf %877, %889 : vector<8x8xf32>
    %c55 = arith.constant 55 : index
    %891 = memref.load %arg2[%c55] : memref<72xf32, #tpu.memory_space<smem>>
    %892 = vector.broadcast %891 : f32 to vector<8x8xf32>
    %893 = arith.mulf %119, %892 : vector<8x8xf32>
    %894 = arith.addf %881, %893 : vector<8x8xf32>
    %895 = vector.broadcast %891 : f32 to vector<8x8xf32>
    %896 = arith.mulf %120, %895 : vector<8x8xf32>
    %897 = arith.addf %884, %896 : vector<8x8xf32>
    %898 = vector.broadcast %891 : f32 to vector<8x8xf32>
    %899 = arith.mulf %123, %898 : vector<8x8xf32>
    %900 = arith.addf %887, %899 : vector<8x8xf32>
    %901 = vector.broadcast %891 : f32 to vector<8x8xf32>
    %902 = arith.mulf %124, %901 : vector<8x8xf32>
    %903 = arith.addf %890, %902 : vector<8x8xf32>
    %c56 = arith.constant 56 : index
    %904 = memref.load %arg2[%c56] : memref<72xf32, #tpu.memory_space<smem>>
    %905 = vector.broadcast %904 : f32 to vector<8x8xf32>
    %906 = arith.mulf %120, %905 : vector<8x8xf32>
    %907 = arith.addf %894, %906 : vector<8x8xf32>
    %908 = vector.broadcast %904 : f32 to vector<8x8xf32>
    %909 = arith.mulf %121, %908 : vector<8x8xf32>
    %910 = arith.addf %897, %909 : vector<8x8xf32>
    %911 = vector.broadcast %904 : f32 to vector<8x8xf32>
    %912 = arith.mulf %124, %911 : vector<8x8xf32>
    %913 = arith.addf %900, %912 : vector<8x8xf32>
    %914 = vector.broadcast %904 : f32 to vector<8x8xf32>
    %915 = arith.mulf %125, %914 : vector<8x8xf32>
    %916 = arith.addf %903, %915 : vector<8x8xf32>
    %c57 = arith.constant 57 : index
    %917 = memref.load %arg2[%c57] : memref<72xf32, #tpu.memory_space<smem>>
    %918 = vector.broadcast %917 : f32 to vector<8x8xf32>
    %919 = arith.mulf %122, %918 : vector<8x8xf32>
    %920 = arith.addf %907, %919 : vector<8x8xf32>
    %921 = vector.broadcast %917 : f32 to vector<8x8xf32>
    %922 = arith.mulf %123, %921 : vector<8x8xf32>
    %923 = arith.addf %910, %922 : vector<8x8xf32>
    %924 = vector.broadcast %917 : f32 to vector<8x8xf32>
    %925 = arith.mulf %126, %924 : vector<8x8xf32>
    %926 = arith.addf %913, %925 : vector<8x8xf32>
    %927 = vector.broadcast %917 : f32 to vector<8x8xf32>
    %928 = arith.mulf %127, %927 : vector<8x8xf32>
    %929 = arith.addf %916, %928 : vector<8x8xf32>
    %c58 = arith.constant 58 : index
    %930 = memref.load %arg2[%c58] : memref<72xf32, #tpu.memory_space<smem>>
    %931 = vector.broadcast %930 : f32 to vector<8x8xf32>
    %932 = arith.mulf %123, %931 : vector<8x8xf32>
    %933 = arith.addf %920, %932 : vector<8x8xf32>
    %934 = vector.broadcast %930 : f32 to vector<8x8xf32>
    %935 = arith.mulf %124, %934 : vector<8x8xf32>
    %936 = arith.addf %923, %935 : vector<8x8xf32>
    %937 = vector.broadcast %930 : f32 to vector<8x8xf32>
    %938 = arith.mulf %127, %937 : vector<8x8xf32>
    %939 = arith.addf %926, %938 : vector<8x8xf32>
    %940 = vector.broadcast %930 : f32 to vector<8x8xf32>
    %941 = arith.mulf %128, %940 : vector<8x8xf32>
    %942 = arith.addf %929, %941 : vector<8x8xf32>
    %c59 = arith.constant 59 : index
    %943 = memref.load %arg2[%c59] : memref<72xf32, #tpu.memory_space<smem>>
    %944 = vector.broadcast %943 : f32 to vector<8x8xf32>
    %945 = arith.mulf %124, %944 : vector<8x8xf32>
    %946 = arith.addf %933, %945 : vector<8x8xf32>
    %947 = vector.broadcast %943 : f32 to vector<8x8xf32>
    %948 = arith.mulf %125, %947 : vector<8x8xf32>
    %949 = arith.addf %936, %948 : vector<8x8xf32>
    %950 = vector.broadcast %943 : f32 to vector<8x8xf32>
    %951 = arith.mulf %128, %950 : vector<8x8xf32>
    %952 = arith.addf %939, %951 : vector<8x8xf32>
    %953 = vector.broadcast %943 : f32 to vector<8x8xf32>
    %954 = arith.mulf %129, %953 : vector<8x8xf32>
    %955 = arith.addf %942, %954 : vector<8x8xf32>
    %c60 = arith.constant 60 : index
    %956 = memref.load %arg2[%c60] : memref<72xf32, #tpu.memory_space<smem>>
    %957 = vector.broadcast %956 : f32 to vector<8x8xf32>
    %958 = arith.mulf %126, %957 : vector<8x8xf32>
    %959 = arith.addf %946, %958 : vector<8x8xf32>
    %960 = vector.broadcast %956 : f32 to vector<8x8xf32>
    %961 = arith.mulf %127, %960 : vector<8x8xf32>
    %962 = arith.addf %949, %961 : vector<8x8xf32>
    %963 = vector.broadcast %956 : f32 to vector<8x8xf32>
    %964 = arith.mulf %130, %963 : vector<8x8xf32>
    %965 = arith.addf %952, %964 : vector<8x8xf32>
    %966 = vector.broadcast %956 : f32 to vector<8x8xf32>
    %967 = arith.mulf %131, %966 : vector<8x8xf32>
    %968 = arith.addf %955, %967 : vector<8x8xf32>
    %c61 = arith.constant 61 : index
    %969 = memref.load %arg2[%c61] : memref<72xf32, #tpu.memory_space<smem>>
    %970 = vector.broadcast %969 : f32 to vector<8x8xf32>
    %971 = arith.mulf %127, %970 : vector<8x8xf32>
    %972 = arith.addf %959, %971 : vector<8x8xf32>
    %973 = vector.broadcast %969 : f32 to vector<8x8xf32>
    %974 = arith.mulf %128, %973 : vector<8x8xf32>
    %975 = arith.addf %962, %974 : vector<8x8xf32>
    %976 = vector.broadcast %969 : f32 to vector<8x8xf32>
    %977 = arith.mulf %131, %976 : vector<8x8xf32>
    %978 = arith.addf %965, %977 : vector<8x8xf32>
    %979 = vector.broadcast %969 : f32 to vector<8x8xf32>
    %980 = arith.mulf %132, %979 : vector<8x8xf32>
    %981 = arith.addf %968, %980 : vector<8x8xf32>
    %c62 = arith.constant 62 : index
    %982 = memref.load %arg2[%c62] : memref<72xf32, #tpu.memory_space<smem>>
    %983 = vector.broadcast %982 : f32 to vector<8x8xf32>
    %984 = arith.mulf %128, %983 : vector<8x8xf32>
    %985 = arith.addf %972, %984 : vector<8x8xf32>
    %986 = vector.broadcast %982 : f32 to vector<8x8xf32>
    %987 = arith.mulf %129, %986 : vector<8x8xf32>
    %988 = arith.addf %975, %987 : vector<8x8xf32>
    %989 = vector.broadcast %982 : f32 to vector<8x8xf32>
    %990 = arith.mulf %132, %989 : vector<8x8xf32>
    %991 = arith.addf %978, %990 : vector<8x8xf32>
    %992 = vector.broadcast %982 : f32 to vector<8x8xf32>
    %993 = arith.mulf %133, %992 : vector<8x8xf32>
    %994 = arith.addf %981, %993 : vector<8x8xf32>
    %c63 = arith.constant 63 : index
    %995 = memref.load %arg2[%c63] : memref<72xf32, #tpu.memory_space<smem>>
    %996 = vector.broadcast %995 : f32 to vector<8x8xf32>
    %997 = arith.mulf %140, %996 : vector<8x8xf32>
    %998 = arith.addf %985, %997 : vector<8x8xf32>
    %999 = vector.broadcast %995 : f32 to vector<8x8xf32>
    %1000 = arith.mulf %141, %999 : vector<8x8xf32>
    %1001 = arith.addf %988, %1000 : vector<8x8xf32>
    %1002 = vector.broadcast %995 : f32 to vector<8x8xf32>
    %1003 = arith.mulf %144, %1002 : vector<8x8xf32>
    %1004 = arith.addf %991, %1003 : vector<8x8xf32>
    %1005 = vector.broadcast %995 : f32 to vector<8x8xf32>
    %1006 = arith.mulf %145, %1005 : vector<8x8xf32>
    %1007 = arith.addf %994, %1006 : vector<8x8xf32>
    %c64 = arith.constant 64 : index
    %1008 = memref.load %arg2[%c64] : memref<72xf32, #tpu.memory_space<smem>>
    %1009 = vector.broadcast %1008 : f32 to vector<8x8xf32>
    %1010 = arith.mulf %141, %1009 : vector<8x8xf32>
    %1011 = arith.addf %998, %1010 : vector<8x8xf32>
    %1012 = vector.broadcast %1008 : f32 to vector<8x8xf32>
    %1013 = arith.mulf %142, %1012 : vector<8x8xf32>
    %1014 = arith.addf %1001, %1013 : vector<8x8xf32>
    %1015 = vector.broadcast %1008 : f32 to vector<8x8xf32>
    %1016 = arith.mulf %145, %1015 : vector<8x8xf32>
    %1017 = arith.addf %1004, %1016 : vector<8x8xf32>
    %1018 = vector.broadcast %1008 : f32 to vector<8x8xf32>
    %1019 = arith.mulf %146, %1018 : vector<8x8xf32>
    %1020 = arith.addf %1007, %1019 : vector<8x8xf32>
    %c65 = arith.constant 65 : index
    %1021 = memref.load %arg2[%c65] : memref<72xf32, #tpu.memory_space<smem>>
    %1022 = vector.broadcast %1021 : f32 to vector<8x8xf32>
    %1023 = arith.mulf %142, %1022 : vector<8x8xf32>
    %1024 = arith.addf %1011, %1023 : vector<8x8xf32>
    %1025 = vector.broadcast %1021 : f32 to vector<8x8xf32>
    %1026 = arith.mulf %143, %1025 : vector<8x8xf32>
    %1027 = arith.addf %1014, %1026 : vector<8x8xf32>
    %1028 = vector.broadcast %1021 : f32 to vector<8x8xf32>
    %1029 = arith.mulf %146, %1028 : vector<8x8xf32>
    %1030 = arith.addf %1017, %1029 : vector<8x8xf32>
    %1031 = vector.broadcast %1021 : f32 to vector<8x8xf32>
    %1032 = arith.mulf %147, %1031 : vector<8x8xf32>
    %1033 = arith.addf %1020, %1032 : vector<8x8xf32>
    %c66 = arith.constant 66 : index
    %1034 = memref.load %arg2[%c66] : memref<72xf32, #tpu.memory_space<smem>>
    %1035 = vector.broadcast %1034 : f32 to vector<8x8xf32>
    %1036 = arith.mulf %144, %1035 : vector<8x8xf32>
    %1037 = arith.addf %1024, %1036 : vector<8x8xf32>
    %1038 = vector.broadcast %1034 : f32 to vector<8x8xf32>
    %1039 = arith.mulf %145, %1038 : vector<8x8xf32>
    %1040 = arith.addf %1027, %1039 : vector<8x8xf32>
    %1041 = vector.broadcast %1034 : f32 to vector<8x8xf32>
    %1042 = arith.mulf %148, %1041 : vector<8x8xf32>
    %1043 = arith.addf %1030, %1042 : vector<8x8xf32>
    %1044 = vector.broadcast %1034 : f32 to vector<8x8xf32>
    %1045 = arith.mulf %149, %1044 : vector<8x8xf32>
    %1046 = arith.addf %1033, %1045 : vector<8x8xf32>
    %c67 = arith.constant 67 : index
    %1047 = memref.load %arg2[%c67] : memref<72xf32, #tpu.memory_space<smem>>
    %1048 = vector.broadcast %1047 : f32 to vector<8x8xf32>
    %1049 = arith.mulf %145, %1048 : vector<8x8xf32>
    %1050 = arith.addf %1037, %1049 : vector<8x8xf32>
    %1051 = vector.broadcast %1047 : f32 to vector<8x8xf32>
    %1052 = arith.mulf %146, %1051 : vector<8x8xf32>
    %1053 = arith.addf %1040, %1052 : vector<8x8xf32>
    %1054 = vector.broadcast %1047 : f32 to vector<8x8xf32>
    %1055 = arith.mulf %149, %1054 : vector<8x8xf32>
    %1056 = arith.addf %1043, %1055 : vector<8x8xf32>
    %1057 = vector.broadcast %1047 : f32 to vector<8x8xf32>
    %1058 = arith.mulf %150, %1057 : vector<8x8xf32>
    %1059 = arith.addf %1046, %1058 : vector<8x8xf32>
    %c68 = arith.constant 68 : index
    %1060 = memref.load %arg2[%c68] : memref<72xf32, #tpu.memory_space<smem>>
    %1061 = vector.broadcast %1060 : f32 to vector<8x8xf32>
    %1062 = arith.mulf %146, %1061 : vector<8x8xf32>
    %1063 = arith.addf %1050, %1062 : vector<8x8xf32>
    %1064 = vector.broadcast %1060 : f32 to vector<8x8xf32>
    %1065 = arith.mulf %147, %1064 : vector<8x8xf32>
    %1066 = arith.addf %1053, %1065 : vector<8x8xf32>
    %1067 = vector.broadcast %1060 : f32 to vector<8x8xf32>
    %1068 = arith.mulf %150, %1067 : vector<8x8xf32>
    %1069 = arith.addf %1056, %1068 : vector<8x8xf32>
    %1070 = vector.broadcast %1060 : f32 to vector<8x8xf32>
    %1071 = arith.mulf %151, %1070 : vector<8x8xf32>
    %1072 = arith.addf %1059, %1071 : vector<8x8xf32>
    %c69 = arith.constant 69 : index
    %1073 = memref.load %arg2[%c69] : memref<72xf32, #tpu.memory_space<smem>>
    %1074 = vector.broadcast %1073 : f32 to vector<8x8xf32>
    %1075 = arith.mulf %148, %1074 : vector<8x8xf32>
    %1076 = arith.addf %1063, %1075 : vector<8x8xf32>
    %1077 = vector.broadcast %1073 : f32 to vector<8x8xf32>
    %1078 = arith.mulf %149, %1077 : vector<8x8xf32>
    %1079 = arith.addf %1066, %1078 : vector<8x8xf32>
    %1080 = vector.broadcast %1073 : f32 to vector<8x8xf32>
    %1081 = arith.mulf %152, %1080 : vector<8x8xf32>
    %1082 = arith.addf %1069, %1081 : vector<8x8xf32>
    %1083 = vector.broadcast %1073 : f32 to vector<8x8xf32>
    %1084 = arith.mulf %153, %1083 : vector<8x8xf32>
    %1085 = arith.addf %1072, %1084 : vector<8x8xf32>
    %c70 = arith.constant 70 : index
    %1086 = memref.load %arg2[%c70] : memref<72xf32, #tpu.memory_space<smem>>
    %1087 = vector.broadcast %1086 : f32 to vector<8x8xf32>
    %1088 = arith.mulf %149, %1087 : vector<8x8xf32>
    %1089 = arith.addf %1076, %1088 : vector<8x8xf32>
    %1090 = vector.broadcast %1086 : f32 to vector<8x8xf32>
    %1091 = arith.mulf %150, %1090 : vector<8x8xf32>
    %1092 = arith.addf %1079, %1091 : vector<8x8xf32>
    %1093 = vector.broadcast %1086 : f32 to vector<8x8xf32>
    %1094 = arith.mulf %153, %1093 : vector<8x8xf32>
    %1095 = arith.addf %1082, %1094 : vector<8x8xf32>
    %1096 = vector.broadcast %1086 : f32 to vector<8x8xf32>
    %1097 = arith.mulf %154, %1096 : vector<8x8xf32>
    %1098 = arith.addf %1085, %1097 : vector<8x8xf32>
    %c71 = arith.constant 71 : index
    %1099 = memref.load %arg2[%c71] : memref<72xf32, #tpu.memory_space<smem>>
    %1100 = vector.broadcast %1099 : f32 to vector<8x8xf32>
    %1101 = arith.mulf %150, %1100 : vector<8x8xf32>
    %1102 = arith.addf %1089, %1101 : vector<8x8xf32>
    %1103 = vector.broadcast %1099 : f32 to vector<8x8xf32>
    %1104 = arith.mulf %151, %1103 : vector<8x8xf32>
    %1105 = arith.addf %1092, %1104 : vector<8x8xf32>
    %1106 = vector.broadcast %1099 : f32 to vector<8x8xf32>
    %1107 = arith.mulf %154, %1106 : vector<8x8xf32>
    %1108 = arith.addf %1095, %1107 : vector<8x8xf32>
    %1109 = vector.broadcast %1099 : f32 to vector<8x8xf32>
    %1110 = arith.mulf %155, %1109 : vector<8x8xf32>
    %1111 = arith.addf %1098, %1110 : vector<8x8xf32>
    %c0_151 = arith.constant 0 : index
    %c1_152 = arith.constant 1 : index
    %c0_153 = arith.constant 0 : index
    %c0_154 = arith.constant 0 : index
    %c0_155 = arith.constant 0 : index
    %1112 = vector.load %arg3[%c0_151, %c1_152, %c0_153, %c0_154, %c0_155] : memref<1x2x4x8x8xf32, #tpu.memory_space<vmem>>, vector<1x1x1x8x8xf32>
    %1113 = vector.shape_cast %1112 : vector<1x1x1x8x8xf32> to vector<8x8xf32>
    %1114 = vector.shape_cast %1102 : vector<8x8xf32> to vector<1x1x1x8x8xf32>
    tpu.vector_store %arg3[%c0_151, %c1_152, %c0_153, %c0_154, %c0_155], %1114 {strides = array<i32>} : memref<1x2x4x8x8xf32, #tpu.memory_space<vmem>>, vector<1x1x1x8x8xf32>,
    %c0_156 = arith.constant 0 : index
    %c1_157 = arith.constant 1 : index
    %c1_158 = arith.constant 1 : index
    %c0_159 = arith.constant 0 : index
    %c0_160 = arith.constant 0 : index
    %1115 = vector.load %arg3[%c0_156, %c1_157, %c1_158, %c0_159, %c0_160] : memref<1x2x4x8x8xf32, #tpu.memory_space<vmem>>, vector<1x1x1x8x8xf32>
    %1116 = vector.shape_cast %1115 : vector<1x1x1x8x8xf32> to vector<8x8xf32>
    %1117 = vector.shape_cast %1105 : vector<8x8xf32> to vector<1x1x1x8x8xf32>
    tpu.vector_store %arg3[%c0_156, %c1_157, %c1_158, %c0_159, %c0_160], %1117 {strides = array<i32>} : memref<1x2x4x8x8xf32, #tpu.memory_space<vmem>>, vector<1x1x1x8x8xf32>,
    %c0_161 = arith.constant 0 : index
    %c1_162 = arith.constant 1 : index
    %c2_163 = arith.constant 2 : index
    %c0_164 = arith.constant 0 : index
    %c0_165 = arith.constant 0 : index
    %1118 = vector.load %arg3[%c0_161, %c1_162, %c2_163, %c0_164, %c0_165] : memref<1x2x4x8x8xf32, #tpu.memory_space<vmem>>, vector<1x1x1x8x8xf32>
    %1119 = vector.shape_cast %1118 : vector<1x1x1x8x8xf32> to vector<8x8xf32>
    %1120 = vector.shape_cast %1108 : vector<8x8xf32> to vector<1x1x1x8x8xf32>
    tpu.vector_store %arg3[%c0_161, %c1_162, %c2_163, %c0_164, %c0_165], %1120 {strides = array<i32>} : memref<1x2x4x8x8xf32, #tpu.memory_space<vmem>>, vector<1x1x1x8x8xf32>,
    %c0_166 = arith.constant 0 : index
    %c1_167 = arith.constant 1 : index
    %c3_168 = arith.constant 3 : index
    %c0_169 = arith.constant 0 : index
    %c0_170 = arith.constant 0 : index
    %1121 = vector.load %arg3[%c0_166, %c1_167, %c3_168, %c0_169, %c0_170] : memref<1x2x4x8x8xf32, #tpu.memory_space<vmem>>, vector<1x1x1x8x8xf32>
    %1122 = vector.shape_cast %1121 : vector<1x1x1x8x8xf32> to vector<8x8xf32>
    %1123 = vector.shape_cast %1111 : vector<8x8xf32> to vector<1x1x1x8x8xf32>
    tpu.vector_store %arg3[%c0_166, %c1_167, %c3_168, %c0_169, %c0_170], %1123 {strides = array<i32>} : memref<1x2x4x8x8xf32, #tpu.memory_space<vmem>>, vector<1x1x1x8x8xf32>,
    return
  }
  func.func @transform_0(%arg0: i32) -> (i32, i32, i32, i32) {
    %c0_i32 = arith.constant 0 : i32
    %c0_i32_0 = arith.constant 0 : i32
    %c0_i32_1 = arith.constant 0 : i32
    %c0_i32_2 = arith.constant 0 : i32
    return %arg0, %c0_i32, %c0_i32_0, %c0_i32_1 : i32, i32, i32, i32
  }
  func.func @transform_1(%arg0: i32) -> i32 {
    %c0_i32 = arith.constant 0 : i32
    %c0_i32_0 = arith.constant 0 : i32
    return %c0_i32 : i32
  }
  func.func @transform_2(%arg0: i32) -> (i32, i32, i32, i32, i32) {
    %c0_i32 = arith.constant 0 : i32
    %c0_i32_0 = arith.constant 0 : i32
    %c0_i32_1 = arith.constant 0 : i32
    %c0_i32_2 = arith.constant 0 : i32
    %c0_i32_3 = arith.constant 0 : i32
    return %arg0, %c0_i32, %c0_i32_0, %c0_i32_1, %c0_i32_2 : i32, i32, i32, i32, i32
  }
}

</mosaic_0001>

<llo_original>
// kernel: tpu_custom_call.1
$region0: #{tpu_custom_call.1}
  #allocation0 [shape = 'u32[]', space=smem, size = 0x4, offset = 0x4, fixed_abs, tag = 'smem constant byte address 0x4 - core index']
  #allocation1 [shape = 'u32[144,128]{1,0:T(1,128)}', space=vmem, size = 0x12000, scoped, tag = 'internal scratch']
  %s0 = inlined_call_operand.hbm [shape: f32[2,4,16,16], index: 0, kind: input, shape index: {}]
  %s1 = inlined_call_operand.vmem [shape: f32[72], index: 1, kind: input, shape index: {}]
  %s2 = inlined_call_operand.hbm [shape: f32[2,2,4,8,8], index: 2, kind: output, shape index: {}]
  %s3 = sld [smem:[#allocation0]]
  $region49: #{tpu_custom_call.1} parent=0
    _
  %s5 = ssub.s32 1, %s3
  %s6 = scalar_select 0, %s5, %s3
  $region1: #{tpu_custom_call.1} parent=0
    #allocation2 [shape = 'u8[65536]{0}', space=vmem, size = 0x10000, scoped, tag = 'input window, operand 0']
    #allocation3 [shape = 's32[2]{0}', space=sflag, size = 0x8, scoped, tag = 'scoped memory for tpu_custom_call.1']
    #allocation4 [shape = 's32[2]{0}', space=sflag, size = 0x8, scoped, tag = 'scoped memory for tpu_custom_call.1']
    #allocation5 [shape = 's32[2]{0}', space=sflag, size = 0x8, scoped, tag = 'scoped memory for tpu_custom_call.1']
    #allocation6 [shape = 'u8[512]{0}', space=smem, size = 0x200, scoped, tag = 'input window, operand 1, single buffered']
    #allocation7 [shape = 'u8[65536]{0}', space=vmem, size = 0x10000, scoped, tag = 'output window, operand 0']
    %7 = vsyncpa [#allocation3], 0
    %s8 = scalar_lea.sflag [#allocation3], 1
    %9 = vsyncpa %s8, 0
    %10 = vsyncpa [#allocation5], 0
    %11 = vsyncpa [#allocation4], 0
    %s12 = scalar_lea.sflag [#allocation4], 1
    %13 = vsyncpa %s12, 0
    loop: start=0, step=1, limit=4
    $region2: #{tpu_custom_call.1} parent=1 // loop_pre_header
      _
    $region3: #{tpu_custom_call.1} parent=1 // loop_header
      %s15 = sphi 0, %s19
      %p16 = scmp.ge.s32.totalorder %s15, 4
      %s25 = sphi 0, %s27
      %s28 = sphi 0, %s25
      %s29 = sphi 0, %s28
      %s45 = sphi 0, %s29
      %s49 = sphi 0, %s49
      %s51 = sphi 0, %s49
      %s52 = sphi 0, %s51
      %s66 = sphi 0, %s52
      %s72 = sphi 0, %s74
      %s75 = sphi 0, %s72
      %s76 = sphi 0, %s75
      %s92 = sphi 0, %s76
    $region4: #{tpu_custom_call.1} parent=1 // loop_header_branch
      %18 = sbr.rel (%p16) target = $region8
    $region5: #{tpu_custom_call.1} parent=1 // loop_body
      %s20 = ssub.s32 %s15, 1
      %s21 = ssub.s32 %s15, 2
      %s22 = sadd.s32 %s15, 1
      %s23 = ssub.s32 %s15, %s22
      %p24 = scmp.eq.s32.totalorder %s23, 0
      %s26 = sadd.s32 %s25, 1
      %s27 = scalar_select %p24, %s25, %s26
      %p30 = pneg %p24
      %p31 = scmp.eq.s32.totalorder %s15, 1
      %p32 = por %p30, %p31
      %p33 = scmp.ne.s32.totalorder %s25, %s28
      %p34 = scmp.eq.s32.totalorder %s15, 0
      %p35 = por %p33, %p34
      %p36 = scmp.ne.s32.totalorder %s25, %s28
      %p37 = scmp.eq.s32.totalorder %s20, 1
      %p38 = por %p36, %p37
      %p39 = scmp.ne.s32.totalorder %s28, %s29
      %p40 = scmp.eq.s32.totalorder %s20, 0
      %p41 = por %p39, %p40
      %p42 = scmp.ne.s32.totalorder %s28, %s29
      %p43 = scmp.eq.s32.totalorder %s21, 1
      %p44 = por %p42, %p43
      %p46 = scmp.ne.s32.totalorder %s29, %s45
      %p47 = scmp.eq.s32.totalorder %s21, 0
      %p48 = por %p46, %p47
      %s50 = sadd.s32 %s49, 1
      %p53 = scmp.eq.s32.totalorder %s15, 1
      %p54 = scmp.ne.s32.totalorder %s49, %s51
      %p55 = scmp.eq.s32.totalorder %s15, 0
      %p56 = por %p54, %p55
      %p57 = scmp.ne.s32.totalorder %s49, %s51
      %p58 = scmp.eq.s32.totalorder %s20, 1
      %p59 = por %p57, %p58
      %p60 = scmp.ne.s32.totalorder %s51, %s52
      %p61 = scmp.eq.s32.totalorder %s20, 0
      %p62 = por %p60, %p61
      %p63 = scmp.ne.s32.totalorder %s51, %s52
      %p64 = scmp.eq.s32.totalorder %s21, 1
      %p65 = por %p63, %p64
      %p67 = scmp.ne.s32.totalorder %s52, %s66
      %p68 = scmp.eq.s32.totalorder %s21, 0
      %p69 = por %p67, %p68
      %s70 = ssub.s32 %s15, %s22
      %p71 = scmp.eq.s32.totalorder %s70, 0
      %s73 = sadd.s32 %s72, 1
      %s74 = scalar_select %p71, %s72, %s73
      %p77 = pneg %p71
      %p78 = scmp.eq.s32.totalorder %s15, 1
      %p79 = por %p77, %p78
      %p80 = scmp.ne.s32.totalorder %s72, %s75
      %p81 = scmp.eq.s32.totalorder %s15, 0
      %p82 = por %p80, %p81
      %p83 = scmp.ne.s32.totalorder %s72, %s75
      %p84 = scmp.eq.s32.totalorder %s20, 1
      %p85 = por %p83, %p84
      %p86 = scmp.ne.s32.totalorder %s75, %s76
      %p87 = scmp.eq.s32.totalorder %s20, 0
      %p88 = por %p86, %p87
      %p89 = scmp.ne.s32.totalorder %s75, %s76
      %p90 = scmp.eq.s32.totalorder %s21, 1
      %p91 = por %p89, %p90
      %p93 = scmp.ne.s32.totalorder %s76, %s92
      %p94 = scmp.eq.s32.totalorder %s21, 0
      %p95 = por %p93, %p94
      %p96 = scmp.le.s32.totalorder 1, %s15
      %p97 = scmp.lt.s32.totalorder %s15, 3
      %p98 = pnand %p96, %p97
      %p99 = pneg %p98
      // Predicated region
      $region9: #{tpu_custom_call.1} parent=5 // pred_check
        _
      $region10: #{tpu_custom_call.1} parent=5 // pred_check_branch
        %101 = sbr.rel (%p98) target = $region12
      $region11: #{tpu_custom_call.1} parent=5 // pred_region
        %s102 = ssub.s32 %s15, 1
        // Predicated region
        $region13: #{tpu_custom_call.1} parent=11 // pred_check
          %p103 = pneg %p62
        $region14: #{tpu_custom_call.1} parent=11 // pred_check_branch
          %105 = sbr.rel (%p103) target = $region16
        $region15: #{tpu_custom_call.1} parent=11 // pred_region
          %s107 = ssub.s32 16, 16
          %108 = vsyncadd [#allocation5], %s107
          %s110 = sshll.u32 %s1, 4
          %s111 = int_to_ptr.vmem [resolvable:$true] %s110
          %113 = dma.vmem_to_smem %s111, 16, [#allocation6], [#allocation5]
        $region16: #{tpu_custom_call.1} parent=11 // pred_fallthru
          _
      $region12: #{tpu_custom_call.1} parent=5 // pred_fallthru
        _
      %p114 = scmp.lt.s32.totalorder %s15, 2
      // Predicated region
      $region17: #{tpu_custom_call.1} parent=5 // pred_check
        %p115 = pneg %p114
      $region18: #{tpu_custom_call.1} parent=5 // pred_check_branch
        %117 = sbr.rel (%p115) target = $region20
      $region19: #{tpu_custom_call.1} parent=5 // pred_region
        // Predicated region
        $region21: #{tpu_custom_call.1} parent=19 // pred_check
          %p118 = pneg %p35
        $region22: #{tpu_custom_call.1} parent=19 // pred_check_branch
          %120 = sbr.rel (%p118) target = $region24
        $region23: #{tpu_custom_call.1} parent=19 // pred_region
          %s121 = sand.u32 %s25, 1
          %s122 = scalar_lea.sflag [#allocation3], %s121
          %s123 = sand.u32 %s25, 1
          %s124 = smul.addr %s123, 64
          %s125 = scalar_lea.vmem [#allocation2], %s124
          %s127 = ssub.s32 1024, 1024
          %128 = vsyncadd %s122, %s127
          %s129 = smul.addr %s15, 8
          %s130 = smul.addr %s129, 128
          %s131 = scalar_lea.hbm %s0, %s130
          %s132 = sshll.u32 %s125, 4
          %s133 = int_to_ptr.vmem [resolvable:$true] %s132
          %138 = dma.hbm_to_vmem [thread:$0]  %s131, 1024, %s133, %s122, 128, 128, 8
        $region24: #{tpu_custom_call.1} parent=19 // pred_fallthru
          _
      $region20: #{tpu_custom_call.1} parent=5 // pred_fallthru
        _
      %p139 = scmp.le.s32.totalorder 1, %s15
      %p140 = scmp.lt.s32.totalorder %s15, 3
      %p141 = pnand %p139, %p140
      %p142 = pneg %p141
      // Predicated region
      $region25: #{tpu_custom_call.1} parent=5 // pred_check
        _
      $region26: #{tpu_custom_call.1} parent=5 // pred_check_branch
        %144 = sbr.rel (%p141) target = $region28
      $region27: #{tpu_custom_call.1} parent=5 // pred_region
        %s145 = ssub.s32 %s15, 1
        %s146 = sand.u32 %s28, 1
        %s147 = scalar_lea.sflag [#allocation3], %s146
        %s148 = sand.u32 %s28, 1
        %s149 = smul.addr %s148, 64
        %s150 = scalar_lea.vmem [#allocation2], %s149
        // Predicated region
        $region29: #{tpu_custom_call.1} parent=27 // pred_check
          %p151 = pneg %p41
        $region30: #{tpu_custom_call.1} parent=27 // pred_check_branch
          %153 = sbr.rel (%p151) target = $region32
        $region31: #{tpu_custom_call.1} parent=27 // pred_region
          %154 = dma.done %s147, 1024
        $region32: #{tpu_custom_call.1} parent=27 // pred_fallthru
          _
        // Predicated region
        $region33: #{tpu_custom_call.1} parent=27 // pred_check
          %p155 = pneg %p62
        $region34: #{tpu_custom_call.1} parent=27 // pred_check_branch
          %157 = sbr.rel (%p155) target = $region36
        $region35: #{tpu_custom_call.1} parent=27 // pred_region
          %158 = dma.done [#allocation5], 16
        $region36: #{tpu_custom_call.1} parent=27 // pred_fallthru
          _
        %159 = sfence
        %s160 = sand.u32 %s28, 1
        %s161 = scalar_lea.sflag [#allocation3], %s160
        %s162 = sand.u32 %s28, 1
        %s163 = smul.addr %s162, 64
        %s164 = scalar_lea.vmem [#allocation2], %s163
        %p165 = pneg %p41
        %p166 = pneg %p38
        %p167 = pneg %p62
        %p168 = pneg %p59
        %p169 = pneg %p88
        %p170 = pneg %p85
        %s171 = sand.u32 %s75, 1
        %s172 = scalar_lea.sflag [#allocation4], %s171
        %s173 = sand.u32 %s75, 1
        %s174 = smul.addr %s173, 64
        %s175 = scalar_lea.vmem [#allocation7], %s174
        %v176 = vlaneseq
        %v177 = vshrl.u32 %v176, 7
        %v178 = vlaneseq
        %v179 = vand.u32 %v178, 127
        %v180 = vadd.s32 %v177, 8
        %v181 = vmul.u32 %v177, 2
        %v182 = vadd.s32 %v181, 4294967295
        %vm183 = vcmp.eq.s32.totalorder %v179, %v182
        %v184 = vsel %vm183, 1.0, 0.0
        %vm185 = vcmp.eq.s32.totalorder %v179, %v181
        %v186 = vsel %vm185, 1.0, 0.0
        %v187 = vadd.s32 %v181, 1
        %vm188 = vcmp.eq.s32.totalorder %v179, %v187
        %v189 = vsel %vm188, 1.0, 0.0
        %v190 = vadd.s32 %v181, 2
        %vm191 = vcmp.eq.s32.totalorder %v179, %v190
        %v192 = vsel %vm191, 1.0, 0.0
        %v193 = vmul.u32 %v179, 2
        %v194 = vadd.s32 %v193, 4294967295
        %vm195 = vcmp.eq.s32.totalorder %v177, %v194
        %vm196 = vcmp.eq.s32.totalorder %v180, %v194
        %v197 = vsel %vm195, 1.0, 0.0
        %v198 = vsel %vm196, 1.0, 0.0
        %vm199 = vcmp.eq.s32.totalorder %v177, %v193
        %vm200 = vcmp.eq.s32.totalorder %v180, %v193
        %v201 = vsel %vm199, 1.0, 0.0
        %v202 = vsel %vm200, 1.0, 0.0
        %v203 = vadd.s32 %v193, 1
        %vm204 = vcmp.eq.s32.totalorder %v177, %v203
        %vm205 = vcmp.eq.s32.totalorder %v180, %v203
        %v206 = vsel %vm204, 1.0, 0.0
        %v207 = vsel %vm205, 1.0, 0.0
        %v208 = vadd.s32 %v193, 2
        %vm209 = vcmp.eq.s32.totalorder %v177, %v208
        %vm210 = vcmp.eq.s32.totalorder %v180, %v208
        %v211 = vsel %vm209, 1.0, 0.0
        %v212 = vsel %vm210, 1.0, 0.0
        %v213 = vld [vmem:[%s150] sm:$0xff]
        %v214 = vld [vmem:[%s150 + $0x8] sm:$0xff]
        %vm215 = vcmask 130048
        %v217 = vsel %vm215, %v184, 0
        %219 = vmatprep.subr.mxu0 0.0
        %220 = vmatpush1.msra.mxu0 0.0
        %221 = vmatprep.subr.mxu0 0.0
        %222 = vmatpush1.msra.mxu0 0.0
        %223 = vmatprep.subr.mxu0 0.0
        %224 = vmatpush1.msra.mxu0 0.0
        %225 = vmatprep.subr.mxu0 0.0
        %226 = vmatpush1.msra.mxu0 0.0
        %227 = vmatprep.subr.mxu0 0.0
        %228 = vmatpush1.msra.mxu0 0.0
        %229 = vmatprep.subr.mxu0 0.0
        %230 = vmatpush1.msra.mxu0 0.0
        %231 = vmatprep.subr.mxu0 0.0
        %232 = vmatpush1.msra.mxu0 0.0
        %233 = vmatprep.subr.mxu0 0.0
        %234 = vmatpush1.msra.mxu0 0.0
        %235 = vmatprep.subr.mxu0 0.0
        %236 = vmatpush1.msra.mxu0 0.0
        %237 = vmatprep.subr.mxu0 0.0
        %238 = vmatpush1.msra.mxu0 0.0
        %239 = vmatprep.subr.mxu0 0.0
        %240 = vmatpush1.msra.mxu0 0.0
        %241 = vmatprep.subr.mxu0 0.0
        %242 = vmatpush1.msra.mxu0 0.0
        %243 = vmatprep.subr.mxu0 0.0
        %244 = vmatpush1.msra.mxu0 0.0
        %245 = vmatprep.subr.mxu0 0.0
        %246 = vmatpush1.msra.mxu0 0.0
        %247 = vmatprep.subr.mxu0 0.0
        %248 = vmatpush1.msra.mxu0 %v214
        %249 = vmatprep.subr.mxu0 0.0
        %250 = vmatpush1.msra.mxu0 %v213
        %251 = vmatprep.subr.mxu0 0.0
        %252 = vmatpush2.msra.mxu0 0.0
        %253 = vmatprep.subr.mxu0 0.0
        %254 = vmatpush2.msra.mxu0 0.0
        %255 = vmatprep.subr.mxu0 0.0
        %256 = vmatpush2.msra.mxu0 0.0
        %257 = vmatprep.subr.mxu0 0.0
        %258 = vmatpush2.msra.mxu0 0.0
        %259 = vmatprep.subr.mxu0 0.0
        %260 = vmatpush2.msra.mxu0 0.0
        %261 = vmatprep.subr.mxu0 0.0
        %262 = vmatpush2.msra.mxu0 0.0
        %263 = vmatprep.subr.mxu0 0.0
        %264 = vmatpush2.msra.mxu0 0.0
        %265 = vmatprep.subr.mxu0 0.0
        %266 = vmatpush2.msra.mxu0 0.0
        %267 = vmatprep.subr.mxu0 0.0
        %268 = vmatpush2.msra.mxu0 0.0
        %269 = vmatprep.subr.mxu0 0.0
        %270 = vmatpush2.msra.mxu0 0.0
        %271 = vmatprep.subr.mxu0 0.0
        %272 = vmatpush2.msra.mxu0 0.0
        %273 = vmatprep.subr.mxu0 0.0
        %274 = vmatpush2.msra.mxu0 0.0
        %275 = vmatprep.subr.mxu0 0.0
        %276 = vmatpush2.msra.mxu0 0.0
        %277 = vmatprep.subr.mxu0 0.0
        %278 = vmatpush2.msra.mxu0 0.0
        %279 = vmatprep.subr.mxu0 0.0
        %280 = vmatpush2.msra.mxu0 0.0
        %281 = vmatprep.subr.mxu0 0.0
        %282 = vmatpush2.msra.mxu0 0.0
        %283 = vmatprep.mubr.f32.mxu0 0.0
        %284 = vmatmul.mubr.f32.gmra.mxu0 %v217
        %v285 = vpop.f32.mrf.mxu0
        %v286 = vadd.f32 0.0, %v285
        %v287 = vpop.f32.mrf.mxu0
        %288 = vdwg.mxu0
        %v290 = vsel %vm215, %v186, 0
        %292 = vmatprep.subr.mxu0 0.0
        %293 = vmatpush1.msra.mxu0 0.0
        %294 = vmatprep.subr.mxu0 0.0
        %295 = vmatpush1.msra.mxu0 0.0
        %296 = vmatprep.subr.mxu0 0.0
        %297 = vmatpush1.msra.mxu0 0.0
        %298 = vmatprep.subr.mxu0 0.0
        %299 = vmatpush1.msra.mxu0 0.0
        %300 = vmatprep.subr.mxu0 0.0
        %301 = vmatpush1.msra.mxu0 0.0
        %302 = vmatprep.subr.mxu0 0.0
        %303 = vmatpush1.msra.mxu0 0.0
        %304 = vmatprep.subr.mxu0 0.0
        %305 = vmatpush1.msra.mxu0 0.0
        %306 = vmatprep.subr.mxu0 0.0
        %307 = vmatpush1.msra.mxu0 0.0
        %308 = vmatprep.subr.mxu0 0.0
        %309 = vmatpush1.msra.mxu0 0.0
        %310 = vmatprep.subr.mxu0 0.0
        %311 = vmatpush1.msra.mxu0 0.0
        %312 = vmatprep.subr.mxu0 0.0
        %313 = vmatpush1.msra.mxu0 0.0
        %314 = vmatprep.subr.mxu0 0.0
        %315 = vmatpush1.msra.mxu0 0.0
        %316 = vmatprep.subr.mxu0 0.0
        %317 = vmatpush1.msra.mxu0 0.0
        %318 = vmatprep.subr.mxu0 0.0
        %319 = vmatpush1.msra.mxu0 0.0
        %320 = vmatprep.subr.mxu0 0.0
        %321 = vmatpush1.msra.mxu0 %v214
        %322 = vmatprep.subr.mxu0 0.0
        %323 = vmatpush1.msra.mxu0 %v213
        %324 = vmatprep.subr.mxu0 0.0
        %325 = vmatpush2.msra.mxu0 0.0
        %326 = vmatprep.subr.mxu0 0.0
        %327 = vmatpush2.msra.mxu0 0.0
        %328 = vmatprep.subr.mxu0 0.0
        %329 = vmatpush2.msra.mxu0 0.0
        %330 = vmatprep.subr.mxu0 0.0
        %331 = vmatpush2.msra.mxu0 0.0
        %332 = vmatprep.subr.mxu0 0.0
        %333 = vmatpush2.msra.mxu0 0.0
        %334 = vmatprep.subr.mxu0 0.0
        %335 = vmatpush2.msra.mxu0 0.0
        %336 = vmatprep.subr.mxu0 0.0
        %337 = vmatpush2.msra.mxu0 0.0
        %338 = vmatprep.subr.mxu0 0.0
        %339 = vmatpush2.msra.mxu0 0.0
        %340 = vmatprep.subr.mxu0 0.0
        %341 = vmatpush2.msra.mxu0 0.0
        %342 = vmatprep.subr.mxu0 0.0
        %343 = vmatpush2.msra.mxu0 0.0
        %344 = vmatprep.subr.mxu0 0.0
        %345 = vmatpush2.msra.mxu0 0.0
        %346 = vmatprep.subr.mxu0 0.0
        %347 = vmatpush2.msra.mxu0 0.0
        %348 = vmatprep.subr.mxu0 0.0
        %349 = vmatpush2.msra.mxu0 0.0
        %350 = vmatprep.subr.mxu0 0.0
        %351 = vmatpush2.msra.mxu0 0.0
        %352 = vmatprep.subr.mxu0 0.0
        %353 = vmatpush2.msra.mxu0 0.0
        %354 = vmatprep.subr.mxu0 0.0
        %355 = vmatpush2.msra.mxu0 0.0
        %356 = vmatprep.mubr.f32.mxu0 0.0
        %357 = vmatmul.mubr.f32.gmra.mxu0 %v290
        %v358 = vpop.f32.mrf.mxu0
        %v359 = vadd.f32 0.0, %v358
        %v360 = vpop.f32.mrf.mxu0
        %361 = vdwg.mxu0
        %v363 = vsel %vm215, %v189, 0
        %365 = vmatprep.subr.mxu0 0.0
        %366 = vmatpush1.msra.mxu0 0.0
        %367 = vmatprep.subr.mxu0 0.0
        %368 = vmatpush1.msra.mxu0 0.0
        %369 = vmatprep.subr.mxu0 0.0
        %370 = vmatpush1.msra.mxu0 0.0
        %371 = vmatprep.subr.mxu0 0.0
        %372 = vmatpush1.msra.mxu0 0.0
        %373 = vmatprep.subr.mxu0 0.0
        %374 = vmatpush1.msra.mxu0 0.0
        %375 = vmatprep.subr.mxu0 0.0
        %376 = vmatpush1.msra.mxu0 0.0
        %377 = vmatprep.subr.mxu0 0.0
        %378 = vmatpush1.msra.mxu0 0.0
        %379 = vmatprep.subr.mxu0 0.0
        %380 = vmatpush1.msra.mxu0 0.0
        %381 = vmatprep.subr.mxu0 0.0
        %382 = vmatpush1.msra.mxu0 0.0
        %383 = vmatprep.subr.mxu0 0.0
        %384 = vmatpush1.msra.mxu0 0.0
        %385 = vmatprep.subr.mxu0 0.0
        %386 = vmatpush1.msra.mxu0 0.0
        %387 = vmatprep.subr.mxu0 0.0
        %388 = vmatpush1.msra.mxu0 0.0
        %389 = vmatprep.subr.mxu0 0.0
        %390 = vmatpush1.msra.mxu0 0.0
        %391 = vmatprep.subr.mxu0 0.0
        %392 = vmatpush1.msra.mxu0 0.0
        %393 = vmatprep.subr.mxu0 0.0
        %394 = vmatpush1.msra.mxu0 %v214
        %395 = vmatprep.subr.mxu0 0.0
        %396 = vmatpush1.msra.mxu0 %v213
        %397 = vmatprep.subr.mxu0 0.0
        %398 = vmatpush2.msra.mxu0 0.0
        %399 = vmatprep.subr.mxu0 0.0
        %400 = vmatpush2.msra.mxu0 0.0
        %401 = vmatprep.subr.mxu0 0.0
        %402 = vmatpush2.msra.mxu0 0.0
        %403 = vmatprep.subr.mxu0 0.0
        %404 = vmatpush2.msra.mxu0 0.0
        %405 = vmatprep.subr.mxu0 0.0
        %406 = vmatpush2.msra.mxu0 0.0
        %407 = vmatprep.subr.mxu0 0.0
        %408 = vmatpush2.msra.mxu0 0.0
        %409 = vmatprep.subr.mxu0 0.0
        %410 = vmatpush2.msra.mxu0 0.0
        %411 = vmatprep.subr.mxu0 0.0
        %412 = vmatpush2.msra.mxu0 0.0
        %413 = vmatprep.subr.mxu0 0.0
        %414 = vmatpush2.msra.mxu0 0.0
        %415 = vmatprep.subr.mxu0 0.0
        %416 = vmatpush2.msra.mxu0 0.0
        %417 = vmatprep.subr.mxu0 0.0
        %418 = vmatpush2.msra.mxu0 0.0
        %419 = vmatprep.subr.mxu0 0.0
        %420 = vmatpush2.msra.mxu0 0.0
        %421 = vmatprep.subr.mxu0 0.0
        %422 = vmatpush2.msra.mxu0 0.0
        %423 = vmatprep.subr.mxu0 0.0
        %424 = vmatpush2.msra.mxu0 0.0
        %425 = vmatprep.subr.mxu0 0.0
        %426 = vmatpush2.msra.mxu0 0.0
        %427 = vmatprep.subr.mxu0 0.0
        %428 = vmatpush2.msra.mxu0 0.0
        %429 = vmatprep.mubr.f32.mxu0 0.0
        %430 = vmatmul.mubr.f32.gmra.mxu0 %v363
        %v431 = vpop.f32.mrf.mxu0
        %v432 = vadd.f32 0.0, %v431
        %v433 = vpop.f32.mrf.mxu0
        %434 = vdwg.mxu0
        %v436 = vsel %vm215, %v192, 0
        %438 = vmatprep.subr.mxu0 0.0
        %439 = vmatpush1.msra.mxu0 0.0
        %440 = vmatprep.subr.mxu0 0.0
        %441 = vmatpush1.msra.mxu0 0.0
        %442 = vmatprep.subr.mxu0 0.0
        %443 = vmatpush1.msra.mxu0 0.0
        %444 = vmatprep.subr.mxu0 0.0
        %445 = vmatpush1.msra.mxu0 0.0
        %446 = vmatprep.subr.mxu0 0.0
        %447 = vmatpush1.msra.mxu0 0.0
        %448 = vmatprep.subr.mxu0 0.0
        %449 = vmatpush1.msra.mxu0 0.0
        %450 = vmatprep.subr.mxu0 0.0
        %451 = vmatpush1.msra.mxu0 0.0
        %452 = vmatprep.subr.mxu0 0.0
        %453 = vmatpush1.msra.mxu0 0.0
        %454 = vmatprep.subr.mxu0 0.0
        %455 = vmatpush1.msra.mxu0 0.0
        %456 = vmatprep.subr.mxu0 0.0
        %457 = vmatpush1.msra.mxu0 0.0
        %458 = vmatprep.subr.mxu0 0.0
        %459 = vmatpush1.msra.mxu0 0.0
        %460 = vmatprep.subr.mxu0 0.0
        %461 = vmatpush1.msra.mxu0 0.0
        %462 = vmatprep.subr.mxu0 0.0
        %463 = vmatpush1.msra.mxu0 0.0
        %464 = vmatprep.subr.mxu0 0.0
        %465 = vmatpush1.msra.mxu0 0.0
        %466 = vmatprep.subr.mxu0 0.0
        %467 = vmatpush1.msra.mxu0 %v214
        %468 = vmatprep.subr.mxu0 0.0
        %469 = vmatpush1.msra.mxu0 %v213
        %470 = vmatprep.subr.mxu0 0.0
        %471 = vmatpush2.msra.mxu0 0.0
        %472 = vmatprep.subr.mxu0 0.0
        %473 = vmatpush2.msra.mxu0 0.0
        %474 = vmatprep.subr.mxu0 0.0
        %475 = vmatpush2.msra.mxu0 0.0
        %476 = vmatprep.subr.mxu0 0.0
        %477 = vmatpush2.msra.mxu0 0.0
        %478 = vmatprep.subr.mxu0 0.0
        %479 = vmatpush2.msra.mxu0 0.0
        %480 = vmatprep.subr.mxu0 0.0
        %481 = vmatpush2.msra.mxu0 0.0
        %482 = vmatprep.subr.mxu0 0.0
        %483 = vmatpush2.msra.mxu0 0.0
        %484 = vmatprep.subr.mxu0 0.0
        %485 = vmatpush2.msra.mxu0 0.0
        %486 = vmatprep.subr.mxu0 0.0
        %487 = vmatpush2.msra.mxu0 0.0
        %488 = vmatprep.subr.mxu0 0.0
        %489 = vmatpush2.msra.mxu0 0.0
        %490 = vmatprep.subr.mxu0 0.0
        %491 = vmatpush2.msra.mxu0 0.0
        %492 = vmatprep.subr.mxu0 0.0
        %493 = vmatpush2.msra.mxu0 0.0
        %494 = vmatprep.subr.mxu0 0.0
        %495 = vmatpush2.msra.mxu0 0.0
        %496 = vmatprep.subr.mxu0 0.0
        %497 = vmatpush2.msra.mxu0 0.0
        %498 = vmatprep.subr.mxu0 0.0
        %499 = vmatpush2.msra.mxu0 0.0
        %500 = vmatprep.subr.mxu0 0.0
        %501 = vmatpush2.msra.mxu0 0.0
        %502 = vmatprep.mubr.f32.mxu0 0.0
        %503 = vmatmul.mubr.f32.gmra.mxu0 %v436
        %v504 = vpop.f32.mrf.mxu0
        %v505 = vadd.f32 0.0, %v504
        %v506 = vpop.f32.mrf.mxu0
        %507 = vdwg.mxu0
        %v509 = vsel %vm215, %v286, 0
        %511 = vmatprep.subr.mxu0 0.0
        %512 = vmatpush1.msra.mxu0 0.0
        %513 = vmatprep.subr.mxu0 0.0
        %514 = vmatpush1.msra.mxu0 0.0
        %515 = vmatprep.subr.mxu0 0.0
        %516 = vmatpush1.msra.mxu0 0.0
        %517 = vmatprep.subr.mxu0 0.0
        %518 = vmatpush1.msra.mxu0 0.0
        %519 = vmatprep.subr.mxu0 0.0
        %520 = vmatpush1.msra.mxu0 0.0
        %521 = vmatprep.subr.mxu0 0.0
        %522 = vmatpush1.msra.mxu0 0.0
        %523 = vmatprep.subr.mxu0 0.0
        %524 = vmatpush1.msra.mxu0 0.0
        %525 = vmatprep.subr.mxu0 0.0
        %526 = vmatpush1.msra.mxu0 0.0
        %527 = vmatprep.subr.mxu0 0.0
        %528 = vmatpush1.msra.mxu0 0.0
        %529 = vmatprep.subr.mxu0 0.0
        %530 = vmatpush1.msra.mxu0 0.0
        %531 = vmatprep.subr.mxu0 0.0
        %532 = vmatpush1.msra.mxu0 0.0
        %533 = vmatprep.subr.mxu0 0.0
        %534 = vmatpush1.msra.mxu0 0.0
        %535 = vmatprep.subr.mxu0 0.0
        %536 = vmatpush1.msra.mxu0 0.0
        %537 = vmatprep.subr.mxu0 0.0
        %538 = vmatpush1.msra.mxu0 0.0
        %539 = vmatprep.subr.mxu0 0.0
        %540 = vmatpush1.msra.mxu0 %v198
        %541 = vmatprep.subr.mxu0 0.0
        %542 = vmatpush1.msra.mxu0 %v197
        %543 = vmatprep.subr.mxu0 0.0
        %544 = vmatpush2.msra.mxu0 0.0
        %545 = vmatprep.subr.mxu0 0.0
        %546 = vmatpush2.msra.mxu0 0.0
        %547 = vmatprep.subr.mxu0 0.0
        %548 = vmatpush2.msra.mxu0 0.0
        %549 = vmatprep.subr.mxu0 0.0
        %550 = vmatpush2.msra.mxu0 0.0
        %551 = vmatprep.subr.mxu0 0.0
        %552 = vmatpush2.msra.mxu0 0.0
        %553 = vmatprep.subr.mxu0 0.0
        %554 = vmatpush2.msra.mxu0 0.0
        %555 = vmatprep.subr.mxu0 0.0
        %556 = vmatpush2.msra.mxu0 0.0
        %557 = vmatprep.subr.mxu0 0.0
        %558 = vmatpush2.msra.mxu0 0.0
        %559 = vmatprep.subr.mxu0 0.0
        %560 = vmatpush2.msra.mxu0 0.0
        %561 = vmatprep.subr.mxu0 0.0
        %562 = vmatpush2.msra.mxu0 0.0
        %563 = vmatprep.subr.mxu0 0.0
        %564 = vmatpush2.msra.mxu0 0.0
        %565 = vmatprep.subr.mxu0 0.0
        %566 = vmatpush2.msra.mxu0 0.0
        %567 = vmatprep.subr.mxu0 0.0
        %568 = vmatpush2.msra.mxu0 0.0
        %569 = vmatprep.subr.mxu0 0.0
        %570 = vmatpush2.msra.mxu0 0.0
        %571 = vmatprep.subr.mxu0 0.0
        %572 = vmatpush2.msra.mxu0 0.0
        %573 = vmatprep.subr.mxu0 0.0
        %574 = vmatpush2.msra.mxu0 0.0
        %575 = vmatprep.mubr.f32.mxu0 0.0
        %576 = vmatmul.mubr.f32.gmra.mxu0 %v509
        %v577 = vpop.f32.mrf.mxu0
        %v578 = vadd.f32 0.0, %v577
        %v579 = vpop.f32.mrf.mxu0
        %580 = vdwg.mxu0
        %581 = vmatprep.subr.mxu0 0.0
        %582 = vmatpush1.msra.mxu0 0.0
        %583 = vmatprep.subr.mxu0 0.0
        %584 = vmatpush1.msra.mxu0 0.0
        %585 = vmatprep.subr.mxu0 0.0
        %586 = vmatpush1.msra.mxu0 0.0
        %587 = vmatprep.subr.mxu0 0.0
        %588 = vmatpush1.msra.mxu0 0.0
        %589 = vmatprep.subr.mxu0 0.0
        %590 = vmatpush1.msra.mxu0 0.0
        %591 = vmatprep.subr.mxu0 0.0
        %592 = vmatpush1.msra.mxu0 0.0
        %593 = vmatprep.subr.mxu0 0.0
        %594 = vmatpush1.msra.mxu0 0.0
        %595 = vmatprep.subr.mxu0 0.0
        %596 = vmatpush1.msra.mxu0 0.0
        %597 = vmatprep.subr.mxu0 0.0
        %598 = vmatpush1.msra.mxu0 0.0
        %599 = vmatprep.subr.mxu0 0.0
        %600 = vmatpush1.msra.mxu0 0.0
        %601 = vmatprep.subr.mxu0 0.0
        %602 = vmatpush1.msra.mxu0 0.0
        %603 = vmatprep.subr.mxu0 0.0
        %604 = vmatpush1.msra.mxu0 0.0
        %605 = vmatprep.subr.mxu0 0.0
        %606 = vmatpush1.msra.mxu0 0.0
        %607 = vmatprep.subr.mxu0 0.0
        %608 = vmatpush1.msra.mxu0 0.0
        %609 = vmatprep.subr.mxu0 0.0
        %610 = vmatpush1.msra.mxu0 %v202
        %611 = vmatprep.subr.mxu0 0.0
        %612 = vmatpush1.msra.mxu0 %v201
        %613 = vmatprep.subr.mxu0 0.0
        %614 = vmatpush2.msra.mxu0 0.0
        %615 = vmatprep.subr.mxu0 0.0
        %616 = vmatpush2.msra.mxu0 0.0
        %617 = vmatprep.subr.mxu0 0.0
        %618 = vmatpush2.msra.mxu0 0.0
        %619 = vmatprep.subr.mxu0 0.0
        %620 = vmatpush2.msra.mxu0 0.0
        %621 = vmatprep.subr.mxu0 0.0
        %622 = vmatpush2.msra.mxu0 0.0
        %623 = vmatprep.subr.mxu0 0.0
        %624 = vmatpush2.msra.mxu0 0.0
        %625 = vmatprep.subr.mxu0 0.0
        %626 = vmatpush2.msra.mxu0 0.0
        %627 = vmatprep.subr.mxu0 0.0
        %628 = vmatpush2.msra.mxu0 0.0
        %629 = vmatprep.subr.mxu0 0.0
        %630 = vmatpush2.msra.mxu0 0.0
        %631 = vmatprep.subr.mxu0 0.0
        %632 = vmatpush2.msra.mxu0 0.0
        %633 = vmatprep.subr.mxu0 0.0
        %634 = vmatpush2.msra.mxu0 0.0
        %635 = vmatprep.subr.mxu0 0.0
        %636 = vmatpush2.msra.mxu0 0.0
        %637 = vmatprep.subr.mxu0 0.0
        %638 = vmatpush2.msra.mxu0 0.0
        %639 = vmatprep.subr.mxu0 0.0
        %640 = vmatpush2.msra.mxu0 0.0
        %641 = vmatprep.subr.mxu0 0.0
        %642 = vmatpush2.msra.mxu0 0.0
        %643 = vmatprep.subr.mxu0 0.0
        %644 = vmatpush2.msra.mxu0 0.0
        %645 = vmatprep.mubr.f32.mxu0 0.0
        %646 = vmatmul.mubr.f32.gmra.mxu0 %v509
        %v647 = vpop.f32.mrf.mxu0
        %v648 = vadd.f32 0.0, %v647
        %v649 = vpop.f32.mrf.mxu0
        %650 = vdwg.mxu0
        %651 = vmatprep.subr.mxu0 0.0
        %652 = vmatpush1.msra.mxu0 0.0
        %653 = vmatprep.subr.mxu0 0.0
        %654 = vmatpush1.msra.mxu0 0.0
        %655 = vmatprep.subr.mxu0 0.0
        %656 = vmatpush1.msra.mxu0 0.0
        %657 = vmatprep.subr.mxu0 0.0
        %658 = vmatpush1.msra.mxu0 0.0
        %659 = vmatprep.subr.mxu0 0.0
        %660 = vmatpush1.msra.mxu0 0.0
        %661 = vmatprep.subr.mxu0 0.0
        %662 = vmatpush1.msra.mxu0 0.0
        %663 = vmatprep.subr.mxu0 0.0
        %664 = vmatpush1.msra.mxu0 0.0
        %665 = vmatprep.subr.mxu0 0.0
        %666 = vmatpush1.msra.mxu0 0.0
        %667 = vmatprep.subr.mxu0 0.0
        %668 = vmatpush1.msra.mxu0 0.0
        %669 = vmatprep.subr.mxu0 0.0
        %670 = vmatpush1.msra.mxu0 0.0
        %671 = vmatprep.subr.mxu0 0.0
        %672 = vmatpush1.msra.mxu0 0.0
        %673 = vmatprep.subr.mxu0 0.0
        %674 = vmatpush1.msra.mxu0 0.0
        %675 = vmatprep.subr.mxu0 0.0
        %676 = vmatpush1.msra.mxu0 0.0
        %677 = vmatprep.subr.mxu0 0.0
        %678 = vmatpush1.msra.mxu0 0.0
        %679 = vmatprep.subr.mxu0 0.0
        %680 = vmatpush1.msra.mxu0 %v207
        %681 = vmatprep.subr.mxu0 0.0
        %682 = vmatpush1.msra.mxu0 %v206
        %683 = vmatprep.subr.mxu0 0.0
        %684 = vmatpush2.msra.mxu0 0.0
        %685 = vmatprep.subr.mxu0 0.0
        %686 = vmatpush2.msra.mxu0 0.0
        %687 = vmatprep.subr.mxu0 0.0
        %688 = vmatpush2.msra.mxu0 0.0
        %689 = vmatprep.subr.mxu0 0.0
        %690 = vmatpush2.msra.mxu0 0.0
        %691 = vmatprep.subr.mxu0 0.0
        %692 = vmatpush2.msra.mxu0 0.0
        %693 = vmatprep.subr.mxu0 0.0
        %694 = vmatpush2.msra.mxu0 0.0
        %695 = vmatprep.subr.mxu0 0.0
        %696 = vmatpush2.msra.mxu0 0.0
        %697 = vmatprep.subr.mxu0 0.0
        %698 = vmatpush2.msra.mxu0 0.0
        %699 = vmatprep.subr.mxu0 0.0
        %700 = vmatpush2.msra.mxu0 0.0
        %701 = vmatprep.subr.mxu0 0.0
        %702 = vmatpush2.msra.mxu0 0.0
        %703 = vmatprep.subr.mxu0 0.0
        %704 = vmatpush2.msra.mxu0 0.0
        %705 = vmatprep.subr.mxu0 0.0
        %706 = vmatpush2.msra.mxu0 0.0
        %707 = vmatprep.subr.mxu0 0.0
        %708 = vmatpush2.msra.mxu0 0.0
        %709 = vmatprep.subr.mxu0 0.0
        %710 = vmatpush2.msra.mxu0 0.0
        %711 = vmatprep.subr.mxu0 0.0
        %712 = vmatpush2.msra.mxu0 0.0
        %713 = vmatprep.subr.mxu0 0.0
        %714 = vmatpush2.msra.mxu0 0.0
        %715 = vmatprep.mubr.f32.mxu0 0.0
        %716 = vmatmul.mubr.f32.gmra.mxu0 %v509
        %v717 = vpop.f32.mrf.mxu0
        %v718 = vadd.f32 0.0, %v717
        %v719 = vpop.f32.mrf.mxu0
        %720 = vdwg.mxu0
        %721 = vmatprep.subr.mxu0 0.0
        %722 = vmatpush1.msra.mxu0 0.0
        %723 = vmatprep.subr.mxu0 0.0
        %724 = vmatpush1.msra.mxu0 0.0
        %725 = vmatprep.subr.mxu0 0.0
        %726 = vmatpush1.msra.mxu0 0.0
        %727 = vmatprep.subr.mxu0 0.0
        %728 = vmatpush1.msra.mxu0 0.0
        %729 = vmatprep.subr.mxu0 0.0
        %730 = vmatpush1.msra.mxu0 0.0
        %731 = vmatprep.subr.mxu0 0.0
        %732 = vmatpush1.msra.mxu0 0.0
        %733 = vmatprep.subr.mxu0 0.0
        %734 = vmatpush1.msra.mxu0 0.0
        %735 = vmatprep.subr.mxu0 0.0
        %736 = vmatpush1.msra.mxu0 0.0
        %737 = vmatprep.subr.mxu0 0.0
        %738 = vmatpush1.msra.mxu0 0.0
        %739 = vmatprep.subr.mxu0 0.0
        %740 = vmatpush1.msra.mxu0 0.0
        %741 = vmatprep.subr.mxu0 0.0
        %742 = vmatpush1.msra.mxu0 0.0
        %743 = vmatprep.subr.mxu0 0.0
        %744 = vmatpush1.msra.mxu0 0.0
        %745 = vmatprep.subr.mxu0 0.0
        %746 = vmatpush1.msra.mxu0 0.0
        %747 = vmatprep.subr.mxu0 0.0
        %748 = vmatpush1.msra.mxu0 0.0
        %749 = vmatprep.subr.mxu0 0.0
        %750 = vmatpush1.msra.mxu0 %v212
        %751 = vmatprep.subr.mxu0 0.0
        %752 = vmatpush1.msra.mxu0 %v211
        %753 = vmatprep.subr.mxu0 0.0
        %754 = vmatpush2.msra.mxu0 0.0
        %755 = vmatprep.subr.mxu0 0.0
        %756 = vmatpush2.msra.mxu0 0.0
        %757 = vmatprep.subr.mxu0 0.0
        %758 = vmatpush2.msra.mxu0 0.0
        %759 = vmatprep.subr.mxu0 0.0
        %760 = vmatpush2.msra.mxu0 0.0
        %761 = vmatprep.subr.mxu0 0.0
        %762 = vmatpush2.msra.mxu0 0.0
        %763 = vmatprep.subr.mxu0 0.0
        %764 = vmatpush2.msra.mxu0 0.0
        %765 = vmatprep.subr.mxu0 0.0
        %766 = vmatpush2.msra.mxu0 0.0
        %767 = vmatprep.subr.mxu0 0.0
        %768 = vmatpush2.msra.mxu0 0.0
        %769 = vmatprep.subr.mxu0 0.0
        %770 = vmatpush2.msra.mxu0 0.0
        %771 = vmatprep.subr.mxu0 0.0
        %772 = vmatpush2.msra.mxu0 0.0
        %773 = vmatprep.subr.mxu0 0.0
        %774 = vmatpush2.msra.mxu0 0.0
        %775 = vmatprep.subr.mxu0 0.0
        %776 = vmatpush2.msra.mxu0 0.0
        %777 = vmatprep.subr.mxu0 0.0
        %778 = vmatpush2.msra.mxu0 0.0
        %779 = vmatprep.subr.mxu0 0.0
        %780 = vmatpush2.msra.mxu0 0.0
        %781 = vmatprep.subr.mxu0 0.0
        %782 = vmatpush2.msra.mxu0 0.0
        %783 = vmatprep.subr.mxu0 0.0
        %784 = vmatpush2.msra.mxu0 0.0
        %785 = vmatprep.mubr.f32.mxu0 0.0
        %786 = vmatmul.mubr.f32.gmra.mxu0 %v509
        %v787 = vpop.f32.mrf.mxu0
        %v788 = vadd.f32 0.0, %v787
        %v789 = vpop.f32.mrf.mxu0
        %790 = vdwg.mxu0
        %v792 = vsel %vm215, %v359, 0
        %794 = vmatprep.subr.mxu0 0.0
        %795 = vmatpush1.msra.mxu0 0.0
        %796 = vmatprep.subr.mxu0 0.0
        %797 = vmatpush1.msra.mxu0 0.0
        %798 = vmatprep.subr.mxu0 0.0
        %799 = vmatpush1.msra.mxu0 0.0
        %800 = vmatprep.subr.mxu0 0.0
        %801 = vmatpush1.msra.mxu0 0.0
        %802 = vmatprep.subr.mxu0 0.0
        %803 = vmatpush1.msra.mxu0 0.0
        %804 = vmatprep.subr.mxu0 0.0
        %805 = vmatpush1.msra.mxu0 0.0
        %806 = vmatprep.subr.mxu0 0.0
        %807 = vmatpush1.msra.mxu0 0.0
        %808 = vmatprep.subr.mxu0 0.0
        %809 = vmatpush1.msra.mxu0 0.0
        %810 = vmatprep.subr.mxu0 0.0
        %811 = vmatpush1.msra.mxu0 0.0
        %812 = vmatprep.subr.mxu0 0.0
        %813 = vmatpush1.msra.mxu0 0.0
        %814 = vmatprep.subr.mxu0 0.0
        %815 = vmatpush1.msra.mxu0 0.0
        %816 = vmatprep.subr.mxu0 0.0
        %817 = vmatpush1.msra.mxu0 0.0
        %818 = vmatprep.subr.mxu0 0.0
        %819 = vmatpush1.msra.mxu0 0.0
        %820 = vmatprep.subr.mxu0 0.0
        %821 = vmatpush1.msra.mxu0 0.0
        %822 = vmatprep.subr.mxu0 0.0
        %823 = vmatpush1.msra.mxu0 %v198
        %824 = vmatprep.subr.mxu0 0.0
        %825 = vmatpush1.msra.mxu0 %v197
        %826 = vmatprep.subr.mxu0 0.0
        %827 = vmatpush2.msra.mxu0 0.0
        %828 = vmatprep.subr.mxu0 0.0
        %829 = vmatpush2.msra.mxu0 0.0
        %830 = vmatprep.subr.mxu0 0.0
        %831 = vmatpush2.msra.mxu0 0.0
        %832 = vmatprep.subr.mxu0 0.0
        %833 = vmatpush2.msra.mxu0 0.0
        %834 = vmatprep.subr.mxu0 0.0
        %835 = vmatpush2.msra.mxu0 0.0
        %836 = vmatprep.subr.mxu0 0.0
        %837 = vmatpush2.msra.mxu0 0.0
        %838 = vmatprep.subr.mxu0 0.0
        %839 = vmatpush2.msra.mxu0 0.0
        %840 = vmatprep.subr.mxu0 0.0
        %841 = vmatpush2.msra.mxu0 0.0
        %842 = vmatprep.subr.mxu0 0.0
        %843 = vmatpush2.msra.mxu0 0.0
        %844 = vmatprep.subr.mxu0 0.0
        %845 = vmatpush2.msra.mxu0 0.0
        %846 = vmatprep.subr.mxu0 0.0
        %847 = vmatpush2.msra.mxu0 0.0
        %848 = vmatprep.subr.mxu0 0.0
        %849 = vmatpush2.msra.mxu0 0.0
        %850 = vmatprep.subr.mxu0 0.0
        %851 = vmatpush2.msra.mxu0 0.0
        %852 = vmatprep.subr.mxu0 0.0
        %853 = vmatpush2.msra.mxu0 0.0
        %854 = vmatprep.subr.mxu0 0.0
        %855 = vmatpush2.msra.mxu0 0.0
        %856 = vmatprep.subr.mxu0 0.0
        %857 = vmatpush2.msra.mxu0 0.0
        %858 = vmatprep.mubr.f32.mxu0 0.0
        %859 = vmatmul.mubr.f32.gmra.mxu0 %v792
        %v860 = vpop.f32.mrf.mxu0
        %v861 = vadd.f32 0.0, %v860
        %v862 = vpop.f32.mrf.mxu0
        %863 = vdwg.mxu0
        %864 = vmatprep.subr.mxu0 0.0
        %865 = vmatpush1.msra.mxu0 0.0
        %866 = vmatprep.subr.mxu0 0.0
        %867 = vmatpush1.msra.mxu0 0.0
        %868 = vmatprep.subr.mxu0 0.0
        %869 = vmatpush1.msra.mxu0 0.0
        %870 = vmatprep.subr.mxu0 0.0
        %871 = vmatpush1.msra.mxu0 0.0
        %872 = vmatprep.subr.mxu0 0.0
        %873 = vmatpush1.msra.mxu0 0.0
        %874 = vmatprep.subr.mxu0 0.0
        %875 = vmatpush1.msra.mxu0 0.0
        %876 = vmatprep.subr.mxu0 0.0
        %877 = vmatpush1.msra.mxu0 0.0
        %878 = vmatprep.subr.mxu0 0.0
        %879 = vmatpush1.msra.mxu0 0.0
        %880 = vmatprep.subr.mxu0 0.0
        %881 = vmatpush1.msra.mxu0 0.0
        %882 = vmatprep.subr.mxu0 0.0
        %883 = vmatpush1.msra.mxu0 0.0
        %884 = vmatprep.subr.mxu0 0.0
        %885 = vmatpush1.msra.mxu0 0.0
        %886 = vmatprep.subr.mxu0 0.0
        %887 = vmatpush1.msra.mxu0 0.0
        %888 = vmatprep.subr.mxu0 0.0
        %889 = vmatpush1.msra.mxu0 0.0
        %890 = vmatprep.subr.mxu0 0.0
        %891 = vmatpush1.msra.mxu0 0.0
        %892 = vmatprep.subr.mxu0 0.0
        %893 = vmatpush1.msra.mxu0 %v202
        %894 = vmatprep.subr.mxu0 0.0
        %895 = vmatpush1.msra.mxu0 %v201
        %896 = vmatprep.subr.mxu0 0.0
        %897 = vmatpush2.msra.mxu0 0.0
        %898 = vmatprep.subr.mxu0 0.0
        %899 = vmatpush2.msra.mxu0 0.0
        %900 = vmatprep.subr.mxu0 0.0
        %901 = vmatpush2.msra.mxu0 0.0
        %902 = vmatprep.subr.mxu0 0.0
        %903 = vmatpush2.msra.mxu0 0.0
        %904 = vmatprep.subr.mxu0 0.0
        %905 = vmatpush2.msra.mxu0 0.0
        %906 = vmatprep.subr.mxu0 0.0
        %907 = vmatpush2.msra.mxu0 0.0
        %908 = vmatprep.subr.mxu0 0.0
        %909 = vmatpush2.msra.mxu0 0.0
        %910 = vmatprep.subr.mxu0 0.0
        %911 = vmatpush2.msra.mxu0 0.0
        %912 = vmatprep.subr.mxu0 0.0
        %913 = vmatpush2.msra.mxu0 0.0
        %914 = vmatprep.subr.mxu0 0.0
        %915 = vmatpush2.msra.mxu0 0.0
        %916 = vmatprep.subr.mxu0 0.0
        %917 = vmatpush2.msra.mxu0 0.0
        %918 = vmatprep.subr.mxu0 0.0
        %919 = vmatpush2.msra.mxu0 0.0
        %920 = vmatprep.subr.mxu0 0.0
        %921 = vmatpush2.msra.mxu0 0.0
        %922 = vmatprep.subr.mxu0 0.0
        %923 = vmatpush2.msra.mxu0 0.0
        %924 = vmatprep.subr.mxu0 0.0
        %925 = vmatpush2.msra.mxu0 0.0
        %926 = vmatprep.subr.mxu0 0.0
        %927 = vmatpush2.msra.mxu0 0.0
        %928 = vmatprep.mubr.f32.mxu0 0.0
        %929 = vmatmul.mubr.f32.gmra.mxu0 %v792
        %v930 = vpop.f32.mrf.mxu0
        %v931 = vadd.f32 0.0, %v930
        %v932 = vpop.f32.mrf.mxu0
        %933 = vdwg.mxu0
        %934 = vmatprep.subr.mxu0 0.0
        %935 = vmatpush1.msra.mxu0 0.0
        %936 = vmatprep.subr.mxu0 0.0
        %937 = vmatpush1.msra.mxu0 0.0
        %938 = vmatprep.subr.mxu0 0.0
        %939 = vmatpush1.msra.mxu0 0.0
        %940 = vmatprep.subr.mxu0 0.0
        %941 = vmatpush1.msra.mxu0 0.0
        %942 = vmatprep.subr.mxu0 0.0
        %943 = vmatpush1.msra.mxu0 0.0
        %944 = vmatprep.subr.mxu0 0.0
        %945 = vmatpush1.msra.mxu0 0.0
        %946 = vmatprep.subr.mxu0 0.0
        %947 = vmatpush1.msra.mxu0 0.0
        %948 = vmatprep.subr.mxu0 0.0
        %949 = vmatpush1.msra.mxu0 0.0
        %950 = vmatprep.subr.mxu0 0.0
        %951 = vmatpush1.msra.mxu0 0.0
        %952 = vmatprep.subr.mxu0 0.0
        %953 = vmatpush1.msra.mxu0 0.0
        %954 = vmatprep.subr.mxu0 0.0
        %955 = vmatpush1.msra.mxu0 0.0
        %956 = vmatprep.subr.mxu0 0.0
        %957 = vmatpush1.msra.mxu0 0.0
        %958 = vmatprep.subr.mxu0 0.0
        %959 = vmatpush1.msra.mxu0 0.0
        %960 = vmatprep.subr.mxu0 0.0
        %961 = vmatpush1.msra.mxu0 0.0
        %962 = vmatprep.subr.mxu0 0.0
        %963 = vmatpush1.msra.mxu0 %v207
        %964 = vmatprep.subr.mxu0 0.0
        %965 = vmatpush1.msra.mxu0 %v206
        %966 = vmatprep.subr.mxu0 0.0
        %967 = vmatpush2.msra.mxu0 0.0
        %968 = vmatprep.subr.mxu0 0.0
        %969 = vmatpush2.msra.mxu0 0.0
        %970 = vmatprep.subr.mxu0 0.0
        %971 = vmatpush2.msra.mxu0 0.0
        %972 = vmatprep.subr.mxu0 0.0
        %973 = vmatpush2.msra.mxu0 0.0
        %974 = vmatprep.subr.mxu0 0.0
        %975 = vmatpush2.msra.mxu0 0.0
        %976 = vmatprep.subr.mxu0 0.0
        %977 = vmatpush2.msra.mxu0 0.0
        %978 = vmatprep.subr.mxu0 0.0
        %979 = vmatpush2.msra.mxu0 0.0
        %980 = vmatprep.subr.mxu0 0.0
        %981 = vmatpush2.msra.mxu0 0.0
        %982 = vmatprep.subr.mxu0 0.0
        %983 = vmatpush2.msra.mxu0 0.0
        %984 = vmatprep.subr.mxu0 0.0
        %985 = vmatpush2.msra.mxu0 0.0
        %986 = vmatprep.subr.mxu0 0.0
        %987 = vmatpush2.msra.mxu0 0.0
        %988 = vmatprep.subr.mxu0 0.0
        %989 = vmatpush2.msra.mxu0 0.0
        %990 = vmatprep.subr.mxu0 0.0
        %991 = vmatpush2.msra.mxu0 0.0
        %992 = vmatprep.subr.mxu0 0.0
        %993 = vmatpush2.msra.mxu0 0.0
        %994 = vmatprep.subr.mxu0 0.0
        %995 = vmatpush2.msra.mxu0 0.0
        %996 = vmatprep.subr.mxu0 0.0
        %997 = vmatpush2.msra.mxu0 0.0
        %998 = vmatprep.mubr.f32.mxu0 0.0
        %999 = vmatmul.mubr.f32.gmra.mxu0 %v792
        %v1000 = vpop.f32.mrf.mxu0
        %v1001 = vadd.f32 0.0, %v1000
        %v1002 = vpop.f32.mrf.mxu0
        %1003 = vdwg.mxu0
        %1004 = vmatprep.subr.mxu0 0.0
        %1005 = vmatpush1.msra.mxu0 0.0
        %1006 = vmatprep.subr.mxu0 0.0
        %1007 = vmatpush1.msra.mxu0 0.0
        %1008 = vmatprep.subr.mxu0 0.0
        %1009 = vmatpush1.msra.mxu0 0.0
        %1010 = vmatprep.subr.mxu0 0.0
        %1011 = vmatpush1.msra.mxu0 0.0
        %1012 = vmatprep.subr.mxu0 0.0
        %1013 = vmatpush1.msra.mxu0 0.0
        %1014 = vmatprep.subr.mxu0 0.0
        %1015 = vmatpush1.msra.mxu0 0.0
        %1016 = vmatprep.subr.mxu0 0.0
        %1017 = vmatpush1.msra.mxu0 0.0
        %1018 = vmatprep.subr.mxu0 0.0
        %1019 = vmatpush1.msra.mxu0 0.0
        %1020 = vmatprep.subr.mxu0 0.0
        %1021 = vmatpush1.msra.mxu0 0.0
        %1022 = vmatprep.subr.mxu0 0.0
        %1023 = vmatpush1.msra.mxu0 0.0
        %1024 = vmatprep.subr.mxu0 0.0
        %1025 = vmatpush1.msra.mxu0 0.0
        %1026 = vmatprep.subr.mxu0 0.0
        %1027 = vmatpush1.msra.mxu0 0.0
        %1028 = vmatprep.subr.mxu0 0.0
        %1029 = vmatpush1.msra.mxu0 0.0
        %1030 = vmatprep.subr.mxu0 0.0
        %1031 = vmatpush1.msra.mxu0 0.0
        %1032 = vmatprep.subr.mxu0 0.0
        %1033 = vmatpush1.msra.mxu0 %v212
        %1034 = vmatprep.subr.mxu0 0.0
        %1035 = vmatpush1.msra.mxu0 %v211
        %1036 = vmatprep.subr.mxu0 0.0
        %1037 = vmatpush2.msra.mxu0 0.0
        %1038 = vmatprep.subr.mxu0 0.0
        %1039 = vmatpush2.msra.mxu0 0.0
        %1040 = vmatprep.subr.mxu0 0.0
        %1041 = vmatpush2.msra.mxu0 0.0
        %1042 = vmatprep.subr.mxu0 0.0
        %1043 = vmatpush2.msra.mxu0 0.0
        %1044 = vmatprep.subr.mxu0 0.0
        %1045 = vmatpush2.msra.mxu0 0.0
        %1046 = vmatprep.subr.mxu0 0.0
        %1047 = vmatpush2.msra.mxu0 0.0
        %1048 = vmatprep.subr.mxu0 0.0
        %1049 = vmatpush2.msra.mxu0 0.0
        %1050 = vmatprep.subr.mxu0 0.0
        %1051 = vmatpush2.msra.mxu0 0.0
        %1052 = vmatprep.subr.mxu0 0.0
        %1053 = vmatpush2.msra.mxu0 0.0
        %1054 = vmatprep.subr.mxu0 0.0
        %1055 = vmatpush2.msra.mxu0 0.0
        %1056 = vmatprep.subr.mxu0 0.0
        %1057 = vmatpush2.msra.mxu0 0.0
        %1058 = vmatprep.subr.mxu0 0.0
        %1059 = vmatpush2.msra.mxu0 0.0
        %1060 = vmatprep.subr.mxu0 0.0
        %1061 = vmatpush2.msra.mxu0 0.0
        %1062 = vmatprep.subr.mxu0 0.0
        %1063 = vmatpush2.msra.mxu0 0.0
        %1064 = vmatprep.subr.mxu0 0.0
        %1065 = vmatpush2.msra.mxu0 0.0
        %1066 = vmatprep.subr.mxu0 0.0
        %1067 = vmatpush2.msra.mxu0 0.0
        %1068 = vmatprep.mubr.f32.mxu0 0.0
        %1069 = vmatmul.mubr.f32.gmra.mxu0 %v792
        %v1070 = vpop.f32.mrf.mxu0
        %v1071 = vadd.f32 0.0, %v1070
        %v1072 = vpop.f32.mrf.mxu0
        %1073 = vdwg.mxu0
        %v1075 = vsel %vm215, %v432, 0
        %1077 = vmatprep.subr.mxu0 0.0
        %1078 = vmatpush1.msra.mxu0 0.0
        %1079 = vmatprep.subr.mxu0 0.0
        %1080 = vmatpush1.msra.mxu0 0.0
        %1081 = vmatprep.subr.mxu0 0.0
        %1082 = vmatpush1.msra.mxu0 0.0
        %1083 = vmatprep.subr.mxu0 0.0
        %1084 = vmatpush1.msra.mxu0 0.0
        %1085 = vmatprep.subr.mxu0 0.0
        %1086 = vmatpush1.msra.mxu0 0.0
        %1087 = vmatprep.subr.mxu0 0.0
        %1088 = vmatpush1.msra.mxu0 0.0
        %1089 = vmatprep.subr.mxu0 0.0
        %1090 = vmatpush1.msra.mxu0 0.0
        %1091 = vmatprep.subr.mxu0 0.0
        %1092 = vmatpush1.msra.mxu0 0.0
        %1093 = vmatprep.subr.mxu0 0.0
        %1094 = vmatpush1.msra.mxu0 0.0
        %1095 = vmatprep.subr.mxu0 0.0
        %1096 = vmatpush1.msra.mxu0 0.0
        %1097 = vmatprep.subr.mxu0 0.0
        %1098 = vmatpush1.msra.mxu0 0.0
        %1099 = vmatprep.subr.mxu0 0.0
        %1100 = vmatpush1.msra.mxu0 0.0
        %1101 = vmatprep.subr.mxu0 0.0
        %1102 = vmatpush1.msra.mxu0 0.0
        %1103 = vmatprep.subr.mxu0 0.0
        %1104 = vmatpush1.msra.mxu0 0.0
        %1105 = vmatprep.subr.mxu0 0.0
        %1106 = vmatpush1.msra.mxu0 %v198
        %1107 = vmatprep.subr.mxu0 0.0
        %1108 = vmatpush1.msra.mxu0 %v197
        %1109 = vmatprep.subr.mxu0 0.0
        %1110 = vmatpush2.msra.mxu0 0.0
        %1111 = vmatprep.subr.mxu0 0.0
        %1112 = vmatpush2.msra.mxu0 0.0
        %1113 = vmatprep.subr.mxu0 0.0
        %1114 = vmatpush2.msra.mxu0 0.0
        %1115 = vmatprep.subr.mxu0 0.0
        %1116 = vmatpush2.msra.mxu0 0.0
        %1117 = vmatprep.subr.mxu0 0.0
        %1118 = vmatpush2.msra.mxu0 0.0
        %1119 = vmatprep.subr.mxu0 0.0
        %1120 = vmatpush2.msra.mxu0 0.0
        %1121 = vmatprep.subr.mxu0 0.0
        %1122 = vmatpush2.msra.mxu0 0.0
        %1123 = vmatprep.subr.mxu0 0.0
        %1124 = vmatpush2.msra.mxu0 0.0
        %1125 = vmatprep.subr.mxu0 0.0
        %1126 = vmatpush2.msra.mxu0 0.0
        %1127 = vmatprep.subr.mxu0 0.0
        %1128 = vmatpush2.msra.mxu0 0.0
        %1129 = vmatprep.subr.mxu0 0.0
        %1130 = vmatpush2.msra.mxu0 0.0
        %1131 = vmatprep.subr.mxu0 0.0
        %1132 = vmatpush2.msra.mxu0 0.0
        %1133 = vmatprep.subr.mxu0 0.0
        %1134 = vmatpush2.msra.mxu0 0.0
        %1135 = vmatprep.subr.mxu0 0.0
        %1136 = vmatpush2.msra.mxu0 0.0
        %1137 = vmatprep.subr.mxu0 0.0
        %1138 = vmatpush2.msra.mxu0 0.0
        %1139 = vmatprep.subr.mxu0 0.0
        %1140 = vmatpush2.msra.mxu0 0.0
        %1141 = vmatprep.mubr.f32.mxu0 0.0
        %1142 = vmatmul.mubr.f32.gmra.mxu0 %v1075
        %v1143 = vpop.f32.mrf.mxu0
        %v1144 = vadd.f32 0.0, %v1143
        %v1145 = vpop.f32.mrf.mxu0
        %1146 = vdwg.mxu0
        %1147 = vmatprep.subr.mxu0 0.0
        %1148 = vmatpush1.msra.mxu0 0.0
        %1149 = vmatprep.subr.mxu0 0.0
        %1150 = vmatpush1.msra.mxu0 0.0
        %1151 = vmatprep.subr.mxu0 0.0
        %1152 = vmatpush1.msra.mxu0 0.0
        %1153 = vmatprep.subr.mxu0 0.0
        %1154 = vmatpush1.msra.mxu0 0.0
        %1155 = vmatprep.subr.mxu0 0.0
        %1156 = vmatpush1.msra.mxu0 0.0
        %1157 = vmatprep.subr.mxu0 0.0
        %1158 = vmatpush1.msra.mxu0 0.0
        %1159 = vmatprep.subr.mxu0 0.0
        %1160 = vmatpush1.msra.mxu0 0.0
        %1161 = vmatprep.subr.mxu0 0.0
        %1162 = vmatpush1.msra.mxu0 0.0
        %1163 = vmatprep.subr.mxu0 0.0
        %1164 = vmatpush1.msra.mxu0 0.0
        %1165 = vmatprep.subr.mxu0 0.0
        %1166 = vmatpush1.msra.mxu0 0.0
        %1167 = vmatprep.subr.mxu0 0.0
        %1168 = vmatpush1.msra.mxu0 0.0
        %1169 = vmatprep.subr.mxu0 0.0
        %1170 = vmatpush1.msra.mxu0 0.0
        %1171 = vmatprep.subr.mxu0 0.0
        %1172 = vmatpush1.msra.mxu0 0.0
        %1173 = vmatprep.subr.mxu0 0.0
        %1174 = vmatpush1.msra.mxu0 0.0
        %1175 = vmatprep.subr.mxu0 0.0
        %1176 = vmatpush1.msra.mxu0 %v202
        %1177 = vmatprep.subr.mxu0 0.0
        %1178 = vmatpush1.msra.mxu0 %v201
        %1179 = vmatprep.subr.mxu0 0.0
        %1180 = vmatpush2.msra.mxu0 0.0
        %1181 = vmatprep.subr.mxu0 0.0
        %1182 = vmatpush2.msra.mxu0 0.0
        %1183 = vmatprep.subr.mxu0 0.0
        %1184 = vmatpush2.msra.mxu0 0.0
        %1185 = vmatprep.subr.mxu0 0.0
        %1186 = vmatpush2.msra.mxu0 0.0
        %1187 = vmatprep.subr.mxu0 0.0
        %1188 = vmatpush2.msra.mxu0 0.0
        %1189 = vmatprep.subr.mxu0 0.0
        %1190 = vmatpush2.msra.mxu0 0.0
        %1191 = vmatprep.subr.mxu0 0.0
        %1192 = vmatpush2.msra.mxu0 0.0
        %1193 = vmatprep.subr.mxu0 0.0
        %1194 = vmatpush2.msra.mxu0 0.0
        %1195 = vmatprep.subr.mxu0 0.0
        %1196 = vmatpush2.msra.mxu0 0.0
        %1197 = vmatprep.subr.mxu0 0.0
        %1198 = vmatpush2.msra.mxu0 0.0
        %1199 = vmatprep.subr.mxu0 0.0
        %1200 = vmatpush2.msra.mxu0 0.0
        %1201 = vmatprep.subr.mxu0 0.0
        %1202 = vmatpush2.msra.mxu0 0.0
        %1203 = vmatprep.subr.mxu0 0.0
        %1204 = vmatpush2.msra.mxu0 0.0
        %1205 = vmatprep.subr.mxu0 0.0
        %1206 = vmatpush2.msra.mxu0 0.0
        %1207 = vmatprep.subr.mxu0 0.0
        %1208 = vmatpush2.msra.mxu0 0.0
        %1209 = vmatprep.subr.mxu0 0.0
        %1210 = vmatpush2.msra.mxu0 0.0
        %1211 = vmatprep.mubr.f32.mxu0 0.0
        %1212 = vmatmul.mubr.f32.gmra.mxu0 %v1075
        %v1213 = vpop.f32.mrf.mxu0
        %v1214 = vadd.f32 0.0, %v1213
        %v1215 = vpop.f32.mrf.mxu0
        %1216 = vdwg.mxu0
        %1217 = vmatprep.subr.mxu0 0.0
        %1218 = vmatpush1.msra.mxu0 0.0
        %1219 = vmatprep.subr.mxu0 0.0
        %1220 = vmatpush1.msra.mxu0 0.0
        %1221 = vmatprep.subr.mxu0 0.0
        %1222 = vmatpush1.msra.mxu0 0.0
        %1223 = vmatprep.subr.mxu0 0.0
        %1224 = vmatpush1.msra.mxu0 0.0
        %1225 = vmatprep.subr.mxu0 0.0
        %1226 = vmatpush1.msra.mxu0 0.0
        %1227 = vmatprep.subr.mxu0 0.0
        %1228 = vmatpush1.msra.mxu0 0.0
        %1229 = vmatprep.subr.mxu0 0.0
        %1230 = vmatpush1.msra.mxu0 0.0
        %1231 = vmatprep.subr.mxu0 0.0
        %1232 = vmatpush1.msra.mxu0 0.0
        %1233 = vmatprep.subr.mxu0 0.0
        %1234 = vmatpush1.msra.mxu0 0.0
        %1235 = vmatprep.subr.mxu0 0.0
        %1236 = vmatpush1.msra.mxu0 0.0
        %1237 = vmatprep.subr.mxu0 0.0
        %1238 = vmatpush1.msra.mxu0 0.0
        %1239 = vmatprep.subr.mxu0 0.0
        %1240 = vmatpush1.msra.mxu0 0.0
        %1241 = vmatprep.subr.mxu0 0.0
        %1242 = vmatpush1.msra.mxu0 0.0
        %1243 = vmatprep.subr.mxu0 0.0
        %1244 = vmatpush1.msra.mxu0 0.0
        %1245 = vmatprep.subr.mxu0 0.0
        %1246 = vmatpush1.msra.mxu0 %v207
        %1247 = vmatprep.subr.mxu0 0.0
        %1248 = vmatpush1.msra.mxu0 %v206
        %1249 = vmatprep.subr.mxu0 0.0
        %1250 = vmatpush2.msra.mxu0 0.0
        %1251 = vmatprep.subr.mxu0 0.0
        %1252 = vmatpush2.msra.mxu0 0.0
        %1253 = vmatprep.subr.mxu0 0.0
        %1254 = vmatpush2.msra.mxu0 0.0
        %1255 = vmatprep.subr.mxu0 0.0
        %1256 = vmatpush2.msra.mxu0 0.0
        %1257 = vmatprep.subr.mxu0 0.0
        %1258 = vmatpush2.msra.mxu0 0.0
        %1259 = vmatprep.subr.mxu0 0.0
        %1260 = vmatpush2.msra.mxu0 0.0
        %1261 = vmatprep.subr.mxu0 0.0
        %1262 = vmatpush2.msra.mxu0 0.0
        %1263 = vmatprep.subr.mxu0 0.0
        %1264 = vmatpush2.msra.mxu0 0.0
        %1265 = vmatprep.subr.mxu0 0.0
        %1266 = vmatpush2.msra.mxu0 0.0
        %1267 = vmatprep.subr.mxu0 0.0
        %1268 = vmatpush2.msra.mxu0 0.0
        %1269 = vmatprep.subr.mxu0 0.0
        %1270 = vmatpush2.msra.mxu0 0.0
        %1271 = vmatprep.subr.mxu0 0.0
        %1272 = vmatpush2.msra.mxu0 0.0
        %1273 = vmatprep.subr.mxu0 0.0
        %1274 = vmatpush2.msra.mxu0 0.0
        %1275 = vmatprep.subr.mxu0 0.0
        %1276 = vmatpush2.msra.mxu0 0.0
        %1277 = vmatprep.subr.mxu0 0.0
        %1278 = vmatpush2.msra.mxu0 0.0
        %1279 = vmatprep.subr.mxu0 0.0
        %1280 = vmatpush2.msra.mxu0 0.0
        %1281 = vmatprep.mubr.f32.mxu0 0.0
        %1282 = vmatmul.mubr.f32.gmra.mxu0 %v1075
        %v1283 = vpop.f32.mrf.mxu0
        %v1284 = vadd.f32 0.0, %v1283
        %v1285 = vpop.f32.mrf.mxu0
        %1286 = vdwg.mxu0
        %1287 = vmatprep.subr.mxu0 0.0
        %1288 = vmatpush1.msra.mxu0 0.0
        %1289 = vmatprep.subr.mxu0 0.0
        %1290 = vmatpush1.msra.mxu0 0.0
        %1291 = vmatprep.subr.mxu0 0.0
        %1292 = vmatpush1.msra.mxu0 0.0
        %1293 = vmatprep.subr.mxu0 0.0
        %1294 = vmatpush1.msra.mxu0 0.0
        %1295 = vmatprep.subr.mxu0 0.0
        %1296 = vmatpush1.msra.mxu0 0.0
        %1297 = vmatprep.subr.mxu0 0.0
        %1298 = vmatpush1.msra.mxu0 0.0
        %1299 = vmatprep.subr.mxu0 0.0
        %1300 = vmatpush1.msra.mxu0 0.0
        %1301 = vmatprep.subr.mxu0 0.0
        %1302 = vmatpush1.msra.mxu0 0.0
        %1303 = vmatprep.subr.mxu0 0.0
        %1304 = vmatpush1.msra.mxu0 0.0
        %1305 = vmatprep.subr.mxu0 0.0
        %1306 = vmatpush1.msra.mxu0 0.0
        %1307 = vmatprep.subr.mxu0 0.0
        %1308 = vmatpush1.msra.mxu0 0.0
        %1309 = vmatprep.subr.mxu0 0.0
        %1310 = vmatpush1.msra.mxu0 0.0
        %1311 = vmatprep.subr.mxu0 0.0
        %1312 = vmatpush1.msra.mxu0 0.0
        %1313 = vmatprep.subr.mxu0 0.0
        %1314 = vmatpush1.msra.mxu0 0.0
        %1315 = vmatprep.subr.mxu0 0.0
        %1316 = vmatpush1.msra.mxu0 %v212
        %1317 = vmatprep.subr.mxu0 0.0
        %1318 = vmatpush1.msra.mxu0 %v211
        %1319 = vmatprep.subr.mxu0 0.0
        %1320 = vmatpush2.msra.mxu0 0.0
        %1321 = vmatprep.subr.mxu0 0.0
        %1322 = vmatpush2.msra.mxu0 0.0
        %1323 = vmatprep.subr.mxu0 0.0
        %1324 = vmatpush2.msra.mxu0 0.0
        %1325 = vmatprep.subr.mxu0 0.0
        %1326 = vmatpush2.msra.mxu0 0.0
        %1327 = vmatprep.subr.mxu0 0.0
        %1328 = vmatpush2.msra.mxu0 0.0
        %1329 = vmatprep.subr.mxu0 0.0
        %1330 = vmatpush2.msra.mxu0 0.0
        %1331 = vmatprep.subr.mxu0 0.0
        %1332 = vmatpush2.msra.mxu0 0.0
        %1333 = vmatprep.subr.mxu0 0.0
        %1334 = vmatpush2.msra.mxu0 0.0
        %1335 = vmatprep.subr.mxu0 0.0
        %1336 = vmatpush2.msra.mxu0 0.0
        %1337 = vmatprep.subr.mxu0 0.0
        %1338 = vmatpush2.msra.mxu0 0.0
        %1339 = vmatprep.subr.mxu0 0.0
        %1340 = vmatpush2.msra.mxu0 0.0
        %1341 = vmatprep.subr.mxu0 0.0
        %1342 = vmatpush2.msra.mxu0 0.0
        %1343 = vmatprep.subr.mxu0 0.0
        %1344 = vmatpush2.msra.mxu0 0.0
        %1345 = vmatprep.subr.mxu0 0.0
        %1346 = vmatpush2.msra.mxu0 0.0
        %1347 = vmatprep.subr.mxu0 0.0
        %1348 = vmatpush2.msra.mxu0 0.0
        %1349 = vmatprep.subr.mxu0 0.0
        %1350 = vmatpush2.msra.mxu0 0.0
        %1351 = vmatprep.mubr.f32.mxu0 0.0
        %1352 = vmatmul.mubr.f32.gmra.mxu0 %v1075
        %v1353 = vpop.f32.mrf.mxu0
        %v1354 = vadd.f32 0.0, %v1353
        %v1355 = vpop.f32.mrf.mxu0
        %1356 = vdwg.mxu0
        %v1358 = vsel %vm215, %v505, 0
        %1360 = vmatprep.subr.mxu0 0.0
        %1361 = vmatpush1.msra.mxu0 0.0
        %1362 = vmatprep.subr.mxu0 0.0
        %1363 = vmatpush1.msra.mxu0 0.0
        %1364 = vmatprep.subr.mxu0 0.0
        %1365 = vmatpush1.msra.mxu0 0.0
        %1366 = vmatprep.subr.mxu0 0.0
        %1367 = vmatpush1.msra.mxu0 0.0
        %1368 = vmatprep.subr.mxu0 0.0
        %1369 = vmatpush1.msra.mxu0 0.0
        %1370 = vmatprep.subr.mxu0 0.0
        %1371 = vmatpush1.msra.mxu0 0.0
        %1372 = vmatprep.subr.mxu0 0.0
        %1373 = vmatpush1.msra.mxu0 0.0
        %1374 = vmatprep.subr.mxu0 0.0
        %1375 = vmatpush1.msra.mxu0 0.0
        %1376 = vmatprep.subr.mxu0 0.0
        %1377 = vmatpush1.msra.mxu0 0.0
        %1378 = vmatprep.subr.mxu0 0.0
        %1379 = vmatpush1.msra.mxu0 0.0
        %1380 = vmatprep.subr.mxu0 0.0
        %1381 = vmatpush1.msra.mxu0 0.0
        %1382 = vmatprep.subr.mxu0 0.0
        %1383 = vmatpush1.msra.mxu0 0.0
        %1384 = vmatprep.subr.mxu0 0.0
        %1385 = vmatpush1.msra.mxu0 0.0
        %1386 = vmatprep.subr.mxu0 0.0
        %1387 = vmatpush1.msra.mxu0 0.0
        %1388 = vmatprep.subr.mxu0 0.0
        %1389 = vmatpush1.msra.mxu0 %v198
        %1390 = vmatprep.subr.mxu0 0.0
        %1391 = vmatpush1.msra.mxu0 %v197
        %1392 = vmatprep.subr.mxu0 0.0
        %1393 = vmatpush2.msra.mxu0 0.0
        %1394 = vmatprep.subr.mxu0 0.0
        %1395 = vmatpush2.msra.mxu0 0.0
        %1396 = vmatprep.subr.mxu0 0.0
        %1397 = vmatpush2.msra.mxu0 0.0
        %1398 = vmatprep.subr.mxu0 0.0
        %1399 = vmatpush2.msra.mxu0 0.0
        %1400 = vmatprep.subr.mxu0 0.0
        %1401 = vmatpush2.msra.mxu0 0.0
        %1402 = vmatprep.subr.mxu0 0.0
        %1403 = vmatpush2.msra.mxu0 0.0
        %1404 = vmatprep.subr.mxu0 0.0
        %1405 = vmatpush2.msra.mxu0 0.0
        %1406 = vmatprep.subr.mxu0 0.0
        %1407 = vmatpush2.msra.mxu0 0.0
        %1408 = vmatprep.subr.mxu0 0.0
        %1409 = vmatpush2.msra.mxu0 0.0
        %1410 = vmatprep.subr.mxu0 0.0
        %1411 = vmatpush2.msra.mxu0 0.0
        %1412 = vmatprep.subr.mxu0 0.0
        %1413 = vmatpush2.msra.mxu0 0.0
        %1414 = vmatprep.subr.mxu0 0.0
        %1415 = vmatpush2.msra.mxu0 0.0
        %1416 = vmatprep.subr.mxu0 0.0
        %1417 = vmatpush2.msra.mxu0 0.0
        %1418 = vmatprep.subr.mxu0 0.0
        %1419 = vmatpush2.msra.mxu0 0.0
        %1420 = vmatprep.subr.mxu0 0.0
        %1421 = vmatpush2.msra.mxu0 0.0
        %1422 = vmatprep.subr.mxu0 0.0
        %1423 = vmatpush2.msra.mxu0 0.0
        %1424 = vmatprep.mubr.f32.mxu0 0.0
        %1425 = vmatmul.mubr.f32.gmra.mxu0 %v1358
        %v1426 = vpop.f32.mrf.mxu0
        %v1427 = vadd.f32 0.0, %v1426
        %v1428 = vpop.f32.mrf.mxu0
        %1429 = vdwg.mxu0
        %1430 = vmatprep.subr.mxu0 0.0
        %1431 = vmatpush1.msra.mxu0 0.0
        %1432 = vmatprep.subr.mxu0 0.0
        %1433 = vmatpush1.msra.mxu0 0.0
        %1434 = vmatprep.subr.mxu0 0.0
        %1435 = vmatpush1.msra.mxu0 0.0
        %1436 = vmatprep.subr.mxu0 0.0
        %1437 = vmatpush1.msra.mxu0 0.0
        %1438 = vmatprep.subr.mxu0 0.0
        %1439 = vmatpush1.msra.mxu0 0.0
        %1440 = vmatprep.subr.mxu0 0.0
        %1441 = vmatpush1.msra.mxu0 0.0
        %1442 = vmatprep.subr.mxu0 0.0
        %1443 = vmatpush1.msra.mxu0 0.0
        %1444 = vmatprep.subr.mxu0 0.0
        %1445 = vmatpush1.msra.mxu0 0.0
        %1446 = vmatprep.subr.mxu0 0.0
        %1447 = vmatpush1.msra.mxu0 0.0
        %1448 = vmatprep.subr.mxu0 0.0
        %1449 = vmatpush1.msra.mxu0 0.0
        %1450 = vmatprep.subr.mxu0 0.0
        %1451 = vmatpush1.msra.mxu0 0.0
        %1452 = vmatprep.subr.mxu0 0.0
        %1453 = vmatpush1.msra.mxu0 0.0
        %1454 = vmatprep.subr.mxu0 0.0
        %1455 = vmatpush1.msra.mxu0 0.0
        %1456 = vmatprep.subr.mxu0 0.0
        %1457 = vmatpush1.msra.mxu0 0.0
        %1458 = vmatprep.subr.mxu0 0.0
        %1459 = vmatpush1.msra.mxu0 %v202
        %1460 = vmatprep.subr.mxu0 0.0
        %1461 = vmatpush1.msra.mxu0 %v201
        %1462 = vmatprep.subr.mxu0 0.0
        %1463 = vmatpush2.msra.mxu0 0.0
        %1464 = vmatprep.subr.mxu0 0.0
        %1465 = vmatpush2.msra.mxu0 0.0
        %1466 = vmatprep.subr.mxu0 0.0
        %1467 = vmatpush2.msra.mxu0 0.0
        %1468 = vmatprep.subr.mxu0 0.0
        %1469 = vmatpush2.msra.mxu0 0.0
        %1470 = vmatprep.subr.mxu0 0.0
        %1471 = vmatpush2.msra.mxu0 0.0
        %1472 = vmatprep.subr.mxu0 0.0
        %1473 = vmatpush2.msra.mxu0 0.0
        %1474 = vmatprep.subr.mxu0 0.0
        %1475 = vmatpush2.msra.mxu0 0.0
        %1476 = vmatprep.subr.mxu0 0.0
        %1477 = vmatpush2.msra.mxu0 0.0
        %1478 = vmatprep.subr.mxu0 0.0
        %1479 = vmatpush2.msra.mxu0 0.0
        %1480 = vmatprep.subr.mxu0 0.0
        %1481 = vmatpush2.msra.mxu0 0.0
        %1482 = vmatprep.subr.mxu0 0.0
        %1483 = vmatpush2.msra.mxu0 0.0
        %1484 = vmatprep.subr.mxu0 0.0
        %1485 = vmatpush2.msra.mxu0 0.0
        %1486 = vmatprep.subr.mxu0 0.0
        %1487 = vmatpush2.msra.mxu0 0.0
        %1488 = vmatprep.subr.mxu0 0.0
        %1489 = vmatpush2.msra.mxu0 0.0
        %1490 = vmatprep.subr.mxu0 0.0
        %1491 = vmatpush2.msra.mxu0 0.0
        %1492 = vmatprep.subr.mxu0 0.0
        %1493 = vmatpush2.msra.mxu0 0.0
        %1494 = vmatprep.mubr.f32.mxu0 0.0
        %1495 = vmatmul.mubr.f32.gmra.mxu0 %v1358
        %v1496 = vpop.f32.mrf.mxu0
        %v1497 = vadd.f32 0.0, %v1496
        %v1498 = vpop.f32.mrf.mxu0
        %1499 = vdwg.mxu0
        %1500 = vmatprep.subr.mxu0 0.0
        %1501 = vmatpush1.msra.mxu0 0.0
        %1502 = vmatprep.subr.mxu0 0.0
        %1503 = vmatpush1.msra.mxu0 0.0
        %1504 = vmatprep.subr.mxu0 0.0
        %1505 = vmatpush1.msra.mxu0 0.0
        %1506 = vmatprep.subr.mxu0 0.0
        %1507 = vmatpush1.msra.mxu0 0.0
        %1508 = vmatprep.subr.mxu0 0.0
        %1509 = vmatpush1.msra.mxu0 0.0
        %1510 = vmatprep.subr.mxu0 0.0
        %1511 = vmatpush1.msra.mxu0 0.0
        %1512 = vmatprep.subr.mxu0 0.0
        %1513 = vmatpush1.msra.mxu0 0.0
        %1514 = vmatprep.subr.mxu0 0.0
        %1515 = vmatpush1.msra.mxu0 0.0
        %1516 = vmatprep.subr.mxu0 0.0
        %1517 = vmatpush1.msra.mxu0 0.0
        %1518 = vmatprep.subr.mxu0 0.0
        %1519 = vmatpush1.msra.mxu0 0.0
        %1520 = vmatprep.subr.mxu0 0.0
        %1521 = vmatpush1.msra.mxu0 0.0
        %1522 = vmatprep.subr.mxu0 0.0
        %1523 = vmatpush1.msra.mxu0 0.0
        %1524 = vmatprep.subr.mxu0 0.0
        %1525 = vmatpush1.msra.mxu0 0.0
        %1526 = vmatprep.subr.mxu0 0.0
        %1527 = vmatpush1.msra.mxu0 0.0
        %1528 = vmatprep.subr.mxu0 0.0
        %1529 = vmatpush1.msra.mxu0 %v207
        %1530 = vmatprep.subr.mxu0 0.0
        %1531 = vmatpush1.msra.mxu0 %v206
        %1532 = vmatprep.subr.mxu0 0.0
        %1533 = vmatpush2.msra.mxu0 0.0
        %1534 = vmatprep.subr.mxu0 0.0
        %1535 = vmatpush2.msra.mxu0 0.0
        %1536 = vmatprep.subr.mxu0 0.0
        %1537 = vmatpush2.msra.mxu0 0.0
        %1538 = vmatprep.subr.mxu0 0.0
        %1539 = vmatpush2.msra.mxu0 0.0
        %1540 = vmatprep.subr.mxu0 0.0
        %1541 = vmatpush2.msra.mxu0 0.0
        %1542 = vmatprep.subr.mxu0 0.0
        %1543 = vmatpush2.msra.mxu0 0.0
        %1544 = vmatprep.subr.mxu0 0.0
        %1545 = vmatpush2.msra.mxu0 0.0
        %1546 = vmatprep.subr.mxu0 0.0
        %1547 = vmatpush2.msra.mxu0 0.0
        %1548 = vmatprep.subr.mxu0 0.0
        %1549 = vmatpush2.msra.mxu0 0.0
        %1550 = vmatprep.subr.mxu0 0.0
        %1551 = vmatpush2.msra.mxu0 0.0
        %1552 = vmatprep.subr.mxu0 0.0
        %1553 = vmatpush2.msra.mxu0 0.0
        %1554 = vmatprep.subr.mxu0 0.0
        %1555 = vmatpush2.msra.mxu0 0.0
        %1556 = vmatprep.subr.mxu0 0.0
        %1557 = vmatpush2.msra.mxu0 0.0
        %1558 = vmatprep.subr.mxu0 0.0
        %1559 = vmatpush2.msra.mxu0 0.0
        %1560 = vmatprep.subr.mxu0 0.0
        %1561 = vmatpush2.msra.mxu0 0.0
        %1562 = vmatprep.subr.mxu0 0.0
        %1563 = vmatpush2.msra.mxu0 0.0
        %1564 = vmatprep.mubr.f32.mxu0 0.0
        %1565 = vmatmul.mubr.f32.gmra.mxu0 %v1358
        %v1566 = vpop.f32.mrf.mxu0
        %v1567 = vadd.f32 0.0, %v1566
        %v1568 = vpop.f32.mrf.mxu0
        %1569 = vdwg.mxu0
        %1570 = vmatprep.subr.mxu0 0.0
        %1571 = vmatpush1.msra.mxu0 0.0
        %1572 = vmatprep.subr.mxu0 0.0
        %1573 = vmatpush1.msra.mxu0 0.0
        %1574 = vmatprep.subr.mxu0 0.0
        %1575 = vmatpush1.msra.mxu0 0.0
        %1576 = vmatprep.subr.mxu0 0.0
        %1577 = vmatpush1.msra.mxu0 0.0
        %1578 = vmatprep.subr.mxu0 0.0
        %1579 = vmatpush1.msra.mxu0 0.0
        %1580 = vmatprep.subr.mxu0 0.0
        %1581 = vmatpush1.msra.mxu0 0.0
        %1582 = vmatprep.subr.mxu0 0.0
        %1583 = vmatpush1.msra.mxu0 0.0
        %1584 = vmatprep.subr.mxu0 0.0
        %1585 = vmatpush1.msra.mxu0 0.0
        %1586 = vmatprep.subr.mxu0 0.0
        %1587 = vmatpush1.msra.mxu0 0.0
        %1588 = vmatprep.subr.mxu0 0.0
        %1589 = vmatpush1.msra.mxu0 0.0
        %1590 = vmatprep.subr.mxu0 0.0
        %1591 = vmatpush1.msra.mxu0 0.0
        %1592 = vmatprep.subr.mxu0 0.0
        %1593 = vmatpush1.msra.mxu0 0.0
        %1594 = vmatprep.subr.mxu0 0.0
        %1595 = vmatpush1.msra.mxu0 0.0
        %1596 = vmatprep.subr.mxu0 0.0
        %1597 = vmatpush1.msra.mxu0 0.0
        %1598 = vmatprep.subr.mxu0 0.0
        %1599 = vmatpush1.msra.mxu0 %v212
        %1600 = vmatprep.subr.mxu0 0.0
        %1601 = vmatpush1.msra.mxu0 %v211
        %1602 = vmatprep.subr.mxu0 0.0
        %1603 = vmatpush2.msra.mxu0 0.0
        %1604 = vmatprep.subr.mxu0 0.0
        %1605 = vmatpush2.msra.mxu0 0.0
        %1606 = vmatprep.subr.mxu0 0.0
        %1607 = vmatpush2.msra.mxu0 0.0
        %1608 = vmatprep.subr.mxu0 0.0
        %1609 = vmatpush2.msra.mxu0 0.0
        %1610 = vmatprep.subr.mxu0 0.0
        %1611 = vmatpush2.msra.mxu0 0.0
        %1612 = vmatprep.subr.mxu0 0.0
        %1613 = vmatpush2.msra.mxu0 0.0
        %1614 = vmatprep.subr.mxu0 0.0
        %1615 = vmatpush2.msra.mxu0 0.0
        %1616 = vmatprep.subr.mxu0 0.0
        %1617 = vmatpush2.msra.mxu0 0.0
        %1618 = vmatprep.subr.mxu0 0.0
        %1619 = vmatpush2.msra.mxu0 0.0
        %1620 = vmatprep.subr.mxu0 0.0
        %1621 = vmatpush2.msra.mxu0 0.0
        %1622 = vmatprep.subr.mxu0 0.0
        %1623 = vmatpush2.msra.mxu0 0.0
        %1624 = vmatprep.subr.mxu0 0.0
        %1625 = vmatpush2.msra.mxu0 0.0
        %1626 = vmatprep.subr.mxu0 0.0
        %1627 = vmatpush2.msra.mxu0 0.0
        %1628 = vmatprep.subr.mxu0 0.0
        %1629 = vmatpush2.msra.mxu0 0.0
        %1630 = vmatprep.subr.mxu0 0.0
        %1631 = vmatpush2.msra.mxu0 0.0
        %1632 = vmatprep.subr.mxu0 0.0
        %1633 = vmatpush2.msra.mxu0 0.0
        %1634 = vmatprep.mubr.f32.mxu0 0.0
        %1635 = vmatmul.mubr.f32.gmra.mxu0 %v1358
        %v1636 = vpop.f32.mrf.mxu0
        %v1637 = vadd.f32 0.0, %v1636
        %v1638 = vpop.f32.mrf.mxu0
        %1639 = vdwg.mxu0
        %s1640 = scalar_lea.vmem %s150, 16 [#allocation2]
        %v1641 = vld [vmem:[%s1640] sm:$0xff]
        %v1642 = vld [vmem:[%s1640 + $0x8] sm:$0xff]
        %1643 = vmatprep.subr.mxu0 0.0
        %1644 = vmatpush1.msra.mxu0 0.0
        %1645 = vmatprep.subr.mxu0 0.0
        %1646 = vmatpush1.msra.mxu0 0.0
        %1647 = vmatprep.subr.mxu0 0.0
        %1648 = vmatpush1.msra.mxu0 0.0
        %1649 = vmatprep.subr.mxu0 0.0
        %1650 = vmatpush1.msra.mxu0 0.0
        %1651 = vmatprep.subr.mxu0 0.0
        %1652 = vmatpush1.msra.mxu0 0.0
        %1653 = vmatprep.subr.mxu0 0.0
        %1654 = vmatpush1.msra.mxu0 0.0
        %1655 = vmatprep.subr.mxu0 0.0
        %1656 = vmatpush1.msra.mxu0 0.0
        %1657 = vmatprep.subr.mxu0 0.0
        %1658 = vmatpush1.msra.mxu0 0.0
        %1659 = vmatprep.subr.mxu0 0.0
        %1660 = vmatpush1.msra.mxu0 0.0
        %1661 = vmatprep.subr.mxu0 0.0
        %1662 = vmatpush1.msra.mxu0 0.0
        %1663 = vmatprep.subr.mxu0 0.0
        %1664 = vmatpush1.msra.mxu0 0.0
        %1665 = vmatprep.subr.mxu0 0.0
        %1666 = vmatpush1.msra.mxu0 0.0
        %1667 = vmatprep.subr.mxu0 0.0
        %1668 = vmatpush1.msra.mxu0 0.0
        %1669 = vmatprep.subr.mxu0 0.0
        %1670 = vmatpush1.msra.mxu0 0.0
        %1671 = vmatprep.subr.mxu0 0.0
        %1672 = vmatpush1.msra.mxu0 %v1642
        %1673 = vmatprep.subr.mxu0 0.0
        %1674 = vmatpush1.msra.mxu0 %v1641
        %1675 = vmatprep.subr.mxu0 0.0
        %1676 = vmatpush2.msra.mxu0 0.0
        %1677 = vmatprep.subr.mxu0 0.0
        %1678 = vmatpush2.msra.mxu0 0.0
        %1679 = vmatprep.subr.mxu0 0.0
        %1680 = vmatpush2.msra.mxu0 0.0
        %1681 = vmatprep.subr.mxu0 0.0
        %1682 = vmatpush2.msra.mxu0 0.0
        %1683 = vmatprep.subr.mxu0 0.0
        %1684 = vmatpush2.msra.mxu0 0.0
        %1685 = vmatprep.subr.mxu0 0.0
        %1686 = vmatpush2.msra.mxu0 0.0
        %1687 = vmatprep.subr.mxu0 0.0
        %1688 = vmatpush2.msra.mxu0 0.0
        %1689 = vmatprep.subr.mxu0 0.0
        %1690 = vmatpush2.msra.mxu0 0.0
        %1691 = vmatprep.subr.mxu0 0.0
        %1692 = vmatpush2.msra.mxu0 0.0
        %1693 = vmatprep.subr.mxu0 0.0
        %1694 = vmatpush2.msra.mxu0 0.0
        %1695 = vmatprep.subr.mxu0 0.0
        %1696 = vmatpush2.msra.mxu0 0.0
        %1697 = vmatprep.subr.mxu0 0.0
        %1698 = vmatpush2.msra.mxu0 0.0
        %1699 = vmatprep.subr.mxu0 0.0
        %1700 = vmatpush2.msra.mxu0 0.0
        %1701 = vmatprep.subr.mxu0 0.0
        %1702 = vmatpush2.msra.mxu0 0.0
        %1703 = vmatprep.subr.mxu0 0.0
        %1704 = vmatpush2.msra.mxu0 0.0
        %1705 = vmatprep.subr.mxu0 0.0
        %1706 = vmatpush2.msra.mxu0 0.0
        %1707 = vmatprep.mubr.f32.mxu0 0.0
        %1708 = vmatmul.mubr.f32.gmra.mxu0 %v217
        %v1709 = vpop.f32.mrf.mxu0
        %v1710 = vadd.f32 0.0, %v1709
        %v1711 = vpop.f32.mrf.mxu0
        %1712 = vdwg.mxu0
        %1713 = vmatprep.subr.mxu0 0.0
        %1714 = vmatpush1.msra.mxu0 0.0
        %1715 = vmatprep.subr.mxu0 0.0
        %1716 = vmatpush1.msra.mxu0 0.0
        %1717 = vmatprep.subr.mxu0 0.0
        %1718 = vmatpush1.msra.mxu0 0.0
        %1719 = vmatprep.subr.mxu0 0.0
        %1720 = vmatpush1.msra.mxu0 0.0
        %1721 = vmatprep.subr.mxu0 0.0
        %1722 = vmatpush1.msra.mxu0 0.0
        %1723 = vmatprep.subr.mxu0 0.0
        %1724 = vmatpush1.msra.mxu0 0.0
        %1725 = vmatprep.subr.mxu0 0.0
        %1726 = vmatpush1.msra.mxu0 0.0
        %1727 = vmatprep.subr.mxu0 0.0
        %1728 = vmatpush1.msra.mxu0 0.0
        %1729 = vmatprep.subr.mxu0 0.0
        %1730 = vmatpush1.msra.mxu0 0.0
        %1731 = vmatprep.subr.mxu0 0.0
        %1732 = vmatpush1.msra.mxu0 0.0
        %1733 = vmatprep.subr.mxu0 0.0
        %1734 = vmatpush1.msra.mxu0 0.0
        %1735 = vmatprep.subr.mxu0 0.0
        %1736 = vmatpush1.msra.mxu0 0.0
        %1737 = vmatprep.subr.mxu0 0.0
        %1738 = vmatpush1.msra.mxu0 0.0
        %1739 = vmatprep.subr.mxu0 0.0
        %1740 = vmatpush1.msra.mxu0 0.0
        %1741 = vmatprep.subr.mxu0 0.0
        %1742 = vmatpush1.msra.mxu0 %v1642
        %1743 = vmatprep.subr.mxu0 0.0
        %1744 = vmatpush1.msra.mxu0 %v1641
        %1745 = vmatprep.subr.mxu0 0.0
        %1746 = vmatpush2.msra.mxu0 0.0
        %1747 = vmatprep.subr.mxu0 0.0
        %1748 = vmatpush2.msra.mxu0 0.0
        %1749 = vmatprep.subr.mxu0 0.0
        %1750 = vmatpush2.msra.mxu0 0.0
        %1751 = vmatprep.subr.mxu0 0.0
        %1752 = vmatpush2.msra.mxu0 0.0
        %1753 = vmatprep.subr.mxu0 0.0
        %1754 = vmatpush2.msra.mxu0 0.0
        %1755 = vmatprep.subr.mxu0 0.0
        %1756 = vmatpush2.msra.mxu0 0.0
        %1757 = vmatprep.subr.mxu0 0.0
        %1758 = vmatpush2.msra.mxu0 0.0
        %1759 = vmatprep.subr.mxu0 0.0
        %1760 = vmatpush2.msra.mxu0 0.0
        %1761 = vmatprep.subr.mxu0 0.0
        %1762 = vmatpush2.msra.mxu0 0.0
        %1763 = vmatprep.subr.mxu0 0.0
        %1764 = vmatpush2.msra.mxu0 0.0
        %1765 = vmatprep.subr.mxu0 0.0
        %1766 = vmatpush2.msra.mxu0 0.0
        %1767 = vmatprep.subr.mxu0 0.0
        %1768 = vmatpush2.msra.mxu0 0.0
        %1769 = vmatprep.subr.mxu0 0.0
        %1770 = vmatpush2.msra.mxu0 0.0
        %1771 = vmatprep.subr.mxu0 0.0
        %1772 = vmatpush2.msra.mxu0 0.0
        %1773 = vmatprep.subr.mxu0 0.0
        %1774 = vmatpush2.msra.mxu0 0.0
        %1775 = vmatprep.subr.mxu0 0.0
        %1776 = vmatpush2.msra.mxu0 0.0
        %1777 = vmatprep.mubr.f32.mxu0 0.0
        %1778 = vmatmul.mubr.f32.gmra.mxu0 %v290
        %v1779 = vpop.f32.mrf.mxu0
        %v1780 = vadd.f32 0.0, %v1779
        %v1781 = vpop.f32.mrf.mxu0
        %1782 = vdwg.mxu0
        %1783 = vmatprep.subr.mxu0 0.0
        %1784 = vmatpush1.msra.mxu0 0.0
        %1785 = vmatprep.subr.mxu0 0.0
        %1786 = vmatpush1.msra.mxu0 0.0
        %1787 = vmatprep.subr.mxu0 0.0
        %1788 = vmatpush1.msra.mxu0 0.0
        %1789 = vmatprep.subr.mxu0 0.0
        %1790 = vmatpush1.msra.mxu0 0.0
        %1791 = vmatprep.subr.mxu0 0.0
        %1792 = vmatpush1.msra.mxu0 0.0
        %1793 = vmatprep.subr.mxu0 0.0
        %1794 = vmatpush1.msra.mxu0 0.0
        %1795 = vmatprep.subr.mxu0 0.0
        %1796 = vmatpush1.msra.mxu0 0.0
        %1797 = vmatprep.subr.mxu0 0.0
        %1798 = vmatpush1.msra.mxu0 0.0
        %1799 = vmatprep.subr.mxu0 0.0
        %1800 = vmatpush1.msra.mxu0 0.0
        %1801 = vmatprep.subr.mxu0 0.0
        %1802 = vmatpush1.msra.mxu0 0.0
        %1803 = vmatprep.subr.mxu0 0.0
        %1804 = vmatpush1.msra.mxu0 0.0
        %1805 = vmatprep.subr.mxu0 0.0
        %1806 = vmatpush1.msra.mxu0 0.0
        %1807 = vmatprep.subr.mxu0 0.0
        %1808 = vmatpush1.msra.mxu0 0.0
        %1809 = vmatprep.subr.mxu0 0.0
        %1810 = vmatpush1.msra.mxu0 0.0
        %1811 = vmatprep.subr.mxu0 0.0
        %1812 = vmatpush1.msra.mxu0 %v1642
        %1813 = vmatprep.subr.mxu0 0.0
        %1814 = vmatpush1.msra.mxu0 %v1641
        %1815 = vmatprep.subr.mxu0 0.0
        %1816 = vmatpush2.msra.mxu0 0.0
        %1817 = vmatprep.subr.mxu0 0.0
        %1818 = vmatpush2.msra.mxu0 0.0
        %1819 = vmatprep.subr.mxu0 0.0
        %1820 = vmatpush2.msra.mxu0 0.0
        %1821 = vmatprep.subr.mxu0 0.0
        %1822 = vmatpush2.msra.mxu0 0.0
        %1823 = vmatprep.subr.mxu0 0.0
        %1824 = vmatpush2.msra.mxu0 0.0
        %1825 = vmatprep.subr.mxu0 0.0
        %1826 = vmatpush2.msra.mxu0 0.0
        %1827 = vmatprep.subr.mxu0 0.0
        %1828 = vmatpush2.msra.mxu0 0.0
        %1829 = vmatprep.subr.mxu0 0.0
        %1830 = vmatpush2.msra.mxu0 0.0
        %1831 = vmatprep.subr.mxu0 0.0
        %1832 = vmatpush2.msra.mxu0 0.0
        %1833 = vmatprep.subr.mxu0 0.0
        %1834 = vmatpush2.msra.mxu0 0.0
        %1835 = vmatprep.subr.mxu0 0.0
        %1836 = vmatpush2.msra.mxu0 0.0
        %1837 = vmatprep.subr.mxu0 0.0
        %1838 = vmatpush2.msra.mxu0 0.0
        %1839 = vmatprep.subr.mxu0 0.0
        %1840 = vmatpush2.msra.mxu0 0.0
        %1841 = vmatprep.subr.mxu0 0.0
        %1842 = vmatpush2.msra.mxu0 0.0
        %1843 = vmatprep.subr.mxu0 0.0
        %1844 = vmatpush2.msra.mxu0 0.0
        %1845 = vmatprep.subr.mxu0 0.0
        %1846 = vmatpush2.msra.mxu0 0.0
        %1847 = vmatprep.mubr.f32.mxu0 0.0
        %1848 = vmatmul.mubr.f32.gmra.mxu0 %v363
        %v1849 = vpop.f32.mrf.mxu0
        %v1850 = vadd.f32 0.0, %v1849
        %v1851 = vpop.f32.mrf.mxu0
        %1852 = vdwg.mxu0
        %1853 = vmatprep.subr.mxu0 0.0
        %1854 = vmatpush1.msra.mxu0 0.0
        %1855 = vmatprep.subr.mxu0 0.0
        %1856 = vmatpush1.msra.mxu0 0.0
        %1857 = vmatprep.subr.mxu0 0.0
        %1858 = vmatpush1.msra.mxu0 0.0
        %1859 = vmatprep.subr.mxu0 0.0
        %1860 = vmatpush1.msra.mxu0 0.0
        %1861 = vmatprep.subr.mxu0 0.0
        %1862 = vmatpush1.msra.mxu0 0.0
        %1863 = vmatprep.subr.mxu0 0.0
        %1864 = vmatpush1.msra.mxu0 0.0
        %1865 = vmatprep.subr.mxu0 0.0
        %1866 = vmatpush1.msra.mxu0 0.0
        %1867 = vmatprep.subr.mxu0 0.0
        %1868 = vmatpush1.msra.mxu0 0.0
        %1869 = vmatprep.subr.mxu0 0.0
        %1870 = vmatpush1.msra.mxu0 0.0
        %1871 = vmatprep.subr.mxu0 0.0
        %1872 = vmatpush1.msra.mxu0 0.0
        %1873 = vmatprep.subr.mxu0 0.0
        %1874 = vmatpush1.msra.mxu0 0.0
        %1875 = vmatprep.subr.mxu0 0.0
        %1876 = vmatpush1.msra.mxu0 0.0
        %1877 = vmatprep.subr.mxu0 0.0
        %1878 = vmatpush1.msra.mxu0 0.0
        %1879 = vmatprep.subr.mxu0 0.0
        %1880 = vmatpush1.msra.mxu0 0.0
        %1881 = vmatprep.subr.mxu0 0.0
        %1882 = vmatpush1.msra.mxu0 %v1642
        %1883 = vmatprep.subr.mxu0 0.0
        %1884 = vmatpush1.msra.mxu0 %v1641
        %1885 = vmatprep.subr.mxu0 0.0
        %1886 = vmatpush2.msra.mxu0 0.0
        %1887 = vmatprep.subr.mxu0 0.0
        %1888 = vmatpush2.msra.mxu0 0.0
        %1889 = vmatprep.subr.mxu0 0.0
        %1890 = vmatpush2.msra.mxu0 0.0
        %1891 = vmatprep.subr.mxu0 0.0
        %1892 = vmatpush2.msra.mxu0 0.0
        %1893 = vmatprep.subr.mxu0 0.0
        %1894 = vmatpush2.msra.mxu0 0.0
        %1895 = vmatprep.subr.mxu0 0.0
        %1896 = vmatpush2.msra.mxu0 0.0
        %1897 = vmatprep.subr.mxu0 0.0
        %1898 = vmatpush2.msra.mxu0 0.0
        %1899 = vmatprep.subr.mxu0 0.0
        %1900 = vmatpush2.msra.mxu0 0.0
        %1901 = vmatprep.subr.mxu0 0.0
        %1902 = vmatpush2.msra.mxu0 0.0
        %1903 = vmatprep.subr.mxu0 0.0
        %1904 = vmatpush2.msra.mxu0 0.0
        %1905 = vmatprep.subr.mxu0 0.0
        %1906 = vmatpush2.msra.mxu0 0.0
        %1907 = vmatprep.subr.mxu0 0.0
        %1908 = vmatpush2.msra.mxu0 0.0
        %1909 = vmatprep.subr.mxu0 0.0
        %1910 = vmatpush2.msra.mxu0 0.0
        %1911 = vmatprep.subr.mxu0 0.0
        %1912 = vmatpush2.msra.mxu0 0.0
        %1913 = vmatprep.subr.mxu0 0.0
        %1914 = vmatpush2.msra.mxu0 0.0
        %1915 = vmatprep.subr.mxu0 0.0
        %1916 = vmatpush2.msra.mxu0 0.0
        %1917 = vmatprep.mubr.f32.mxu0 0.0
        %1918 = vmatmul.mubr.f32.gmra.mxu0 %v436
        %v1919 = vpop.f32.mrf.mxu0
        %v1920 = vadd.f32 0.0, %v1919
        %v1921 = vpop.f32.mrf.mxu0
        %1922 = vdwg.mxu0
        %v1924 = vsel %vm215, %v1710, 0
        %1926 = vmatprep.subr.mxu0 0.0
        %1927 = vmatpush1.msra.mxu0 0.0
        %1928 = vmatprep.subr.mxu0 0.0
        %1929 = vmatpush1.msra.mxu0 0.0
        %1930 = vmatprep.subr.mxu0 0.0
        %1931 = vmatpush1.msra.mxu0 0.0
        %1932 = vmatprep.subr.mxu0 0.0
        %1933 = vmatpush1.msra.mxu0 0.0
        %1934 = vmatprep.subr.mxu0 0.0
        %1935 = vmatpush1.msra.mxu0 0.0
        %1936 = vmatprep.subr.mxu0 0.0
        %1937 = vmatpush1.msra.mxu0 0.0
        %1938 = vmatprep.subr.mxu0 0.0
        %1939 = vmatpush1.msra.mxu0 0.0
        %1940 = vmatprep.subr.mxu0 0.0
        %1941 = vmatpush1.msra.mxu0 0.0
        %1942 = vmatprep.subr.mxu0 0.0
        %1943 = vmatpush1.msra.mxu0 0.0
        %1944 = vmatprep.subr.mxu0 0.0
        %1945 = vmatpush1.msra.mxu0 0.0
        %1946 = vmatprep.subr.mxu0 0.0
        %1947 = vmatpush1.msra.mxu0 0.0
        %1948 = vmatprep.subr.mxu0 0.0
        %1949 = vmatpush1.msra.mxu0 0.0
        %1950 = vmatprep.subr.mxu0 0.0
        %1951 = vmatpush1.msra.mxu0 0.0
        %1952 = vmatprep.subr.mxu0 0.0
        %1953 = vmatpush1.msra.mxu0 0.0
        %1954 = vmatprep.subr.mxu0 0.0
        %1955 = vmatpush1.msra.mxu0 %v198
        %1956 = vmatprep.subr.mxu0 0.0
        %1957 = vmatpush1.msra.mxu0 %v197
        %1958 = vmatprep.subr.mxu0 0.0
        %1959 = vmatpush2.msra.mxu0 0.0
        %1960 = vmatprep.subr.mxu0 0.0
        %1961 = vmatpush2.msra.mxu0 0.0
        %1962 = vmatprep.subr.mxu0 0.0
        %1963 = vmatpush2.msra.mxu0 0.0
        %1964 = vmatprep.subr.mxu0 0.0
        %1965 = vmatpush2.msra.mxu0 0.0
        %1966 = vmatprep.subr.mxu0 0.0
        %1967 = vmatpush2.msra.mxu0 0.0
        %1968 = vmatprep.subr.mxu0 0.0
        %1969 = vmatpush2.msra.mxu0 0.0
        %1970 = vmatprep.subr.mxu0 0.0
        %1971 = vmatpush2.msra.mxu0 0.0
        %1972 = vmatprep.subr.mxu0 0.0
        %1973 = vmatpush2.msra.mxu0 0.0
        %1974 = vmatprep.subr.mxu0 0.0
        %1975 = vmatpush2.msra.mxu0 0.0
        %1976 = vmatprep.subr.mxu0 0.0
        %1977 = vmatpush2.msra.mxu0 0.0
        %1978 = vmatprep.subr.mxu0 0.0
        %1979 = vmatpush2.msra.mxu0 0.0
        %1980 = vmatprep.subr.mxu0 0.0
        %1981 = vmatpush2.msra.mxu0 0.0
        %1982 = vmatprep.subr.mxu0 0.0
        %1983 = vmatpush2.msra.mxu0 0.0
        %1984 = vmatprep.subr.mxu0 0.0
        %1985 = vmatpush2.msra.mxu0 0.0
        %1986 = vmatprep.subr.mxu0 0.0
        %1987 = vmatpush2.msra.mxu0 0.0
        %1988 = vmatprep.subr.mxu0 0.0
        %1989 = vmatpush2.msra.mxu0 0.0
        %1990 = vmatprep.mubr.f32.mxu0 0.0
        %1991 = vmatmul.mubr.f32.gmra.mxu0 %v1924
        %v1992 = vpop.f32.mrf.mxu0
        %v1993 = vadd.f32 0.0, %v1992
        %v1994 = vpop.f32.mrf.mxu0
        %1995 = vdwg.mxu0
        %1996 = vmatprep.subr.mxu0 0.0
        %1997 = vmatpush1.msra.mxu0 0.0
        %1998 = vmatprep.subr.mxu0 0.0
        %1999 = vmatpush1.msra.mxu0 0.0
        %2000 = vmatprep.subr.mxu0 0.0
        %2001 = vmatpush1.msra.mxu0 0.0
        %2002 = vmatprep.subr.mxu0 0.0
        %2003 = vmatpush1.msra.mxu0 0.0
        %2004 = vmatprep.subr.mxu0 0.0
        %2005 = vmatpush1.msra.mxu0 0.0
        %2006 = vmatprep.subr.mxu0 0.0
        %2007 = vmatpush1.msra.mxu0 0.0
        %2008 = vmatprep.subr.mxu0 0.0
        %2009 = vmatpush1.msra.mxu0 0.0
        %2010 = vmatprep.subr.mxu0 0.0
        %2011 = vmatpush1.msra.mxu0 0.0
        %2012 = vmatprep.subr.mxu0 0.0
        %2013 = vmatpush1.msra.mxu0 0.0
        %2014 = vmatprep.subr.mxu0 0.0
        %2015 = vmatpush1.msra.mxu0 0.0
        %2016 = vmatprep.subr.mxu0 0.0
        %2017 = vmatpush1.msra.mxu0 0.0
        %2018 = vmatprep.subr.mxu0 0.0
        %2019 = vmatpush1.msra.mxu0 0.0
        %2020 = vmatprep.subr.mxu0 0.0
        %2021 = vmatpush1.msra.mxu0 0.0
        %2022 = vmatprep.subr.mxu0 0.0
        %2023 = vmatpush1.msra.mxu0 0.0
        %2024 = vmatprep.subr.mxu0 0.0
        %2025 = vmatpush1.msra.mxu0 %v202
        %2026 = vmatprep.subr.mxu0 0.0
        %2027 = vmatpush1.msra.mxu0 %v201
        %2028 = vmatprep.subr.mxu0 0.0
        %2029 = vmatpush2.msra.mxu0 0.0
        %2030 = vmatprep.subr.mxu0 0.0
        %2031 = vmatpush2.msra.mxu0 0.0
        %2032 = vmatprep.subr.mxu0 0.0
        %2033 = vmatpush2.msra.mxu0 0.0
        %2034 = vmatprep.subr.mxu0 0.0
        %2035 = vmatpush2.msra.mxu0 0.0
        %2036 = vmatprep.subr.mxu0 0.0
        %2037 = vmatpush2.msra.mxu0 0.0
        %2038 = vmatprep.subr.mxu0 0.0
        %2039 = vmatpush2.msra.mxu0 0.0
        %2040 = vmatprep.subr.mxu0 0.0
        %2041 = vmatpush2.msra.mxu0 0.0
        %2042 = vmatprep.subr.mxu0 0.0
        %2043 = vmatpush2.msra.mxu0 0.0
        %2044 = vmatprep.subr.mxu0 0.0
        %2045 = vmatpush2.msra.mxu0 0.0
        %2046 = vmatprep.subr.mxu0 0.0
        %2047 = vmatpush2.msra.mxu0 0.0
        %2048 = vmatprep.subr.mxu0 0.0
        %2049 = vmatpush2.msra.mxu0 0.0
        %2050 = vmatprep.subr.mxu0 0.0
        %2051 = vmatpush2.msra.mxu0 0.0
        %2052 = vmatprep.subr.mxu0 0.0
        %2053 = vmatpush2.msra.mxu0 0.0
        %2054 = vmatprep.subr.mxu0 0.0
        %2055 = vmatpush2.msra.mxu0 0.0
        %2056 = vmatprep.subr.mxu0 0.0
        %2057 = vmatpush2.msra.mxu0 0.0
        %2058 = vmatprep.subr.mxu0 0.0
        %2059 = vmatpush2.msra.mxu0 0.0
        %2060 = vmatprep.mubr.f32.mxu0 0.0
        %2061 = vmatmul.mubr.f32.gmra.mxu0 %v1924
        %v2062 = vpop.f32.mrf.mxu0
        %v2063 = vadd.f32 0.0, %v2062
        %v2064 = vpop.f32.mrf.mxu0
        %2065 = vdwg.mxu0
        %2066 = vmatprep.subr.mxu0 0.0
        %2067 = vmatpush1.msra.mxu0 0.0
        %2068 = vmatprep.subr.mxu0 0.0
        %2069 = vmatpush1.msra.mxu0 0.0
        %2070 = vmatprep.subr.mxu0 0.0
        %2071 = vmatpush1.msra.mxu0 0.0
        %2072 = vmatprep.subr.mxu0 0.0
        %2073 = vmatpush1.msra.mxu0 0.0
        %2074 = vmatprep.subr.mxu0 0.0
        %2075 = vmatpush1.msra.mxu0 0.0
        %2076 = vmatprep.subr.mxu0 0.0
        %2077 = vmatpush1.msra.mxu0 0.0
        %2078 = vmatprep.subr.mxu0 0.0
        %2079 = vmatpush1.msra.mxu0 0.0
        %2080 = vmatprep.subr.mxu0 0.0
        %2081 = vmatpush1.msra.mxu0 0.0
        %2082 = vmatprep.subr.mxu0 0.0
        %2083 = vmatpush1.msra.mxu0 0.0
        %2084 = vmatprep.subr.mxu0 0.0
        %2085 = vmatpush1.msra.mxu0 0.0
        %2086 = vmatprep.subr.mxu0 0.0
        %2087 = vmatpush1.msra.mxu0 0.0
        %2088 = vmatprep.subr.mxu0 0.0
        %2089 = vmatpush1.msra.mxu0 0.0
        %2090 = vmatprep.subr.mxu0 0.0
        %2091 = vmatpush1.msra.mxu0 0.0
        %2092 = vmatprep.subr.mxu0 0.0
        %2093 = vmatpush1.msra.mxu0 0.0
        %2094 = vmatprep.subr.mxu0 0.0
        %2095 = vmatpush1.msra.mxu0 %v207
        %2096 = vmatprep.subr.mxu0 0.0
        %2097 = vmatpush1.msra.mxu0 %v206
        %2098 = vmatprep.subr.mxu0 0.0
        %2099 = vmatpush2.msra.mxu0 0.0
        %2100 = vmatprep.subr.mxu0 0.0
        %2101 = vmatpush2.msra.mxu0 0.0
        %2102 = vmatprep.subr.mxu0 0.0
        %2103 = vmatpush2.msra.mxu0 0.0
        %2104 = vmatprep.subr.mxu0 0.0
        %2105 = vmatpush2.msra.mxu0 0.0
        %2106 = vmatprep.subr.mxu0 0.0
        %2107 = vmatpush2.msra.mxu0 0.0
        %2108 = vmatprep.subr.mxu0 0.0
        %2109 = vmatpush2.msra.mxu0 0.0
        %2110 = vmatprep.subr.mxu0 0.0
        %2111 = vmatpush2.msra.mxu0 0.0
        %2112 = vmatprep.subr.mxu0 0.0
        %2113 = vmatpush2.msra.mxu0 0.0
        %2114 = vmatprep.subr.mxu0 0.0
        %2115 = vmatpush2.msra.mxu0 0.0
        %2116 = vmatprep.subr.mxu0 0.0
        %2117 = vmatpush2.msra.mxu0 0.0
        %2118 = vmatprep.subr.mxu0 0.0
        %2119 = vmatpush2.msra.mxu0 0.0
        %2120 = vmatprep.subr.mxu0 0.0
        %2121 = vmatpush2.msra.mxu0 0.0
        %2122 = vmatprep.subr.mxu0 0.0
        %2123 = vmatpush2.msra.mxu0 0.0
        %2124 = vmatprep.subr.mxu0 0.0
        %2125 = vmatpush2.msra.mxu0 0.0
        %2126 = vmatprep.subr.mxu0 0.0
        %2127 = vmatpush2.msra.mxu0 0.0
        %2128 = vmatprep.subr.mxu0 0.0
        %2129 = vmatpush2.msra.mxu0 0.0
        %2130 = vmatprep.mubr.f32.mxu0 0.0
        %2131 = vmatmul.mubr.f32.gmra.mxu0 %v1924
        %v2132 = vpop.f32.mrf.mxu0
        %v2133 = vadd.f32 0.0, %v2132
        %v2134 = vpop.f32.mrf.mxu0
        %2135 = vdwg.mxu0
        %2136 = vmatprep.subr.mxu0 0.0
        %2137 = vmatpush1.msra.mxu0 0.0
        %2138 = vmatprep.subr.mxu0 0.0
        %2139 = vmatpush1.msra.mxu0 0.0
        %2140 = vmatprep.subr.mxu0 0.0
        %2141 = vmatpush1.msra.mxu0 0.0
        %2142 = vmatprep.subr.mxu0 0.0
        %2143 = vmatpush1.msra.mxu0 0.0
        %2144 = vmatprep.subr.mxu0 0.0
        %2145 = vmatpush1.msra.mxu0 0.0
        %2146 = vmatprep.subr.mxu0 0.0
        %2147 = vmatpush1.msra.mxu0 0.0
        %2148 = vmatprep.subr.mxu0 0.0
        %2149 = vmatpush1.msra.mxu0 0.0
        %2150 = vmatprep.subr.mxu0 0.0
        %2151 = vmatpush1.msra.mxu0 0.0
        %2152 = vmatprep.subr.mxu0 0.0
        %2153 = vmatpush1.msra.mxu0 0.0
        %2154 = vmatprep.subr.mxu0 0.0
        %2155 = vmatpush1.msra.mxu0 0.0
        %2156 = vmatprep.subr.mxu0 0.0
        %2157 = vmatpush1.msra.mxu0 0.0
        %2158 = vmatprep.subr.mxu0 0.0
        %2159 = vmatpush1.msra.mxu0 0.0
        %2160 = vmatprep.subr.mxu0 0.0
        %2161 = vmatpush1.msra.mxu0 0.0
        %2162 = vmatprep.subr.mxu0 0.0
        %2163 = vmatpush1.msra.mxu0 0.0
        %2164 = vmatprep.subr.mxu0 0.0
        %2165 = vmatpush1.msra.mxu0 %v212
        %2166 = vmatprep.subr.mxu0 0.0
        %2167 = vmatpush1.msra.mxu0 %v211
        %2168 = vmatprep.subr.mxu0 0.0
        %2169 = vmatpush2.msra.mxu0 0.0
        %2170 = vmatprep.subr.mxu0 0.0
        %2171 = vmatpush2.msra.mxu0 0.0
        %2172 = vmatprep.subr.mxu0 0.0
        %2173 = vmatpush2.msra.mxu0 0.0
        %2174 = vmatprep.subr.mxu0 0.0
        %2175 = vmatpush2.msra.mxu0 0.0
        %2176 = vmatprep.subr.mxu0 0.0
        %2177 = vmatpush2.msra.mxu0 0.0
        %2178 = vmatprep.subr.mxu0 0.0
        %2179 = vmatpush2.msra.mxu0 0.0
        %2180 = vmatprep.subr.mxu0 0.0
        %2181 = vmatpush2.msra.mxu0 0.0
        %2182 = vmatprep.subr.mxu0 0.0
        %2183 = vmatpush2.msra.mxu0 0.0
        %2184 = vmatprep.subr.mxu0 0.0
        %2185 = vmatpush2.msra.mxu0 0.0
        %2186 = vmatprep.subr.mxu0 0.0
        %2187 = vmatpush2.msra.mxu0 0.0
        %2188 = vmatprep.subr.mxu0 0.0
        %2189 = vmatpush2.msra.mxu0 0.0
        %2190 = vmatprep.subr.mxu0 0.0
        %2191 = vmatpush2.msra.mxu0 0.0
        %2192 = vmatprep.subr.mxu0 0.0
        %2193 = vmatpush2.msra.mxu0 0.0
        %2194 = vmatprep.subr.mxu0 0.0
        %2195 = vmatpush2.msra.mxu0 0.0
        %2196 = vmatprep.subr.mxu0 0.0
        %2197 = vmatpush2.msra.mxu0 0.0
        %2198 = vmatprep.subr.mxu0 0.0
        %2199 = vmatpush2.msra.mxu0 0.0
        %2200 = vmatprep.mubr.f32.mxu0 0.0
        %2201 = vmatmul.mubr.f32.gmra.mxu0 %v1924
        %v2202 = vpop.f32.mrf.mxu0
        %v2203 = vadd.f32 0.0, %v2202
        %v2204 = vpop.f32.mrf.mxu0
        %2205 = vdwg.mxu0
        %v2207 = vsel %vm215, %v1780, 0
        %2209 = vmatprep.subr.mxu0 0.0
        %2210 = vmatpush1.msra.mxu0 0.0
        %2211 = vmatprep.subr.mxu0 0.0
        %2212 = vmatpush1.msra.mxu0 0.0
        %2213 = vmatprep.subr.mxu0 0.0
        %2214 = vmatpush1.msra.mxu0 0.0
        %2215 = vmatprep.subr.mxu0 0.0
        %2216 = vmatpush1.msra.mxu0 0.0
        %2217 = vmatprep.subr.mxu0 0.0
        %2218 = vmatpush1.msra.mxu0 0.0
        %2219 = vmatprep.subr.mxu0 0.0
        %2220 = vmatpush1.msra.mxu0 0.0
        %2221 = vmatprep.subr.mxu0 0.0
        %2222 = vmatpush1.msra.mxu0 0.0
        %2223 = vmatprep.subr.mxu0 0.0
        %2224 = vmatpush1.msra.mxu0 0.0
        %2225 = vmatprep.subr.mxu0 0.0
        %2226 = vmatpush1.msra.mxu0 0.0
        %2227 = vmatprep.subr.mxu0 0.0
        %2228 = vmatpush1.msra.mxu0 0.0
        %2229 = vmatprep.subr.mxu0 0.0
        %2230 = vmatpush1.msra.mxu0 0.0
        %2231 = vmatprep.subr.mxu0 0.0
        %2232 = vmatpush1.msra.mxu0 0.0
        %2233 = vmatprep.subr.mxu0 0.0
        %2234 = vmatpush1.msra.mxu0 0.0
        %2235 = vmatprep.subr.mxu0 0.0
        %2236 = vmatpush1.msra.mxu0 0.0
        %2237 = vmatprep.subr.mxu0 0.0
        %2238 = vmatpush1.msra.mxu0 %v198
        %2239 = vmatprep.subr.mxu0 0.0
        %2240 = vmatpush1.msra.mxu0 %v197
        %2241 = vmatprep.subr.mxu0 0.0
        %2242 = vmatpush2.msra.mxu0 0.0
        %2243 = vmatprep.subr.mxu0 0.0
        %2244 = vmatpush2.msra.mxu0 0.0
        %2245 = vmatprep.subr.mxu0 0.0
        %2246 = vmatpush2.msra.mxu0 0.0
        %2247 = vmatprep.subr.mxu0 0.0
        %2248 = vmatpush2.msra.mxu0 0.0
        %2249 = vmatprep.subr.mxu0 0.0
        %2250 = vmatpush2.msra.mxu0 0.0
        %2251 = vmatprep.subr.mxu0 0.0
        %2252 = vmatpush2.msra.mxu0 0.0
        %2253 = vmatprep.subr.mxu0 0.0
        %2254 = vmatpush2.msra.mxu0 0.0
        %2255 = vmatprep.subr.mxu0 0.0
        %2256 = vmatpush2.msra.mxu0 0.0
        %2257 = vmatprep.subr.mxu0 0.0
        %2258 = vmatpush2.msra.mxu0 0.0
        %2259 = vmatprep.subr.mxu0 0.0
        %2260 = vmatpush2.msra.mxu0 0.0
        %2261 = vmatprep.subr.mxu0 0.0
        %2262 = vmatpush2.msra.mxu0 0.0
        %2263 = vmatprep.subr.mxu0 0.0
        %2264 = vmatpush2.msra.mxu0 0.0
        %2265 = vmatprep.subr.mxu0 0.0
        %2266 = vmatpush2.msra.mxu0 0.0
        %2267 = vmatprep.subr.mxu0 0.0
        %2268 = vmatpush2.msra.mxu0 0.0
        %2269 = vmatprep.subr.mxu0 0.0
        %2270 = vmatpush2.msra.mxu0 0.0
        %2271 = vmatprep.subr.mxu0 0.0
        %2272 = vmatpush2.msra.mxu0 0.0
        %2273 = vmatprep.mubr.f32.mxu0 0.0
        %2274 = vmatmul.mubr.f32.gmra.mxu0 %v2207
        %v2275 = vpop.f32.mrf.mxu0
        %v2276 = vadd.f32 0.0, %v2275
        %v2277 = vpop.f32.mrf.mxu0
        %2278 = vdwg.mxu0
        %2279 = vmatprep.subr.mxu0 0.0
        %2280 = vmatpush1.msra.mxu0 0.0
        %2281 = vmatprep.subr.mxu0 0.0
        %2282 = vmatpush1.msra.mxu0 0.0
        %2283 = vmatprep.subr.mxu0 0.0
        %2284 = vmatpush1.msra.mxu0 0.0
        %2285 = vmatprep.subr.mxu0 0.0
        %2286 = vmatpush1.msra.mxu0 0.0
        %2287 = vmatprep.subr.mxu0 0.0
        %2288 = vmatpush1.msra.mxu0 0.0
        %2289 = vmatprep.subr.mxu0 0.0
        %2290 = vmatpush1.msra.mxu0 0.0
        %2291 = vmatprep.subr.mxu0 0.0
        %2292 = vmatpush1.msra.mxu0 0.0
        %2293 = vmatprep.subr.mxu0 0.0
        %2294 = vmatpush1.msra.mxu0 0.0
        %2295 = vmatprep.subr.mxu0 0.0
        %2296 = vmatpush1.msra.mxu0 0.0
        %2297 = vmatprep.subr.mxu0 0.0
        %2298 = vmatpush1.msra.mxu0 0.0
        %2299 = vmatprep.subr.mxu0 0.0
        %2300 = vmatpush1.msra.mxu0 0.0
        %2301 = vmatprep.subr.mxu0 0.0
        %2302 = vmatpush1.msra.mxu0 0.0
        %2303 = vmatprep.subr.mxu0 0.0
        %2304 = vmatpush1.msra.mxu0 0.0
        %2305 = vmatprep.subr.mxu0 0.0
        %2306 = vmatpush1.msra.mxu0 0.0
        %2307 = vmatprep.subr.mxu0 0.0
        %2308 = vmatpush1.msra.mxu0 %v202
        %2309 = vmatprep.subr.mxu0 0.0
        %2310 = vmatpush1.msra.mxu0 %v201
        %2311 = vmatprep.subr.mxu0 0.0
        %2312 = vmatpush2.msra.mxu0 0.0
        %2313 = vmatprep.subr.mxu0 0.0
        %2314 = vmatpush2.msra.mxu0 0.0
        %2315 = vmatprep.subr.mxu0 0.0
        %2316 = vmatpush2.msra.mxu0 0.0
        %2317 = vmatprep.subr.mxu0 0.0
        %2318 = vmatpush2.msra.mxu0 0.0
        %2319 = vmatprep.subr.mxu0 0.0
        %2320 = vmatpush2.msra.mxu0 0.0
        %2321 = vmatprep.subr.mxu0 0.0
        %2322 = vmatpush2.msra.mxu0 0.0
        %2323 = vmatprep.subr.mxu0 0.0
        %2324 = vmatpush2.msra.mxu0 0.0
        %2325 = vmatprep.subr.mxu0 0.0
        %2326 = vmatpush2.msra.mxu0 0.0
        %2327 = vmatprep.subr.mxu0 0.0
        %2328 = vmatpush2.msra.mxu0 0.0
        %2329 = vmatprep.subr.mxu0 0.0
        %2330 = vmatpush2.msra.mxu0 0.0
        %2331 = vmatprep.subr.mxu0 0.0
        %2332 = vmatpush2.msra.mxu0 0.0
        %2333 = vmatprep.subr.mxu0 0.0
        %2334 = vmatpush2.msra.mxu0 0.0
        %2335 = vmatprep.subr.mxu0 0.0
        %2336 = vmatpush2.msra.mxu0 0.0
        %2337 = vmatprep.subr.mxu0 0.0
        %2338 = vmatpush2.msra.mxu0 0.0
        %2339 = vmatprep.subr.mxu0 0.0
        %2340 = vmatpush2.msra.mxu0 0.0
        %2341 = vmatprep.subr.mxu0 0.0
        %2342 = vmatpush2.msra.mxu0 0.0
        %2343 = vmatprep.mubr.f32.mxu0 0.0
        %2344 = vmatmul.mubr.f32.gmra.mxu0 %v2207
        %v2345 = vpop.f32.mrf.mxu0
        %v2346 = vadd.f32 0.0, %v2345
        %v2347 = vpop.f32.mrf.mxu0
        %2348 = vdwg.mxu0
        %2349 = vmatprep.subr.mxu0 0.0
        %2350 = vmatpush1.msra.mxu0 0.0
        %2351 = vmatprep.subr.mxu0 0.0
        %2352 = vmatpush1.msra.mxu0 0.0
        %2353 = vmatprep.subr.mxu0 0.0
        %2354 = vmatpush1.msra.mxu0 0.0
        %2355 = vmatprep.subr.mxu0 0.0
        %2356 = vmatpush1.msra.mxu0 0.0
        %2357 = vmatprep.subr.mxu0 0.0
        %2358 = vmatpush1.msra.mxu0 0.0
        %2359 = vmatprep.subr.mxu0 0.0
        %2360 = vmatpush1.msra.mxu0 0.0
        %2361 = vmatprep.subr.mxu0 0.0
        %2362 = vmatpush1.msra.mxu0 0.0
        %2363 = vmatprep.subr.mxu0 0.0
        %2364 = vmatpush1.msra.mxu0 0.0
        %2365 = vmatprep.subr.mxu0 0.0
        %2366 = vmatpush1.msra.mxu0 0.0
        %2367 = vmatprep.subr.mxu0 0.0
        %2368 = vmatpush1.msra.mxu0 0.0
        %2369 = vmatprep.subr.mxu0 0.0
        %2370 = vmatpush1.msra.mxu0 0.0
        %2371 = vmatprep.subr.mxu0 0.0
        %2372 = vmatpush1.msra.mxu0 0.0
        %2373 = vmatprep.subr.mxu0 0.0
        %2374 = vmatpush1.msra.mxu0 0.0
        %2375 = vmatprep.subr.mxu0 0.0
        %2376 = vmatpush1.msra.mxu0 0.0
        %2377 = vmatprep.subr.mxu0 0.0
        %2378 = vmatpush1.msra.mxu0 %v207
        %2379 = vmatprep.subr.mxu0 0.0
        %2380 = vmatpush1.msra.mxu0 %v206
        %2381 = vmatprep.subr.mxu0 0.0
        %2382 = vmatpush2.msra.mxu0 0.0
        %2383 = vmatprep.subr.mxu0 0.0
        %2384 = vmatpush2.msra.mxu0 0.0
        %2385 = vmatprep.subr.mxu0 0.0
        %2386 = vmatpush2.msra.mxu0 0.0
        %2387 = vmatprep.subr.mxu0 0.0
        %2388 = vmatpush2.msra.mxu0 0.0
        %2389 = vmatprep.subr.mxu0 0.0
        %2390 = vmatpush2.msra.mxu0 0.0
        %2391 = vmatprep.subr.mxu0 0.0
        %2392 = vmatpush2.msra.mxu0 0.0
        %2393 = vmatprep.subr.mxu0 0.0
        %2394 = vmatpush2.msra.mxu0 0.0
        %2395 = vmatprep.subr.mxu0 0.0
        %2396 = vmatpush2.msra.mxu0 0.0
        %2397 = vmatprep.subr.mxu0 0.0
        %2398 = vmatpush2.msra.mxu0 0.0
        %2399 = vmatprep.subr.mxu0 0.0
        %2400 = vmatpush2.msra.mxu0 0.0
        %2401 = vmatprep.subr.mxu0 0.0
        %2402 = vmatpush2.msra.mxu0 0.0
        %2403 = vmatprep.subr.mxu0 0.0
        %2404 = vmatpush2.msra.mxu0 0.0
        %2405 = vmatprep.subr.mxu0 0.0
        %2406 = vmatpush2.msra.mxu0 0.0
        %2407 = vmatprep.subr.mxu0 0.0
        %2408 = vmatpush2.msra.mxu0 0.0
        %2409 = vmatprep.subr.mxu0 0.0
        %2410 = vmatpush2.msra.mxu0 0.0
        %2411 = vmatprep.subr.mxu0 0.0
        %2412 = vmatpush2.msra.mxu0 0.0
        %2413 = vmatprep.mubr.f32.mxu0 0.0
        %2414 = vmatmul.mubr.f32.gmra.mxu0 %v2207
        %v2415 = vpop.f32.mrf.mxu0
        %v2416 = vadd.f32 0.0, %v2415
        %v2417 = vpop.f32.mrf.mxu0
        %2418 = vdwg.mxu0
        %2419 = vmatprep.subr.mxu0 0.0
        %2420 = vmatpush1.msra.mxu0 0.0
        %2421 = vmatprep.subr.mxu0 0.0
        %2422 = vmatpush1.msra.mxu0 0.0
        %2423 = vmatprep.subr.mxu0 0.0
        %2424 = vmatpush1.msra.mxu0 0.0
        %2425 = vmatprep.subr.mxu0 0.0
        %2426 = vmatpush1.msra.mxu0 0.0
        %2427 = vmatprep.subr.mxu0 0.0
        %2428 = vmatpush1.msra.mxu0 0.0
        %2429 = vmatprep.subr.mxu0 0.0
        %2430 = vmatpush1.msra.mxu0 0.0
        %2431 = vmatprep.subr.mxu0 0.0
        %2432 = vmatpush1.msra.mxu0 0.0
        %2433 = vmatprep.subr.mxu0 0.0
        %2434 = vmatpush1.msra.mxu0 0.0
        %2435 = vmatprep.subr.mxu0 0.0
        %2436 = vmatpush1.msra.mxu0 0.0
        %2437 = vmatprep.subr.mxu0 0.0
        %2438 = vmatpush1.msra.mxu0 0.0
        %2439 = vmatprep.subr.mxu0 0.0
        %2440 = vmatpush1.msra.mxu0 0.0
        %2441 = vmatprep.subr.mxu0 0.0
        %2442 = vmatpush1.msra.mxu0 0.0
        %2443 = vmatprep.subr.mxu0 0.0
        %2444 = vmatpush1.msra.mxu0 0.0
        %2445 = vmatprep.subr.mxu0 0.0
        %2446 = vmatpush1.msra.mxu0 0.0
        %2447 = vmatprep.subr.mxu0 0.0
        %2448 = vmatpush1.msra.mxu0 %v212
        %2449 = vmatprep.subr.mxu0 0.0
        %2450 = vmatpush1.msra.mxu0 %v211
        %2451 = vmatprep.subr.mxu0 0.0
        %2452 = vmatpush2.msra.mxu0 0.0
        %2453 = vmatprep.subr.mxu0 0.0
        %2454 = vmatpush2.msra.mxu0 0.0
        %2455 = vmatprep.subr.mxu0 0.0
        %2456 = vmatpush2.msra.mxu0 0.0
        %2457 = vmatprep.subr.mxu0 0.0
        %2458 = vmatpush2.msra.mxu0 0.0
        %2459 = vmatprep.subr.mxu0 0.0
        %2460 = vmatpush2.msra.mxu0 0.0
        %2461 = vmatprep.subr.mxu0 0.0
        %2462 = vmatpush2.msra.mxu0 0.0
        %2463 = vmatprep.subr.mxu0 0.0
        %2464 = vmatpush2.msra.mxu0 0.0
        %2465 = vmatprep.subr.mxu0 0.0
        %2466 = vmatpush2.msra.mxu0 0.0
        %2467 = vmatprep.subr.mxu0 0.0
        %2468 = vmatpush2.msra.mxu0 0.0
        %2469 = vmatprep.subr.mxu0 0.0
        %2470 = vmatpush2.msra.mxu0 0.0
        %2471 = vmatprep.subr.mxu0 0.0
        %2472 = vmatpush2.msra.mxu0 0.0
        %2473 = vmatprep.subr.mxu0 0.0
        %2474 = vmatpush2.msra.mxu0 0.0
        %2475 = vmatprep.subr.mxu0 0.0
        %2476 = vmatpush2.msra.mxu0 0.0
        %2477 = vmatprep.subr.mxu0 0.0
        %2478 = vmatpush2.msra.mxu0 0.0
        %2479 = vmatprep.subr.mxu0 0.0
        %2480 = vmatpush2.msra.mxu0 0.0
        %2481 = vmatprep.subr.mxu0 0.0
        %2482 = vmatpush2.msra.mxu0 0.0
        %2483 = vmatprep.mubr.f32.mxu0 0.0
        %2484 = vmatmul.mubr.f32.gmra.mxu0 %v2207
        %v2485 = vpop.f32.mrf.mxu0
        %v2486 = vadd.f32 0.0, %v2485
        %v2487 = vpop.f32.mrf.mxu0
        %2488 = vdwg.mxu0
        %v2490 = vsel %vm215, %v1850, 0
        %2492 = vmatprep.subr.mxu0 0.0
        %2493 = vmatpush1.msra.mxu0 0.0
        %2494 = vmatprep.subr.mxu0 0.0
        %2495 = vmatpush1.msra.mxu0 0.0
        %2496 = vmatprep.subr.mxu0 0.0
        %2497 = vmatpush1.msra.mxu0 0.0
        %2498 = vmatprep.subr.mxu0 0.0
        %2499 = vmatpush1.msra.mxu0 0.0
        %2500 = vmatprep.subr.mxu0 0.0
        %2501 = vmatpush1.msra.mxu0 0.0
        %2502 = vmatprep.subr.mxu0 0.0
        %2503 = vmatpush1.msra.mxu0 0.0
        %2504 = vmatprep.subr.mxu0 0.0
        %2505 = vmatpush1.msra.mxu0 0.0
        %2506 = vmatprep.subr.mxu0 0.0
        %2507 = vmatpush1.msra.mxu0 0.0
        %2508 = vmatprep.subr.mxu0 0.0
        %2509 = vmatpush1.msra.mxu0 0.0
        %2510 = vmatprep.subr.mxu0 0.0
        %2511 = vmatpush1.msra.mxu0 0.0
        %2512 = vmatprep.subr.mxu0 0.0
        %2513 = vmatpush1.msra.mxu0 0.0
        %2514 = vmatprep.subr.mxu0 0.0
        %2515 = vmatpush1.msra.mxu0 0.0
        %2516 = vmatprep.subr.mxu0 0.0
        %2517 = vmatpush1.msra.mxu0 0.0
        %2518 = vmatprep.subr.mxu0 0.0
        %2519 = vmatpush1.msra.mxu0 0.0
        %2520 = vmatprep.subr.mxu0 0.0
        %2521 = vmatpush1.msra.mxu0 %v198
        %2522 = vmatprep.subr.mxu0 0.0
        %2523 = vmatpush1.msra.mxu0 %v197
        %2524 = vmatprep.subr.mxu0 0.0
        %2525 = vmatpush2.msra.mxu0 0.0
        %2526 = vmatprep.subr.mxu0 0.0
        %2527 = vmatpush2.msra.mxu0 0.0
        %2528 = vmatprep.subr.mxu0 0.0
        %2529 = vmatpush2.msra.mxu0 0.0
        %2530 = vmatprep.subr.mxu0 0.0
        %2531 = vmatpush2.msra.mxu0 0.0
        %2532 = vmatprep.subr.mxu0 0.0
        %2533 = vmatpush2.msra.mxu0 0.0
        %2534 = vmatprep.subr.mxu0 0.0
        %2535 = vmatpush2.msra.mxu0 0.0
        %2536 = vmatprep.subr.mxu0 0.0
        %2537 = vmatpush2.msra.mxu0 0.0
        %2538 = vmatprep.subr.mxu0 0.0
        %2539 = vmatpush2.msra.mxu0 0.0
        %2540 = vmatprep.subr.mxu0 0.0
        %2541 = vmatpush2.msra.mxu0 0.0
        %2542 = vmatprep.subr.mxu0 0.0
        %2543 = vmatpush2.msra.mxu0 0.0
        %2544 = vmatprep.subr.mxu0 0.0
        %2545 = vmatpush2.msra.mxu0 0.0
        %2546 = vmatprep.subr.mxu0 0.0
        %2547 = vmatpush2.msra.mxu0 0.0
        %2548 = vmatprep.subr.mxu0 0.0
        %2549 = vmatpush2.msra.mxu0 0.0
        %2550 = vmatprep.subr.mxu0 0.0
        %2551 = vmatpush2.msra.mxu0 0.0
        %2552 = vmatprep.subr.mxu0 0.0
        %2553 = vmatpush2.msra.mxu0 0.0
        %2554 = vmatprep.subr.mxu0 0.0
        %2555 = vmatpush2.msra.mxu0 0.0
        %2556 = vmatprep.mubr.f32.mxu0 0.0
        %2557 = vmatmul.mubr.f32.gmra.mxu0 %v2490
        %v2558 = vpop.f32.mrf.mxu0
        %v2559 = vadd.f32 0.0, %v2558
        %v2560 = vpop.f32.mrf.mxu0
        %2561 = vdwg.mxu0
        %2562 = vmatprep.subr.mxu0 0.0
        %2563 = vmatpush1.msra.mxu0 0.0
        %2564 = vmatprep.subr.mxu0 0.0
        %2565 = vmatpush1.msra.mxu0 0.0
        %2566 = vmatprep.subr.mxu0 0.0
        %2567 = vmatpush1.msra.mxu0 0.0
        %2568 = vmatprep.subr.mxu0 0.0
        %2569 = vmatpush1.msra.mxu0 0.0
        %2570 = vmatprep.subr.mxu0 0.0
        %2571 = vmatpush1.msra.mxu0 0.0
        %2572 = vmatprep.subr.mxu0 0.0
        %2573 = vmatpush1.msra.mxu0 0.0
        %2574 = vmatprep.subr.mxu0 0.0
        %2575 = vmatpush1.msra.mxu0 0.0
        %2576 = vmatprep.subr.mxu0 0.0
        %2577 = vmatpush1.msra.mxu0 0.0
        %2578 = vmatprep.subr.mxu0 0.0
        %2579 = vmatpush1.msra.mxu0 0.0
        %2580 = vmatprep.subr.mxu0 0.0
        %2581 = vmatpush1.msra.mxu0 0.0
        %2582 = vmatprep.subr.mxu0 0.0
        %2583 = vmatpush1.msra.mxu0 0.0
        %2584 = vmatprep.subr.mxu0 0.0
        %2585 = vmatpush1.msra.mxu0 0.0
        %2586 = vmatprep.subr.mxu0 0.0
        %2587 = vmatpush1.msra.mxu0 0.0
        %2588 = vmatprep.subr.mxu0 0.0
        %2589 = vmatpush1.msra.mxu0 0.0
        %2590 = vmatprep.subr.mxu0 0.0
        %2591 = vmatpush1.msra.mxu0 %v202
        %2592 = vmatprep.subr.mxu0 0.0
        %2593 = vmatpush1.msra.mxu0 %v201
        %2594 = vmatprep.subr.mxu0 0.0
        %2595 = vmatpush2.msra.mxu0 0.0
        %2596 = vmatprep.subr.mxu0 0.0
        %2597 = vmatpush2.msra.mxu0 0.0
        %2598 = vmatprep.subr.mxu0 0.0
        %2599 = vmatpush2.msra.mxu0 0.0
        %2600 = vmatprep.subr.mxu0 0.0
        %2601 = vmatpush2.msra.mxu0 0.0
        %2602 = vmatprep.subr.mxu0 0.0
        %2603 = vmatpush2.msra.mxu0 0.0
        %2604 = vmatprep.subr.mxu0 0.0
        %2605 = vmatpush2.msra.mxu0 0.0
        %2606 = vmatprep.subr.mxu0 0.0
        %2607 = vmatpush2.msra.mxu0 0.0
        %2608 = vmatprep.subr.mxu0 0.0
        %2609 = vmatpush2.msra.mxu0 0.0
        %2610 = vmatprep.subr.mxu0 0.0
        %2611 = vmatpush2.msra.mxu0 0.0
        %2612 = vmatprep.subr.mxu0 0.0
        %2613 = vmatpush2.msra.mxu0 0.0
        %2614 = vmatprep.subr.mxu0 0.0
        %2615 = vmatpush2.msra.mxu0 0.0
        %2616 = vmatprep.subr.mxu0 0.0
        %2617 = vmatpush2.msra.mxu0 0.0
        %2618 = vmatprep.subr.mxu0 0.0
        %2619 = vmatpush2.msra.mxu0 0.0
        %2620 = vmatprep.subr.mxu0 0.0
        %2621 = vmatpush2.msra.mxu0 0.0
        %2622 = vmatprep.subr.mxu0 0.0
        %2623 = vmatpush2.msra.mxu0 0.0
        %2624 = vmatprep.subr.mxu0 0.0
        %2625 = vmatpush2.msra.mxu0 0.0
        %2626 = vmatprep.mubr.f32.mxu0 0.0
        %2627 = vmatmul.mubr.f32.gmra.mxu0 %v2490
        %v2628 = vpop.f32.mrf.mxu0
        %v2629 = vadd.f32 0.0, %v2628
        %v2630 = vpop.f32.mrf.mxu0
        %2631 = vdwg.mxu0
        %2632 = vmatprep.subr.mxu0 0.0
        %2633 = vmatpush1.msra.mxu0 0.0
        %2634 = vmatprep.subr.mxu0 0.0
        %2635 = vmatpush1.msra.mxu0 0.0
        %2636 = vmatprep.subr.mxu0 0.0
        %2637 = vmatpush1.msra.mxu0 0.0
        %2638 = vmatprep.subr.mxu0 0.0
        %2639 = vmatpush1.msra.mxu0 0.0
        %2640 = vmatprep.subr.mxu0 0.0
        %2641 = vmatpush1.msra.mxu0 0.0
        %2642 = vmatprep.subr.mxu0 0.0
        %2643 = vmatpush1.msra.mxu0 0.0
        %2644 = vmatprep.subr.mxu0 0.0
        %2645 = vmatpush1.msra.mxu0 0.0
        %2646 = vmatprep.subr.mxu0 0.0
        %2647 = vmatpush1.msra.mxu0 0.0
        %2648 = vmatprep.subr.mxu0 0.0
        %2649 = vmatpush1.msra.mxu0 0.0
        %2650 = vmatprep.subr.mxu0 0.0
        %2651 = vmatpush1.msra.mxu0 0.0
        %2652 = vmatprep.subr.mxu0 0.0
        %2653 = vmatpush1.msra.mxu0 0.0
        %2654 = vmatprep.subr.mxu0 0.0
        %2655 = vmatpush1.msra.mxu0 0.0
        %2656 = vmatprep.subr.mxu0 0.0
        %2657 = vmatpush1.msra.mxu0 0.0
        %2658 = vmatprep.subr.mxu0 0.0
        %2659 = vmatpush1.msra.mxu0 0.0
        %2660 = vmatprep.subr.mxu0 0.0
        %2661 = vmatpush1.msra.mxu0 %v207
        %2662 = vmatprep.subr.mxu0 0.0
        %2663 = vmatpush1.msra.mxu0 %v206
        %2664 = vmatprep.subr.mxu0 0.0
        %2665 = vmatpush2.msra.mxu0 0.0
        %2666 = vmatprep.subr.mxu0 0.0
        %2667 = vmatpush2.msra.mxu0 0.0
        %2668 = vmatprep.subr.mxu0 0.0
        %2669 = vmatpush2.msra.mxu0 0.0
        %2670 = vmatprep.subr.mxu0 0.0
        %2671 = vmatpush2.msra.mxu0 0.0
        %2672 = vmatprep.subr.mxu0 0.0
        %2673 = vmatpush2.msra.mxu0 0.0
        %2674 = vmatprep.subr.mxu0 0.0
        %2675 = vmatpush2.msra.mxu0 0.0
        %2676 = vmatprep.subr.mxu0 0.0
        %2677 = vmatpush2.msra.mxu0 0.0
        %2678 = vmatprep.subr.mxu0 0.0
        %2679 = vmatpush2.msra.mxu0 0.0
        %2680 = vmatprep.subr.mxu0 0.0
        %2681 = vmatpush2.msra.mxu0 0.0
        %2682 = vmatprep.subr.mxu0 0.0
        %2683 = vmatpush2.msra.mxu0 0.0
        %2684 = vmatprep.subr.mxu0 0.0
        %2685 = vmatpush2.msra.mxu0 0.0
        %2686 = vmatprep.subr.mxu0 0.0
        %2687 = vmatpush2.msra.mxu0 0.0
        %2688 = vmatprep.subr.mxu0 0.0
        %2689 = vmatpush2.msra.mxu0 0.0
        %2690 = vmatprep.subr.mxu0 0.0
        %2691 = vmatpush2.msra.mxu0 0.0
        %2692 = vmatprep.subr.mxu0 0.0
        %2693 = vmatpush2.msra.mxu0 0.0
        %2694 = vmatprep.subr.mxu0 0.0
        %2695 = vmatpush2.msra.mxu0 0.0
        %2696 = vmatprep.mubr.f32.mxu0 0.0
        %2697 = vmatmul.mubr.f32.gmra.mxu0 %v2490
        %v2698 = vpop.f32.mrf.mxu0
        %v2699 = vadd.f32 0.0, %v2698
        %v2700 = vpop.f32.mrf.mxu0
        %2701 = vdwg.mxu0
        %2702 = vmatprep.subr.mxu0 0.0
        %2703 = vmatpush1.msra.mxu0 0.0
        %2704 = vmatprep.subr.mxu0 0.0
        %2705 = vmatpush1.msra.mxu0 0.0
        %2706 = vmatprep.subr.mxu0 0.0
        %2707 = vmatpush1.msra.mxu0 0.0
        %2708 = vmatprep.subr.mxu0 0.0
        %2709 = vmatpush1.msra.mxu0 0.0
        %2710 = vmatprep.subr.mxu0 0.0
        %2711 = vmatpush1.msra.mxu0 0.0
        %2712 = vmatprep.subr.mxu0 0.0
        %2713 = vmatpush1.msra.mxu0 0.0
        %2714 = vmatprep.subr.mxu0 0.0
        %2715 = vmatpush1.msra.mxu0 0.0
        %2716 = vmatprep.subr.mxu0 0.0
        %2717 = vmatpush1.msra.mxu0 0.0
        %2718 = vmatprep.subr.mxu0 0.0
        %2719 = vmatpush1.msra.mxu0 0.0
        %2720 = vmatprep.subr.mxu0 0.0
        %2721 = vmatpush1.msra.mxu0 0.0
        %2722 = vmatprep.subr.mxu0 0.0
        %2723 = vmatpush1.msra.mxu0 0.0
        %2724 = vmatprep.subr.mxu0 0.0
        %2725 = vmatpush1.msra.mxu0 0.0
        %2726 = vmatprep.subr.mxu0 0.0
        %2727 = vmatpush1.msra.mxu0 0.0
        %2728 = vmatprep.subr.mxu0 0.0
        %2729 = vmatpush1.msra.mxu0 0.0
        %2730 = vmatprep.subr.mxu0 0.0
        %2731 = vmatpush1.msra.mxu0 %v212
        %2732 = vmatprep.subr.mxu0 0.0
        %2733 = vmatpush1.msra.mxu0 %v211
        %2734 = vmatprep.subr.mxu0 0.0
        %2735 = vmatpush2.msra.mxu0 0.0
        %2736 = vmatprep.subr.mxu0 0.0
        %2737 = vmatpush2.msra.mxu0 0.0
        %2738 = vmatprep.subr.mxu0 0.0
        %2739 = vmatpush2.msra.mxu0 0.0
        %2740 = vmatprep.subr.mxu0 0.0
        %2741 = vmatpush2.msra.mxu0 0.0
        %2742 = vmatprep.subr.mxu0 0.0
        %2743 = vmatpush2.msra.mxu0 0.0
        %2744 = vmatprep.subr.mxu0 0.0
        %2745 = vmatpush2.msra.mxu0 0.0
        %2746 = vmatprep.subr.mxu0 0.0
        %2747 = vmatpush2.msra.mxu0 0.0
        %2748 = vmatprep.subr.mxu0 0.0
        %2749 = vmatpush2.msra.mxu0 0.0
        %2750 = vmatprep.subr.mxu0 0.0
        %2751 = vmatpush2.msra.mxu0 0.0
        %2752 = vmatprep.subr.mxu0 0.0
        %2753 = vmatpush2.msra.mxu0 0.0
        %2754 = vmatprep.subr.mxu0 0.0
        %2755 = vmatpush2.msra.mxu0 0.0
        %2756 = vmatprep.subr.mxu0 0.0
        %2757 = vmatpush2.msra.mxu0 0.0
        %2758 = vmatprep.subr.mxu0 0.0
        %2759 = vmatpush2.msra.mxu0 0.0
        %2760 = vmatprep.subr.mxu0 0.0
        %2761 = vmatpush2.msra.mxu0 0.0
        %2762 = vmatprep.subr.mxu0 0.0
        %2763 = vmatpush2.msra.mxu0 0.0
        %2764 = vmatprep.subr.mxu0 0.0
        %2765 = vmatpush2.msra.mxu0 0.0
        %2766 = vmatprep.mubr.f32.mxu0 0.0
        %2767 = vmatmul.mubr.f32.gmra.mxu0 %v2490
        %v2768 = vpop.f32.mrf.mxu0
        %v2769 = vadd.f32 0.0, %v2768
        %v2770 = vpop.f32.mrf.mxu0
        %2771 = vdwg.mxu0
        %v2773 = vsel %vm215, %v1920, 0
        %2775 = vmatprep.subr.mxu0 0.0
        %2776 = vmatpush1.msra.mxu0 0.0
        %2777 = vmatprep.subr.mxu0 0.0
        %2778 = vmatpush1.msra.mxu0 0.0
        %2779 = vmatprep.subr.mxu0 0.0
        %2780 = vmatpush1.msra.mxu0 0.0
        %2781 = vmatprep.subr.mxu0 0.0
        %2782 = vmatpush1.msra.mxu0 0.0
        %2783 = vmatprep.subr.mxu0 0.0
        %2784 = vmatpush1.msra.mxu0 0.0
        %2785 = vmatprep.subr.mxu0 0.0
        %2786 = vmatpush1.msra.mxu0 0.0
        %2787 = vmatprep.subr.mxu0 0.0
        %2788 = vmatpush1.msra.mxu0 0.0
        %2789 = vmatprep.subr.mxu0 0.0
        %2790 = vmatpush1.msra.mxu0 0.0
        %2791 = vmatprep.subr.mxu0 0.0
        %2792 = vmatpush1.msra.mxu0 0.0
        %2793 = vmatprep.subr.mxu0 0.0
        %2794 = vmatpush1.msra.mxu0 0.0
        %2795 = vmatprep.subr.mxu0 0.0
        %2796 = vmatpush1.msra.mxu0 0.0
        %2797 = vmatprep.subr.mxu0 0.0
        %2798 = vmatpush1.msra.mxu0 0.0
        %2799 = vmatprep.subr.mxu0 0.0
        %2800 = vmatpush1.msra.mxu0 0.0
        %2801 = vmatprep.subr.mxu0 0.0
        %2802 = vmatpush1.msra.mxu0 0.0
        %2803 = vmatprep.subr.mxu0 0.0
        %2804 = vmatpush1.msra.mxu0 %v198
        %2805 = vmatprep.subr.mxu0 0.0
        %2806 = vmatpush1.msra.mxu0 %v197
        %2807 = vmatprep.subr.mxu0 0.0
        %2808 = vmatpush2.msra.mxu0 0.0
        %2809 = vmatprep.subr.mxu0 0.0
        %2810 = vmatpush2.msra.mxu0 0.0
        %2811 = vmatprep.subr.mxu0 0.0
        %2812 = vmatpush2.msra.mxu0 0.0
        %2813 = vmatprep.subr.mxu0 0.0
        %2814 = vmatpush2.msra.mxu0 0.0
        %2815 = vmatprep.subr.mxu0 0.0
        %2816 = vmatpush2.msra.mxu0 0.0
        %2817 = vmatprep.subr.mxu0 0.0
        %2818 = vmatpush2.msra.mxu0 0.0
        %2819 = vmatprep.subr.mxu0 0.0
        %2820 = vmatpush2.msra.mxu0 0.0
        %2821 = vmatprep.subr.mxu0 0.0
        %2822 = vmatpush2.msra.mxu0 0.0
        %2823 = vmatprep.subr.mxu0 0.0
        %2824 = vmatpush2.msra.mxu0 0.0
        %2825 = vmatprep.subr.mxu0 0.0
        %2826 = vmatpush2.msra.mxu0 0.0
        %2827 = vmatprep.subr.mxu0 0.0
        %2828 = vmatpush2.msra.mxu0 0.0
        %2829 = vmatprep.subr.mxu0 0.0
        %2830 = vmatpush2.msra.mxu0 0.0
        %2831 = vmatprep.subr.mxu0 0.0
        %2832 = vmatpush2.msra.mxu0 0.0
        %2833 = vmatprep.subr.mxu0 0.0
        %2834 = vmatpush2.msra.mxu0 0.0
        %2835 = vmatprep.subr.mxu0 0.0
        %2836 = vmatpush2.msra.mxu0 0.0
        %2837 = vmatprep.subr.mxu0 0.0
        %2838 = vmatpush2.msra.mxu0 0.0
        %2839 = vmatprep.mubr.f32.mxu0 0.0
        %2840 = vmatmul.mubr.f32.gmra.mxu0 %v2773
        %v2841 = vpop.f32.mrf.mxu0
        %v2842 = vadd.f32 0.0, %v2841
        %v2843 = vpop.f32.mrf.mxu0
        %2844 = vdwg.mxu0
        %2845 = vmatprep.subr.mxu0 0.0
        %2846 = vmatpush1.msra.mxu0 0.0
        %2847 = vmatprep.subr.mxu0 0.0
        %2848 = vmatpush1.msra.mxu0 0.0
        %2849 = vmatprep.subr.mxu0 0.0
        %2850 = vmatpush1.msra.mxu0 0.0
        %2851 = vmatprep.subr.mxu0 0.0
        %2852 = vmatpush1.msra.mxu0 0.0
        %2853 = vmatprep.subr.mxu0 0.0
        %2854 = vmatpush1.msra.mxu0 0.0
        %2855 = vmatprep.subr.mxu0 0.0
        %2856 = vmatpush1.msra.mxu0 0.0
        %2857 = vmatprep.subr.mxu0 0.0
        %2858 = vmatpush1.msra.mxu0 0.0
        %2859 = vmatprep.subr.mxu0 0.0
        %2860 = vmatpush1.msra.mxu0 0.0
        %2861 = vmatprep.subr.mxu0 0.0
        %2862 = vmatpush1.msra.mxu0 0.0
        %2863 = vmatprep.subr.mxu0 0.0
        %2864 = vmatpush1.msra.mxu0 0.0
        %2865 = vmatprep.subr.mxu0 0.0
        %2866 = vmatpush1.msra.mxu0 0.0
        %2867 = vmatprep.subr.mxu0 0.0
        %2868 = vmatpush1.msra.mxu0 0.0
        %2869 = vmatprep.subr.mxu0 0.0
        %2870 = vmatpush1.msra.mxu0 0.0
        %2871 = vmatprep.subr.mxu0 0.0
        %2872 = vmatpush1.msra.mxu0 0.0
        %2873 = vmatprep.subr.mxu0 0.0
        %2874 = vmatpush1.msra.mxu0 %v202
        %2875 = vmatprep.subr.mxu0 0.0
        %2876 = vmatpush1.msra.mxu0 %v201
        %2877 = vmatprep.subr.mxu0 0.0
        %2878 = vmatpush2.msra.mxu0 0.0
        %2879 = vmatprep.subr.mxu0 0.0
        %2880 = vmatpush2.msra.mxu0 0.0
        %2881 = vmatprep.subr.mxu0 0.0
        %2882 = vmatpush2.msra.mxu0 0.0
        %2883 = vmatprep.subr.mxu0 0.0
        %2884 = vmatpush2.msra.mxu0 0.0
        %2885 = vmatprep.subr.mxu0 0.0
        %2886 = vmatpush2.msra.mxu0 0.0
        %2887 = vmatprep.subr.mxu0 0.0
        %2888 = vmatpush2.msra.mxu0 0.0
        %2889 = vmatprep.subr.mxu0 0.0
        %2890 = vmatpush2.msra.mxu0 0.0
        %2891 = vmatprep.subr.mxu0 0.0
        %2892 = vmatpush2.msra.mxu0 0.0
        %2893 = vmatprep.subr.mxu0 0.0
        %2894 = vmatpush2.msra.mxu0 0.0
        %2895 = vmatprep.subr.mxu0 0.0
        %2896 = vmatpush2.msra.mxu0 0.0
        %2897 = vmatprep.subr.mxu0 0.0
        %2898 = vmatpush2.msra.mxu0 0.0
        %2899 = vmatprep.subr.mxu0 0.0
        %2900 = vmatpush2.msra.mxu0 0.0
        %2901 = vmatprep.subr.mxu0 0.0
        %2902 = vmatpush2.msra.mxu0 0.0
        %2903 = vmatprep.subr.mxu0 0.0
        %2904 = vmatpush2.msra.mxu0 0.0
        %2905 = vmatprep.subr.mxu0 0.0
        %2906 = vmatpush2.msra.mxu0 0.0
        %2907 = vmatprep.subr.mxu0 0.0
        %2908 = vmatpush2.msra.mxu0 0.0
        %2909 = vmatprep.mubr.f32.mxu0 0.0
        %2910 = vmatmul.mubr.f32.gmra.mxu0 %v2773
        %v2911 = vpop.f32.mrf.mxu0
        %v2912 = vadd.f32 0.0, %v2911
        %v2913 = vpop.f32.mrf.mxu0
        %2914 = vdwg.mxu0
        %2915 = vmatprep.subr.mxu0 0.0
        %2916 = vmatpush1.msra.mxu0 0.0
        %2917 = vmatprep.subr.mxu0 0.0
        %2918 = vmatpush1.msra.mxu0 0.0
        %2919 = vmatprep.subr.mxu0 0.0
        %2920 = vmatpush1.msra.mxu0 0.0
        %2921 = vmatprep.subr.mxu0 0.0
        %2922 = vmatpush1.msra.mxu0 0.0
        %2923 = vmatprep.subr.mxu0 0.0
        %2924 = vmatpush1.msra.mxu0 0.0
        %2925 = vmatprep.subr.mxu0 0.0
        %2926 = vmatpush1.msra.mxu0 0.0
        %2927 = vmatprep.subr.mxu0 0.0
        %2928 = vmatpush1.msra.mxu0 0.0
        %2929 = vmatprep.subr.mxu0 0.0
        %2930 = vmatpush1.msra.mxu0 0.0
        %2931 = vmatprep.subr.mxu0 0.0
        %2932 = vmatpush1.msra.mxu0 0.0
        %2933 = vmatprep.subr.mxu0 0.0
        %2934 = vmatpush1.msra.mxu0 0.0
        %2935 = vmatprep.subr.mxu0 0.0
        %2936 = vmatpush1.msra.mxu0 0.0
        %2937 = vmatprep.subr.mxu0 0.0
        %2938 = vmatpush1.msra.mxu0 0.0
        %2939 = vmatprep.subr.mxu0 0.0
        %2940 = vmatpush1.msra.mxu0 0.0
        %2941 = vmatprep.subr.mxu0 0.0
        %2942 = vmatpush1.msra.mxu0 0.0
        %2943 = vmatprep.subr.mxu0 0.0
        %2944 = vmatpush1.msra.mxu0 %v207
        %2945 = vmatprep.subr.mxu0 0.0
        %2946 = vmatpush1.msra.mxu0 %v206
        %2947 = vmatprep.subr.mxu0 0.0
        %2948 = vmatpush2.msra.mxu0 0.0
        %2949 = vmatprep.subr.mxu0 0.0
        %2950 = vmatpush2.msra.mxu0 0.0
        %2951 = vmatprep.subr.mxu0 0.0
        %2952 = vmatpush2.msra.mxu0 0.0
        %2953 = vmatprep.subr.mxu0 0.0
        %2954 = vmatpush2.msra.mxu0 0.0
        %2955 = vmatprep.subr.mxu0 0.0
        %2956 = vmatpush2.msra.mxu0 0.0
        %2957 = vmatprep.subr.mxu0 0.0
        %2958 = vmatpush2.msra.mxu0 0.0
        %2959 = vmatprep.subr.mxu0 0.0
        %2960 = vmatpush2.msra.mxu0 0.0
        %2961 = vmatprep.subr.mxu0 0.0
        %2962 = vmatpush2.msra.mxu0 0.0
        %2963 = vmatprep.subr.mxu0 0.0
        %2964 = vmatpush2.msra.mxu0 0.0
        %2965 = vmatprep.subr.mxu0 0.0
        %2966 = vmatpush2.msra.mxu0 0.0
        %2967 = vmatprep.subr.mxu0 0.0
        %2968 = vmatpush2.msra.mxu0 0.0
        %2969 = vmatprep.subr.mxu0 0.0
        %2970 = vmatpush2.msra.mxu0 0.0
        %2971 = vmatprep.subr.mxu0 0.0
        %2972 = vmatpush2.msra.mxu0 0.0
        %2973 = vmatprep.subr.mxu0 0.0
        %2974 = vmatpush2.msra.mxu0 0.0
        %2975 = vmatprep.subr.mxu0 0.0
        %2976 = vmatpush2.msra.mxu0 0.0
        %2977 = vmatprep.subr.mxu0 0.0
        %2978 = vmatpush2.msra.mxu0 0.0
        %2979 = vmatprep.mubr.f32.mxu0 0.0
        %2980 = vmatmul.mubr.f32.gmra.mxu0 %v2773
        %v2981 = vpop.f32.mrf.mxu0
        %v2982 = vadd.f32 0.0, %v2981
        %v2983 = vpop.f32.mrf.mxu0
        %2984 = vdwg.mxu0
        %2985 = vmatprep.subr.mxu0 0.0
        %2986 = vmatpush1.msra.mxu0 0.0
        %2987 = vmatprep.subr.mxu0 0.0
        %2988 = vmatpush1.msra.mxu0 0.0
        %2989 = vmatprep.subr.mxu0 0.0
        %2990 = vmatpush1.msra.mxu0 0.0
        %2991 = vmatprep.subr.mxu0 0.0
        %2992 = vmatpush1.msra.mxu0 0.0
        %2993 = vmatprep.subr.mxu0 0.0
        %2994 = vmatpush1.msra.mxu0 0.0
        %2995 = vmatprep.subr.mxu0 0.0
        %2996 = vmatpush1.msra.mxu0 0.0
        %2997 = vmatprep.subr.mxu0 0.0
        %2998 = vmatpush1.msra.mxu0 0.0
        %2999 = vmatprep.subr.mxu0 0.0
        %3000 = vmatpush1.msra.mxu0 0.0
        %3001 = vmatprep.subr.mxu0 0.0
        %3002 = vmatpush1.msra.mxu0 0.0
        %3003 = vmatprep.subr.mxu0 0.0
        %3004 = vmatpush1.msra.mxu0 0.0
        %3005 = vmatprep.subr.mxu0 0.0
        %3006 = vmatpush1.msra.mxu0 0.0
        %3007 = vmatprep.subr.mxu0 0.0
        %3008 = vmatpush1.msra.mxu0 0.0
        %3009 = vmatprep.subr.mxu0 0.0
        %3010 = vmatpush1.msra.mxu0 0.0
        %3011 = vmatprep.subr.mxu0 0.0
        %3012 = vmatpush1.msra.mxu0 0.0
        %3013 = vmatprep.subr.mxu0 0.0
        %3014 = vmatpush1.msra.mxu0 %v212
        %3015 = vmatprep.subr.mxu0 0.0
        %3016 = vmatpush1.msra.mxu0 %v211
        %3017 = vmatprep.subr.mxu0 0.0
        %3018 = vmatpush2.msra.mxu0 0.0
        %3019 = vmatprep.subr.mxu0 0.0
        %3020 = vmatpush2.msra.mxu0 0.0
        %3021 = vmatprep.subr.mxu0 0.0
        %3022 = vmatpush2.msra.mxu0 0.0
        %3023 = vmatprep.subr.mxu0 0.0
        %3024 = vmatpush2.msra.mxu0 0.0
        %3025 = vmatprep.subr.mxu0 0.0
        %3026 = vmatpush2.msra.mxu0 0.0
        %3027 = vmatprep.subr.mxu0 0.0
        %3028 = vmatpush2.msra.mxu0 0.0
        %3029 = vmatprep.subr.mxu0 0.0
        %3030 = vmatpush2.msra.mxu0 0.0
        %3031 = vmatprep.subr.mxu0 0.0
        %3032 = vmatpush2.msra.mxu0 0.0
        %3033 = vmatprep.subr.mxu0 0.0
        %3034 = vmatpush2.msra.mxu0 0.0
        %3035 = vmatprep.subr.mxu0 0.0
        %3036 = vmatpush2.msra.mxu0 0.0
        %3037 = vmatprep.subr.mxu0 0.0
        %3038 = vmatpush2.msra.mxu0 0.0
        %3039 = vmatprep.subr.mxu0 0.0
        %3040 = vmatpush2.msra.mxu0 0.0
        %3041 = vmatprep.subr.mxu0 0.0
        %3042 = vmatpush2.msra.mxu0 0.0
        %3043 = vmatprep.subr.mxu0 0.0
        %3044 = vmatpush2.msra.mxu0 0.0
        %3045 = vmatprep.subr.mxu0 0.0
        %3046 = vmatpush2.msra.mxu0 0.0
        %3047 = vmatprep.subr.mxu0 0.0
        %3048 = vmatpush2.msra.mxu0 0.0
        %3049 = vmatprep.mubr.f32.mxu0 0.0
        %3050 = vmatmul.mubr.f32.gmra.mxu0 %v2773
        %v3051 = vpop.f32.mrf.mxu0
        %v3052 = vadd.f32 0.0, %v3051
        %v3053 = vpop.f32.mrf.mxu0
        %3054 = vdwg.mxu0
        %s3055 = scalar_lea.vmem %s150, 32 [#allocation2]
        %v3056 = vld [vmem:[%s3055] sm:$0xff]
        %v3057 = vld [vmem:[%s3055 + $0x8] sm:$0xff]
        %3058 = vmatprep.subr.mxu0 0.0
        %3059 = vmatpush1.msra.mxu0 0.0
        %3060 = vmatprep.subr.mxu0 0.0
        %3061 = vmatpush1.msra.mxu0 0.0
        %3062 = vmatprep.subr.mxu0 0.0
        %3063 = vmatpush1.msra.mxu0 0.0
        %3064 = vmatprep.subr.mxu0 0.0
        %3065 = vmatpush1.msra.mxu0 0.0
        %3066 = vmatprep.subr.mxu0 0.0
        %3067 = vmatpush1.msra.mxu0 0.0
        %3068 = vmatprep.subr.mxu0 0.0
        %3069 = vmatpush1.msra.mxu0 0.0
        %3070 = vmatprep.subr.mxu0 0.0
        %3071 = vmatpush1.msra.mxu0 0.0
        %3072 = vmatprep.subr.mxu0 0.0
        %3073 = vmatpush1.msra.mxu0 0.0
        %3074 = vmatprep.subr.mxu0 0.0
        %3075 = vmatpush1.msra.mxu0 0.0
        %3076 = vmatprep.subr.mxu0 0.0
        %3077 = vmatpush1.msra.mxu0 0.0
        %3078 = vmatprep.subr.mxu0 0.0
        %3079 = vmatpush1.msra.mxu0 0.0
        %3080 = vmatprep.subr.mxu0 0.0
        %3081 = vmatpush1.msra.mxu0 0.0
        %3082 = vmatprep.subr.mxu0 0.0
        %3083 = vmatpush1.msra.mxu0 0.0
        %3084 = vmatprep.subr.mxu0 0.0
        %3085 = vmatpush1.msra.mxu0 0.0
        %3086 = vmatprep.subr.mxu0 0.0
        %3087 = vmatpush1.msra.mxu0 %v3057
        %3088 = vmatprep.subr.mxu0 0.0
        %3089 = vmatpush1.msra.mxu0 %v3056
        %3090 = vmatprep.subr.mxu0 0.0
        %3091 = vmatpush2.msra.mxu0 0.0
        %3092 = vmatprep.subr.mxu0 0.0
        %3093 = vmatpush2.msra.mxu0 0.0
        %3094 = vmatprep.subr.mxu0 0.0
        %3095 = vmatpush2.msra.mxu0 0.0
        %3096 = vmatprep.subr.mxu0 0.0
        %3097 = vmatpush2.msra.mxu0 0.0
        %3098 = vmatprep.subr.mxu0 0.0
        %3099 = vmatpush2.msra.mxu0 0.0
        %3100 = vmatprep.subr.mxu0 0.0
        %3101 = vmatpush2.msra.mxu0 0.0
        %3102 = vmatprep.subr.mxu0 0.0
        %3103 = vmatpush2.msra.mxu0 0.0
        %3104 = vmatprep.subr.mxu0 0.0
        %3105 = vmatpush2.msra.mxu0 0.0
        %3106 = vmatprep.subr.mxu0 0.0
        %3107 = vmatpush2.msra.mxu0 0.0
        %3108 = vmatprep.subr.mxu0 0.0
        %3109 = vmatpush2.msra.mxu0 0.0
        %3110 = vmatprep.subr.mxu0 0.0
        %3111 = vmatpush2.msra.mxu0 0.0
        %3112 = vmatprep.subr.mxu0 0.0
        %3113 = vmatpush2.msra.mxu0 0.0
        %3114 = vmatprep.subr.mxu0 0.0
        %3115 = vmatpush2.msra.mxu0 0.0
        %3116 = vmatprep.subr.mxu0 0.0
        %3117 = vmatpush2.msra.mxu0 0.0
        %3118 = vmatprep.subr.mxu0 0.0
        %3119 = vmatpush2.msra.mxu0 0.0
        %3120 = vmatprep.subr.mxu0 0.0
        %3121 = vmatpush2.msra.mxu0 0.0
        %3122 = vmatprep.mubr.f32.mxu0 0.0
        %3123 = vmatmul.mubr.f32.gmra.mxu0 %v217
        %v3124 = vpop.f32.mrf.mxu0
        %v3125 = vadd.f32 0.0, %v3124
        %v3126 = vpop.f32.mrf.mxu0
        %3127 = vdwg.mxu0
        %3128 = vmatprep.subr.mxu0 0.0
        %3129 = vmatpush1.msra.mxu0 0.0
        %3130 = vmatprep.subr.mxu0 0.0
        %3131 = vmatpush1.msra.mxu0 0.0
        %3132 = vmatprep.subr.mxu0 0.0
        %3133 = vmatpush1.msra.mxu0 0.0
        %3134 = vmatprep.subr.mxu0 0.0
        %3135 = vmatpush1.msra.mxu0 0.0
        %3136 = vmatprep.subr.mxu0 0.0
        %3137 = vmatpush1.msra.mxu0 0.0
        %3138 = vmatprep.subr.mxu0 0.0
        %3139 = vmatpush1.msra.mxu0 0.0
        %3140 = vmatprep.subr.mxu0 0.0
        %3141 = vmatpush1.msra.mxu0 0.0
        %3142 = vmatprep.subr.mxu0 0.0
        %3143 = vmatpush1.msra.mxu0 0.0
        %3144 = vmatprep.subr.mxu0 0.0
        %3145 = vmatpush1.msra.mxu0 0.0
        %3146 = vmatprep.subr.mxu0 0.0
        %3147 = vmatpush1.msra.mxu0 0.0
        %3148 = vmatprep.subr.mxu0 0.0
        %3149 = vmatpush1.msra.mxu0 0.0
        %3150 = vmatprep.subr.mxu0 0.0
        %3151 = vmatpush1.msra.mxu0 0.0
        %3152 = vmatprep.subr.mxu0 0.0
        %3153 = vmatpush1.msra.mxu0 0.0
        %3154 = vmatprep.subr.mxu0 0.0
        %3155 = vmatpush1.msra.mxu0 0.0
        %3156 = vmatprep.subr.mxu0 0.0
        %3157 = vmatpush1.msra.mxu0 %v3057
        %3158 = vmatprep.subr.mxu0 0.0
        %3159 = vmatpush1.msra.mxu0 %v3056
        %3160 = vmatprep.subr.mxu0 0.0
        %3161 = vmatpush2.msra.mxu0 0.0
        %3162 = vmatprep.subr.mxu0 0.0
        %3163 = vmatpush2.msra.mxu0 0.0
        %3164 = vmatprep.subr.mxu0 0.0
        %3165 = vmatpush2.msra.mxu0 0.0
        %3166 = vmatprep.subr.mxu0 0.0
        %3167 = vmatpush2.msra.mxu0 0.0
        %3168 = vmatprep.subr.mxu0 0.0
        %3169 = vmatpush2.msra.mxu0 0.0
        %3170 = vmatprep.subr.mxu0 0.0
        %3171 = vmatpush2.msra.mxu0 0.0
        %3172 = vmatprep.subr.mxu0 0.0
        %3173 = vmatpush2.msra.mxu0 0.0
        %3174 = vmatprep.subr.mxu0 0.0
        %3175 = vmatpush2.msra.mxu0 0.0
        %3176 = vmatprep.subr.mxu0 0.0
        %3177 = vmatpush2.msra.mxu0 0.0
        %3178 = vmatprep.subr.mxu0 0.0
        %3179 = vmatpush2.msra.mxu0 0.0
        %3180 = vmatprep.subr.mxu0 0.0
        %3181 = vmatpush2.msra.mxu0 0.0
        %3182 = vmatprep.subr.mxu0 0.0
        %3183 = vmatpush2.msra.mxu0 0.0
        %3184 = vmatprep.subr.mxu0 0.0
        %3185 = vmatpush2.msra.mxu0 0.0
        %3186 = vmatprep.subr.mxu0 0.0
        %3187 = vmatpush2.msra.mxu0 0.0
        %3188 = vmatprep.subr.mxu0 0.0
        %3189 = vmatpush2.msra.mxu0 0.0
        %3190 = vmatprep.subr.mxu0 0.0
        %3191 = vmatpush2.msra.mxu0 0.0
        %3192 = vmatprep.mubr.f32.mxu0 0.0
        %3193 = vmatmul.mubr.f32.gmra.mxu0 %v290
        %v3194 = vpop.f32.mrf.mxu0
        %v3195 = vadd.f32 0.0, %v3194
        %v3196 = vpop.f32.mrf.mxu0
        %3197 = vdwg.mxu0
        %3198 = vmatprep.subr.mxu0 0.0
        %3199 = vmatpush1.msra.mxu0 0.0
        %3200 = vmatprep.subr.mxu0 0.0
        %3201 = vmatpush1.msra.mxu0 0.0
        %3202 = vmatprep.subr.mxu0 0.0
        %3203 = vmatpush1.msra.mxu0 0.0
        %3204 = vmatprep.subr.mxu0 0.0
        %3205 = vmatpush1.msra.mxu0 0.0
        %3206 = vmatprep.subr.mxu0 0.0
        %3207 = vmatpush1.msra.mxu0 0.0
        %3208 = vmatprep.subr.mxu0 0.0
        %3209 = vmatpush1.msra.mxu0 0.0
        %3210 = vmatprep.subr.mxu0 0.0
        %3211 = vmatpush1.msra.mxu0 0.0
        %3212 = vmatprep.subr.mxu0 0.0
        %3213 = vmatpush1.msra.mxu0 0.0
        %3214 = vmatprep.subr.mxu0 0.0
        %3215 = vmatpush1.msra.mxu0 0.0
        %3216 = vmatprep.subr.mxu0 0.0
        %3217 = vmatpush1.msra.mxu0 0.0
        %3218 = vmatprep.subr.mxu0 0.0
        %3219 = vmatpush1.msra.mxu0 0.0
        %3220 = vmatprep.subr.mxu0 0.0
        %3221 = vmatpush1.msra.mxu0 0.0
        %3222 = vmatprep.subr.mxu0 0.0
        %3223 = vmatpush1.msra.mxu0 0.0
        %3224 = vmatprep.subr.mxu0 0.0
        %3225 = vmatpush1.msra.mxu0 0.0
        %3226 = vmatprep.subr.mxu0 0.0
        %3227 = vmatpush1.msra.mxu0 %v3057
        %3228 = vmatprep.subr.mxu0 0.0
        %3229 = vmatpush1.msra.mxu0 %v3056
        %3230 = vmatprep.subr.mxu0 0.0
        %3231 = vmatpush2.msra.mxu0 0.0
        %3232 = vmatprep.subr.mxu0 0.0
        %3233 = vmatpush2.msra.mxu0 0.0
        %3234 = vmatprep.subr.mxu0 0.0
        %3235 = vmatpush2.msra.mxu0 0.0
        %3236 = vmatprep.subr.mxu0 0.0
        %3237 = vmatpush2.msra.mxu0 0.0
        %3238 = vmatprep.subr.mxu0 0.0
        %3239 = vmatpush2.msra.mxu0 0.0
        %3240 = vmatprep.subr.mxu0 0.0
        %3241 = vmatpush2.msra.mxu0 0.0
        %3242 = vmatprep.subr.mxu0 0.0
        %3243 = vmatpush2.msra.mxu0 0.0
        %3244 = vmatprep.subr.mxu0 0.0
        %3245 = vmatpush2.msra.mxu0 0.0
        %3246 = vmatprep.subr.mxu0 0.0
        %3247 = vmatpush2.msra.mxu0 0.0
        %3248 = vmatprep.subr.mxu0 0.0
        %3249 = vmatpush2.msra.mxu0 0.0
        %3250 = vmatprep.subr.mxu0 0.0
        %3251 = vmatpush2.msra.mxu0 0.0
        %3252 = vmatprep.subr.mxu0 0.0
        %3253 = vmatpush2.msra.mxu0 0.0
        %3254 = vmatprep.subr.mxu0 0.0
        %3255 = vmatpush2.msra.mxu0 0.0
        %3256 = vmatprep.subr.mxu0 0.0
        %3257 = vmatpush2.msra.mxu0 0.0
        %3258 = vmatprep.subr.mxu0 0.0
        %3259 = vmatpush2.msra.mxu0 0.0
        %3260 = vmatprep.subr.mxu0 0.0
        %3261 = vmatpush2.msra.mxu0 0.0
        %3262 = vmatprep.mubr.f32.mxu0 0.0
        %3263 = vmatmul.mubr.f32.gmra.mxu0 %v363
        %v3264 = vpop.f32.mrf.mxu0
        %v3265 = vadd.f32 0.0, %v3264
        %v3266 = vpop.f32.mrf.mxu0
        %3267 = vdwg.mxu0
        %3268 = vmatprep.subr.mxu0 0.0
        %3269 = vmatpush1.msra.mxu0 0.0
        %3270 = vmatprep.subr.mxu0 0.0
        %3271 = vmatpush1.msra.mxu0 0.0
        %3272 = vmatprep.subr.mxu0 0.0
        %3273 = vmatpush1.msra.mxu0 0.0
        %3274 = vmatprep.subr.mxu0 0.0
        %3275 = vmatpush1.msra.mxu0 0.0
        %3276 = vmatprep.subr.mxu0 0.0
        %3277 = vmatpush1.msra.mxu0 0.0
        %3278 = vmatprep.subr.mxu0 0.0
        %3279 = vmatpush1.msra.mxu0 0.0
        %3280 = vmatprep.subr.mxu0 0.0
        %3281 = vmatpush1.msra.mxu0 0.0
        %3282 = vmatprep.subr.mxu0 0.0
        %3283 = vmatpush1.msra.mxu0 0.0
        %3284 = vmatprep.subr.mxu0 0.0
        %3285 = vmatpush1.msra.mxu0 0.0
        %3286 = vmatprep.subr.mxu0 0.0
        %3287 = vmatpush1.msra.mxu0 0.0
        %3288 = vmatprep.subr.mxu0 0.0
        %3289 = vmatpush1.msra.mxu0 0.0
        %3290 = vmatprep.subr.mxu0 0.0
        %3291 = vmatpush1.msra.mxu0 0.0
        %3292 = vmatprep.subr.mxu0 0.0
        %3293 = vmatpush1.msra.mxu0 0.0
        %3294 = vmatprep.subr.mxu0 0.0
        %3295 = vmatpush1.msra.mxu0 0.0
        %3296 = vmatprep.subr.mxu0 0.0
        %3297 = vmatpush1.msra.mxu0 %v3057
        %3298 = vmatprep.subr.mxu0 0.0
        %3299 = vmatpush1.msra.mxu0 %v3056
        %3300 = vmatprep.subr.mxu0 0.0
        %3301 = vmatpush2.msra.mxu0 0.0
        %3302 = vmatprep.subr.mxu0 0.0
        %3303 = vmatpush2.msra.mxu0 0.0
        %3304 = vmatprep.subr.mxu0 0.0
        %3305 = vmatpush2.msra.mxu0 0.0
        %3306 = vmatprep.subr.mxu0 0.0
        %3307 = vmatpush2.msra.mxu0 0.0
        %3308 = vmatprep.subr.mxu0 0.0
        %3309 = vmatpush2.msra.mxu0 0.0
        %3310 = vmatprep.subr.mxu0 0.0
        %3311 = vmatpush2.msra.mxu0 0.0
        %3312 = vmatprep.subr.mxu0 0.0
        %3313 = vmatpush2.msra.mxu0 0.0
        %3314 = vmatprep.subr.mxu0 0.0
        %3315 = vmatpush2.msra.mxu0 0.0
        %3316 = vmatprep.subr.mxu0 0.0
        %3317 = vmatpush2.msra.mxu0 0.0
        %3318 = vmatprep.subr.mxu0 0.0
        %3319 = vmatpush2.msra.mxu0 0.0
        %3320 = vmatprep.subr.mxu0 0.0
        %3321 = vmatpush2.msra.mxu0 0.0
        %3322 = vmatprep.subr.mxu0 0.0
        %3323 = vmatpush2.msra.mxu0 0.0
        %3324 = vmatprep.subr.mxu0 0.0
        %3325 = vmatpush2.msra.mxu0 0.0
        %3326 = vmatprep.subr.mxu0 0.0
        %3327 = vmatpush2.msra.mxu0 0.0
        %3328 = vmatprep.subr.mxu0 0.0
        %3329 = vmatpush2.msra.mxu0 0.0
        %3330 = vmatprep.subr.mxu0 0.0
        %3331 = vmatpush2.msra.mxu0 0.0
        %3332 = vmatprep.mubr.f32.mxu0 0.0
        %3333 = vmatmul.mubr.f32.gmra.mxu0 %v436
        %v3334 = vpop.f32.mrf.mxu0
        %v3335 = vadd.f32 0.0, %v3334
        %v3336 = vpop.f32.mrf.mxu0
        %3337 = vdwg.mxu0
        %v3339 = vsel %vm215, %v3125, 0
        %3341 = vmatprep.subr.mxu0 0.0
        %3342 = vmatpush1.msra.mxu0 0.0
        %3343 = vmatprep.subr.mxu0 0.0
        %3344 = vmatpush1.msra.mxu0 0.0
        %3345 = vmatprep.subr.mxu0 0.0
        %3346 = vmatpush1.msra.mxu0 0.0
        %3347 = vmatprep.subr.mxu0 0.0
        %3348 = vmatpush1.msra.mxu0 0.0
        %3349 = vmatprep.subr.mxu0 0.0
        %3350 = vmatpush1.msra.mxu0 0.0
        %3351 = vmatprep.subr.mxu0 0.0
        %3352 = vmatpush1.msra.mxu0 0.0
        %3353 = vmatprep.subr.mxu0 0.0
        %3354 = vmatpush1.msra.mxu0 0.0
        %3355 = vmatprep.subr.mxu0 0.0
        %3356 = vmatpush1.msra.mxu0 0.0
        %3357 = vmatprep.subr.mxu0 0.0
        %3358 = vmatpush1.msra.mxu0 0.0
        %3359 = vmatprep.subr.mxu0 0.0
        %3360 = vmatpush1.msra.mxu0 0.0
        %3361 = vmatprep.subr.mxu0 0.0
        %3362 = vmatpush1.msra.mxu0 0.0
        %3363 = vmatprep.subr.mxu0 0.0
        %3364 = vmatpush1.msra.mxu0 0.0
        %3365 = vmatprep.subr.mxu0 0.0
        %3366 = vmatpush1.msra.mxu0 0.0
        %3367 = vmatprep.subr.mxu0 0.0
        %3368 = vmatpush1.msra.mxu0 0.0
        %3369 = vmatprep.subr.mxu0 0.0
        %3370 = vmatpush1.msra.mxu0 %v198
        %3371 = vmatprep.subr.mxu0 0.0
        %3372 = vmatpush1.msra.mxu0 %v197
        %3373 = vmatprep.subr.mxu0 0.0
        %3374 = vmatpush2.msra.mxu0 0.0
        %3375 = vmatprep.subr.mxu0 0.0
        %3376 = vmatpush2.msra.mxu0 0.0
        %3377 = vmatprep.subr.mxu0 0.0
        %3378 = vmatpush2.msra.mxu0 0.0
        %3379 = vmatprep.subr.mxu0 0.0
        %3380 = vmatpush2.msra.mxu0 0.0
        %3381 = vmatprep.subr.mxu0 0.0
        %3382 = vmatpush2.msra.mxu0 0.0
        %3383 = vmatprep.subr.mxu0 0.0
        %3384 = vmatpush2.msra.mxu0 0.0
        %3385 = vmatprep.subr.mxu0 0.0
        %3386 = vmatpush2.msra.mxu0 0.0
        %3387 = vmatprep.subr.mxu0 0.0
        %3388 = vmatpush2.msra.mxu0 0.0
        %3389 = vmatprep.subr.mxu0 0.0
        %3390 = vmatpush2.msra.mxu0 0.0
        %3391 = vmatprep.subr.mxu0 0.0
        %3392 = vmatpush2.msra.mxu0 0.0
        %3393 = vmatprep.subr.mxu0 0.0
        %3394 = vmatpush2.msra.mxu0 0.0
        %3395 = vmatprep.subr.mxu0 0.0
        %3396 = vmatpush2.msra.mxu0 0.0
        %3397 = vmatprep.subr.mxu0 0.0
        %3398 = vmatpush2.msra.mxu0 0.0
        %3399 = vmatprep.subr.mxu0 0.0
        %3400 = vmatpush2.msra.mxu0 0.0
        %3401 = vmatprep.subr.mxu0 0.0
        %3402 = vmatpush2.msra.mxu0 0.0
        %3403 = vmatprep.subr.mxu0 0.0
        %3404 = vmatpush2.msra.mxu0 0.0
        %3405 = vmatprep.mubr.f32.mxu0 0.0
        %3406 = vmatmul.mubr.f32.gmra.mxu0 %v3339
        %v3407 = vpop.f32.mrf.mxu0
        %v3408 = vadd.f32 0.0, %v3407
        %v3409 = vpop.f32.mrf.mxu0
        %3410 = vdwg.mxu0
        %3411 = vmatprep.subr.mxu0 0.0
        %3412 = vmatpush1.msra.mxu0 0.0
        %3413 = vmatprep.subr.mxu0 0.0
        %3414 = vmatpush1.msra.mxu0 0.0
        %3415 = vmatprep.subr.mxu0 0.0
        %3416 = vmatpush1.msra.mxu0 0.0
        %3417 = vmatprep.subr.mxu0 0.0
        %3418 = vmatpush1.msra.mxu0 0.0
        %3419 = vmatprep.subr.mxu0 0.0
        %3420 = vmatpush1.msra.mxu0 0.0
        %3421 = vmatprep.subr.mxu0 0.0
        %3422 = vmatpush1.msra.mxu0 0.0
        %3423 = vmatprep.subr.mxu0 0.0
        %3424 = vmatpush1.msra.mxu0 0.0
        %3425 = vmatprep.subr.mxu0 0.0
        %3426 = vmatpush1.msra.mxu0 0.0
        %3427 = vmatprep.subr.mxu0 0.0
        %3428 = vmatpush1.msra.mxu0 0.0
        %3429 = vmatprep.subr.mxu0 0.0
        %3430 = vmatpush1.msra.mxu0 0.0
        %3431 = vmatprep.subr.mxu0 0.0
        %3432 = vmatpush1.msra.mxu0 0.0
        %3433 = vmatprep.subr.mxu0 0.0
        %3434 = vmatpush1.msra.mxu0 0.0
        %3435 = vmatprep.subr.mxu0 0.0
        %3436 = vmatpush1.msra.mxu0 0.0
        %3437 = vmatprep.subr.mxu0 0.0
        %3438 = vmatpush1.msra.mxu0 0.0
        %3439 = vmatprep.subr.mxu0 0.0
        %3440 = vmatpush1.msra.mxu0 %v202
        %3441 = vmatprep.subr.mxu0 0.0
        %3442 = vmatpush1.msra.mxu0 %v201
        %3443 = vmatprep.subr.mxu0 0.0
        %3444 = vmatpush2.msra.mxu0 0.0
        %3445 = vmatprep.subr.mxu0 0.0
        %3446 = vmatpush2.msra.mxu0 0.0
        %3447 = vmatprep.subr.mxu0 0.0
        %3448 = vmatpush2.msra.mxu0 0.0
        %3449 = vmatprep.subr.mxu0 0.0
        %3450 = vmatpush2.msra.mxu0 0.0
        %3451 = vmatprep.subr.mxu0 0.0
        %3452 = vmatpush2.msra.mxu0 0.0
        %3453 = vmatprep.subr.mxu0 0.0
        %3454 = vmatpush2.msra.mxu0 0.0
        %3455 = vmatprep.subr.mxu0 0.0
        %3456 = vmatpush2.msra.mxu0 0.0
        %3457 = vmatprep.subr.mxu0 0.0
        %3458 = vmatpush2.msra.mxu0 0.0
        %3459 = vmatprep.subr.mxu0 0.0
        %3460 = vmatpush2.msra.mxu0 0.0
        %3461 = vmatprep.subr.mxu0 0.0
        %3462 = vmatpush2.msra.mxu0 0.0
        %3463 = vmatprep.subr.mxu0 0.0
        %3464 = vmatpush2.msra.mxu0 0.0
        %3465 = vmatprep.subr.mxu0 0.0
        %3466 = vmatpush2.msra.mxu0 0.0
        %3467 = vmatprep.subr.mxu0 0.0
        %3468 = vmatpush2.msra.mxu0 0.0
        %3469 = vmatprep.subr.mxu0 0.0
        %3470 = vmatpush2.msra.mxu0 0.0
        %3471 = vmatprep.subr.mxu0 0.0
        %3472 = vmatpush2.msra.mxu0 0.0
        %3473 = vmatprep.subr.mxu0 0.0
        %3474 = vmatpush2.msra.mxu0 0.0
        %3475 = vmatprep.mubr.f32.mxu0 0.0
        %3476 = vmatmul.mubr.f32.gmra.mxu0 %v3339
        %v3477 = vpop.f32.mrf.mxu0
        %v3478 = vadd.f32 0.0, %v3477
        %v3479 = vpop.f32.mrf.mxu0
        %3480 = vdwg.mxu0
        %3481 = vmatprep.subr.mxu0 0.0
        %3482 = vmatpush1.msra.mxu0 0.0
        %3483 = vmatprep.subr.mxu0 0.0
        %3484 = vmatpush1.msra.mxu0 0.0
        %3485 = vmatprep.subr.mxu0 0.0
        %3486 = vmatpush1.msra.mxu0 0.0
        %3487 = vmatprep.subr.mxu0 0.0
        %3488 = vmatpush1.msra.mxu0 0.0
        %3489 = vmatprep.subr.mxu0 0.0
        %3490 = vmatpush1.msra.mxu0 0.0
        %3491 = vmatprep.subr.mxu0 0.0
        %3492 = vmatpush1.msra.mxu0 0.0
        %3493 = vmatprep.subr.mxu0 0.0
        %3494 = vmatpush1.msra.mxu0 0.0
        %3495 = vmatprep.subr.mxu0 0.0
        %3496 = vmatpush1.msra.mxu0 0.0
        %3497 = vmatprep.subr.mxu0 0.0
        %3498 = vmatpush1.msra.mxu0 0.0
        %3499 = vmatprep.subr.mxu0 0.0
        %3500 = vmatpush1.msra.mxu0 0.0
        %3501 = vmatprep.subr.mxu0 0.0
        %3502 = vmatpush1.msra.mxu0 0.0
        %3503 = vmatprep.subr.mxu0 0.0
        %3504 = vmatpush1.msra.mxu0 0.0
        %3505 = vmatprep.subr.mxu0 0.0
        %3506 = vmatpush1.msra.mxu0 0.0
        %3507 = vmatprep.subr.mxu0 0.0
        %3508 = vmatpush1.msra.mxu0 0.0
        %3509 = vmatprep.subr.mxu0 0.0
        %3510 = vmatpush1.msra.mxu0 %v207
        %3511 = vmatprep.subr.mxu0 0.0
        %3512 = vmatpush1.msra.mxu0 %v206
        %3513 = vmatprep.subr.mxu0 0.0
        %3514 = vmatpush2.msra.mxu0 0.0
        %3515 = vmatprep.subr.mxu0 0.0
        %3516 = vmatpush2.msra.mxu0 0.0
        %3517 = vmatprep.subr.mxu0 0.0
        %3518 = vmatpush2.msra.mxu0 0.0
        %3519 = vmatprep.subr.mxu0 0.0
        %3520 = vmatpush2.msra.mxu0 0.0
        %3521 = vmatprep.subr.mxu0 0.0
        %3522 = vmatpush2.msra.mxu0 0.0
        %3523 = vmatprep.subr.mxu0 0.0
        %3524 = vmatpush2.msra.mxu0 0.0
        %3525 = vmatprep.subr.mxu0 0.0
        %3526 = vmatpush2.msra.mxu0 0.0
        %3527 = vmatprep.subr.mxu0 0.0
        %3528 = vmatpush2.msra.mxu0 0.0
        %3529 = vmatprep.subr.mxu0 0.0
        %3530 = vmatpush2.msra.mxu0 0.0
        %3531 = vmatprep.subr.mxu0 0.0
        %3532 = vmatpush2.msra.mxu0 0.0
        %3533 = vmatprep.subr.mxu0 0.0
        %3534 = vmatpush2.msra.mxu0 0.0
        %3535 = vmatprep.subr.mxu0 0.0
        %3536 = vmatpush2.msra.mxu0 0.0
        %3537 = vmatprep.subr.mxu0 0.0
        %3538 = vmatpush2.msra.mxu0 0.0
        %3539 = vmatprep.subr.mxu0 0.0
        %3540 = vmatpush2.msra.mxu0 0.0
        %3541 = vmatprep.subr.mxu0 0.0
        %3542 = vmatpush2.msra.mxu0 0.0
        %3543 = vmatprep.subr.mxu0 0.0
        %3544 = vmatpush2.msra.mxu0 0.0
        %3545 = vmatprep.mubr.f32.mxu0 0.0
        %3546 = vmatmul.mubr.f32.gmra.mxu0 %v3339
        %v3547 = vpop.f32.mrf.mxu0
        %v3548 = vadd.f32 0.0, %v3547
        %v3549 = vpop.f32.mrf.mxu0
        %3550 = vdwg.mxu0
        %3551 = vmatprep.subr.mxu0 0.0
        %3552 = vmatpush1.msra.mxu0 0.0
        %3553 = vmatprep.subr.mxu0 0.0
        %3554 = vmatpush1.msra.mxu0 0.0
        %3555 = vmatprep.subr.mxu0 0.0
        %3556 = vmatpush1.msra.mxu0 0.0
        %3557 = vmatprep.subr.mxu0 0.0
        %3558 = vmatpush1.msra.mxu0 0.0
        %3559 = vmatprep.subr.mxu0 0.0
        %3560 = vmatpush1.msra.mxu0 0.0
        %3561 = vmatprep.subr.mxu0 0.0
        %3562 = vmatpush1.msra.mxu0 0.0
        %3563 = vmatprep.subr.mxu0 0.0
        %3564 = vmatpush1.msra.mxu0 0.0
        %3565 = vmatprep.subr.mxu0 0.0
        %3566 = vmatpush1.msra.mxu0 0.0
        %3567 = vmatprep.subr.mxu0 0.0
        %3568 = vmatpush1.msra.mxu0 0.0
        %3569 = vmatprep.subr.mxu0 0.0
        %3570 = vmatpush1.msra.mxu0 0.0
        %3571 = vmatprep.subr.mxu0 0.0
        %3572 = vmatpush1.msra.mxu0 0.0
        %3573 = vmatprep.subr.mxu0 0.0
        %3574 = vmatpush1.msra.mxu0 0.0
        %3575 = vmatprep.subr.mxu0 0.0
        %3576 = vmatpush1.msra.mxu0 0.0
        %3577 = vmatprep.subr.mxu0 0.0
        %3578 = vmatpush1.msra.mxu0 0.0
        %3579 = vmatprep.subr.mxu0 0.0
        %3580 = vmatpush1.msra.mxu0 %v212
        %3581 = vmatprep.subr.mxu0 0.0
        %3582 = vmatpush1.msra.mxu0 %v211
        %3583 = vmatprep.subr.mxu0 0.0
        %3584 = vmatpush2.msra.mxu0 0.0
        %3585 = vmatprep.subr.mxu0 0.0
        %3586 = vmatpush2.msra.mxu0 0.0
        %3587 = vmatprep.subr.mxu0 0.0
        %3588 = vmatpush2.msra.mxu0 0.0
        %3589 = vmatprep.subr.mxu0 0.0
        %3590 = vmatpush2.msra.mxu0 0.0
        %3591 = vmatprep.subr.mxu0 0.0
        %3592 = vmatpush2.msra.mxu0 0.0
        %3593 = vmatprep.subr.mxu0 0.0
        %3594 = vmatpush2.msra.mxu0 0.0
        %3595 = vmatprep.subr.mxu0 0.0
        %3596 = vmatpush2.msra.mxu0 0.0
        %3597 = vmatprep.subr.mxu0 0.0
        %3598 = vmatpush2.msra.mxu0 0.0
        %3599 = vmatprep.subr.mxu0 0.0
        %3600 = vmatpush2.msra.mxu0 0.0
        %3601 = vmatprep.subr.mxu0 0.0
        %3602 = vmatpush2.msra.mxu0 0.0
        %3603 = vmatprep.subr.mxu0 0.0
        %3604 = vmatpush2.msra.mxu0 0.0
        %3605 = vmatprep.subr.mxu0 0.0
        %3606 = vmatpush2.msra.mxu0 0.0
        %3607 = vmatprep.subr.mxu0 0.0
        %3608 = vmatpush2.msra.mxu0 0.0
        %3609 = vmatprep.subr.mxu0 0.0
        %3610 = vmatpush2.msra.mxu0 0.0
        %3611 = vmatprep.subr.mxu0 0.0
        %3612 = vmatpush2.msra.mxu0 0.0
        %3613 = vmatprep.subr.mxu0 0.0
        %3614 = vmatpush2.msra.mxu0 0.0
        %3615 = vmatprep.mubr.f32.mxu0 0.0
        %3616 = vmatmul.mubr.f32.gmra.mxu0 %v3339
        %v3617 = vpop.f32.mrf.mxu0
        %v3618 = vadd.f32 0.0, %v3617
        %v3619 = vpop.f32.mrf.mxu0
        %3620 = vdwg.mxu0
        %v3622 = vsel %vm215, %v3195, 0
        %3624 = vmatprep.subr.mxu0 0.0
        %3625 = vmatpush1.msra.mxu0 0.0
        %3626 = vmatprep.subr.mxu0 0.0
        %3627 = vmatpush1.msra.mxu0 0.0
        %3628 = vmatprep.subr.mxu0 0.0
        %3629 = vmatpush1.msra.mxu0 0.0
        %3630 = vmatprep.subr.mxu0 0.0
        %3631 = vmatpush1.msra.mxu0 0.0
        %3632 = vmatprep.subr.mxu0 0.0
        %3633 = vmatpush1.msra.mxu0 0.0
        %3634 = vmatprep.subr.mxu0 0.0
        %3635 = vmatpush1.msra.mxu0 0.0
        %3636 = vmatprep.subr.mxu0 0.0
        %3637 = vmatpush1.msra.mxu0 0.0
        %3638 = vmatprep.subr.mxu0 0.0
        %3639 = vmatpush1.msra.mxu0 0.0
        %3640 = vmatprep.subr.mxu0 0.0
        %3641 = vmatpush1.msra.mxu0 0.0
        %3642 = vmatprep.subr.mxu0 0.0
        %3643 = vmatpush1.msra.mxu0 0.0
        %3644 = vmatprep.subr.mxu0 0.0
        %3645 = vmatpush1.msra.mxu0 0.0
        %3646 = vmatprep.subr.mxu0 0.0
        %3647 = vmatpush1.msra.mxu0 0.0
        %3648 = vmatprep.subr.mxu0 0.0
        %3649 = vmatpush1.msra.mxu0 0.0
        %3650 = vmatprep.subr.mxu0 0.0
        %3651 = vmatpush1.msra.mxu0 0.0
        %3652 = vmatprep.subr.mxu0 0.0
        %3653 = vmatpush1.msra.mxu0 %v198
        %3654 = vmatprep.subr.mxu0 0.0
        %3655 = vmatpush1.msra.mxu0 %v197
        %3656 = vmatprep.subr.mxu0 0.0
        %3657 = vmatpush2.msra.mxu0 0.0
        %3658 = vmatprep.subr.mxu0 0.0
        %3659 = vmatpush2.msra.mxu0 0.0
        %3660 = vmatprep.subr.mxu0 0.0
        %3661 = vmatpush2.msra.mxu0 0.0
        %3662 = vmatprep.subr.mxu0 0.0
        %3663 = vmatpush2.msra.mxu0 0.0
        %3664 = vmatprep.subr.mxu0 0.0
        %3665 = vmatpush2.msra.mxu0 0.0
        %3666 = vmatprep.subr.mxu0 0.0
        %3667 = vmatpush2.msra.mxu0 0.0
        %3668 = vmatprep.subr.mxu0 0.0
        %3669 = vmatpush2.msra.mxu0 0.0
        %3670 = vmatprep.subr.mxu0 0.0
        %3671 = vmatpush2.msra.mxu0 0.0
        %3672 = vmatprep.subr.mxu0 0.0
        %3673 = vmatpush2.msra.mxu0 0.0
        %3674 = vmatprep.subr.mxu0 0.0
        %3675 = vmatpush2.msra.mxu0 0.0
        %3676 = vmatprep.subr.mxu0 0.0
        %3677 = vmatpush2.msra.mxu0 0.0
        %3678 = vmatprep.subr.mxu0 0.0
        %3679 = vmatpush2.msra.mxu0 0.0
        %3680 = vmatprep.subr.mxu0 0.0
        %3681 = vmatpush2.msra.mxu0 0.0
        %3682 = vmatprep.subr.mxu0 0.0
        %3683 = vmatpush2.msra.mxu0 0.0
        %3684 = vmatprep.subr.mxu0 0.0
        %3685 = vmatpush2.msra.mxu0 0.0
        %3686 = vmatprep.subr.mxu0 0.0
        %3687 = vmatpush2.msra.mxu0 0.0
        %3688 = vmatprep.mubr.f32.mxu0 0.0
        %3689 = vmatmul.mubr.f32.gmra.mxu0 %v3622
        %v3690 = vpop.f32.mrf.mxu0
        %v3691 = vadd.f32 0.0, %v3690
        %v3692 = vpop.f32.mrf.mxu0
        %3693 = vdwg.mxu0
        %3694 = vmatprep.subr.mxu0 0.0
        %3695 = vmatpush1.msra.mxu0 0.0
        %3696 = vmatprep.subr.mxu0 0.0
        %3697 = vmatpush1.msra.mxu0 0.0
        %3698 = vmatprep.subr.mxu0 0.0
        %3699 = vmatpush1.msra.mxu0 0.0
        %3700 = vmatprep.subr.mxu0 0.0
        %3701 = vmatpush1.msra.mxu0 0.0
        %3702 = vmatprep.subr.mxu0 0.0
        %3703 = vmatpush1.msra.mxu0 0.0
        %3704 = vmatprep.subr.mxu0 0.0
        %3705 = vmatpush1.msra.mxu0 0.0
        %3706 = vmatprep.subr.mxu0 0.0
        %3707 = vmatpush1.msra.mxu0 0.0
        %3708 = vmatprep.subr.mxu0 0.0
        %3709 = vmatpush1.msra.mxu0 0.0
        %3710 = vmatprep.subr.mxu0 0.0
        %3711 = vmatpush1.msra.mxu0 0.0
        %3712 = vmatprep.subr.mxu0 0.0
        %3713 = vmatpush1.msra.mxu0 0.0
        %3714 = vmatprep.subr.mxu0 0.0
        %3715 = vmatpush1.msra.mxu0 0.0
        %3716 = vmatprep.subr.mxu0 0.0
        %3717 = vmatpush1.msra.mxu0 0.0
        %3718 = vmatprep.subr.mxu0 0.0
        %3719 = vmatpush1.msra.mxu0 0.0
        %3720 = vmatprep.subr.mxu0 0.0
        %3721 = vmatpush1.msra.mxu0 0.0
        %3722 = vmatprep.subr.mxu0 0.0
        %3723 = vmatpush1.msra.mxu0 %v202
        %3724 = vmatprep.subr.mxu0 0.0
        %3725 = vmatpush1.msra.mxu0 %v201
        %3726 = vmatprep.subr.mxu0 0.0
        %3727 = vmatpush2.msra.mxu0 0.0
        %3728 = vmatprep.subr.mxu0 0.0
        %3729 = vmatpush2.msra.mxu0 0.0
        %3730 = vmatprep.subr.mxu0 0.0
        %3731 = vmatpush2.msra.mxu0 0.0
        %3732 = vmatprep.subr.mxu0 0.0
        %3733 = vmatpush2.msra.mxu0 0.0
        %3734 = vmatprep.subr.mxu0 0.0
        %3735 = vmatpush2.msra.mxu0 0.0
        %3736 = vmatprep.subr.mxu0 0.0
        %3737 = vmatpush2.msra.mxu0 0.0
        %3738 = vmatprep.subr.mxu0 0.0
        %3739 = vmatpush2.msra.mxu0 0.0
        %3740 = vmatprep.subr.mxu0 0.0
        %3741 = vmatpush2.msra.mxu0 0.0
        %3742 = vmatprep.subr.mxu0 0.0
        %3743 = vmatpush2.msra.mxu0 0.0
        %3744 = vmatprep.subr.mxu0 0.0
        %3745 = vmatpush2.msra.mxu0 0.0
        %3746 = vmatprep.subr.mxu0 0.0
        %3747 = vmatpush2.msra.mxu0 0.0
        %3748 = vmatprep.subr.mxu0 0.0
        %3749 = vmatpush2.msra.mxu0 0.0
        %3750 = vmatprep.subr.mxu0 0.0
        %3751 = vmatpush2.msra.mxu0 0.0
        %3752 = vmatprep.subr.mxu0 0.0
        %3753 = vmatpush2.msra.mxu0 0.0
        %3754 = vmatprep.subr.mxu0 0.0
        %3755 = vmatpush2.msra.mxu0 0.0
        %3756 = vmatprep.subr.mxu0 0.0
        %3757 = vmatpush2.msra.mxu0 0.0
        %3758 = vmatprep.mubr.f32.mxu0 0.0
        %3759 = vmatmul.mubr.f32.gmra.mxu0 %v3622
        %v3760 = vpop.f32.mrf.mxu0
        %v3761 = vadd.f32 0.0, %v3760
        %v3762 = vpop.f32.mrf.mxu0
        %3763 = vdwg.mxu0
        %3764 = vmatprep.subr.mxu0 0.0
        %3765 = vmatpush1.msra.mxu0 0.0
        %3766 = vmatprep.subr.mxu0 0.0
        %3767 = vmatpush1.msra.mxu0 0.0
        %3768 = vmatprep.subr.mxu0 0.0
        %3769 = vmatpush1.msra.mxu0 0.0
        %3770 = vmatprep.subr.mxu0 0.0
        %3771 = vmatpush1.msra.mxu0 0.0
        %3772 = vmatprep.subr.mxu0 0.0
        %3773 = vmatpush1.msra.mxu0 0.0
        %3774 = vmatprep.subr.mxu0 0.0
        %3775 = vmatpush1.msra.mxu0 0.0
        %3776 = vmatprep.subr.mxu0 0.0
        %3777 = vmatpush1.msra.mxu0 0.0
        %3778 = vmatprep.subr.mxu0 0.0
        %3779 = vmatpush1.msra.mxu0 0.0
        %3780 = vmatprep.subr.mxu0 0.0
        %3781 = vmatpush1.msra.mxu0 0.0
        %3782 = vmatprep.subr.mxu0 0.0
        %3783 = vmatpush1.msra.mxu0 0.0
        %3784 = vmatprep.subr.mxu0 0.0
        %3785 = vmatpush1.msra.mxu0 0.0
        %3786 = vmatprep.subr.mxu0 0.0
        %3787 = vmatpush1.msra.mxu0 0.0
        %3788 = vmatprep.subr.mxu0 0.0
        %3789 = vmatpush1.msra.mxu0 0.0
        %3790 = vmatprep.subr.mxu0 0.0
        %3791 = vmatpush1.msra.mxu0 0.0
        %3792 = vmatprep.subr.mxu0 0.0
        %3793 = vmatpush1.msra.mxu0 %v207
        %3794 = vmatprep.subr.mxu0 0.0
        %3795 = vmatpush1.msra.mxu0 %v206
        %3796 = vmatprep.subr.mxu0 0.0
        %3797 = vmatpush2.msra.mxu0 0.0
        %3798 = vmatprep.subr.mxu0 0.0
        %3799 = vmatpush2.msra.mxu0 0.0
        %3800 = vmatprep.subr.mxu0 0.0
        %3801 = vmatpush2.msra.mxu0 0.0
        %3802 = vmatprep.subr.mxu0 0.0
        %3803 = vmatpush2.msra.mxu0 0.0
        %3804 = vmatprep.subr.mxu0 0.0
        %3805 = vmatpush2.msra.mxu0 0.0
        %3806 = vmatprep.subr.mxu0 0.0
        %3807 = vmatpush2.msra.mxu0 0.0
        %3808 = vmatprep.subr.mxu0 0.0
        %3809 = vmatpush2.msra.mxu0 0.0
        %3810 = vmatprep.subr.mxu0 0.0
        %3811 = vmatpush2.msra.mxu0 0.0
        %3812 = vmatprep.subr.mxu0 0.0
        %3813 = vmatpush2.msra.mxu0 0.0
        %3814 = vmatprep.subr.mxu0 0.0
        %3815 = vmatpush2.msra.mxu0 0.0
        %3816 = vmatprep.subr.mxu0 0.0
        %3817 = vmatpush2.msra.mxu0 0.0
        %3818 = vmatprep.subr.mxu0 0.0
        %3819 = vmatpush2.msra.mxu0 0.0
        %3820 = vmatprep.subr.mxu0 0.0
        %3821 = vmatpush2.msra.mxu0 0.0
        %3822 = vmatprep.subr.mxu0 0.0
        %3823 = vmatpush2.msra.mxu0 0.0
        %3824 = vmatprep.subr.mxu0 0.0
        %3825 = vmatpush2.msra.mxu0 0.0
        %3826 = vmatprep.subr.mxu0 0.0
        %3827 = vmatpush2.msra.mxu0 0.0
        %3828 = vmatprep.mubr.f32.mxu0 0.0
        %3829 = vmatmul.mubr.f32.gmra.mxu0 %v3622
        %v3830 = vpop.f32.mrf.mxu0
        %v3831 = vadd.f32 0.0, %v3830
        %v3832 = vpop.f32.mrf.mxu0
        %3833 = vdwg.mxu0
        %3834 = vmatprep.subr.mxu0 0.0
        %3835 = vmatpush1.msra.mxu0 0.0
        %3836 = vmatprep.subr.mxu0 0.0
        %3837 = vmatpush1.msra.mxu0 0.0
        %3838 = vmatprep.subr.mxu0 0.0
        %3839 = vmatpush1.msra.mxu0 0.0
        %3840 = vmatprep.subr.mxu0 0.0
        %3841 = vmatpush1.msra.mxu0 0.0
        %3842 = vmatprep.subr.mxu0 0.0
        %3843 = vmatpush1.msra.mxu0 0.0
        %3844 = vmatprep.subr.mxu0 0.0
        %3845 = vmatpush1.msra.mxu0 0.0
        %3846 = vmatprep.subr.mxu0 0.0
        %3847 = vmatpush1.msra.mxu0 0.0
        %3848 = vmatprep.subr.mxu0 0.0
        %3849 = vmatpush1.msra.mxu0 0.0
        %3850 = vmatprep.subr.mxu0 0.0
        %3851 = vmatpush1.msra.mxu0 0.0
        %3852 = vmatprep.subr.mxu0 0.0
        %3853 = vmatpush1.msra.mxu0 0.0
        %3854 = vmatprep.subr.mxu0 0.0
        %3855 = vmatpush1.msra.mxu0 0.0
        %3856 = vmatprep.subr.mxu0 0.0
        %3857 = vmatpush1.msra.mxu0 0.0
        %3858 = vmatprep.subr.mxu0 0.0
        %3859 = vmatpush1.msra.mxu0 0.0
        %3860 = vmatprep.subr.mxu0 0.0
        %3861 = vmatpush1.msra.mxu0 0.0
        %3862 = vmatprep.subr.mxu0 0.0
        %3863 = vmatpush1.msra.mxu0 %v212
        %3864 = vmatprep.subr.mxu0 0.0
        %3865 = vmatpush1.msra.mxu0 %v211
        %3866 = vmatprep.subr.mxu0 0.0
        %3867 = vmatpush2.msra.mxu0 0.0
        %3868 = vmatprep.subr.mxu0 0.0
        %3869 = vmatpush2.msra.mxu0 0.0
        %3870 = vmatprep.subr.mxu0 0.0
        %3871 = vmatpush2.msra.mxu0 0.0
        %3872 = vmatprep.subr.mxu0 0.0
        %3873 = vmatpush2.msra.mxu0 0.0
        %3874 = vmatprep.subr.mxu0 0.0
        %3875 = vmatpush2.msra.mxu0 0.0
        %3876 = vmatprep.subr.mxu0 0.0
        %3877 = vmatpush2.msra.mxu0 0.0
        %3878 = vmatprep.subr.mxu0 0.0
        %3879 = vmatpush2.msra.mxu0 0.0
        %3880 = vmatprep.subr.mxu0 0.0
        %3881 = vmatpush2.msra.mxu0 0.0
        %3882 = vmatprep.subr.mxu0 0.0
        %3883 = vmatpush2.msra.mxu0 0.0
        %3884 = vmatprep.subr.mxu0 0.0
        %3885 = vmatpush2.msra.mxu0 0.0
        %3886 = vmatprep.subr.mxu0 0.0
        %3887 = vmatpush2.msra.mxu0 0.0
        %3888 = vmatprep.subr.mxu0 0.0
        %3889 = vmatpush2.msra.mxu0 0.0
        %3890 = vmatprep.subr.mxu0 0.0
        %3891 = vmatpush2.msra.mxu0 0.0
        %3892 = vmatprep.subr.mxu0 0.0
        %3893 = vmatpush2.msra.mxu0 0.0
        %3894 = vmatprep.subr.mxu0 0.0
        %3895 = vmatpush2.msra.mxu0 0.0
        %3896 = vmatprep.subr.mxu0 0.0
        %3897 = vmatpush2.msra.mxu0 0.0
        %3898 = vmatprep.mubr.f32.mxu0 0.0
        %3899 = vmatmul.mubr.f32.gmra.mxu0 %v3622
        %v3900 = vpop.f32.mrf.mxu0
        %v3901 = vadd.f32 0.0, %v3900
        %v3902 = vpop.f32.mrf.mxu0
        %3903 = vdwg.mxu0
        %v3905 = vsel %vm215, %v3265, 0
        %3907 = vmatprep.subr.mxu0 0.0
        %3908 = vmatpush1.msra.mxu0 0.0
        %3909 = vmatprep.subr.mxu0 0.0
        %3910 = vmatpush1.msra.mxu0 0.0
        %3911 = vmatprep.subr.mxu0 0.0
        %3912 = vmatpush1.msra.mxu0 0.0
        %3913 = vmatprep.subr.mxu0 0.0
        %3914 = vmatpush1.msra.mxu0 0.0
        %3915 = vmatprep.subr.mxu0 0.0
        %3916 = vmatpush1.msra.mxu0 0.0
        %3917 = vmatprep.subr.mxu0 0.0
        %3918 = vmatpush1.msra.mxu0 0.0
        %3919 = vmatprep.subr.mxu0 0.0
        %3920 = vmatpush1.msra.mxu0 0.0
        %3921 = vmatprep.subr.mxu0 0.0
        %3922 = vmatpush1.msra.mxu0 0.0
        %3923 = vmatprep.subr.mxu0 0.0
        %3924 = vmatpush1.msra.mxu0 0.0
        %3925 = vmatprep.subr.mxu0 0.0
        %3926 = vmatpush1.msra.mxu0 0.0
        %3927 = vmatprep.subr.mxu0 0.0
        %3928 = vmatpush1.msra.mxu0 0.0
        %3929 = vmatprep.subr.mxu0 0.0
        %3930 = vmatpush1.msra.mxu0 0.0
        %3931 = vmatprep.subr.mxu0 0.0
        %3932 = vmatpush1.msra.mxu0 0.0
        %3933 = vmatprep.subr.mxu0 0.0
        %3934 = vmatpush1.msra.mxu0 0.0
        %3935 = vmatprep.subr.mxu0 0.0
        %3936 = vmatpush1.msra.mxu0 %v198
        %3937 = vmatprep.subr.mxu0 0.0
        %3938 = vmatpush1.msra.mxu0 %v197
        %3939 = vmatprep.subr.mxu0 0.0
        %3940 = vmatpush2.msra.mxu0 0.0
        %3941 = vmatprep.subr.mxu0 0.0
        %3942 = vmatpush2.msra.mxu0 0.0
        %3943 = vmatprep.subr.mxu0 0.0
        %3944 = vmatpush2.msra.mxu0 0.0
        %3945 = vmatprep.subr.mxu0 0.0
        %3946 = vmatpush2.msra.mxu0 0.0
        %3947 = vmatprep.subr.mxu0 0.0
        %3948 = vmatpush2.msra.mxu0 0.0
        %3949 = vmatprep.subr.mxu0 0.0
        %3950 = vmatpush2.msra.mxu0 0.0
        %3951 = vmatprep.subr.mxu0 0.0
        %3952 = vmatpush2.msra.mxu0 0.0
        %3953 = vmatprep.subr.mxu0 0.0
        %3954 = vmatpush2.msra.mxu0 0.0
        %3955 = vmatprep.subr.mxu0 0.0
        %3956 = vmatpush2.msra.mxu0 0.0
        %3957 = vmatprep.subr.mxu0 0.0
        %3958 = vmatpush2.msra.mxu0 0.0
        %3959 = vmatprep.subr.mxu0 0.0
        %3960 = vmatpush2.msra.mxu0 0.0
        %3961 = vmatprep.subr.mxu0 0.0
        %3962 = vmatpush2.msra.mxu0 0.0
        %3963 = vmatprep.subr.mxu0 0.0
        %3964 = vmatpush2.msra.mxu0 0.0
        %3965 = vmatprep.subr.mxu0 0.0
        %3966 = vmatpush2.msra.mxu0 0.0
        %3967 = vmatprep.subr.mxu0 0.0
        %3968 = vmatpush2.msra.mxu0 0.0
        %3969 = vmatprep.subr.mxu0 0.0
        %3970 = vmatpush2.msra.mxu0 0.0
        %3971 = vmatprep.mubr.f32.mxu0 0.0
        %3972 = vmatmul.mubr.f32.gmra.mxu0 %v3905
        %v3973 = vpop.f32.mrf.mxu0
        %v3974 = vadd.f32 0.0, %v3973
        %v3975 = vpop.f32.mrf.mxu0
        %3976 = vdwg.mxu0
        %3977 = vmatprep.subr.mxu0 0.0
        %3978 = vmatpush1.msra.mxu0 0.0
        %3979 = vmatprep.subr.mxu0 0.0
        %3980 = vmatpush1.msra.mxu0 0.0
        %3981 = vmatprep.subr.mxu0 0.0
        %3982 = vmatpush1.msra.mxu0 0.0
        %3983 = vmatprep.subr.mxu0 0.0
        %3984 = vmatpush1.msra.mxu0 0.0
        %3985 = vmatprep.subr.mxu0 0.0
        %3986 = vmatpush1.msra.mxu0 0.0
        %3987 = vmatprep.subr.mxu0 0.0
        %3988 = vmatpush1.msra.mxu0 0.0
        %3989 = vmatprep.subr.mxu0 0.0
        %3990 = vmatpush1.msra.mxu0 0.0
        %3991 = vmatprep.subr.mxu0 0.0
        %3992 = vmatpush1.msra.mxu0 0.0
        %3993 = vmatprep.subr.mxu0 0.0
        %3994 = vmatpush1.msra.mxu0 0.0
        %3995 = vmatprep.subr.mxu0 0.0
        %3996 = vmatpush1.msra.mxu0 0.0
        %3997 = vmatprep.subr.mxu0 0.0
        %3998 = vmatpush1.msra.mxu0 0.0
        %3999 = vmatprep.subr.mxu0 0.0
        %4000 = vmatpush1.msra.mxu0 0.0
        %4001 = vmatprep.subr.mxu0 0.0
        %4002 = vmatpush1.msra.mxu0 0.0
        %4003 = vmatprep.subr.mxu0 0.0
        %4004 = vmatpush1.msra.mxu0 0.0
        %4005 = vmatprep.subr.mxu0 0.0
        %4006 = vmatpush1.msra.mxu0 %v202
        %4007 = vmatprep.subr.mxu0 0.0
        %4008 = vmatpush1.msra.mxu0 %v201
        %4009 = vmatprep.subr.mxu0 0.0
        %4010 = vmatpush2.msra.mxu0 0.0
        %4011 = vmatprep.subr.mxu0 0.0
        %4012 = vmatpush2.msra.mxu0 0.0
        %4013 = vmatprep.subr.mxu0 0.0
        %4014 = vmatpush2.msra.mxu0 0.0
        %4015 = vmatprep.subr.mxu0 0.0
        %4016 = vmatpush2.msra.mxu0 0.0
        %4017 = vmatprep.subr.mxu0 0.0
        %4018 = vmatpush2.msra.mxu0 0.0
        %4019 = vmatprep.subr.mxu0 0.0
        %4020 = vmatpush2.msra.mxu0 0.0
        %4021 = vmatprep.subr.mxu0 0.0
        %4022 = vmatpush2.msra.mxu0 0.0
        %4023 = vmatprep.subr.mxu0 0.0
        %4024 = vmatpush2.msra.mxu0 0.0
        %4025 = vmatprep.subr.mxu0 0.0
        %4026 = vmatpush2.msra.mxu0 0.0
        %4027 = vmatprep.subr.mxu0 0.0
        %4028 = vmatpush2.msra.mxu0 0.0
        %4029 = vmatprep.subr.mxu0 0.0
        %4030 = vmatpush2.msra.mxu0 0.0
        %4031 = vmatprep.subr.mxu0 0.0
        %4032 = vmatpush2.msra.mxu0 0.0
        %4033 = vmatprep.subr.mxu0 0.0
        %4034 = vmatpush2.msra.mxu0 0.0
        %4035 = vmatprep.subr.mxu0 0.0
        %4036 = vmatpush2.msra.mxu0 0.0
        %4037 = vmatprep.subr.mxu0 0.0
        %4038 = vmatpush2.msra.mxu0 0.0
        %4039 = vmatprep.subr.mxu0 0.0
        %4040 = vmatpush2.msra.mxu0 0.0
        %4041 = vmatprep.mubr.f32.mxu0 0.0
        %4042 = vmatmul.mubr.f32.gmra.mxu0 %v3905
        %v4043 = vpop.f32.mrf.mxu0
        %v4044 = vadd.f32 0.0, %v4043
        %v4045 = vpop.f32.mrf.mxu0
        %4046 = vdwg.mxu0
        %4047 = vmatprep.subr.mxu0 0.0
        %4048 = vmatpush1.msra.mxu0 0.0
        %4049 = vmatprep.subr.mxu0 0.0
        %4050 = vmatpush1.msra.mxu0 0.0
        %4051 = vmatprep.subr.mxu0 0.0
        %4052 = vmatpush1.msra.mxu0 0.0
        %4053 = vmatprep.subr.mxu0 0.0
        %4054 = vmatpush1.msra.mxu0 0.0
        %4055 = vmatprep.subr.mxu0 0.0
        %4056 = vmatpush1.msra.mxu0 0.0
        %4057 = vmatprep.subr.mxu0 0.0
        %4058 = vmatpush1.msra.mxu0 0.0
        %4059 = vmatprep.subr.mxu0 0.0
        %4060 = vmatpush1.msra.mxu0 0.0
        %4061 = vmatprep.subr.mxu0 0.0
        %4062 = vmatpush1.msra.mxu0 0.0
        %4063 = vmatprep.subr.mxu0 0.0
        %4064 = vmatpush1.msra.mxu0 0.0
        %4065 = vmatprep.subr.mxu0 0.0
        %4066 = vmatpush1.msra.mxu0 0.0
        %4067 = vmatprep.subr.mxu0 0.0
        %4068 = vmatpush1.msra.mxu0 0.0
        %4069 = vmatprep.subr.mxu0 0.0
        %4070 = vmatpush1.msra.mxu0 0.0
        %4071 = vmatprep.subr.mxu0 0.0
        %4072 = vmatpush1.msra.mxu0 0.0
        %4073 = vmatprep.subr.mxu0 0.0
        %4074 = vmatpush1.msra.mxu0 0.0
        %4075 = vmatprep.subr.mxu0 0.0
        %4076 = vmatpush1.msra.mxu0 %v207
        %4077 = vmatprep.subr.mxu0 0.0
        %4078 = vmatpush1.msra.mxu0 %v206
        %4079 = vmatprep.subr.mxu0 0.0
        %4080 = vmatpush2.msra.mxu0 0.0
        %4081 = vmatprep.subr.mxu0 0.0
        %4082 = vmatpush2.msra.mxu0 0.0
        %4083 = vmatprep.subr.mxu0 0.0
        %4084 = vmatpush2.msra.mxu0 0.0
        %4085 = vmatprep.subr.mxu0 0.0
        %4086 = vmatpush2.msra.mxu0 0.0
        %4087 = vmatprep.subr.mxu0 0.0
        %4088 = vmatpush2.msra.mxu0 0.0
        %4089 = vmatprep.subr.mxu0 0.0
        %4090 = vmatpush2.msra.mxu0 0.0
        %4091 = vmatprep.subr.mxu0 0.0
        %4092 = vmatpush2.msra.mxu0 0.0
        %4093 = vmatprep.subr.mxu0 0.0
        %4094 = vmatpush2.msra.mxu0 0.0
        %4095 = vmatprep.subr.mxu0 0.0
        %4096 = vmatpush2.msra.mxu0 0.0
        %4097 = vmatprep.subr.mxu0 0.0
        %4098 = vmatpush2.msra.mxu0 0.0
        %4099 = vmatprep.subr.mxu0 0.0
        %4100 = vmatpush2.msra.mxu0 0.0
        %4101 = vmatprep.subr.mxu0 0.0
        %4102 = vmatpush2.msra.mxu0 0.0
        %4103 = vmatprep.subr.mxu0 0.0
        %4104 = vmatpush2.msra.mxu0 0.0
        %4105 = vmatprep.subr.mxu0 0.0
        %4106 = vmatpush2.msra.mxu0 0.0
        %4107 = vmatprep.subr.mxu0 0.0
        %4108 = vmatpush2.msra.mxu0 0.0
        %4109 = vmatprep.subr.mxu0 0.0
        %4110 = vmatpush2.msra.mxu0 0.0
        %4111 = vmatprep.mubr.f32.mxu0 0.0
        %4112 = vmatmul.mubr.f32.gmra.mxu0 %v3905
        %v4113 = vpop.f32.mrf.mxu0
        %v4114 = vadd.f32 0.0, %v4113
        %v4115 = vpop.f32.mrf.mxu0
        %4116 = vdwg.mxu0
        %4117 = vmatprep.subr.mxu0 0.0
        %4118 = vmatpush1.msra.mxu0 0.0
        %4119 = vmatprep.subr.mxu0 0.0
        %4120 = vmatpush1.msra.mxu0 0.0
        %4121 = vmatprep.subr.mxu0 0.0
        %4122 = vmatpush1.msra.mxu0 0.0
        %4123 = vmatprep.subr.mxu0 0.0
        %4124 = vmatpush1.msra.mxu0 0.0
        %4125 = vmatprep.subr.mxu0 0.0
        %4126 = vmatpush1.msra.mxu0 0.0
        %4127 = vmatprep.subr.mxu0 0.0
        %4128 = vmatpush1.msra.mxu0 0.0
        %4129 = vmatprep.subr.mxu0 0.0
        %4130 = vmatpush1.msra.mxu0 0.0
        %4131 = vmatprep.subr.mxu0 0.0
        %4132 = vmatpush1.msra.mxu0 0.0
        %4133 = vmatprep.subr.mxu0 0.0
        %4134 = vmatpush1.msra.mxu0 0.0
        %4135 = vmatprep.subr.mxu0 0.0
        %4136 = vmatpush1.msra.mxu0 0.0
        %4137 = vmatprep.subr.mxu0 0.0
        %4138 = vmatpush1.msra.mxu0 0.0
        %4139 = vmatprep.subr.mxu0 0.0
        %4140 = vmatpush1.msra.mxu0 0.0
        %4141 = vmatprep.subr.mxu0 0.0
        %4142 = vmatpush1.msra.mxu0 0.0
        %4143 = vmatprep.subr.mxu0 0.0
        %4144 = vmatpush1.msra.mxu0 0.0
        %4145 = vmatprep.subr.mxu0 0.0
        %4146 = vmatpush1.msra.mxu0 %v212
        %4147 = vmatprep.subr.mxu0 0.0
        %4148 = vmatpush1.msra.mxu0 %v211
        %4149 = vmatprep.subr.mxu0 0.0
        %4150 = vmatpush2.msra.mxu0 0.0
        %4151 = vmatprep.subr.mxu0 0.0
        %4152 = vmatpush2.msra.mxu0 0.0
        %4153 = vmatprep.subr.mxu0 0.0
        %4154 = vmatpush2.msra.mxu0 0.0
        %4155 = vmatprep.subr.mxu0 0.0
        %4156 = vmatpush2.msra.mxu0 0.0
        %4157 = vmatprep.subr.mxu0 0.0
        %4158 = vmatpush2.msra.mxu0 0.0
        %4159 = vmatprep.subr.mxu0 0.0
        %4160 = vmatpush2.msra.mxu0 0.0
        %4161 = vmatprep.subr.mxu0 0.0
        %4162 = vmatpush2.msra.mxu0 0.0
        %4163 = vmatprep.subr.mxu0 0.0
        %4164 = vmatpush2.msra.mxu0 0.0
        %4165 = vmatprep.subr.mxu0 0.0
        %4166 = vmatpush2.msra.mxu0 0.0
        %4167 = vmatprep.subr.mxu0 0.0
        %4168 = vmatpush2.msra.mxu0 0.0
        %4169 = vmatprep.subr.mxu0 0.0
        %4170 = vmatpush2.msra.mxu0 0.0
        %4171 = vmatprep.subr.mxu0 0.0
        %4172 = vmatpush2.msra.mxu0 0.0
        %4173 = vmatprep.subr.mxu0 0.0
        %4174 = vmatpush2.msra.mxu0 0.0
        %4175 = vmatprep.subr.mxu0 0.0
        %4176 = vmatpush2.msra.mxu0 0.0
        %4177 = vmatprep.subr.mxu0 0.0
        %4178 = vmatpush2.msra.mxu0 0.0
        %4179 = vmatprep.subr.mxu0 0.0
        %4180 = vmatpush2.msra.mxu0 0.0
        %4181 = vmatprep.mubr.f32.mxu0 0.0
        %4182 = vmatmul.mubr.f32.gmra.mxu0 %v3905
        %v4183 = vpop.f32.mrf.mxu0
        %v4184 = vadd.f32 0.0, %v4183
        %v4185 = vpop.f32.mrf.mxu0
        %4186 = vdwg.mxu0
        %v4188 = vsel %vm215, %v3335, 0
        %4190 = vmatprep.subr.mxu0 0.0
        %4191 = vmatpush1.msra.mxu0 0.0
        %4192 = vmatprep.subr.mxu0 0.0
        %4193 = vmatpush1.msra.mxu0 0.0
        %4194 = vmatprep.subr.mxu0 0.0
        %4195 = vmatpush1.msra.mxu0 0.0
        %4196 = vmatprep.subr.mxu0 0.0
        %4197 = vmatpush1.msra.mxu0 0.0
        %4198 = vmatprep.subr.mxu0 0.0
        %4199 = vmatpush1.msra.mxu0 0.0
        %4200 = vmatprep.subr.mxu0 0.0
        %4201 = vmatpush1.msra.mxu0 0.0
        %4202 = vmatprep.subr.mxu0 0.0
        %4203 = vmatpush1.msra.mxu0 0.0
        %4204 = vmatprep.subr.mxu0 0.0
        %4205 = vmatpush1.msra.mxu0 0.0
        %4206 = vmatprep.subr.mxu0 0.0
        %4207 = vmatpush1.msra.mxu0 0.0
        %4208 = vmatprep.subr.mxu0 0.0
        %4209 = vmatpush1.msra.mxu0 0.0
        %4210 = vmatprep.subr.mxu0 0.0
        %4211 = vmatpush1.msra.mxu0 0.0
        %4212 = vmatprep.subr.mxu0 0.0
        %4213 = vmatpush1.msra.mxu0 0.0
        %4214 = vmatprep.subr.mxu0 0.0
        %4215 = vmatpush1.msra.mxu0 0.0
        %4216 = vmatprep.subr.mxu0 0.0
        %4217 = vmatpush1.msra.mxu0 0.0
        %4218 = vmatprep.subr.mxu0 0.0
        %4219 = vmatpush1.msra.mxu0 %v198
        %4220 = vmatprep.subr.mxu0 0.0
        %4221 = vmatpush1.msra.mxu0 %v197
        %4222 = vmatprep.subr.mxu0 0.0
        %4223 = vmatpush2.msra.mxu0 0.0
        %4224 = vmatprep.subr.mxu0 0.0
        %4225 = vmatpush2.msra.mxu0 0.0
        %4226 = vmatprep.subr.mxu0 0.0
        %4227 = vmatpush2.msra.mxu0 0.0
        %4228 = vmatprep.subr.mxu0 0.0
        %4229 = vmatpush2.msra.mxu0 0.0
        %4230 = vmatprep.subr.mxu0 0.0
        %4231 = vmatpush2.msra.mxu0 0.0
        %4232 = vmatprep.subr.mxu0 0.0
        %4233 = vmatpush2.msra.mxu0 0.0
        %4234 = vmatprep.subr.mxu0 0.0
        %4235 = vmatpush2.msra.mxu0 0.0
        %4236 = vmatprep.subr.mxu0 0.0
        %4237 = vmatpush2.msra.mxu0 0.0
        %4238 = vmatprep.subr.mxu0 0.0
        %4239 = vmatpush2.msra.mxu0 0.0
        %4240 = vmatprep.subr.mxu0 0.0
        %4241 = vmatpush2.msra.mxu0 0.0
        %4242 = vmatprep.subr.mxu0 0.0
        %4243 = vmatpush2.msra.mxu0 0.0
        %4244 = vmatprep.subr.mxu0 0.0
        %4245 = vmatpush2.msra.mxu0 0.0
        %4246 = vmatprep.subr.mxu0 0.0
        %4247 = vmatpush2.msra.mxu0 0.0
        %4248 = vmatprep.subr.mxu0 0.0
        %4249 = vmatpush2.msra.mxu0 0.0
        %4250 = vmatprep.subr.mxu0 0.0
        %4251 = vmatpush2.msra.mxu0 0.0
        %4252 = vmatprep.subr.mxu0 0.0
        %4253 = vmatpush2.msra.mxu0 0.0
        %4254 = vmatprep.mubr.f32.mxu0 0.0
        %4255 = vmatmul.mubr.f32.gmra.mxu0 %v4188
        %v4256 = vpop.f32.mrf.mxu0
        %v4257 = vadd.f32 0.0, %v4256
        %v4258 = vpop.f32.mrf.mxu0
        %4259 = vdwg.mxu0
        %4260 = vmatprep.subr.mxu0 0.0
        %4261 = vmatpush1.msra.mxu0 0.0
        %4262 = vmatprep.subr.mxu0 0.0
        %4263 = vmatpush1.msra.mxu0 0.0
        %4264 = vmatprep.subr.mxu0 0.0
        %4265 = vmatpush1.msra.mxu0 0.0
        %4266 = vmatprep.subr.mxu0 0.0
        %4267 = vmatpush1.msra.mxu0 0.0
        %4268 = vmatprep.subr.mxu0 0.0
        %4269 = vmatpush1.msra.mxu0 0.0
        %4270 = vmatprep.subr.mxu0 0.0
        %4271 = vmatpush1.msra.mxu0 0.0
        %4272 = vmatprep.subr.mxu0 0.0
        %4273 = vmatpush1.msra.mxu0 0.0
        %4274 = vmatprep.subr.mxu0 0.0
        %4275 = vmatpush1.msra.mxu0 0.0
        %4276 = vmatprep.subr.mxu0 0.0
        %4277 = vmatpush1.msra.mxu0 0.0
        %4278 = vmatprep.subr.mxu0 0.0
        %4279 = vmatpush1.msra.mxu0 0.0
        %4280 = vmatprep.subr.mxu0 0.0
        %4281 = vmatpush1.msra.mxu0 0.0
        %4282 = vmatprep.subr.mxu0 0.0
        %4283 = vmatpush1.msra.mxu0 0.0
        %4284 = vmatprep.subr.mxu0 0.0
        %4285 = vmatpush1.msra.mxu0 0.0
        %4286 = vmatprep.subr.mxu0 0.0
        %4287 = vmatpush1.msra.mxu0 0.0
        %4288 = vmatprep.subr.mxu0 0.0
        %4289 = vmatpush1.msra.mxu0 %v202
        %4290 = vmatprep.subr.mxu0 0.0
        %4291 = vmatpush1.msra.mxu0 %v201
        %4292 = vmatprep.subr.mxu0 0.0
        %4293 = vmatpush2.msra.mxu0 0.0
        %4294 = vmatprep.subr.mxu0 0.0
        %4295 = vmatpush2.msra.mxu0 0.0
        %4296 = vmatprep.subr.mxu0 0.0
        %4297 = vmatpush2.msra.mxu0 0.0
        %4298 = vmatprep.subr.mxu0 0.0
        %4299 = vmatpush2.msra.mxu0 0.0
        %4300 = vmatprep.subr.mxu0 0.0
        %4301 = vmatpush2.msra.mxu0 0.0
        %4302 = vmatprep.subr.mxu0 0.0
        %4303 = vmatpush2.msra.mxu0 0.0
        %4304 = vmatprep.subr.mxu0 0.0
        %4305 = vmatpush2.msra.mxu0 0.0
        %4306 = vmatprep.subr.mxu0 0.0
        %4307 = vmatpush2.msra.mxu0 0.0
        %4308 = vmatprep.subr.mxu0 0.0
        %4309 = vmatpush2.msra.mxu0 0.0
        %4310 = vmatprep.subr.mxu0 0.0
        %4311 = vmatpush2.msra.mxu0 0.0
        %4312 = vmatprep.subr.mxu0 0.0
        %4313 = vmatpush2.msra.mxu0 0.0
        %4314 = vmatprep.subr.mxu0 0.0
        %4315 = vmatpush2.msra.mxu0 0.0
        %4316 = vmatprep.subr.mxu0 0.0
        %4317 = vmatpush2.msra.mxu0 0.0
        %4318 = vmatprep.subr.mxu0 0.0
        %4319 = vmatpush2.msra.mxu0 0.0
        %4320 = vmatprep.subr.mxu0 0.0
        %4321 = vmatpush2.msra.mxu0 0.0
        %4322 = vmatprep.subr.mxu0 0.0
        %4323 = vmatpush2.msra.mxu0 0.0
        %4324 = vmatprep.mubr.f32.mxu0 0.0
        %4325 = vmatmul.mubr.f32.gmra.mxu0 %v4188
        %v4326 = vpop.f32.mrf.mxu0
        %v4327 = vadd.f32 0.0, %v4326
        %v4328 = vpop.f32.mrf.mxu0
        %4329 = vdwg.mxu0
        %4330 = vmatprep.subr.mxu0 0.0
        %4331 = vmatpush1.msra.mxu0 0.0
        %4332 = vmatprep.subr.mxu0 0.0
        %4333 = vmatpush1.msra.mxu0 0.0
        %4334 = vmatprep.subr.mxu0 0.0
        %4335 = vmatpush1.msra.mxu0 0.0
        %4336 = vmatprep.subr.mxu0 0.0
        %4337 = vmatpush1.msra.mxu0 0.0
        %4338 = vmatprep.subr.mxu0 0.0
        %4339 = vmatpush1.msra.mxu0 0.0
        %4340 = vmatprep.subr.mxu0 0.0
        %4341 = vmatpush1.msra.mxu0 0.0
        %4342 = vmatprep.subr.mxu0 0.0
        %4343 = vmatpush1.msra.mxu0 0.0
        %4344 = vmatprep.subr.mxu0 0.0
        %4345 = vmatpush1.msra.mxu0 0.0
        %4346 = vmatprep.subr.mxu0 0.0
        %4347 = vmatpush1.msra.mxu0 0.0
        %4348 = vmatprep.subr.mxu0 0.0
        %4349 = vmatpush1.msra.mxu0 0.0
        %4350 = vmatprep.subr.mxu0 0.0
        %4351 = vmatpush1.msra.mxu0 0.0
        %4352 = vmatprep.subr.mxu0 0.0
        %4353 = vmatpush1.msra.mxu0 0.0
        %4354 = vmatprep.subr.mxu0 0.0
        %4355 = vmatpush1.msra.mxu0 0.0
        %4356 = vmatprep.subr.mxu0 0.0
        %4357 = vmatpush1.msra.mxu0 0.0
        %4358 = vmatprep.subr.mxu0 0.0
        %4359 = vmatpush1.msra.mxu0 %v207
        %4360 = vmatprep.subr.mxu0 0.0
        %4361 = vmatpush1.msra.mxu0 %v206
        %4362 = vmatprep.subr.mxu0 0.0
        %4363 = vmatpush2.msra.mxu0 0.0
        %4364 = vmatprep.subr.mxu0 0.0
        %4365 = vmatpush2.msra.mxu0 0.0
        %4366 = vmatprep.subr.mxu0 0.0
        %4367 = vmatpush2.msra.mxu0 0.0
        %4368 = vmatprep.subr.mxu0 0.0
        %4369 = vmatpush2.msra.mxu0 0.0
        %4370 = vmatprep.subr.mxu0 0.0
        %4371 = vmatpush2.msra.mxu0 0.0
        %4372 = vmatprep.subr.mxu0 0.0
        %4373 = vmatpush2.msra.mxu0 0.0
        %4374 = vmatprep.subr.mxu0 0.0
        %4375 = vmatpush2.msra.mxu0 0.0
        %4376 = vmatprep.subr.mxu0 0.0
        %4377 = vmatpush2.msra.mxu0 0.0
        %4378 = vmatprep.subr.mxu0 0.0
        %4379 = vmatpush2.msra.mxu0 0.0
        %4380 = vmatprep.subr.mxu0 0.0
        %4381 = vmatpush2.msra.mxu0 0.0
        %4382 = vmatprep.subr.mxu0 0.0
        %4383 = vmatpush2.msra.mxu0 0.0
        %4384 = vmatprep.subr.mxu0 0.0
        %4385 = vmatpush2.msra.mxu0 0.0
        %4386 = vmatprep.subr.mxu0 0.0
        %4387 = vmatpush2.msra.mxu0 0.0
        %4388 = vmatprep.subr.mxu0 0.0
        %4389 = vmatpush2.msra.mxu0 0.0
        %4390 = vmatprep.subr.mxu0 0.0
        %4391 = vmatpush2.msra.mxu0 0.0
        %4392 = vmatprep.subr.mxu0 0.0
        %4393 = vmatpush2.msra.mxu0 0.0
        %4394 = vmatprep.mubr.f32.mxu0 0.0
        %4395 = vmatmul.mubr.f32.gmra.mxu0 %v4188
        %v4396 = vpop.f32.mrf.mxu0
        %v4397 = vadd.f32 0.0, %v4396
        %v4398 = vpop.f32.mrf.mxu0
        %4399 = vdwg.mxu0
        %4400 = vmatprep.subr.mxu0 0.0
        %4401 = vmatpush1.msra.mxu0 0.0
        %4402 = vmatprep.subr.mxu0 0.0
        %4403 = vmatpush1.msra.mxu0 0.0
        %4404 = vmatprep.subr.mxu0 0.0
        %4405 = vmatpush1.msra.mxu0 0.0
        %4406 = vmatprep.subr.mxu0 0.0
        %4407 = vmatpush1.msra.mxu0 0.0
        %4408 = vmatprep.subr.mxu0 0.0
        %4409 = vmatpush1.msra.mxu0 0.0
        %4410 = vmatprep.subr.mxu0 0.0
        %4411 = vmatpush1.msra.mxu0 0.0
        %4412 = vmatprep.subr.mxu0 0.0
        %4413 = vmatpush1.msra.mxu0 0.0
        %4414 = vmatprep.subr.mxu0 0.0
        %4415 = vmatpush1.msra.mxu0 0.0
        %4416 = vmatprep.subr.mxu0 0.0
        %4417 = vmatpush1.msra.mxu0 0.0
        %4418 = vmatprep.subr.mxu0 0.0
        %4419 = vmatpush1.msra.mxu0 0.0
        %4420 = vmatprep.subr.mxu0 0.0
        %4421 = vmatpush1.msra.mxu0 0.0
        %4422 = vmatprep.subr.mxu0 0.0
        %4423 = vmatpush1.msra.mxu0 0.0
        %4424 = vmatprep.subr.mxu0 0.0
        %4425 = vmatpush1.msra.mxu0 0.0
        %4426 = vmatprep.subr.mxu0 0.0
        %4427 = vmatpush1.msra.mxu0 0.0
        %4428 = vmatprep.subr.mxu0 0.0
        %4429 = vmatpush1.msra.mxu0 %v212
        %4430 = vmatprep.subr.mxu0 0.0
        %4431 = vmatpush1.msra.mxu0 %v211
        %4432 = vmatprep.subr.mxu0 0.0
        %4433 = vmatpush2.msra.mxu0 0.0
        %4434 = vmatprep.subr.mxu0 0.0
        %4435 = vmatpush2.msra.mxu0 0.0
        %4436 = vmatprep.subr.mxu0 0.0
        %4437 = vmatpush2.msra.mxu0 0.0
        %4438 = vmatprep.subr.mxu0 0.0
        %4439 = vmatpush2.msra.mxu0 0.0
        %4440 = vmatprep.subr.mxu0 0.0
        %4441 = vmatpush2.msra.mxu0 0.0
        %4442 = vmatprep.subr.mxu0 0.0
        %4443 = vmatpush2.msra.mxu0 0.0
        %4444 = vmatprep.subr.mxu0 0.0
        %4445 = vmatpush2.msra.mxu0 0.0
        %4446 = vmatprep.subr.mxu0 0.0
        %4447 = vmatpush2.msra.mxu0 0.0
        %4448 = vmatprep.subr.mxu0 0.0
        %4449 = vmatpush2.msra.mxu0 0.0
        %4450 = vmatprep.subr.mxu0 0.0
        %4451 = vmatpush2.msra.mxu0 0.0
        %4452 = vmatprep.subr.mxu0 0.0
        %4453 = vmatpush2.msra.mxu0 0.0
        %4454 = vmatprep.subr.mxu0 0.0
        %4455 = vmatpush2.msra.mxu0 0.0
        %4456 = vmatprep.subr.mxu0 0.0
        %4457 = vmatpush2.msra.mxu0 0.0
        %4458 = vmatprep.subr.mxu0 0.0
        %4459 = vmatpush2.msra.mxu0 0.0
        %4460 = vmatprep.subr.mxu0 0.0
        %4461 = vmatpush2.msra.mxu0 0.0
        %4462 = vmatprep.subr.mxu0 0.0
        %4463 = vmatpush2.msra.mxu0 0.0
        %4464 = vmatprep.mubr.f32.mxu0 0.0
        %4465 = vmatmul.mubr.f32.gmra.mxu0 %v4188
        %v4466 = vpop.f32.mrf.mxu0
        %v4467 = vadd.f32 0.0, %v4466
        %v4468 = vpop.f32.mrf.mxu0
        %4469 = vdwg.mxu0
        %s4470 = scalar_lea.vmem %s150, 48 [#allocation2]
        %v4471 = vld [vmem:[%s4470] sm:$0xff]
        %v4472 = vld [vmem:[%s4470 + $0x8] sm:$0xff]
        %4473 = vmatprep.subr.mxu0 0.0
        %4474 = vmatpush1.msra.mxu0 0.0
        %4475 = vmatprep.subr.mxu0 0.0
        %4476 = vmatpush1.msra.mxu0 0.0
        %4477 = vmatprep.subr.mxu0 0.0
        %4478 = vmatpush1.msra.mxu0 0.0
        %4479 = vmatprep.subr.mxu0 0.0
        %4480 = vmatpush1.msra.mxu0 0.0
        %4481 = vmatprep.subr.mxu0 0.0
        %4482 = vmatpush1.msra.mxu0 0.0
        %4483 = vmatprep.subr.mxu0 0.0
        %4484 = vmatpush1.msra.mxu0 0.0
        %4485 = vmatprep.subr.mxu0 0.0
        %4486 = vmatpush1.msra.mxu0 0.0
        %4487 = vmatprep.subr.mxu0 0.0
        %4488 = vmatpush1.msra.mxu0 0.0
        %4489 = vmatprep.subr.mxu0 0.0
        %4490 = vmatpush1.msra.mxu0 0.0
        %4491 = vmatprep.subr.mxu0 0.0
        %4492 = vmatpush1.msra.mxu0 0.0
        %4493 = vmatprep.subr.mxu0 0.0
        %4494 = vmatpush1.msra.mxu0 0.0
        %4495 = vmatprep.subr.mxu0 0.0
        %4496 = vmatpush1.msra.mxu0 0.0
        %4497 = vmatprep.subr.mxu0 0.0
        %4498 = vmatpush1.msra.mxu0 0.0
        %4499 = vmatprep.subr.mxu0 0.0
        %4500 = vmatpush1.msra.mxu0 0.0
        %4501 = vmatprep.subr.mxu0 0.0
        %4502 = vmatpush1.msra.mxu0 %v4472
        %4503 = vmatprep.subr.mxu0 0.0
        %4504 = vmatpush1.msra.mxu0 %v4471
        %4505 = vmatprep.subr.mxu0 0.0
        %4506 = vmatpush2.msra.mxu0 0.0
        %4507 = vmatprep.subr.mxu0 0.0
        %4508 = vmatpush2.msra.mxu0 0.0
        %4509 = vmatprep.subr.mxu0 0.0
        %4510 = vmatpush2.msra.mxu0 0.0
        %4511 = vmatprep.subr.mxu0 0.0
        %4512 = vmatpush2.msra.mxu0 0.0
        %4513 = vmatprep.subr.mxu0 0.0
        %4514 = vmatpush2.msra.mxu0 0.0
        %4515 = vmatprep.subr.mxu0 0.0
        %4516 = vmatpush2.msra.mxu0 0.0
        %4517 = vmatprep.subr.mxu0 0.0
        %4518 = vmatpush2.msra.mxu0 0.0
        %4519 = vmatprep.subr.mxu0 0.0
        %4520 = vmatpush2.msra.mxu0 0.0
        %4521 = vmatprep.subr.mxu0 0.0
        %4522 = vmatpush2.msra.mxu0 0.0
        %4523 = vmatprep.subr.mxu0 0.0
        %4524 = vmatpush2.msra.mxu0 0.0
        %4525 = vmatprep.subr.mxu0 0.0
        %4526 = vmatpush2.msra.mxu0 0.0
        %4527 = vmatprep.subr.mxu0 0.0
        %4528 = vmatpush2.msra.mxu0 0.0
        %4529 = vmatprep.subr.mxu0 0.0
        %4530 = vmatpush2.msra.mxu0 0.0
        %4531 = vmatprep.subr.mxu0 0.0
        %4532 = vmatpush2.msra.mxu0 0.0
        %4533 = vmatprep.subr.mxu0 0.0
        %4534 = vmatpush2.msra.mxu0 0.0
        %4535 = vmatprep.subr.mxu0 0.0
        %4536 = vmatpush2.msra.mxu0 0.0
        %4537 = vmatprep.mubr.f32.mxu0 0.0
        %4538 = vmatmul.mubr.f32.gmra.mxu0 %v217
        %v4539 = vpop.f32.mrf.mxu0
        %v4540 = vadd.f32 0.0, %v4539
        %v4541 = vpop.f32.mrf.mxu0
        %4542 = vdwg.mxu0
        %4543 = vmatprep.subr.mxu0 0.0
        %4544 = vmatpush1.msra.mxu0 0.0
        %4545 = vmatprep.subr.mxu0 0.0
        %4546 = vmatpush1.msra.mxu0 0.0
        %4547 = vmatprep.subr.mxu0 0.0
        %4548 = vmatpush1.msra.mxu0 0.0
        %4549 = vmatprep.subr.mxu0 0.0
        %4550 = vmatpush1.msra.mxu0 0.0
        %4551 = vmatprep.subr.mxu0 0.0
        %4552 = vmatpush1.msra.mxu0 0.0
        %4553 = vmatprep.subr.mxu0 0.0
        %4554 = vmatpush1.msra.mxu0 0.0
        %4555 = vmatprep.subr.mxu0 0.0
        %4556 = vmatpush1.msra.mxu0 0.0
        %4557 = vmatprep.subr.mxu0 0.0
        %4558 = vmatpush1.msra.mxu0 0.0
        %4559 = vmatprep.subr.mxu0 0.0
        %4560 = vmatpush1.msra.mxu0 0.0
        %4561 = vmatprep.subr.mxu0 0.0
        %4562 = vmatpush1.msra.mxu0 0.0
        %4563 = vmatprep.subr.mxu0 0.0
        %4564 = vmatpush1.msra.mxu0 0.0
        %4565 = vmatprep.subr.mxu0 0.0
        %4566 = vmatpush1.msra.mxu0 0.0
        %4567 = vmatprep.subr.mxu0 0.0
        %4568 = vmatpush1.msra.mxu0 0.0
        %4569 = vmatprep.subr.mxu0 0.0
        %4570 = vmatpush1.msra.mxu0 0.0
        %4571 = vmatprep.subr.mxu0 0.0
        %4572 = vmatpush1.msra.mxu0 %v4472
        %4573 = vmatprep.subr.mxu0 0.0
        %4574 = vmatpush1.msra.mxu0 %v4471
        %4575 = vmatprep.subr.mxu0 0.0
        %4576 = vmatpush2.msra.mxu0 0.0
        %4577 = vmatprep.subr.mxu0 0.0
        %4578 = vmatpush2.msra.mxu0 0.0
        %4579 = vmatprep.subr.mxu0 0.0
        %4580 = vmatpush2.msra.mxu0 0.0
        %4581 = vmatprep.subr.mxu0 0.0
        %4582 = vmatpush2.msra.mxu0 0.0
        %4583 = vmatprep.subr.mxu0 0.0
        %4584 = vmatpush2.msra.mxu0 0.0
        %4585 = vmatprep.subr.mxu0 0.0
        %4586 = vmatpush2.msra.mxu0 0.0
        %4587 = vmatprep.subr.mxu0 0.0
        %4588 = vmatpush2.msra.mxu0 0.0
        %4589 = vmatprep.subr.mxu0 0.0
        %4590 = vmatpush2.msra.mxu0 0.0
        %4591 = vmatprep.subr.mxu0 0.0
        %4592 = vmatpush2.msra.mxu0 0.0
        %4593 = vmatprep.subr.mxu0 0.0
        %4594 = vmatpush2.msra.mxu0 0.0
        %4595 = vmatprep.subr.mxu0 0.0
        %4596 = vmatpush2.msra.mxu0 0.0
        %4597 = vmatprep.subr.mxu0 0.0
        %4598 = vmatpush2.msra.mxu0 0.0
        %4599 = vmatprep.subr.mxu0 0.0
        %4600 = vmatpush2.msra.mxu0 0.0
        %4601 = vmatprep.subr.mxu0 0.0
        %4602 = vmatpush2.msra.mxu0 0.0
        %4603 = vmatprep.subr.mxu0 0.0
        %4604 = vmatpush2.msra.mxu0 0.0
        %4605 = vmatprep.subr.mxu0 0.0
        %4606 = vmatpush2.msra.mxu0 0.0
        %4607 = vmatprep.mubr.f32.mxu0 0.0
        %4608 = vmatmul.mubr.f32.gmra.mxu0 %v290
        %v4609 = vpop.f32.mrf.mxu0
        %v4610 = vadd.f32 0.0, %v4609
        %v4611 = vpop.f32.mrf.mxu0
        %4612 = vdwg.mxu0
        %4613 = vmatprep.subr.mxu0 0.0
        %4614 = vmatpush1.msra.mxu0 0.0
        %4615 = vmatprep.subr.mxu0 0.0
        %4616 = vmatpush1.msra.mxu0 0.0
        %4617 = vmatprep.subr.mxu0 0.0
        %4618 = vmatpush1.msra.mxu0 0.0
        %4619 = vmatprep.subr.mxu0 0.0
        %4620 = vmatpush1.msra.mxu0 0.0
        %4621 = vmatprep.subr.mxu0 0.0
        %4622 = vmatpush1.msra.mxu0 0.0
        %4623 = vmatprep.subr.mxu0 0.0
        %4624 = vmatpush1.msra.mxu0 0.0
        %4625 = vmatprep.subr.mxu0 0.0
        %4626 = vmatpush1.msra.mxu0 0.0
        %4627 = vmatprep.subr.mxu0 0.0
        %4628 = vmatpush1.msra.mxu0 0.0
        %4629 = vmatprep.subr.mxu0 0.0
        %4630 = vmatpush1.msra.mxu0 0.0
        %4631 = vmatprep.subr.mxu0 0.0
        %4632 = vmatpush1.msra.mxu0 0.0
        %4633 = vmatprep.subr.mxu0 0.0
        %4634 = vmatpush1.msra.mxu0 0.0
        %4635 = vmatprep.subr.mxu0 0.0
        %4636 = vmatpush1.msra.mxu0 0.0
        %4637 = vmatprep.subr.mxu0 0.0
        %4638 = vmatpush1.msra.mxu0 0.0
        %4639 = vmatprep.subr.mxu0 0.0
        %4640 = vmatpush1.msra.mxu0 0.0
        %4641 = vmatprep.subr.mxu0 0.0
        %4642 = vmatpush1.msra.mxu0 %v4472
        %4643 = vmatprep.subr.mxu0 0.0
        %4644 = vmatpush1.msra.mxu0 %v4471
        %4645 = vmatprep.subr.mxu0 0.0
        %4646 = vmatpush2.msra.mxu0 0.0
        %4647 = vmatprep.subr.mxu0 0.0
        %4648 = vmatpush2.msra.mxu0 0.0
        %4649 = vmatprep.subr.mxu0 0.0
        %4650 = vmatpush2.msra.mxu0 0.0
        %4651 = vmatprep.subr.mxu0 0.0
        %4652 = vmatpush2.msra.mxu0 0.0
        %4653 = vmatprep.subr.mxu0 0.0
        %4654 = vmatpush2.msra.mxu0 0.0
        %4655 = vmatprep.subr.mxu0 0.0
        %4656 = vmatpush2.msra.mxu0 0.0
        %4657 = vmatprep.subr.mxu0 0.0
        %4658 = vmatpush2.msra.mxu0 0.0
        %4659 = vmatprep.subr.mxu0 0.0
        %4660 = vmatpush2.msra.mxu0 0.0
        %4661 = vmatprep.subr.mxu0 0.0
        %4662 = vmatpush2.msra.mxu0 0.0
        %4663 = vmatprep.subr.mxu0 0.0
        %4664 = vmatpush2.msra.mxu0 0.0
        %4665 = vmatprep.subr.mxu0 0.0
        %4666 = vmatpush2.msra.mxu0 0.0
        %4667 = vmatprep.subr.mxu0 0.0
        %4668 = vmatpush2.msra.mxu0 0.0
        %4669 = vmatprep.subr.mxu0 0.0
        %4670 = vmatpush2.msra.mxu0 0.0
        %4671 = vmatprep.subr.mxu0 0.0
        %4672 = vmatpush2.msra.mxu0 0.0
        %4673 = vmatprep.subr.mxu0 0.0
        %4674 = vmatpush2.msra.mxu0 0.0
        %4675 = vmatprep.subr.mxu0 0.0
        %4676 = vmatpush2.msra.mxu0 0.0
        %4677 = vmatprep.mubr.f32.mxu0 0.0
        %4678 = vmatmul.mubr.f32.gmra.mxu0 %v363
        %v4679 = vpop.f32.mrf.mxu0
        %v4680 = vadd.f32 0.0, %v4679
        %v4681 = vpop.f32.mrf.mxu0
        %4682 = vdwg.mxu0
        %4683 = vmatprep.subr.mxu0 0.0
        %4684 = vmatpush1.msra.mxu0 0.0
        %4685 = vmatprep.subr.mxu0 0.0
        %4686 = vmatpush1.msra.mxu0 0.0
        %4687 = vmatprep.subr.mxu0 0.0
        %4688 = vmatpush1.msra.mxu0 0.0
        %4689 = vmatprep.subr.mxu0 0.0
        %4690 = vmatpush1.msra.mxu0 0.0
        %4691 = vmatprep.subr.mxu0 0.0
        %4692 = vmatpush1.msra.mxu0 0.0
        %4693 = vmatprep.subr.mxu0 0.0
        %4694 = vmatpush1.msra.mxu0 0.0
        %4695 = vmatprep.subr.mxu0 0.0
        %4696 = vmatpush1.msra.mxu0 0.0
        %4697 = vmatprep.subr.mxu0 0.0
        %4698 = vmatpush1.msra.mxu0 0.0
        %4699 = vmatprep.subr.mxu0 0.0
        %4700 = vmatpush1.msra.mxu0 0.0
        %4701 = vmatprep.subr.mxu0 0.0
        %4702 = vmatpush1.msra.mxu0 0.0
        %4703 = vmatprep.subr.mxu0 0.0
        %4704 = vmatpush1.msra.mxu0 0.0
        %4705 = vmatprep.subr.mxu0 0.0
        %4706 = vmatpush1.msra.mxu0 0.0
        %4707 = vmatprep.subr.mxu0 0.0
        %4708 = vmatpush1.msra.mxu0 0.0
        %4709 = vmatprep.subr.mxu0 0.0
        %4710 = vmatpush1.msra.mxu0 0.0
        %4711 = vmatprep.subr.mxu0 0.0
        %4712 = vmatpush1.msra.mxu0 %v4472
        %4713 = vmatprep.subr.mxu0 0.0
        %4714 = vmatpush1.msra.mxu0 %v4471
        %4715 = vmatprep.subr.mxu0 0.0
        %4716 = vmatpush2.msra.mxu0 0.0
        %4717 = vmatprep.subr.mxu0 0.0
        %4718 = vmatpush2.msra.mxu0 0.0
        %4719 = vmatprep.subr.mxu0 0.0
        %4720 = vmatpush2.msra.mxu0 0.0
        %4721 = vmatprep.subr.mxu0 0.0
        %4722 = vmatpush2.msra.mxu0 0.0
        %4723 = vmatprep.subr.mxu0 0.0
        %4724 = vmatpush2.msra.mxu0 0.0
        %4725 = vmatprep.subr.mxu0 0.0
        %4726 = vmatpush2.msra.mxu0 0.0
        %4727 = vmatprep.subr.mxu0 0.0
        %4728 = vmatpush2.msra.mxu0 0.0
        %4729 = vmatprep.subr.mxu0 0.0
        %4730 = vmatpush2.msra.mxu0 0.0
        %4731 = vmatprep.subr.mxu0 0.0
        %4732 = vmatpush2.msra.mxu0 0.0
        %4733 = vmatprep.subr.mxu0 0.0
        %4734 = vmatpush2.msra.mxu0 0.0
        %4735 = vmatprep.subr.mxu0 0.0
        %4736 = vmatpush2.msra.mxu0 0.0
        %4737 = vmatprep.subr.mxu0 0.0
        %4738 = vmatpush2.msra.mxu0 0.0
        %4739 = vmatprep.subr.mxu0 0.0
        %4740 = vmatpush2.msra.mxu0 0.0
        %4741 = vmatprep.subr.mxu0 0.0
        %4742 = vmatpush2.msra.mxu0 0.0
        %4743 = vmatprep.subr.mxu0 0.0
        %4744 = vmatpush2.msra.mxu0 0.0
        %4745 = vmatprep.subr.mxu0 0.0
        %4746 = vmatpush2.msra.mxu0 0.0
        %4747 = vmatprep.mubr.f32.mxu0 0.0
        %4748 = vmatmul.mubr.f32.gmra.mxu0 %v436
        %v4749 = vpop.f32.mrf.mxu0
        %v4750 = vadd.f32 0.0, %v4749
        %v4751 = vpop.f32.mrf.mxu0
        %4752 = vdwg.mxu0
        %v4754 = vsel %vm215, %v4540, 0
        %4756 = vmatprep.subr.mxu0 0.0
        %4757 = vmatpush1.msra.mxu0 0.0
        %4758 = vmatprep.subr.mxu0 0.0
        %4759 = vmatpush1.msra.mxu0 0.0
        %4760 = vmatprep.subr.mxu0 0.0
        %4761 = vmatpush1.msra.mxu0 0.0
        %4762 = vmatprep.subr.mxu0 0.0
        %4763 = vmatpush1.msra.mxu0 0.0
        %4764 = vmatprep.subr.mxu0 0.0
        %4765 = vmatpush1.msra.mxu0 0.0
        %4766 = vmatprep.subr.mxu0 0.0
        %4767 = vmatpush1.msra.mxu0 0.0
        %4768 = vmatprep.subr.mxu0 0.0
        %4769 = vmatpush1.msra.mxu0 0.0
        %4770 = vmatprep.subr.mxu0 0.0
        %4771 = vmatpush1.msra.mxu0 0.0
        %4772 = vmatprep.subr.mxu0 0.0
        %4773 = vmatpush1.msra.mxu0 0.0
        %4774 = vmatprep.subr.mxu0 0.0
        %4775 = vmatpush1.msra.mxu0 0.0
        %4776 = vmatprep.subr.mxu0 0.0
        %4777 = vmatpush1.msra.mxu0 0.0
        %4778 = vmatprep.subr.mxu0 0.0
        %4779 = vmatpush1.msra.mxu0 0.0
        %4780 = vmatprep.subr.mxu0 0.0
        %4781 = vmatpush1.msra.mxu0 0.0
        %4782 = vmatprep.subr.mxu0 0.0
        %4783 = vmatpush1.msra.mxu0 0.0
        %4784 = vmatprep.subr.mxu0 0.0
        %4785 = vmatpush1.msra.mxu0 %v198
        %4786 = vmatprep.subr.mxu0 0.0
        %4787 = vmatpush1.msra.mxu0 %v197
        %4788 = vmatprep.subr.mxu0 0.0
        %4789 = vmatpush2.msra.mxu0 0.0
        %4790 = vmatprep.subr.mxu0 0.0
        %4791 = vmatpush2.msra.mxu0 0.0
        %4792 = vmatprep.subr.mxu0 0.0
        %4793 = vmatpush2.msra.mxu0 0.0
        %4794 = vmatprep.subr.mxu0 0.0
        %4795 = vmatpush2.msra.mxu0 0.0
        %4796 = vmatprep.subr.mxu0 0.0
        %4797 = vmatpush2.msra.mxu0 0.0
        %4798 = vmatprep.subr.mxu0 0.0
        %4799 = vmatpush2.msra.mxu0 0.0
        %4800 = vmatprep.subr.mxu0 0.0
        %4801 = vmatpush2.msra.mxu0 0.0
        %4802 = vmatprep.subr.mxu0 0.0
        %4803 = vmatpush2.msra.mxu0 0.0
        %4804 = vmatprep.subr.mxu0 0.0
        %4805 = vmatpush2.msra.mxu0 0.0
        %4806 = vmatprep.subr.mxu0 0.0
        %4807 = vmatpush2.msra.mxu0 0.0
        %4808 = vmatprep.subr.mxu0 0.0
        %4809 = vmatpush2.msra.mxu0 0.0
        %4810 = vmatprep.subr.mxu0 0.0
        %4811 = vmatpush2.msra.mxu0 0.0
        %4812 = vmatprep.subr.mxu0 0.0
        %4813 = vmatpush2.msra.mxu0 0.0
        %4814 = vmatprep.subr.mxu0 0.0
        %4815 = vmatpush2.msra.mxu0 0.0
        %4816 = vmatprep.subr.mxu0 0.0
        %4817 = vmatpush2.msra.mxu0 0.0
        %4818 = vmatprep.subr.mxu0 0.0
        %4819 = vmatpush2.msra.mxu0 0.0
        %4820 = vmatprep.mubr.f32.mxu0 0.0
        %4821 = vmatmul.mubr.f32.gmra.mxu0 %v4754
        %v4822 = vpop.f32.mrf.mxu0
        %v4823 = vadd.f32 0.0, %v4822
        %v4824 = vpop.f32.mrf.mxu0
        %4825 = vdwg.mxu0
        %4826 = vmatprep.subr.mxu0 0.0
        %4827 = vmatpush1.msra.mxu0 0.0
        %4828 = vmatprep.subr.mxu0 0.0
        %4829 = vmatpush1.msra.mxu0 0.0
        %4830 = vmatprep.subr.mxu0 0.0
        %4831 = vmatpush1.msra.mxu0 0.0
        %4832 = vmatprep.subr.mxu0 0.0
        %4833 = vmatpush1.msra.mxu0 0.0
        %4834 = vmatprep.subr.mxu0 0.0
        %4835 = vmatpush1.msra.mxu0 0.0
        %4836 = vmatprep.subr.mxu0 0.0
        %4837 = vmatpush1.msra.mxu0 0.0
        %4838 = vmatprep.subr.mxu0 0.0
        %4839 = vmatpush1.msra.mxu0 0.0
        %4840 = vmatprep.subr.mxu0 0.0
        %4841 = vmatpush1.msra.mxu0 0.0
        %4842 = vmatprep.subr.mxu0 0.0
        %4843 = vmatpush1.msra.mxu0 0.0
        %4844 = vmatprep.subr.mxu0 0.0
        %4845 = vmatpush1.msra.mxu0 0.0
        %4846 = vmatprep.subr.mxu0 0.0
        %4847 = vmatpush1.msra.mxu0 0.0
        %4848 = vmatprep.subr.mxu0 0.0
        %4849 = vmatpush1.msra.mxu0 0.0
        %4850 = vmatprep.subr.mxu0 0.0
        %4851 = vmatpush1.msra.mxu0 0.0
        %4852 = vmatprep.subr.mxu0 0.0
        %4853 = vmatpush1.msra.mxu0 0.0
        %4854 = vmatprep.subr.mxu0 0.0
        %4855 = vmatpush1.msra.mxu0 %v202
        %4856 = vmatprep.subr.mxu0 0.0
        %4857 = vmatpush1.msra.mxu0 %v201
        %4858 = vmatprep.subr.mxu0 0.0
        %4859 = vmatpush2.msra.mxu0 0.0
        %4860 = vmatprep.subr.mxu0 0.0
        %4861 = vmatpush2.msra.mxu0 0.0
        %4862 = vmatprep.subr.mxu0 0.0
        %4863 = vmatpush2.msra.mxu0 0.0
        %4864 = vmatprep.subr.mxu0 0.0
        %4865 = vmatpush2.msra.mxu0 0.0
        %4866 = vmatprep.subr.mxu0 0.0
        %4867 = vmatpush2.msra.mxu0 0.0
        %4868 = vmatprep.subr.mxu0 0.0
        %4869 = vmatpush2.msra.mxu0 0.0
        %4870 = vmatprep.subr.mxu0 0.0
        %4871 = vmatpush2.msra.mxu0 0.0
        %4872 = vmatprep.subr.mxu0 0.0
        %4873 = vmatpush2.msra.mxu0 0.0
        %4874 = vmatprep.subr.mxu0 0.0
        %4875 = vmatpush2.msra.mxu0 0.0
        %4876 = vmatprep.subr.mxu0 0.0
        %4877 = vmatpush2.msra.mxu0 0.0
        %4878 = vmatprep.subr.mxu0 0.0
        %4879 = vmatpush2.msra.mxu0 0.0
        %4880 = vmatprep.subr.mxu0 0.0
        %4881 = vmatpush2.msra.mxu0 0.0
        %4882 = vmatprep.subr.mxu0 0.0
        %4883 = vmatpush2.msra.mxu0 0.0
        %4884 = vmatprep.subr.mxu0 0.0
        %4885 = vmatpush2.msra.mxu0 0.0
        %4886 = vmatprep.subr.mxu0 0.0
        %4887 = vmatpush2.msra.mxu0 0.0
        %4888 = vmatprep.subr.mxu0 0.0
        %4889 = vmatpush2.msra.mxu0 0.0
        %4890 = vmatprep.mubr.f32.mxu0 0.0
        %4891 = vmatmul.mubr.f32.gmra.mxu0 %v4754
        %v4892 = vpop.f32.mrf.mxu0
        %v4893 = vadd.f32 0.0, %v4892
        %v4894 = vpop.f32.mrf.mxu0
        %4895 = vdwg.mxu0
        %4896 = vmatprep.subr.mxu0 0.0
        %4897 = vmatpush1.msra.mxu0 0.0
        %4898 = vmatprep.subr.mxu0 0.0
        %4899 = vmatpush1.msra.mxu0 0.0
        %4900 = vmatprep.subr.mxu0 0.0
        %4901 = vmatpush1.msra.mxu0 0.0
        %4902 = vmatprep.subr.mxu0 0.0
        %4903 = vmatpush1.msra.mxu0 0.0
        %4904 = vmatprep.subr.mxu0 0.0
        %4905 = vmatpush1.msra.mxu0 0.0
        %4906 = vmatprep.subr.mxu0 0.0
        %4907 = vmatpush1.msra.mxu0 0.0
        %4908 = vmatprep.subr.mxu0 0.0
        %4909 = vmatpush1.msra.mxu0 0.0
        %4910 = vmatprep.subr.mxu0 0.0
        %4911 = vmatpush1.msra.mxu0 0.0
        %4912 = vmatprep.subr.mxu0 0.0
        %4913 = vmatpush1.msra.mxu0 0.0
        %4914 = vmatprep.subr.mxu0 0.0
        %4915 = vmatpush1.msra.mxu0 0.0
        %4916 = vmatprep.subr.mxu0 0.0
        %4917 = vmatpush1.msra.mxu0 0.0
        %4918 = vmatprep.subr.mxu0 0.0
        %4919 = vmatpush1.msra.mxu0 0.0
        %4920 = vmatprep.subr.mxu0 0.0
        %4921 = vmatpush1.msra.mxu0 0.0
        %4922 = vmatprep.subr.mxu0 0.0
        %4923 = vmatpush1.msra.mxu0 0.0
        %4924 = vmatprep.subr.mxu0 0.0
        %4925 = vmatpush1.msra.mxu0 %v207
        %4926 = vmatprep.subr.mxu0 0.0
        %4927 = vmatpush1.msra.mxu0 %v206
        %4928 = vmatprep.subr.mxu0 0.0
        %4929 = vmatpush2.msra.mxu0 0.0
        %4930 = vmatprep.subr.mxu0 0.0
        %4931 = vmatpush2.msra.mxu0 0.0
        %4932 = vmatprep.subr.mxu0 0.0
        %4933 = vmatpush2.msra.mxu0 0.0
        %4934 = vmatprep.subr.mxu0 0.0
        %4935 = vmatpush2.msra.mxu0 0.0
        %4936 = vmatprep.subr.mxu0 0.0
        %4937 = vmatpush2.msra.mxu0 0.0
        %4938 = vmatprep.subr.mxu0 0.0
        %4939 = vmatpush2.msra.mxu0 0.0
        %4940 = vmatprep.subr.mxu0 0.0
        %4941 = vmatpush2.msra.mxu0 0.0
        %4942 = vmatprep.subr.mxu0 0.0
        %4943 = vmatpush2.msra.mxu0 0.0
        %4944 = vmatprep.subr.mxu0 0.0
        %4945 = vmatpush2.msra.mxu0 0.0
        %4946 = vmatprep.subr.mxu0 0.0
        %4947 = vmatpush2.msra.mxu0 0.0
        %4948 = vmatprep.subr.mxu0 0.0
        %4949 = vmatpush2.msra.mxu0 0.0
        %4950 = vmatprep.subr.mxu0 0.0
        %4951 = vmatpush2.msra.mxu0 0.0
        %4952 = vmatprep.subr.mxu0 0.0
        %4953 = vmatpush2.msra.mxu0 0.0
        %4954 = vmatprep.subr.mxu0 0.0
        %4955 = vmatpush2.msra.mxu0 0.0
        %4956 = vmatprep.subr.mxu0 0.0
        %4957 = vmatpush2.msra.mxu0 0.0
        %4958 = vmatprep.subr.mxu0 0.0
        %4959 = vmatpush2.msra.mxu0 0.0
        %4960 = vmatprep.mubr.f32.mxu0 0.0
        %4961 = vmatmul.mubr.f32.gmra.mxu0 %v4754
        %v4962 = vpop.f32.mrf.mxu0
        %v4963 = vadd.f32 0.0, %v4962
        %v4964 = vpop.f32.mrf.mxu0
        %4965 = vdwg.mxu0
        %4966 = vmatprep.subr.mxu0 0.0
        %4967 = vmatpush1.msra.mxu0 0.0
        %4968 = vmatprep.subr.mxu0 0.0
        %4969 = vmatpush1.msra.mxu0 0.0
        %4970 = vmatprep.subr.mxu0 0.0
        %4971 = vmatpush1.msra.mxu0 0.0
        %4972 = vmatprep.subr.mxu0 0.0
        %4973 = vmatpush1.msra.mxu0 0.0
        %4974 = vmatprep.subr.mxu0 0.0
        %4975 = vmatpush1.msra.mxu0 0.0
        %4976 = vmatprep.subr.mxu0 0.0
        %4977 = vmatpush1.msra.mxu0 0.0
        %4978 = vmatprep.subr.mxu0 0.0
        %4979 = vmatpush1.msra.mxu0 0.0
        %4980 = vmatprep.subr.mxu0 0.0
        %4981 = vmatpush1.msra.mxu0 0.0
        %4982 = vmatprep.subr.mxu0 0.0
        %4983 = vmatpush1.msra.mxu0 0.0
        %4984 = vmatprep.subr.mxu0 0.0
        %4985 = vmatpush1.msra.mxu0 0.0
        %4986 = vmatprep.subr.mxu0 0.0
        %4987 = vmatpush1.msra.mxu0 0.0
        %4988 = vmatprep.subr.mxu0 0.0
        %4989 = vmatpush1.msra.mxu0 0.0
        %4990 = vmatprep.subr.mxu0 0.0
        %4991 = vmatpush1.msra.mxu0 0.0
        %4992 = vmatprep.subr.mxu0 0.0
        %4993 = vmatpush1.msra.mxu0 0.0
        %4994 = vmatprep.subr.mxu0 0.0
        %4995 = vmatpush1.msra.mxu0 %v212
        %4996 = vmatprep.subr.mxu0 0.0
        %4997 = vmatpush1.msra.mxu0 %v211
        %4998 = vmatprep.subr.mxu0 0.0
        %4999 = vmatpush2.msra.mxu0 0.0
        %5000 = vmatprep.subr.mxu0 0.0
        %5001 = vmatpush2.msra.mxu0 0.0
        %5002 = vmatprep.subr.mxu0 0.0
        %5003 = vmatpush2.msra.mxu0 0.0
        %5004 = vmatprep.subr.mxu0 0.0
        %5005 = vmatpush2.msra.mxu0 0.0
        %5006 = vmatprep.subr.mxu0 0.0
        %5007 = vmatpush2.msra.mxu0 0.0
        %5008 = vmatprep.subr.mxu0 0.0
        %5009 = vmatpush2.msra.mxu0 0.0
        %5010 = vmatprep.subr.mxu0 0.0
        %5011 = vmatpush2.msra.mxu0 0.0
        %5012 = vmatprep.subr.mxu0 0.0
        %5013 = vmatpush2.msra.mxu0 0.0
        %5014 = vmatprep.subr.mxu0 0.0
        %5015 = vmatpush2.msra.mxu0 0.0
        %5016 = vmatprep.subr.mxu0 0.0
        %5017 = vmatpush2.msra.mxu0 0.0
        %5018 = vmatprep.subr.mxu0 0.0
        %5019 = vmatpush2.msra.mxu0 0.0
        %5020 = vmatprep.subr.mxu0 0.0
        %5021 = vmatpush2.msra.mxu0 0.0
        %5022 = vmatprep.subr.mxu0 0.0
        %5023 = vmatpush2.msra.mxu0 0.0
        %5024 = vmatprep.subr.mxu0 0.0
        %5025 = vmatpush2.msra.mxu0 0.0
        %5026 = vmatprep.subr.mxu0 0.0
        %5027 = vmatpush2.msra.mxu0 0.0
        %5028 = vmatprep.subr.mxu0 0.0
        %5029 = vmatpush2.msra.mxu0 0.0
        %5030 = vmatprep.mubr.f32.mxu0 0.0
        %5031 = vmatmul.mubr.f32.gmra.mxu0 %v4754
        %v5032 = vpop.f32.mrf.mxu0
        %v5033 = vadd.f32 0.0, %v5032
        %v5034 = vpop.f32.mrf.mxu0
        %5035 = vdwg.mxu0
        %v5037 = vsel %vm215, %v4610, 0
        %5039 = vmatprep.subr.mxu0 0.0
        %5040 = vmatpush1.msra.mxu0 0.0
        %5041 = vmatprep.subr.mxu0 0.0
        %5042 = vmatpush1.msra.mxu0 0.0
        %5043 = vmatprep.subr.mxu0 0.0
        %5044 = vmatpush1.msra.mxu0 0.0
        %5045 = vmatprep.subr.mxu0 0.0
        %5046 = vmatpush1.msra.mxu0 0.0
        %5047 = vmatprep.subr.mxu0 0.0
        %5048 = vmatpush1.msra.mxu0 0.0
        %5049 = vmatprep.subr.mxu0 0.0
        %5050 = vmatpush1.msra.mxu0 0.0
        %5051 = vmatprep.subr.mxu0 0.0
        %5052 = vmatpush1.msra.mxu0 0.0
        %5053 = vmatprep.subr.mxu0 0.0
        %5054 = vmatpush1.msra.mxu0 0.0
        %5055 = vmatprep.subr.mxu0 0.0
        %5056 = vmatpush1.msra.mxu0 0.0
        %5057 = vmatprep.subr.mxu0 0.0
        %5058 = vmatpush1.msra.mxu0 0.0
        %5059 = vmatprep.subr.mxu0 0.0
        %5060 = vmatpush1.msra.mxu0 0.0
        %5061 = vmatprep.subr.mxu0 0.0
        %5062 = vmatpush1.msra.mxu0 0.0
        %5063 = vmatprep.subr.mxu0 0.0
        %5064 = vmatpush1.msra.mxu0 0.0
        %5065 = vmatprep.subr.mxu0 0.0
        %5066 = vmatpush1.msra.mxu0 0.0
        %5067 = vmatprep.subr.mxu0 0.0
        %5068 = vmatpush1.msra.mxu0 %v198
        %5069 = vmatprep.subr.mxu0 0.0
        %5070 = vmatpush1.msra.mxu0 %v197
        %5071 = vmatprep.subr.mxu0 0.0
        %5072 = vmatpush2.msra.mxu0 0.0
        %5073 = vmatprep.subr.mxu0 0.0
        %5074 = vmatpush2.msra.mxu0 0.0
        %5075 = vmatprep.subr.mxu0 0.0
        %5076 = vmatpush2.msra.mxu0 0.0
        %5077 = vmatprep.subr.mxu0 0.0
        %5078 = vmatpush2.msra.mxu0 0.0
        %5079 = vmatprep.subr.mxu0 0.0
        %5080 = vmatpush2.msra.mxu0 0.0
        %5081 = vmatprep.subr.mxu0 0.0
        %5082 = vmatpush2.msra.mxu0 0.0
        %5083 = vmatprep.subr.mxu0 0.0
        %5084 = vmatpush2.msra.mxu0 0.0
        %5085 = vmatprep.subr.mxu0 0.0
        %5086 = vmatpush2.msra.mxu0 0.0
        %5087 = vmatprep.subr.mxu0 0.0
        %5088 = vmatpush2.msra.mxu0 0.0
        %5089 = vmatprep.subr.mxu0 0.0
        %5090 = vmatpush2.msra.mxu0 0.0
        %5091 = vmatprep.subr.mxu0 0.0
        %5092 = vmatpush2.msra.mxu0 0.0
        %5093 = vmatprep.subr.mxu0 0.0
        %5094 = vmatpush2.msra.mxu0 0.0
        %5095 = vmatprep.subr.mxu0 0.0
        %5096 = vmatpush2.msra.mxu0 0.0
        %5097 = vmatprep.subr.mxu0 0.0
        %5098 = vmatpush2.msra.mxu0 0.0
        %5099 = vmatprep.subr.mxu0 0.0
        %5100 = vmatpush2.msra.mxu0 0.0
        %5101 = vmatprep.subr.mxu0 0.0
        %5102 = vmatpush2.msra.mxu0 0.0
        %5103 = vmatprep.mubr.f32.mxu0 0.0
        %5104 = vmatmul.mubr.f32.gmra.mxu0 %v5037
        %v5105 = vpop.f32.mrf.mxu0
        %v5106 = vadd.f32 0.0, %v5105
        %v5107 = vpop.f32.mrf.mxu0
        %5108 = vdwg.mxu0
        %5109 = vmatprep.subr.mxu0 0.0
        %5110 = vmatpush1.msra.mxu0 0.0
        %5111 = vmatprep.subr.mxu0 0.0
        %5112 = vmatpush1.msra.mxu0 0.0
        %5113 = vmatprep.subr.mxu0 0.0
        %5114 = vmatpush1.msra.mxu0 0.0
        %5115 = vmatprep.subr.mxu0 0.0
        %5116 = vmatpush1.msra.mxu0 0.0
        %5117 = vmatprep.subr.mxu0 0.0
        %5118 = vmatpush1.msra.mxu0 0.0
        %5119 = vmatprep.subr.mxu0 0.0
        %5120 = vmatpush1.msra.mxu0 0.0
        %5121 = vmatprep.subr.mxu0 0.0
        %5122 = vmatpush1.msra.mxu0 0.0
        %5123 = vmatprep.subr.mxu0 0.0
        %5124 = vmatpush1.msra.mxu0 0.0
        %5125 = vmatprep.subr.mxu0 0.0
        %5126 = vmatpush1.msra.mxu0 0.0
        %5127 = vmatprep.subr.mxu0 0.0
        %5128 = vmatpush1.msra.mxu0 0.0
        %5129 = vmatprep.subr.mxu0 0.0
        %5130 = vmatpush1.msra.mxu0 0.0
        %5131 = vmatprep.subr.mxu0 0.0
        %5132 = vmatpush1.msra.mxu0 0.0
        %5133 = vmatprep.subr.mxu0 0.0
        %5134 = vmatpush1.msra.mxu0 0.0
        %5135 = vmatprep.subr.mxu0 0.0
        %5136 = vmatpush1.msra.mxu0 0.0
        %5137 = vmatprep.subr.mxu0 0.0
        %5138 = vmatpush1.msra.mxu0 %v202
        %5139 = vmatprep.subr.mxu0 0.0
        %5140 = vmatpush1.msra.mxu0 %v201
        %5141 = vmatprep.subr.mxu0 0.0
        %5142 = vmatpush2.msra.mxu0 0.0
        %5143 = vmatprep.subr.mxu0 0.0
        %5144 = vmatpush2.msra.mxu0 0.0
        %5145 = vmatprep.subr.mxu0 0.0
        %5146 = vmatpush2.msra.mxu0 0.0
        %5147 = vmatprep.subr.mxu0 0.0
        %5148 = vmatpush2.msra.mxu0 0.0
        %5149 = vmatprep.subr.mxu0 0.0
        %5150 = vmatpush2.msra.mxu0 0.0
        %5151 = vmatprep.subr.mxu0 0.0
        %5152 = vmatpush2.msra.mxu0 0.0
        %5153 = vmatprep.subr.mxu0 0.0
        %5154 = vmatpush2.msra.mxu0 0.0
        %5155 = vmatprep.subr.mxu0 0.0
        %5156 = vmatpush2.msra.mxu0 0.0
        %5157 = vmatprep.subr.mxu0 0.0
        %5158 = vmatpush2.msra.mxu0 0.0
        %5159 = vmatprep.subr.mxu0 0.0
        %5160 = vmatpush2.msra.mxu0 0.0
        %5161 = vmatprep.subr.mxu0 0.0
        %5162 = vmatpush2.msra.mxu0 0.0
        %5163 = vmatprep.subr.mxu0 0.0
        %5164 = vmatpush2.msra.mxu0 0.0
        %5165 = vmatprep.subr.mxu0 0.0
        %5166 = vmatpush2.msra.mxu0 0.0
        %5167 = vmatprep.subr.mxu0 0.0
        %5168 = vmatpush2.msra.mxu0 0.0
        %5169 = vmatprep.subr.mxu0 0.0
        %5170 = vmatpush2.msra.mxu0 0.0
        %5171 = vmatprep.subr.mxu0 0.0
        %5172 = vmatpush2.msra.mxu0 0.0
        %5173 = vmatprep.mubr.f32.mxu0 0.0
        %5174 = vmatmul.mubr.f32.gmra.mxu0 %v5037
        %v5175 = vpop.f32.mrf.mxu0
        %v5176 = vadd.f32 0.0, %v5175
        %v5177 = vpop.f32.mrf.mxu0
        %5178 = vdwg.mxu0
        %5179 = vmatprep.subr.mxu0 0.0
        %5180 = vmatpush1.msra.mxu0 0.0
        %5181 = vmatprep.subr.mxu0 0.0
        %5182 = vmatpush1.msra.mxu0 0.0
        %5183 = vmatprep.subr.mxu0 0.0
        %5184 = vmatpush1.msra.mxu0 0.0
        %5185 = vmatprep.subr.mxu0 0.0
        %5186 = vmatpush1.msra.mxu0 0.0
        %5187 = vmatprep.subr.mxu0 0.0
        %5188 = vmatpush1.msra.mxu0 0.0
        %5189 = vmatprep.subr.mxu0 0.0
        %5190 = vmatpush1.msra.mxu0 0.0
        %5191 = vmatprep.subr.mxu0 0.0
        %5192 = vmatpush1.msra.mxu0 0.0
        %5193 = vmatprep.subr.mxu0 0.0
        %5194 = vmatpush1.msra.mxu0 0.0
        %5195 = vmatprep.subr.mxu0 0.0
        %5196 = vmatpush1.msra.mxu0 0.0
        %5197 = vmatprep.subr.mxu0 0.0
        %5198 = vmatpush1.msra.mxu0 0.0
        %5199 = vmatprep.subr.mxu0 0.0
        %5200 = vmatpush1.msra.mxu0 0.0
        %5201 = vmatprep.subr.mxu0 0.0
        %5202 = vmatpush1.msra.mxu0 0.0
        %5203 = vmatprep.subr.mxu0 0.0
        %5204 = vmatpush1.msra.mxu0 0.0
        %5205 = vmatprep.subr.mxu0 0.0
        %5206 = vmatpush1.msra.mxu0 0.0
        %5207 = vmatprep.subr.mxu0 0.0
        %5208 = vmatpush1.msra.mxu0 %v207
        %5209 = vmatprep.subr.mxu0 0.0
        %5210 = vmatpush1.msra.mxu0 %v206
        %5211 = vmatprep.subr.mxu0 0.0
        %5212 = vmatpush2.msra.mxu0 0.0
        %5213 = vmatprep.subr.mxu0 0.0
        %5214 = vmatpush2.msra.mxu0 0.0
        %5215 = vmatprep.subr.mxu0 0.0
        %5216 = vmatpush2.msra.mxu0 0.0
        %5217 = vmatprep.subr.mxu0 0.0
        %5218 = vmatpush2.msra.mxu0 0.0
        %5219 = vmatprep.subr.mxu0 0.0
        %5220 = vmatpush2.msra.mxu0 0.0
        %5221 = vmatprep.subr.mxu0 0.0
        %5222 = vmatpush2.msra.mxu0 0.0
        %5223 = vmatprep.subr.mxu0 0.0
        %5224 = vmatpush2.msra.mxu0 0.0
        %5225 = vmatprep.subr.mxu0 0.0
        %5226 = vmatpush2.msra.mxu0 0.0
        %5227 = vmatprep.subr.mxu0 0.0
        %5228 = vmatpush2.msra.mxu0 0.0
        %5229 = vmatprep.subr.mxu0 0.0
        %5230 = vmatpush2.msra.mxu0 0.0
        %5231 = vmatprep.subr.mxu0 0.0
        %5232 = vmatpush2.msra.mxu0 0.0
        %5233 = vmatprep.subr.mxu0 0.0
        %5234 = vmatpush2.msra.mxu0 0.0
        %5235 = vmatprep.subr.mxu0 0.0
        %5236 = vmatpush2.msra.mxu0 0.0
        %5237 = vmatprep.subr.mxu0 0.0
        %5238 = vmatpush2.msra.mxu0 0.0
        %5239 = vmatprep.subr.mxu0 0.0
        %5240 = vmatpush2.msra.mxu0 0.0
        %5241 = vmatprep.subr.mxu0 0.0
        %5242 = vmatpush2.msra.mxu0 0.0
        %5243 = vmatprep.mubr.f32.mxu0 0.0
        %5244 = vmatmul.mubr.f32.gmra.mxu0 %v5037
        %v5245 = vpop.f32.mrf.mxu0
        %v5246 = vadd.f32 0.0, %v5245
        %v5247 = vpop.f32.mrf.mxu0
        %5248 = vdwg.mxu0
        %5249 = vmatprep.subr.mxu0 0.0
        %5250 = vmatpush1.msra.mxu0 0.0
        %5251 = vmatprep.subr.mxu0 0.0
        %5252 = vmatpush1.msra.mxu0 0.0
        %5253 = vmatprep.subr.mxu0 0.0
        %5254 = vmatpush1.msra.mxu0 0.0
        %5255 = vmatprep.subr.mxu0 0.0
        %5256 = vmatpush1.msra.mxu0 0.0
        %5257 = vmatprep.subr.mxu0 0.0
        %5258 = vmatpush1.msra.mxu0 0.0
        %5259 = vmatprep.subr.mxu0 0.0
        %5260 = vmatpush1.msra.mxu0 0.0
        %5261 = vmatprep.subr.mxu0 0.0
        %5262 = vmatpush1.msra.mxu0 0.0
        %5263 = vmatprep.subr.mxu0 0.0
        %5264 = vmatpush1.msra.mxu0 0.0
        %5265 = vmatprep.subr.mxu0 0.0
        %5266 = vmatpush1.msra.mxu0 0.0
        %5267 = vmatprep.subr.mxu0 0.0
        %5268 = vmatpush1.msra.mxu0 0.0
        %5269 = vmatprep.subr.mxu0 0.0
        %5270 = vmatpush1.msra.mxu0 0.0
        %5271 = vmatprep.subr.mxu0 0.0
        %5272 = vmatpush1.msra.mxu0 0.0
        %5273 = vmatprep.subr.mxu0 0.0
        %5274 = vmatpush1.msra.mxu0 0.0
        %5275 = vmatprep.subr.mxu0 0.0
        %5276 = vmatpush1.msra.mxu0 0.0
        %5277 = vmatprep.subr.mxu0 0.0
        %5278 = vmatpush1.msra.mxu0 %v212
        %5279 = vmatprep.subr.mxu0 0.0
        %5280 = vmatpush1.msra.mxu0 %v211
        %5281 = vmatprep.subr.mxu0 0.0
        %5282 = vmatpush2.msra.mxu0 0.0
        %5283 = vmatprep.subr.mxu0 0.0
        %5284 = vmatpush2.msra.mxu0 0.0
        %5285 = vmatprep.subr.mxu0 0.0
        %5286 = vmatpush2.msra.mxu0 0.0
        %5287 = vmatprep.subr.mxu0 0.0
        %5288 = vmatpush2.msra.mxu0 0.0
        %5289 = vmatprep.subr.mxu0 0.0
        %5290 = vmatpush2.msra.mxu0 0.0
        %5291 = vmatprep.subr.mxu0 0.0
        %5292 = vmatpush2.msra.mxu0 0.0
        %5293 = vmatprep.subr.mxu0 0.0
        %5294 = vmatpush2.msra.mxu0 0.0
        %5295 = vmatprep.subr.mxu0 0.0
        %5296 = vmatpush2.msra.mxu0 0.0
        %5297 = vmatprep.subr.mxu0 0.0
        %5298 = vmatpush2.msra.mxu0 0.0
        %5299 = vmatprep.subr.mxu0 0.0
        %5300 = vmatpush2.msra.mxu0 0.0
        %5301 = vmatprep.subr.mxu0 0.0
        %5302 = vmatpush2.msra.mxu0 0.0
        %5303 = vmatprep.subr.mxu0 0.0
        %5304 = vmatpush2.msra.mxu0 0.0
        %5305 = vmatprep.subr.mxu0 0.0
        %5306 = vmatpush2.msra.mxu0 0.0
        %5307 = vmatprep.subr.mxu0 0.0
        %5308 = vmatpush2.msra.mxu0 0.0
        %5309 = vmatprep.subr.mxu0 0.0
        %5310 = vmatpush2.msra.mxu0 0.0
        %5311 = vmatprep.subr.mxu0 0.0
        %5312 = vmatpush2.msra.mxu0 0.0
        %5313 = vmatprep.mubr.f32.mxu0 0.0
        %5314 = vmatmul.mubr.f32.gmra.mxu0 %v5037
        %v5315 = vpop.f32.mrf.mxu0
        %v5316 = vadd.f32 0.0, %v5315
        %v5317 = vpop.f32.mrf.mxu0
        %5318 = vdwg.mxu0
        %v5320 = vsel %vm215, %v4680, 0
        %5322 = vmatprep.subr.mxu0 0.0
        %5323 = vmatpush1.msra.mxu0 0.0
        %5324 = vmatprep.subr.mxu0 0.0
        %5325 = vmatpush1.msra.mxu0 0.0
        %5326 = vmatprep.subr.mxu0 0.0
        %5327 = vmatpush1.msra.mxu0 0.0
        %5328 = vmatprep.subr.mxu0 0.0
        %5329 = vmatpush1.msra.mxu0 0.0
        %5330 = vmatprep.subr.mxu0 0.0
        %5331 = vmatpush1.msra.mxu0 0.0
        %5332 = vmatprep.subr.mxu0 0.0
        %5333 = vmatpush1.msra.mxu0 0.0
        %5334 = vmatprep.subr.mxu0 0.0
        %5335 = vmatpush1.msra.mxu0 0.0
        %5336 = vmatprep.subr.mxu0 0.0
        %5337 = vmatpush1.msra.mxu0 0.0
        %5338 = vmatprep.subr.mxu0 0.0
        %5339 = vmatpush1.msra.mxu0 0.0
        %5340 = vmatprep.subr.mxu0 0.0
        %5341 = vmatpush1.msra.mxu0 0.0
        %5342 = vmatprep.subr.mxu0 0.0
        %5343 = vmatpush1.msra.mxu0 0.0
        %5344 = vmatprep.subr.mxu0 0.0
        %5345 = vmatpush1.msra.mxu0 0.0
        %5346 = vmatprep.subr.mxu0 0.0
        %5347 = vmatpush1.msra.mxu0 0.0
        %5348 = vmatprep.subr.mxu0 0.0
        %5349 = vmatpush1.msra.mxu0 0.0
        %5350 = vmatprep.subr.mxu0 0.0
        %5351 = vmatpush1.msra.mxu0 %v198
        %5352 = vmatprep.subr.mxu0 0.0
        %5353 = vmatpush1.msra.mxu0 %v197
        %5354 = vmatprep.subr.mxu0 0.0
        %5355 = vmatpush2.msra.mxu0 0.0
        %5356 = vmatprep.subr.mxu0 0.0
        %5357 = vmatpush2.msra.mxu0 0.0
        %5358 = vmatprep.subr.mxu0 0.0
        %5359 = vmatpush2.msra.mxu0 0.0
        %5360 = vmatprep.subr.mxu0 0.0
        %5361 = vmatpush2.msra.mxu0 0.0
        %5362 = vmatprep.subr.mxu0 0.0
        %5363 = vmatpush2.msra.mxu0 0.0
        %5364 = vmatprep.subr.mxu0 0.0
        %5365 = vmatpush2.msra.mxu0 0.0
        %5366 = vmatprep.subr.mxu0 0.0
        %5367 = vmatpush2.msra.mxu0 0.0
        %5368 = vmatprep.subr.mxu0 0.0
        %5369 = vmatpush2.msra.mxu0 0.0
        %5370 = vmatprep.subr.mxu0 0.0
        %5371 = vmatpush2.msra.mxu0 0.0
        %5372 = vmatprep.subr.mxu0 0.0
        %5373 = vmatpush2.msra.mxu0 0.0
        %5374 = vmatprep.subr.mxu0 0.0
        %5375 = vmatpush2.msra.mxu0 0.0
        %5376 = vmatprep.subr.mxu0 0.0
        %5377 = vmatpush2.msra.mxu0 0.0
        %5378 = vmatprep.subr.mxu0 0.0
        %5379 = vmatpush2.msra.mxu0 0.0
        %5380 = vmatprep.subr.mxu0 0.0
        %5381 = vmatpush2.msra.mxu0 0.0
        %5382 = vmatprep.subr.mxu0 0.0
        %5383 = vmatpush2.msra.mxu0 0.0
        %5384 = vmatprep.subr.mxu0 0.0
        %5385 = vmatpush2.msra.mxu0 0.0
        %5386 = vmatprep.mubr.f32.mxu0 0.0
        %5387 = vmatmul.mubr.f32.gmra.mxu0 %v5320
        %v5388 = vpop.f32.mrf.mxu0
        %v5389 = vadd.f32 0.0, %v5388
        %v5390 = vpop.f32.mrf.mxu0
        %5391 = vdwg.mxu0
        %5392 = vmatprep.subr.mxu0 0.0
        %5393 = vmatpush1.msra.mxu0 0.0
        %5394 = vmatprep.subr.mxu0 0.0
        %5395 = vmatpush1.msra.mxu0 0.0
        %5396 = vmatprep.subr.mxu0 0.0
        %5397 = vmatpush1.msra.mxu0 0.0
        %5398 = vmatprep.subr.mxu0 0.0
        %5399 = vmatpush1.msra.mxu0 0.0
        %5400 = vmatprep.subr.mxu0 0.0
        %5401 = vmatpush1.msra.mxu0 0.0
        %5402 = vmatprep.subr.mxu0 0.0
        %5403 = vmatpush1.msra.mxu0 0.0
        %5404 = vmatprep.subr.mxu0 0.0
        %5405 = vmatpush1.msra.mxu0 0.0
        %5406 = vmatprep.subr.mxu0 0.0
        %5407 = vmatpush1.msra.mxu0 0.0
        %5408 = vmatprep.subr.mxu0 0.0
        %5409 = vmatpush1.msra.mxu0 0.0
        %5410 = vmatprep.subr.mxu0 0.0
        %5411 = vmatpush1.msra.mxu0 0.0
        %5412 = vmatprep.subr.mxu0 0.0
        %5413 = vmatpush1.msra.mxu0 0.0
        %5414 = vmatprep.subr.mxu0 0.0
        %5415 = vmatpush1.msra.mxu0 0.0
        %5416 = vmatprep.subr.mxu0 0.0
        %5417 = vmatpush1.msra.mxu0 0.0
        %5418 = vmatprep.subr.mxu0 0.0
        %5419 = vmatpush1.msra.mxu0 0.0
        %5420 = vmatprep.subr.mxu0 0.0
        %5421 = vmatpush1.msra.mxu0 %v202
        %5422 = vmatprep.subr.mxu0 0.0
        %5423 = vmatpush1.msra.mxu0 %v201
        %5424 = vmatprep.subr.mxu0 0.0
        %5425 = vmatpush2.msra.mxu0 0.0
        %5426 = vmatprep.subr.mxu0 0.0
        %5427 = vmatpush2.msra.mxu0 0.0
        %5428 = vmatprep.subr.mxu0 0.0
        %5429 = vmatpush2.msra.mxu0 0.0
        %5430 = vmatprep.subr.mxu0 0.0
        %5431 = vmatpush2.msra.mxu0 0.0
        %5432 = vmatprep.subr.mxu0 0.0
        %5433 = vmatpush2.msra.mxu0 0.0
        %5434 = vmatprep.subr.mxu0 0.0
        %5435 = vmatpush2.msra.mxu0 0.0
        %5436 = vmatprep.subr.mxu0 0.0
        %5437 = vmatpush2.msra.mxu0 0.0
        %5438 = vmatprep.subr.mxu0 0.0
        %5439 = vmatpush2.msra.mxu0 0.0
        %5440 = vmatprep.subr.mxu0 0.0
        %5441 = vmatpush2.msra.mxu0 0.0
        %5442 = vmatprep.subr.mxu0 0.0
        %5443 = vmatpush2.msra.mxu0 0.0
        %5444 = vmatprep.subr.mxu0 0.0
        %5445 = vmatpush2.msra.mxu0 0.0
        %5446 = vmatprep.subr.mxu0 0.0
        %5447 = vmatpush2.msra.mxu0 0.0
        %5448 = vmatprep.subr.mxu0 0.0
        %5449 = vmatpush2.msra.mxu0 0.0
        %5450 = vmatprep.subr.mxu0 0.0
        %5451 = vmatpush2.msra.mxu0 0.0
        %5452 = vmatprep.subr.mxu0 0.0
        %5453 = vmatpush2.msra.mxu0 0.0
        %5454 = vmatprep.subr.mxu0 0.0
        %5455 = vmatpush2.msra.mxu0 0.0
        %5456 = vmatprep.mubr.f32.mxu0 0.0
        %5457 = vmatmul.mubr.f32.gmra.mxu0 %v5320
        %v5458 = vpop.f32.mrf.mxu0
        %v5459 = vadd.f32 0.0, %v5458
        %v5460 = vpop.f32.mrf.mxu0
        %5461 = vdwg.mxu0
        %5462 = vmatprep.subr.mxu0 0.0
        %5463 = vmatpush1.msra.mxu0 0.0
        %5464 = vmatprep.subr.mxu0 0.0
        %5465 = vmatpush1.msra.mxu0 0.0
        %5466 = vmatprep.subr.mxu0 0.0
        %5467 = vmatpush1.msra.mxu0 0.0
        %5468 = vmatprep.subr.mxu0 0.0
        %5469 = vmatpush1.msra.mxu0 0.0
        %5470 = vmatprep.subr.mxu0 0.0
        %5471 = vmatpush1.msra.mxu0 0.0
        %5472 = vmatprep.subr.mxu0 0.0
        %5473 = vmatpush1.msra.mxu0 0.0
        %5474 = vmatprep.subr.mxu0 0.0
        %5475 = vmatpush1.msra.mxu0 0.0
        %5476 = vmatprep.subr.mxu0 0.0
        %5477 = vmatpush1.msra.mxu0 0.0
        %5478 = vmatprep.subr.mxu0 0.0
        %5479 = vmatpush1.msra.mxu0 0.0
        %5480 = vmatprep.subr.mxu0 0.0
        %5481 = vmatpush1.msra.mxu0 0.0
        %5482 = vmatprep.subr.mxu0 0.0
        %5483 = vmatpush1.msra.mxu0 0.0
        %5484 = vmatprep.subr.mxu0 0.0
        %5485 = vmatpush1.msra.mxu0 0.0
        %5486 = vmatprep.subr.mxu0 0.0
        %5487 = vmatpush1.msra.mxu0 0.0
        %5488 = vmatprep.subr.mxu0 0.0
        %5489 = vmatpush1.msra.mxu0 0.0
        %5490 = vmatprep.subr.mxu0 0.0
        %5491 = vmatpush1.msra.mxu0 %v207
        %5492 = vmatprep.subr.mxu0 0.0
        %5493 = vmatpush1.msra.mxu0 %v206
        %5494 = vmatprep.subr.mxu0 0.0
        %5495 = vmatpush2.msra.mxu0 0.0
        %5496 = vmatprep.subr.mxu0 0.0
        %5497 = vmatpush2.msra.mxu0 0.0
        %5498 = vmatprep.subr.mxu0 0.0
        %5499 = vmatpush2.msra.mxu0 0.0
        %5500 = vmatprep.subr.mxu0 0.0
        %5501 = vmatpush2.msra.mxu0 0.0
        %5502 = vmatprep.subr.mxu0 0.0
        %5503 = vmatpush2.msra.mxu0 0.0
        %5504 = vmatprep.subr.mxu0 0.0
        %5505 = vmatpush2.msra.mxu0 0.0
        %5506 = vmatprep.subr.mxu0 0.0
        %5507 = vmatpush2.msra.mxu0 0.0
        %5508 = vmatprep.subr.mxu0 0.0
        %5509 = vmatpush2.msra.mxu0 0.0
        %5510 = vmatprep.subr.mxu0 0.0
        %5511 = vmatpush2.msra.mxu0 0.0
        %5512 = vmatprep.subr.mxu0 0.0
        %5513 = vmatpush2.msra.mxu0 0.0
        %5514 = vmatprep.subr.mxu0 0.0
        %5515 = vmatpush2.msra.mxu0 0.0
        %5516 = vmatprep.subr.mxu0 0.0
        %5517 = vmatpush2.msra.mxu0 0.0
        %5518 = vmatprep.subr.mxu0 0.0
        %5519 = vmatpush2.msra.mxu0 0.0
        %5520 = vmatprep.subr.mxu0 0.0
        %5521 = vmatpush2.msra.mxu0 0.0
        %5522 = vmatprep.subr.mxu0 0.0
        %5523 = vmatpush2.msra.mxu0 0.0
        %5524 = vmatprep.subr.mxu0 0.0
        %5525 = vmatpush2.msra.mxu0 0.0
        %5526 = vmatprep.mubr.f32.mxu0 0.0
        %5527 = vmatmul.mubr.f32.gmra.mxu0 %v5320
        %v5528 = vpop.f32.mrf.mxu0
        %v5529 = vadd.f32 0.0, %v5528
        %v5530 = vpop.f32.mrf.mxu0
        %5531 = vdwg.mxu0
        %5532 = vmatprep.subr.mxu0 0.0
        %5533 = vmatpush1.msra.mxu0 0.0
        %5534 = vmatprep.subr.mxu0 0.0
        %5535 = vmatpush1.msra.mxu0 0.0
        %5536 = vmatprep.subr.mxu0 0.0
        %5537 = vmatpush1.msra.mxu0 0.0
        %5538 = vmatprep.subr.mxu0 0.0
        %5539 = vmatpush1.msra.mxu0 0.0
        %5540 = vmatprep.subr.mxu0 0.0
        %5541 = vmatpush1.msra.mxu0 0.0
        %5542 = vmatprep.subr.mxu0 0.0
        %5543 = vmatpush1.msra.mxu0 0.0
        %5544 = vmatprep.subr.mxu0 0.0
        %5545 = vmatpush1.msra.mxu0 0.0
        %5546 = vmatprep.subr.mxu0 0.0
        %5547 = vmatpush1.msra.mxu0 0.0
        %5548 = vmatprep.subr.mxu0 0.0
        %5549 = vmatpush1.msra.mxu0 0.0
        %5550 = vmatprep.subr.mxu0 0.0
        %5551 = vmatpush1.msra.mxu0 0.0
        %5552 = vmatprep.subr.mxu0 0.0
        %5553 = vmatpush1.msra.mxu0 0.0
        %5554 = vmatprep.subr.mxu0 0.0
        %5555 = vmatpush1.msra.mxu0 0.0
        %5556 = vmatprep.subr.mxu0 0.0
        %5557 = vmatpush1.msra.mxu0 0.0
        %5558 = vmatprep.subr.mxu0 0.0
        %5559 = vmatpush1.msra.mxu0 0.0
        %5560 = vmatprep.subr.mxu0 0.0
        %5561 = vmatpush1.msra.mxu0 %v212
        %5562 = vmatprep.subr.mxu0 0.0
        %5563 = vmatpush1.msra.mxu0 %v211
        %5564 = vmatprep.subr.mxu0 0.0
        %5565 = vmatpush2.msra.mxu0 0.0
        %5566 = vmatprep.subr.mxu0 0.0
        %5567 = vmatpush2.msra.mxu0 0.0
        %5568 = vmatprep.subr.mxu0 0.0
        %5569 = vmatpush2.msra.mxu0 0.0
        %5570 = vmatprep.subr.mxu0 0.0
        %5571 = vmatpush2.msra.mxu0 0.0
        %5572 = vmatprep.subr.mxu0 0.0
        %5573 = vmatpush2.msra.mxu0 0.0
        %5574 = vmatprep.subr.mxu0 0.0
        %5575 = vmatpush2.msra.mxu0 0.0
        %5576 = vmatprep.subr.mxu0 0.0
        %5577 = vmatpush2.msra.mxu0 0.0
        %5578 = vmatprep.subr.mxu0 0.0
        %5579 = vmatpush2.msra.mxu0 0.0
        %5580 = vmatprep.subr.mxu0 0.0
        %5581 = vmatpush2.msra.mxu0 0.0
        %5582 = vmatprep.subr.mxu0 0.0
        %5583 = vmatpush2.msra.mxu0 0.0
        %5584 = vmatprep.subr.mxu0 0.0
        %5585 = vmatpush2.msra.mxu0 0.0
        %5586 = vmatprep.subr.mxu0 0.0
        %5587 = vmatpush2.msra.mxu0 0.0
        %5588 = vmatprep.subr.mxu0 0.0
        %5589 = vmatpush2.msra.mxu0 0.0
        %5590 = vmatprep.subr.mxu0 0.0
        %5591 = vmatpush2.msra.mxu0 0.0
        %5592 = vmatprep.subr.mxu0 0.0
        %5593 = vmatpush2.msra.mxu0 0.0
        %5594 = vmatprep.subr.mxu0 0.0
        %5595 = vmatpush2.msra.mxu0 0.0
        %5596 = vmatprep.mubr.f32.mxu0 0.0
        %5597 = vmatmul.mubr.f32.gmra.mxu0 %v5320
        %v5598 = vpop.f32.mrf.mxu0
        %v5599 = vadd.f32 0.0, %v5598
        %v5600 = vpop.f32.mrf.mxu0
        %5601 = vdwg.mxu0
        %v5603 = vsel %vm215, %v4750, 0
        %5605 = vmatprep.subr.mxu0 0.0
        %5606 = vmatpush1.msra.mxu0 0.0
        %5607 = vmatprep.subr.mxu0 0.0
        %5608 = vmatpush1.msra.mxu0 0.0
        %5609 = vmatprep.subr.mxu0 0.0
        %5610 = vmatpush1.msra.mxu0 0.0
        %5611 = vmatprep.subr.mxu0 0.0
        %5612 = vmatpush1.msra.mxu0 0.0
        %5613 = vmatprep.subr.mxu0 0.0
        %5614 = vmatpush1.msra.mxu0 0.0
        %5615 = vmatprep.subr.mxu0 0.0
        %5616 = vmatpush1.msra.mxu0 0.0
        %5617 = vmatprep.subr.mxu0 0.0
        %5618 = vmatpush1.msra.mxu0 0.0
        %5619 = vmatprep.subr.mxu0 0.0
        %5620 = vmatpush1.msra.mxu0 0.0
        %5621 = vmatprep.subr.mxu0 0.0
        %5622 = vmatpush1.msra.mxu0 0.0
        %5623 = vmatprep.subr.mxu0 0.0
        %5624 = vmatpush1.msra.mxu0 0.0
        %5625 = vmatprep.subr.mxu0 0.0
        %5626 = vmatpush1.msra.mxu0 0.0
        %5627 = vmatprep.subr.mxu0 0.0
        %5628 = vmatpush1.msra.mxu0 0.0
        %5629 = vmatprep.subr.mxu0 0.0
        %5630 = vmatpush1.msra.mxu0 0.0
        %5631 = vmatprep.subr.mxu0 0.0
        %5632 = vmatpush1.msra.mxu0 0.0
        %5633 = vmatprep.subr.mxu0 0.0
        %5634 = vmatpush1.msra.mxu0 %v198
        %5635 = vmatprep.subr.mxu0 0.0
        %5636 = vmatpush1.msra.mxu0 %v197
        %5637 = vmatprep.subr.mxu0 0.0
        %5638 = vmatpush2.msra.mxu0 0.0
        %5639 = vmatprep.subr.mxu0 0.0
        %5640 = vmatpush2.msra.mxu0 0.0
        %5641 = vmatprep.subr.mxu0 0.0
        %5642 = vmatpush2.msra.mxu0 0.0
        %5643 = vmatprep.subr.mxu0 0.0
        %5644 = vmatpush2.msra.mxu0 0.0
        %5645 = vmatprep.subr.mxu0 0.0
        %5646 = vmatpush2.msra.mxu0 0.0
        %5647 = vmatprep.subr.mxu0 0.0
        %5648 = vmatpush2.msra.mxu0 0.0
        %5649 = vmatprep.subr.mxu0 0.0
        %5650 = vmatpush2.msra.mxu0 0.0
        %5651 = vmatprep.subr.mxu0 0.0
        %5652 = vmatpush2.msra.mxu0 0.0
        %5653 = vmatprep.subr.mxu0 0.0
        %5654 = vmatpush2.msra.mxu0 0.0
        %5655 = vmatprep.subr.mxu0 0.0
        %5656 = vmatpush2.msra.mxu0 0.0
        %5657 = vmatprep.subr.mxu0 0.0
        %5658 = vmatpush2.msra.mxu0 0.0
        %5659 = vmatprep.subr.mxu0 0.0
        %5660 = vmatpush2.msra.mxu0 0.0
        %5661 = vmatprep.subr.mxu0 0.0
        %5662 = vmatpush2.msra.mxu0 0.0
        %5663 = vmatprep.subr.mxu0 0.0
        %5664 = vmatpush2.msra.mxu0 0.0
        %5665 = vmatprep.subr.mxu0 0.0
        %5666 = vmatpush2.msra.mxu0 0.0
        %5667 = vmatprep.subr.mxu0 0.0
        %5668 = vmatpush2.msra.mxu0 0.0
        %5669 = vmatprep.mubr.f32.mxu0 0.0
        %5670 = vmatmul.mubr.f32.gmra.mxu0 %v5603
        %v5671 = vpop.f32.mrf.mxu0
        %v5672 = vadd.f32 0.0, %v5671
        %v5673 = vpop.f32.mrf.mxu0
        %5674 = vdwg.mxu0
        %5675 = vmatprep.subr.mxu0 0.0
        %5676 = vmatpush1.msra.mxu0 0.0
        %5677 = vmatprep.subr.mxu0 0.0
        %5678 = vmatpush1.msra.mxu0 0.0
        %5679 = vmatprep.subr.mxu0 0.0
        %5680 = vmatpush1.msra.mxu0 0.0
        %5681 = vmatprep.subr.mxu0 0.0
        %5682 = vmatpush1.msra.mxu0 0.0
        %5683 = vmatprep.subr.mxu0 0.0
        %5684 = vmatpush1.msra.mxu0 0.0
        %5685 = vmatprep.subr.mxu0 0.0
        %5686 = vmatpush1.msra.mxu0 0.0
        %5687 = vmatprep.subr.mxu0 0.0
        %5688 = vmatpush1.msra.mxu0 0.0
        %5689 = vmatprep.subr.mxu0 0.0
        %5690 = vmatpush1.msra.mxu0 0.0
        %5691 = vmatprep.subr.mxu0 0.0
        %5692 = vmatpush1.msra.mxu0 0.0
        %5693 = vmatprep.subr.mxu0 0.0
        %5694 = vmatpush1.msra.mxu0 0.0
        %5695 = vmatprep.subr.mxu0 0.0
        %5696 = vmatpush1.msra.mxu0 0.0
        %5697 = vmatprep.subr.mxu0 0.0
        %5698 = vmatpush1.msra.mxu0 0.0
        %5699 = vmatprep.subr.mxu0 0.0
        %5700 = vmatpush1.msra.mxu0 0.0
        %5701 = vmatprep.subr.mxu0 0.0
        %5702 = vmatpush1.msra.mxu0 0.0
        %5703 = vmatprep.subr.mxu0 0.0
        %5704 = vmatpush1.msra.mxu0 %v202
        %5705 = vmatprep.subr.mxu0 0.0
        %5706 = vmatpush1.msra.mxu0 %v201
        %5707 = vmatprep.subr.mxu0 0.0
        %5708 = vmatpush2.msra.mxu0 0.0
        %5709 = vmatprep.subr.mxu0 0.0
        %5710 = vmatpush2.msra.mxu0 0.0
        %5711 = vmatprep.subr.mxu0 0.0
        %5712 = vmatpush2.msra.mxu0 0.0
        %5713 = vmatprep.subr.mxu0 0.0
        %5714 = vmatpush2.msra.mxu0 0.0
        %5715 = vmatprep.subr.mxu0 0.0
        %5716 = vmatpush2.msra.mxu0 0.0
        %5717 = vmatprep.subr.mxu0 0.0
        %5718 = vmatpush2.msra.mxu0 0.0
        %5719 = vmatprep.subr.mxu0 0.0
        %5720 = vmatpush2.msra.mxu0 0.0
        %5721 = vmatprep.subr.mxu0 0.0
        %5722 = vmatpush2.msra.mxu0 0.0
        %5723 = vmatprep.subr.mxu0 0.0
        %5724 = vmatpush2.msra.mxu0 0.0
        %5725 = vmatprep.subr.mxu0 0.0
        %5726 = vmatpush2.msra.mxu0 0.0
        %5727 = vmatprep.subr.mxu0 0.0
        %5728 = vmatpush2.msra.mxu0 0.0
        %5729 = vmatprep.subr.mxu0 0.0
        %5730 = vmatpush2.msra.mxu0 0.0
        %5731 = vmatprep.subr.mxu0 0.0
        %5732 = vmatpush2.msra.mxu0 0.0
        %5733 = vmatprep.subr.mxu0 0.0
        %5734 = vmatpush2.msra.mxu0 0.0
        %5735 = vmatprep.subr.mxu0 0.0
        %5736 = vmatpush2.msra.mxu0 0.0
        %5737 = vmatprep.subr.mxu0 0.0
        %5738 = vmatpush2.msra.mxu0 0.0
        %5739 = vmatprep.mubr.f32.mxu0 0.0
        %5740 = vmatmul.mubr.f32.gmra.mxu0 %v5603
        %v5741 = vpop.f32.mrf.mxu0
        %v5742 = vadd.f32 0.0, %v5741
        %v5743 = vpop.f32.mrf.mxu0
        %5744 = vdwg.mxu0
        %5745 = vmatprep.subr.mxu0 0.0
        %5746 = vmatpush1.msra.mxu0 0.0
        %5747 = vmatprep.subr.mxu0 0.0
        %5748 = vmatpush1.msra.mxu0 0.0
        %5749 = vmatprep.subr.mxu0 0.0
        %5750 = vmatpush1.msra.mxu0 0.0
        %5751 = vmatprep.subr.mxu0 0.0
        %5752 = vmatpush1.msra.mxu0 0.0
        %5753 = vmatprep.subr.mxu0 0.0
        %5754 = vmatpush1.msra.mxu0 0.0
        %5755 = vmatprep.subr.mxu0 0.0
        %5756 = vmatpush1.msra.mxu0 0.0
        %5757 = vmatprep.subr.mxu0 0.0
        %5758 = vmatpush1.msra.mxu0 0.0
        %5759 = vmatprep.subr.mxu0 0.0
        %5760 = vmatpush1.msra.mxu0 0.0
        %5761 = vmatprep.subr.mxu0 0.0
        %5762 = vmatpush1.msra.mxu0 0.0
        %5763 = vmatprep.subr.mxu0 0.0
        %5764 = vmatpush1.msra.mxu0 0.0
        %5765 = vmatprep.subr.mxu0 0.0
        %5766 = vmatpush1.msra.mxu0 0.0
        %5767 = vmatprep.subr.mxu0 0.0
        %5768 = vmatpush1.msra.mxu0 0.0
        %5769 = vmatprep.subr.mxu0 0.0
        %5770 = vmatpush1.msra.mxu0 0.0
        %5771 = vmatprep.subr.mxu0 0.0
        %5772 = vmatpush1.msra.mxu0 0.0
        %5773 = vmatprep.subr.mxu0 0.0
        %5774 = vmatpush1.msra.mxu0 %v207
        %5775 = vmatprep.subr.mxu0 0.0
        %5776 = vmatpush1.msra.mxu0 %v206
        %5777 = vmatprep.subr.mxu0 0.0
        %5778 = vmatpush2.msra.mxu0 0.0
        %5779 = vmatprep.subr.mxu0 0.0
        %5780 = vmatpush2.msra.mxu0 0.0
        %5781 = vmatprep.subr.mxu0 0.0
        %5782 = vmatpush2.msra.mxu0 0.0
        %5783 = vmatprep.subr.mxu0 0.0
        %5784 = vmatpush2.msra.mxu0 0.0
        %5785 = vmatprep.subr.mxu0 0.0
        %5786 = vmatpush2.msra.mxu0 0.0
        %5787 = vmatprep.subr.mxu0 0.0
        %5788 = vmatpush2.msra.mxu0 0.0
        %5789 = vmatprep.subr.mxu0 0.0
        %5790 = vmatpush2.msra.mxu0 0.0
        %5791 = vmatprep.subr.mxu0 0.0
        %5792 = vmatpush2.msra.mxu0 0.0
        %5793 = vmatprep.subr.mxu0 0.0
        %5794 = vmatpush2.msra.mxu0 0.0
        %5795 = vmatprep.subr.mxu0 0.0
        %5796 = vmatpush2.msra.mxu0 0.0
        %5797 = vmatprep.subr.mxu0 0.0
        %5798 = vmatpush2.msra.mxu0 0.0
        %5799 = vmatprep.subr.mxu0 0.0
        %5800 = vmatpush2.msra.mxu0 0.0
        %5801 = vmatprep.subr.mxu0 0.0
        %5802 = vmatpush2.msra.mxu0 0.0
        %5803 = vmatprep.subr.mxu0 0.0
        %5804 = vmatpush2.msra.mxu0 0.0
        %5805 = vmatprep.subr.mxu0 0.0
        %5806 = vmatpush2.msra.mxu0 0.0
        %5807 = vmatprep.subr.mxu0 0.0
        %5808 = vmatpush2.msra.mxu0 0.0
        %5809 = vmatprep.mubr.f32.mxu0 0.0
        %5810 = vmatmul.mubr.f32.gmra.mxu0 %v5603
        %v5811 = vpop.f32.mrf.mxu0
        %v5812 = vadd.f32 0.0, %v5811
        %v5813 = vpop.f32.mrf.mxu0
        %5814 = vdwg.mxu0
        %5815 = vmatprep.subr.mxu0 0.0
        %5816 = vmatpush1.msra.mxu0 0.0
        %5817 = vmatprep.subr.mxu0 0.0
        %5818 = vmatpush1.msra.mxu0 0.0
        %5819 = vmatprep.subr.mxu0 0.0
        %5820 = vmatpush1.msra.mxu0 0.0
        %5821 = vmatprep.subr.mxu0 0.0
        %5822 = vmatpush1.msra.mxu0 0.0
        %5823 = vmatprep.subr.mxu0 0.0
        %5824 = vmatpush1.msra.mxu0 0.0
        %5825 = vmatprep.subr.mxu0 0.0
        %5826 = vmatpush1.msra.mxu0 0.0
        %5827 = vmatprep.subr.mxu0 0.0
        %5828 = vmatpush1.msra.mxu0 0.0
        %5829 = vmatprep.subr.mxu0 0.0
        %5830 = vmatpush1.msra.mxu0 0.0
        %5831 = vmatprep.subr.mxu0 0.0
        %5832 = vmatpush1.msra.mxu0 0.0
        %5833 = vmatprep.subr.mxu0 0.0
        %5834 = vmatpush1.msra.mxu0 0.0
        %5835 = vmatprep.subr.mxu0 0.0
        %5836 = vmatpush1.msra.mxu0 0.0
        %5837 = vmatprep.subr.mxu0 0.0
        %5838 = vmatpush1.msra.mxu0 0.0
        %5839 = vmatprep.subr.mxu0 0.0
        %5840 = vmatpush1.msra.mxu0 0.0
        %5841 = vmatprep.subr.mxu0 0.0
        %5842 = vmatpush1.msra.mxu0 0.0
        %5843 = vmatprep.subr.mxu0 0.0
        %5844 = vmatpush1.msra.mxu0 %v212
        %5845 = vmatprep.subr.mxu0 0.0
        %5846 = vmatpush1.msra.mxu0 %v211
        %5847 = vmatprep.subr.mxu0 0.0
        %5848 = vmatpush2.msra.mxu0 0.0
        %5849 = vmatprep.subr.mxu0 0.0
        %5850 = vmatpush2.msra.mxu0 0.0
        %5851 = vmatprep.subr.mxu0 0.0
        %5852 = vmatpush2.msra.mxu0 0.0
        %5853 = vmatprep.subr.mxu0 0.0
        %5854 = vmatpush2.msra.mxu0 0.0
        %5855 = vmatprep.subr.mxu0 0.0
        %5856 = vmatpush2.msra.mxu0 0.0
        %5857 = vmatprep.subr.mxu0 0.0
        %5858 = vmatpush2.msra.mxu0 0.0
        %5859 = vmatprep.subr.mxu0 0.0
        %5860 = vmatpush2.msra.mxu0 0.0
        %5861 = vmatprep.subr.mxu0 0.0
        %5862 = vmatpush2.msra.mxu0 0.0
        %5863 = vmatprep.subr.mxu0 0.0
        %5864 = vmatpush2.msra.mxu0 0.0
        %5865 = vmatprep.subr.mxu0 0.0
        %5866 = vmatpush2.msra.mxu0 0.0
        %5867 = vmatprep.subr.mxu0 0.0
        %5868 = vmatpush2.msra.mxu0 0.0
        %5869 = vmatprep.subr.mxu0 0.0
        %5870 = vmatpush2.msra.mxu0 0.0
        %5871 = vmatprep.subr.mxu0 0.0
        %5872 = vmatpush2.msra.mxu0 0.0
        %5873 = vmatprep.subr.mxu0 0.0
        %5874 = vmatpush2.msra.mxu0 0.0
        %5875 = vmatprep.subr.mxu0 0.0
        %5876 = vmatpush2.msra.mxu0 0.0
        %5877 = vmatprep.subr.mxu0 0.0
        %5878 = vmatpush2.msra.mxu0 0.0
        %5879 = vmatprep.mubr.f32.mxu0 0.0
        %5880 = vmatmul.mubr.f32.gmra.mxu0 %v5603
        %v5881 = vpop.f32.mrf.mxu0
        %v5882 = vadd.f32 0.0, %v5881
        %v5883 = vpop.f32.mrf.mxu0
        %5884 = vdwg.mxu0
        %s5885 = sld [smem:[#allocation6]]
        %v5886 = vstv %s5885
        %v5887 = vmul.f32 %v578, %v5886
        %v5888 = vadd.f32 %v5887, 0.0
        %v5889 = vmul.f32 %v648, %v5886
        %v5890 = vadd.f32 %v5889, 0.0
        %v5891 = vmul.f32 %v861, %v5886
        %v5892 = vadd.f32 %v5891, 0.0
        %v5893 = vmul.f32 %v931, %v5886
        %v5894 = vadd.f32 %v5893, 0.0
        %s5895 = sld [smem:[#allocation6 + $0x1]]
        %v5896 = vstv %s5895
        %v5897 = vmul.f32 %v648, %v5896
        %v5898 = vadd.f32 %v5888, %v5897
        %v5899 = vmul.f32 %v718, %v5896
        %v5900 = vadd.f32 %v5890, %v5899
        %v5901 = vmul.f32 %v931, %v5896
        %v5902 = vadd.f32 %v5892, %v5901
        %v5903 = vmul.f32 %v1001, %v5896
        %v5904 = vadd.f32 %v5894, %v5903
        %s5905 = sld [smem:[#allocation6 + $0x2]]
        %v5906 = vstv %s5905
        %v5907 = vmul.f32 %v718, %v5906
        %v5908 = vadd.f32 %v5898, %v5907
        %v5909 = vmul.f32 %v788, %v5906
        %v5910 = vadd.f32 %v5900, %v5909
        %v5911 = vmul.f32 %v1001, %v5906
        %v5912 = vadd.f32 %v5902, %v5911
        %v5913 = vmul.f32 %v1071, %v5906
        %v5914 = vadd.f32 %v5904, %v5913
        %s5915 = sld [smem:[#allocation6 + $0x3]]
        %v5916 = vstv %s5915
        %v5917 = vmul.f32 %v861, %v5916
        %v5918 = vadd.f32 %v5908, %v5917
        %v5919 = vmul.f32 %v931, %v5916
        %v5920 = vadd.f32 %v5910, %v5919
        %v5921 = vmul.f32 %v1144, %v5916
        %v5922 = vadd.f32 %v5912, %v5921
        %v5923 = vmul.f32 %v1214, %v5916
        %v5924 = vadd.f32 %v5914, %v5923
        %s5925 = sld [smem:[#allocation6 + $0x4]]
        %v5926 = vstv %s5925
        %v5927 = vmul.f32 %v931, %v5926
        %v5928 = vadd.f32 %v5918, %v5927
        %v5929 = vmul.f32 %v1001, %v5926
        %v5930 = vadd.f32 %v5920, %v5929
        %v5931 = vmul.f32 %v1214, %v5926
        %v5932 = vadd.f32 %v5922, %v5931
        %v5933 = vmul.f32 %v1284, %v5926
        %v5934 = vadd.f32 %v5924, %v5933
        %s5935 = sld [smem:[#allocation6 + $0x5]]
        %v5936 = vstv %s5935
        %v5937 = vmul.f32 %v1001, %v5936
        %v5938 = vadd.f32 %v5928, %v5937
        %v5939 = vmul.f32 %v1071, %v5936
        %v5940 = vadd.f32 %v5930, %v5939
        %v5941 = vmul.f32 %v1284, %v5936
        %v5942 = vadd.f32 %v5932, %v5941
        %v5943 = vmul.f32 %v1354, %v5936
        %v5944 = vadd.f32 %v5934, %v5943
        %s5945 = sld [smem:[#allocation6 + $0x6]]
        %v5946 = vstv %s5945
        %v5947 = vmul.f32 %v1144, %v5946
        %v5948 = vadd.f32 %v5938, %v5947
        %v5949 = vmul.f32 %v1214, %v5946
        %v5950 = vadd.f32 %v5940, %v5949
        %v5951 = vmul.f32 %v1427, %v5946
        %v5952 = vadd.f32 %v5942, %v5951
        %v5953 = vmul.f32 %v1497, %v5946
        %v5954 = vadd.f32 %v5944, %v5953
        %s5955 = sld [smem:[#allocation6 + $0x7]]
        %v5956 = vstv %s5955
        %v5957 = vmul.f32 %v1214, %v5956
        %v5958 = vadd.f32 %v5948, %v5957
        %v5959 = vmul.f32 %v1284, %v5956
        %v5960 = vadd.f32 %v5950, %v5959
        %v5961 = vmul.f32 %v1497, %v5956
        %v5962 = vadd.f32 %v5952, %v5961
        %v5963 = vmul.f32 %v1567, %v5956
        %v5964 = vadd.f32 %v5954, %v5963
        %s5965 = sld [smem:[#allocation6 + $0x8]]
        %v5966 = vstv %s5965
        %v5967 = vmul.f32 %v1284, %v5966
        %v5968 = vadd.f32 %v5958, %v5967
        %v5969 = vmul.f32 %v1354, %v5966
        %v5970 = vadd.f32 %v5960, %v5969
        %v5971 = vmul.f32 %v1567, %v5966
        %v5972 = vadd.f32 %v5962, %v5971
        %v5973 = vmul.f32 %v1637, %v5966
        %v5974 = vadd.f32 %v5964, %v5973
        %s5975 = sld [smem:[#allocation6 + $0x9]]
        %v5976 = vstv %s5975
        %v5977 = vmul.f32 %v1993, %v5976
        %v5978 = vadd.f32 %v5968, %v5977
        %v5979 = vmul.f32 %v2063, %v5976
        %v5980 = vadd.f32 %v5970, %v5979
        %v5981 = vmul.f32 %v2276, %v5976
        %v5982 = vadd.f32 %v5972, %v5981
        %v5983 = vmul.f32 %v2346, %v5976
        %v5984 = vadd.f32 %v5974, %v5983
        %s5985 = sld [smem:[#allocation6 + $0xa]]
        %v5986 = vstv %s5985
        %v5987 = vmul.f32 %v2063, %v5986
        %v5988 = vadd.f32 %v5978, %v5987
        %v5989 = vmul.f32 %v2133, %v5986
        %v5990 = vadd.f32 %v5980, %v5989
        %v5991 = vmul.f32 %v2346, %v5986
        %v5992 = vadd.f32 %v5982, %v5991
        %v5993 = vmul.f32 %v2416, %v5986
        %v5994 = vadd.f32 %v5984, %v5993
        %s5995 = sld [smem:[#allocation6 + $0xb]]
        %v5996 = vstv %s5995
        %v5997 = vmul.f32 %v2133, %v5996
        %v5998 = vadd.f32 %v5988, %v5997
        %v5999 = vmul.f32 %v2203, %v5996
        %v6000 = vadd.f32 %v5990, %v5999
        %v6001 = vmul.f32 %v2416, %v5996
        %v6002 = vadd.f32 %v5992, %v6001
        %v6003 = vmul.f32 %v2486, %v5996
        %v6004 = vadd.f32 %v5994, %v6003
        %s6005 = sld [smem:[#allocation6 + $0xc]]
        %v6006 = vstv %s6005
        %v6007 = vmul.f32 %v2276, %v6006
        %v6008 = vadd.f32 %v5998, %v6007
        %v6009 = vmul.f32 %v2346, %v6006
        %v6010 = vadd.f32 %v6000, %v6009
        %v6011 = vmul.f32 %v2559, %v6006
        %v6012 = vadd.f32 %v6002, %v6011
        %v6013 = vmul.f32 %v2629, %v6006
        %v6014 = vadd.f32 %v6004, %v6013
        %s6015 = sld [smem:[#allocation6 + $0xd]]
        %v6016 = vstv %s6015
        %v6017 = vmul.f32 %v2346, %v6016
        %v6018 = vadd.f32 %v6008, %v6017
        %v6019 = vmul.f32 %v2416, %v6016
        %v6020 = vadd.f32 %v6010, %v6019
        %v6021 = vmul.f32 %v2629, %v6016
        %v6022 = vadd.f32 %v6012, %v6021
        %v6023 = vmul.f32 %v2699, %v6016
        %v6024 = vadd.f32 %v6014, %v6023
        %s6025 = sld [smem:[#allocation6 + $0xe]]
        %v6026 = vstv %s6025
        %v6027 = vmul.f32 %v2416, %v6026
        %v6028 = vadd.f32 %v6018, %v6027
        %v6029 = vmul.f32 %v2486, %v6026
        %v6030 = vadd.f32 %v6020, %v6029
        %v6031 = vmul.f32 %v2699, %v6026
        %v6032 = vadd.f32 %v6022, %v6031
        %v6033 = vmul.f32 %v2769, %v6026
        %v6034 = vadd.f32 %v6024, %v6033
        %s6035 = sld [smem:[#allocation6 + $0xf]]
        %v6036 = vstv %s6035
        %v6037 = vmul.f32 %v2559, %v6036
        %v6038 = vadd.f32 %v6028, %v6037
        %v6039 = vmul.f32 %v2629, %v6036
        %v6040 = vadd.f32 %v6030, %v6039
        %v6041 = vmul.f32 %v2842, %v6036
        %v6042 = vadd.f32 %v6032, %v6041
        %v6043 = vmul.f32 %v2912, %v6036
        %v6044 = vadd.f32 %v6034, %v6043
        %s6045 = sld [smem:[#allocation6 + $0x10]]
        %v6046 = vstv %s6045
        %v6047 = vmul.f32 %v2629, %v6046
        %v6048 = vadd.f32 %v6038, %v6047
        %v6049 = vmul.f32 %v2699, %v6046
        %v6050 = vadd.f32 %v6040, %v6049
        %v6051 = vmul.f32 %v2912, %v6046
        %v6052 = vadd.f32 %v6042, %v6051
        %v6053 = vmul.f32 %v2982, %v6046
        %v6054 = vadd.f32 %v6044, %v6053
        %s6055 = sld [smem:[#allocation6 + $0x11]]
        %v6056 = vstv %s6055
        %v6057 = vmul.f32 %v2699, %v6056
        %v6058 = vadd.f32 %v6048, %v6057
        %v6059 = vmul.f32 %v2769, %v6056
        %v6060 = vadd.f32 %v6050, %v6059
        %v6061 = vmul.f32 %v2982, %v6056
        %v6062 = vadd.f32 %v6052, %v6061
        %v6063 = vmul.f32 %v3052, %v6056
        %v6064 = vadd.f32 %v6054, %v6063
        %s6065 = sld [smem:[#allocation6 + $0x12]]
        %v6066 = vstv %s6065
        %v6067 = vmul.f32 %v3408, %v6066
        %v6068 = vadd.f32 %v6058, %v6067
        %v6069 = vmul.f32 %v3478, %v6066
        %v6070 = vadd.f32 %v6060, %v6069
        %v6071 = vmul.f32 %v3691, %v6066
        %v6072 = vadd.f32 %v6062, %v6071
        %v6073 = vmul.f32 %v3761, %v6066
        %v6074 = vadd.f32 %v6064, %v6073
        %s6075 = sld [smem:[#allocation6 + $0x13]]
        %v6076 = vstv %s6075
        %v6077 = vmul.f32 %v3478, %v6076
        %v6078 = vadd.f32 %v6068, %v6077
        %v6079 = vmul.f32 %v3548, %v6076
        %v6080 = vadd.f32 %v6070, %v6079
        %v6081 = vmul.f32 %v3761, %v6076
        %v6082 = vadd.f32 %v6072, %v6081
        %v6083 = vmul.f32 %v3831, %v6076
        %v6084 = vadd.f32 %v6074, %v6083
        %s6085 = sld [smem:[#allocation6 + $0x14]]
        %v6086 = vstv %s6085
        %v6087 = vmul.f32 %v3548, %v6086
        %v6088 = vadd.f32 %v6078, %v6087
        %v6089 = vmul.f32 %v3618, %v6086
        %v6090 = vadd.f32 %v6080, %v6089
        %v6091 = vmul.f32 %v3831, %v6086
        %v6092 = vadd.f32 %v6082, %v6091
        %v6093 = vmul.f32 %v3901, %v6086
        %v6094 = vadd.f32 %v6084, %v6093
        %s6095 = sld [smem:[#allocation6 + $0x15]]
        %v6096 = vstv %s6095
        %v6097 = vmul.f32 %v3691, %v6096
        %v6098 = vadd.f32 %v6088, %v6097
        %v6099 = vmul.f32 %v3761, %v6096
        %v6100 = vadd.f32 %v6090, %v6099
        %v6101 = vmul.f32 %v3974, %v6096
        %v6102 = vadd.f32 %v6092, %v6101
        %v6103 = vmul.f32 %v4044, %v6096
        %v6104 = vadd.f32 %v6094, %v6103
        %s6105 = sld [smem:[#allocation6 + $0x16]]
        %v6106 = vstv %s6105
        %v6107 = vmul.f32 %v3761, %v6106
        %v6108 = vadd.f32 %v6098, %v6107
        %v6109 = vmul.f32 %v3831, %v6106
        %v6110 = vadd.f32 %v6100, %v6109
        %v6111 = vmul.f32 %v4044, %v6106
        %v6112 = vadd.f32 %v6102, %v6111
        %v6113 = vmul.f32 %v4114, %v6106
        %v6114 = vadd.f32 %v6104, %v6113
        %s6115 = sld [smem:[#allocation6 + $0x17]]
        %v6116 = vstv %s6115
        %v6117 = vmul.f32 %v3831, %v6116
        %v6118 = vadd.f32 %v6108, %v6117
        %v6119 = vmul.f32 %v3901, %v6116
        %v6120 = vadd.f32 %v6110, %v6119
        %v6121 = vmul.f32 %v4114, %v6116
        %v6122 = vadd.f32 %v6112, %v6121
        %v6123 = vmul.f32 %v4184, %v6116
        %v6124 = vadd.f32 %v6114, %v6123
        %s6125 = sld [smem:[#allocation6 + $0x18]]
        %v6126 = vstv %s6125
        %v6127 = vmul.f32 %v3974, %v6126
        %v6128 = vadd.f32 %v6118, %v6127
        %v6129 = vmul.f32 %v4044, %v6126
        %v6130 = vadd.f32 %v6120, %v6129
        %v6131 = vmul.f32 %v4257, %v6126
        %v6132 = vadd.f32 %v6122, %v6131
        %v6133 = vmul.f32 %v4327, %v6126
        %v6134 = vadd.f32 %v6124, %v6133
        %s6135 = sld [smem:[#allocation6 + $0x19]]
        %v6136 = vstv %s6135
        %v6137 = vmul.f32 %v4044, %v6136
        %v6138 = vadd.f32 %v6128, %v6137
        %v6139 = vmul.f32 %v4114, %v6136
        %v6140 = vadd.f32 %v6130, %v6139
        %v6141 = vmul.f32 %v4327, %v6136
        %v6142 = vadd.f32 %v6132, %v6141
        %v6143 = vmul.f32 %v4397, %v6136
        %v6144 = vadd.f32 %v6134, %v6143
        %s6145 = sld [smem:[#allocation6 + $0x1a]]
        %v6146 = vstv %s6145
        %v6147 = vmul.f32 %v4114, %v6146
        %v6148 = vadd.f32 %v6138, %v6147
        %v6149 = vmul.f32 %v4184, %v6146
        %v6150 = vadd.f32 %v6140, %v6149
        %v6151 = vmul.f32 %v4397, %v6146
        %v6152 = vadd.f32 %v6142, %v6151
        %v6153 = vmul.f32 %v4467, %v6146
        %v6154 = vadd.f32 %v6144, %v6153
        %s6155 = sld [smem:[#allocation6 + $0x1b]]
        %v6156 = vstv %s6155
        %v6157 = vmul.f32 %v4823, %v6156
        %v6158 = vadd.f32 %v6148, %v6157
        %v6159 = vmul.f32 %v4893, %v6156
        %v6160 = vadd.f32 %v6150, %v6159
        %v6161 = vmul.f32 %v5106, %v6156
        %v6162 = vadd.f32 %v6152, %v6161
        %v6163 = vmul.f32 %v5176, %v6156
        %v6164 = vadd.f32 %v6154, %v6163
        %s6165 = sld [smem:[#allocation6 + $0x1c]]
        %v6166 = vstv %s6165
        %v6167 = vmul.f32 %v4893, %v6166
        %v6168 = vadd.f32 %v6158, %v6167
        %v6169 = vmul.f32 %v4963, %v6166
        %v6170 = vadd.f32 %v6160, %v6169
        %v6171 = vmul.f32 %v5176, %v6166
        %v6172 = vadd.f32 %v6162, %v6171
        %v6173 = vmul.f32 %v5246, %v6166
        %v6174 = vadd.f32 %v6164, %v6173
        %s6175 = sld [smem:[#allocation6 + $0x1d]]
        %v6176 = vstv %s6175
        %v6177 = vmul.f32 %v4963, %v6176
        %v6178 = vadd.f32 %v6168, %v6177
        %v6179 = vmul.f32 %v5033, %v6176
        %v6180 = vadd.f32 %v6170, %v6179
        %v6181 = vmul.f32 %v5246, %v6176
        %v6182 = vadd.f32 %v6172, %v6181
        %v6183 = vmul.f32 %v5316, %v6176
        %v6184 = vadd.f32 %v6174, %v6183
        %s6185 = sld [smem:[#allocation6 + $0x1e]]
        %v6186 = vstv %s6185
        %v6187 = vmul.f32 %v5106, %v6186
        %v6188 = vadd.f32 %v6178, %v6187
        %v6189 = vmul.f32 %v5176, %v6186
        %v6190 = vadd.f32 %v6180, %v6189
        %v6191 = vmul.f32 %v5389, %v6186
        %v6192 = vadd.f32 %v6182, %v6191
        %v6193 = vmul.f32 %v5459, %v6186
        %v6194 = vadd.f32 %v6184, %v6193
        %s6195 = sld [smem:[#allocation6 + $0x1f]]
        %v6196 = vstv %s6195
        %v6197 = vmul.f32 %v5176, %v6196
        %v6198 = vadd.f32 %v6188, %v6197
        %v6199 = vmul.f32 %v5246, %v6196
        %v6200 = vadd.f32 %v6190, %v6199
        %v6201 = vmul.f32 %v5459, %v6196
        %v6202 = vadd.f32 %v6192, %v6201
        %v6203 = vmul.f32 %v5529, %v6196
        %v6204 = vadd.f32 %v6194, %v6203
        %s6205 = sld [smem:[#allocation6 + $0x20]]
        %v6206 = vstv %s6205
        %v6207 = vmul.f32 %v5246, %v6206
        %v6208 = vadd.f32 %v6198, %v6207
        %v6209 = vmul.f32 %v5316, %v6206
        %v6210 = vadd.f32 %v6200, %v6209
        %v6211 = vmul.f32 %v5529, %v6206
        %v6212 = vadd.f32 %v6202, %v6211
        %v6213 = vmul.f32 %v5599, %v6206
        %v6214 = vadd.f32 %v6204, %v6213
        %s6215 = sld [smem:[#allocation6 + $0x21]]
        %v6216 = vstv %s6215
        %v6217 = vmul.f32 %v5389, %v6216
        %v6218 = vadd.f32 %v6208, %v6217
        %v6219 = vmul.f32 %v5459, %v6216
        %v6220 = vadd.f32 %v6210, %v6219
        %v6221 = vmul.f32 %v5672, %v6216
        %v6222 = vadd.f32 %v6212, %v6221
        %v6223 = vmul.f32 %v5742, %v6216
        %v6224 = vadd.f32 %v6214, %v6223
        %s6225 = sld [smem:[#allocation6 + $0x22]]
        %v6226 = vstv %s6225
        %v6227 = vmul.f32 %v5459, %v6226
        %v6228 = vadd.f32 %v6218, %v6227
        %v6229 = vmul.f32 %v5529, %v6226
        %v6230 = vadd.f32 %v6220, %v6229
        %v6231 = vmul.f32 %v5742, %v6226
        %v6232 = vadd.f32 %v6222, %v6231
        %v6233 = vmul.f32 %v5812, %v6226
        %v6234 = vadd.f32 %v6224, %v6233
        %s6235 = sld [smem:[#allocation6 + $0x23]]
        %v6236 = vstv %s6235
        %v6237 = vmul.f32 %v5529, %v6236
        %v6238 = vadd.f32 %v6228, %v6237
        %v6239 = vmul.f32 %v5599, %v6236
        %v6240 = vadd.f32 %v6230, %v6239
        %v6241 = vmul.f32 %v5812, %v6236
        %v6242 = vadd.f32 %v6232, %v6241
        %v6243 = vmul.f32 %v5882, %v6236
        %v6244 = vadd.f32 %v6234, %v6243
        %vm6245 = vcmask 64512
        %6246 = vst.msk [vmem:[%s175] sm:$0xff] %vm6245, %v6238
        %s6247 = scalar_lea.vmem %s175, 8 [#allocation7]
        %6248 = vst.msk [vmem:[%s6247] sm:$0xff] %vm6245, %v6240
        %s6249 = scalar_lea.vmem %s175, 16 [#allocation7]
        %6250 = vst.msk [vmem:[%s6249] sm:$0xff] %vm6245, %v6242
        %s6251 = scalar_lea.vmem %s175, 24 [#allocation7]
        %6252 = vst.msk [vmem:[%s6251] sm:$0xff] %vm6245, %v6244
        %s6253 = sld [smem:[#allocation6 + $0x24]]
        %v6254 = vstv %s6253
        %v6255 = vmul.f32 %v578, %v6254
        %v6256 = vadd.f32 %v6255, 0.0
        %v6257 = vmul.f32 %v648, %v6254
        %v6258 = vadd.f32 %v6257, 0.0
        %v6259 = vmul.f32 %v861, %v6254
        %v6260 = vadd.f32 %v6259, 0.0
        %v6261 = vmul.f32 %v931, %v6254
        %v6262 = vadd.f32 %v6261, 0.0
        %s6263 = sld [smem:[#allocation6 + $0x25]]
        %v6264 = vstv %s6263
        %v6265 = vmul.f32 %v648, %v6264
        %v6266 = vadd.f32 %v6256, %v6265
        %v6267 = vmul.f32 %v718, %v6264
        %v6268 = vadd.f32 %v6258, %v6267
        %v6269 = vmul.f32 %v931, %v6264
        %v6270 = vadd.f32 %v6260, %v6269
        %v6271 = vmul.f32 %v1001, %v6264
        %v6272 = vadd.f32 %v6262, %v6271
        %s6273 = sld [smem:[#allocation6 + $0x26]]
        %v6274 = vstv %s6273
        %v6275 = vmul.f32 %v718, %v6274
        %v6276 = vadd.f32 %v6266, %v6275
        %v6277 = vmul.f32 %v788, %v6274
        %v6278 = vadd.f32 %v6268, %v6277
        %v6279 = vmul.f32 %v1001, %v6274
        %v6280 = vadd.f32 %v6270, %v6279
        %v6281 = vmul.f32 %v1071, %v6274
        %v6282 = vadd.f32 %v6272, %v6281
        %s6283 = sld [smem:[#allocation6 + $0x27]]
        %v6284 = vstv %s6283
        %v6285 = vmul.f32 %v861, %v6284
        %v6286 = vadd.f32 %v6276, %v6285
        %v6287 = vmul.f32 %v931, %v6284
        %v6288 = vadd.f32 %v6278, %v6287
        %v6289 = vmul.f32 %v1144, %v6284
        %v6290 = vadd.f32 %v6280, %v6289
        %v6291 = vmul.f32 %v1214, %v6284
        %v6292 = vadd.f32 %v6282, %v6291
        %s6293 = sld [smem:[#allocation6 + $0x28]]
        %v6294 = vstv %s6293
        %v6295 = vmul.f32 %v931, %v6294
        %v6296 = vadd.f32 %v6286, %v6295
        %v6297 = vmul.f32 %v1001, %v6294
        %v6298 = vadd.f32 %v6288, %v6297
        %v6299 = vmul.f32 %v1214, %v6294
        %v6300 = vadd.f32 %v6290, %v6299
        %v6301 = vmul.f32 %v1284, %v6294
        %v6302 = vadd.f32 %v6292, %v6301
        %s6303 = sld [smem:[#allocation6 + $0x29]]
        %v6304 = vstv %s6303
        %v6305 = vmul.f32 %v1001, %v6304
        %v6306 = vadd.f32 %v6296, %v6305
        %v6307 = vmul.f32 %v1071, %v6304
        %v6308 = vadd.f32 %v6298, %v6307
        %v6309 = vmul.f32 %v1284, %v6304
        %v6310 = vadd.f32 %v6300, %v6309
        %v6311 = vmul.f32 %v1354, %v6304
        %v6312 = vadd.f32 %v6302, %v6311
        %s6313 = sld [smem:[#allocation6 + $0x2a]]
        %v6314 = vstv %s6313
        %v6315 = vmul.f32 %v1144, %v6314
        %v6316 = vadd.f32 %v6306, %v6315
        %v6317 = vmul.f32 %v1214, %v6314
        %v6318 = vadd.f32 %v6308, %v6317
        %v6319 = vmul.f32 %v1427, %v6314
        %v6320 = vadd.f32 %v6310, %v6319
        %v6321 = vmul.f32 %v1497, %v6314
        %v6322 = vadd.f32 %v6312, %v6321
        %s6323 = sld [smem:[#allocation6 + $0x2b]]
        %v6324 = vstv %s6323
        %v6325 = vmul.f32 %v1214, %v6324
        %v6326 = vadd.f32 %v6316, %v6325
        %v6327 = vmul.f32 %v1284, %v6324
        %v6328 = vadd.f32 %v6318, %v6327
        %v6329 = vmul.f32 %v1497, %v6324
        %v6330 = vadd.f32 %v6320, %v6329
        %v6331 = vmul.f32 %v1567, %v6324
        %v6332 = vadd.f32 %v6322, %v6331
        %s6333 = sld [smem:[#allocation6 + $0x2c]]
        %v6334 = vstv %s6333
        %v6335 = vmul.f32 %v1284, %v6334
        %v6336 = vadd.f32 %v6326, %v6335
        %v6337 = vmul.f32 %v1354, %v6334
        %v6338 = vadd.f32 %v6328, %v6337
        %v6339 = vmul.f32 %v1567, %v6334
        %v6340 = vadd.f32 %v6330, %v6339
        %v6341 = vmul.f32 %v1637, %v6334
        %v6342 = vadd.f32 %v6332, %v6341
        %s6343 = sld [smem:[#allocation6 + $0x2d]]
        %v6344 = vstv %s6343
        %v6345 = vmul.f32 %v1993, %v6344
        %v6346 = vadd.f32 %v6336, %v6345
        %v6347 = vmul.f32 %v2063, %v6344
        %v6348 = vadd.f32 %v6338, %v6347
        %v6349 = vmul.f32 %v2276, %v6344
        %v6350 = vadd.f32 %v6340, %v6349
        %v6351 = vmul.f32 %v2346, %v6344
        %v6352 = vadd.f32 %v6342, %v6351
        %s6353 = sld [smem:[#allocation6 + $0x2e]]
        %v6354 = vstv %s6353
        %v6355 = vmul.f32 %v2063, %v6354
        %v6356 = vadd.f32 %v6346, %v6355
        %v6357 = vmul.f32 %v2133, %v6354
        %v6358 = vadd.f32 %v6348, %v6357
        %v6359 = vmul.f32 %v2346, %v6354
        %v6360 = vadd.f32 %v6350, %v6359
        %v6361 = vmul.f32 %v2416, %v6354
        %v6362 = vadd.f32 %v6352, %v6361
        %s6363 = sld [smem:[#allocation6 + $0x2f]]
        %v6364 = vstv %s6363
        %v6365 = vmul.f32 %v2133, %v6364
        %v6366 = vadd.f32 %v6356, %v6365
        %v6367 = vmul.f32 %v2203, %v6364
        %v6368 = vadd.f32 %v6358, %v6367
        %v6369 = vmul.f32 %v2416, %v6364
        %v6370 = vadd.f32 %v6360, %v6369
        %v6371 = vmul.f32 %v2486, %v6364
        %v6372 = vadd.f32 %v6362, %v6371
        %s6373 = sld [smem:[#allocation6 + $0x30]]
        %v6374 = vstv %s6373
        %v6375 = vmul.f32 %v2276, %v6374
        %v6376 = vadd.f32 %v6366, %v6375
        %v6377 = vmul.f32 %v2346, %v6374
        %v6378 = vadd.f32 %v6368, %v6377
        %v6379 = vmul.f32 %v2559, %v6374
        %v6380 = vadd.f32 %v6370, %v6379
        %v6381 = vmul.f32 %v2629, %v6374
        %v6382 = vadd.f32 %v6372, %v6381
        %s6383 = sld [smem:[#allocation6 + $0x31]]
        %v6384 = vstv %s6383
        %v6385 = vmul.f32 %v2346, %v6384
        %v6386 = vadd.f32 %v6376, %v6385
        %v6387 = vmul.f32 %v2416, %v6384
        %v6388 = vadd.f32 %v6378, %v6387
        %v6389 = vmul.f32 %v2629, %v6384
        %v6390 = vadd.f32 %v6380, %v6389
        %v6391 = vmul.f32 %v2699, %v6384
        %v6392 = vadd.f32 %v6382, %v6391
        %s6393 = sld [smem:[#allocation6 + $0x32]]
        %v6394 = vstv %s6393
        %v6395 = vmul.f32 %v2416, %v6394
        %v6396 = vadd.f32 %v6386, %v6395
        %v6397 = vmul.f32 %v2486, %v6394
        %v6398 = vadd.f32 %v6388, %v6397
        %v6399 = vmul.f32 %v2699, %v6394
        %v6400 = vadd.f32 %v6390, %v6399
        %v6401 = vmul.f32 %v2769, %v6394
        %v6402 = vadd.f32 %v6392, %v6401
        %s6403 = sld [smem:[#allocation6 + $0x33]]
        %v6404 = vstv %s6403
        %v6405 = vmul.f32 %v2559, %v6404
        %v6406 = vadd.f32 %v6396, %v6405
        %v6407 = vmul.f32 %v2629, %v6404
        %v6408 = vadd.f32 %v6398, %v6407
        %v6409 = vmul.f32 %v2842, %v6404
        %v6410 = vadd.f32 %v6400, %v6409
        %v6411 = vmul.f32 %v2912, %v6404
        %v6412 = vadd.f32 %v6402, %v6411
        %s6413 = sld [smem:[#allocation6 + $0x34]]
        %v6414 = vstv %s6413
        %v6415 = vmul.f32 %v2629, %v6414
        %v6416 = vadd.f32 %v6406, %v6415
        %v6417 = vmul.f32 %v2699, %v6414
        %v6418 = vadd.f32 %v6408, %v6417
        %v6419 = vmul.f32 %v2912, %v6414
        %v6420 = vadd.f32 %v6410, %v6419
        %v6421 = vmul.f32 %v2982, %v6414
        %v6422 = vadd.f32 %v6412, %v6421
        %s6423 = sld [smem:[#allocation6 + $0x35]]
        %v6424 = vstv %s6423
        %v6425 = vmul.f32 %v2699, %v6424
        %v6426 = vadd.f32 %v6416, %v6425
        %v6427 = vmul.f32 %v2769, %v6424
        %v6428 = vadd.f32 %v6418, %v6427
        %v6429 = vmul.f32 %v2982, %v6424
        %v6430 = vadd.f32 %v6420, %v6429
        %v6431 = vmul.f32 %v3052, %v6424
        %v6432 = vadd.f32 %v6422, %v6431
        %s6433 = sld [smem:[#allocation6 + $0x36]]
        %v6434 = vstv %s6433
        %v6435 = vmul.f32 %v3408, %v6434
        %v6436 = vadd.f32 %v6426, %v6435
        %v6437 = vmul.f32 %v3478, %v6434
        %v6438 = vadd.f32 %v6428, %v6437
        %v6439 = vmul.f32 %v3691, %v6434
        %v6440 = vadd.f32 %v6430, %v6439
        %v6441 = vmul.f32 %v3761, %v6434
        %v6442 = vadd.f32 %v6432, %v6441
        %s6443 = sld [smem:[#allocation6 + $0x37]]
        %v6444 = vstv %s6443
        %v6445 = vmul.f32 %v3478, %v6444
        %v6446 = vadd.f32 %v6436, %v6445
        %v6447 = vmul.f32 %v3548, %v6444
        %v6448 = vadd.f32 %v6438, %v6447
        %v6449 = vmul.f32 %v3761, %v6444
        %v6450 = vadd.f32 %v6440, %v6449
        %v6451 = vmul.f32 %v3831, %v6444
        %v6452 = vadd.f32 %v6442, %v6451
        %s6453 = sld [smem:[#allocation6 + $0x38]]
        %v6454 = vstv %s6453
        %v6455 = vmul.f32 %v3548, %v6454
        %v6456 = vadd.f32 %v6446, %v6455
        %v6457 = vmul.f32 %v3618, %v6454
        %v6458 = vadd.f32 %v6448, %v6457
        %v6459 = vmul.f32 %v3831, %v6454
        %v6460 = vadd.f32 %v6450, %v6459
        %v6461 = vmul.f32 %v3901, %v6454
        %v6462 = vadd.f32 %v6452, %v6461
        %s6463 = sld [smem:[#allocation6 + $0x39]]
        %v6464 = vstv %s6463
        %v6465 = vmul.f32 %v3691, %v6464
        %v6466 = vadd.f32 %v6456, %v6465
        %v6467 = vmul.f32 %v3761, %v6464
        %v6468 = vadd.f32 %v6458, %v6467
        %v6469 = vmul.f32 %v3974, %v6464
        %v6470 = vadd.f32 %v6460, %v6469
        %v6471 = vmul.f32 %v4044, %v6464
        %v6472 = vadd.f32 %v6462, %v6471
        %s6473 = sld [smem:[#allocation6 + $0x3a]]
        %v6474 = vstv %s6473
        %v6475 = vmul.f32 %v3761, %v6474
        %v6476 = vadd.f32 %v6466, %v6475
        %v6477 = vmul.f32 %v3831, %v6474
        %v6478 = vadd.f32 %v6468, %v6477
        %v6479 = vmul.f32 %v4044, %v6474
        %v6480 = vadd.f32 %v6470, %v6479
        %v6481 = vmul.f32 %v4114, %v6474
        %v6482 = vadd.f32 %v6472, %v6481
        %s6483 = sld [smem:[#allocation6 + $0x3b]]
        %v6484 = vstv %s6483
        %v6485 = vmul.f32 %v3831, %v6484
        %v6486 = vadd.f32 %v6476, %v6485
        %v6487 = vmul.f32 %v3901, %v6484
        %v6488 = vadd.f32 %v6478, %v6487
        %v6489 = vmul.f32 %v4114, %v6484
        %v6490 = vadd.f32 %v6480, %v6489
        %v6491 = vmul.f32 %v4184, %v6484
        %v6492 = vadd.f32 %v6482, %v6491
        %s6493 = sld [smem:[#allocation6 + $0x3c]]
        %v6494 = vstv %s6493
        %v6495 = vmul.f32 %v3974, %v6494
        %v6496 = vadd.f32 %v6486, %v6495
        %v6497 = vmul.f32 %v4044, %v6494
        %v6498 = vadd.f32 %v6488, %v6497
        %v6499 = vmul.f32 %v4257, %v6494
        %v6500 = vadd.f32 %v6490, %v6499
        %v6501 = vmul.f32 %v4327, %v6494
        %v6502 = vadd.f32 %v6492, %v6501
        %s6503 = sld [smem:[#allocation6 + $0x3d]]
        %v6504 = vstv %s6503
        %v6505 = vmul.f32 %v4044, %v6504
        %v6506 = vadd.f32 %v6496, %v6505
        %v6507 = vmul.f32 %v4114, %v6504
        %v6508 = vadd.f32 %v6498, %v6507
        %v6509 = vmul.f32 %v4327, %v6504
        %v6510 = vadd.f32 %v6500, %v6509
        %v6511 = vmul.f32 %v4397, %v6504
        %v6512 = vadd.f32 %v6502, %v6511
        %s6513 = sld [smem:[#allocation6 + $0x3e]]
        %v6514 = vstv %s6513
        %v6515 = vmul.f32 %v4114, %v6514
        %v6516 = vadd.f32 %v6506, %v6515
        %v6517 = vmul.f32 %v4184, %v6514
        %v6518 = vadd.f32 %v6508, %v6517
        %v6519 = vmul.f32 %v4397, %v6514
        %v6520 = vadd.f32 %v6510, %v6519
        %v6521 = vmul.f32 %v4467, %v6514
        %v6522 = vadd.f32 %v6512, %v6521
        %s6523 = sld [smem:[#allocation6 + $0x3f]]
        %v6524 = vstv %s6523
        %v6525 = vmul.f32 %v4823, %v6524
        %v6526 = vadd.f32 %v6516, %v6525
        %v6527 = vmul.f32 %v4893, %v6524
        %v6528 = vadd.f32 %v6518, %v6527
        %v6529 = vmul.f32 %v5106, %v6524
        %v6530 = vadd.f32 %v6520, %v6529
        %v6531 = vmul.f32 %v5176, %v6524
        %v6532 = vadd.f32 %v6522, %v6531
        %s6533 = sld [smem:[#allocation6 + $0x40]]
        %v6534 = vstv %s6533
        %v6535 = vmul.f32 %v4893, %v6534
        %v6536 = vadd.f32 %v6526, %v6535
        %v6537 = vmul.f32 %v4963, %v6534
        %v6538 = vadd.f32 %v6528, %v6537
        %v6539 = vmul.f32 %v5176, %v6534
        %v6540 = vadd.f32 %v6530, %v6539
        %v6541 = vmul.f32 %v5246, %v6534
        %v6542 = vadd.f32 %v6532, %v6541
        %s6543 = sld [smem:[#allocation6 + $0x41]]
        %v6544 = vstv %s6543
        %v6545 = vmul.f32 %v4963, %v6544
        %v6546 = vadd.f32 %v6536, %v6545
        %v6547 = vmul.f32 %v5033, %v6544
        %v6548 = vadd.f32 %v6538, %v6547
        %v6549 = vmul.f32 %v5246, %v6544
        %v6550 = vadd.f32 %v6540, %v6549
        %v6551 = vmul.f32 %v5316, %v6544
        %v6552 = vadd.f32 %v6542, %v6551
        %s6553 = sld [smem:[#allocation6 + $0x42]]
        %v6554 = vstv %s6553
        %v6555 = vmul.f32 %v5106, %v6554
        %v6556 = vadd.f32 %v6546, %v6555
        %v6557 = vmul.f32 %v5176, %v6554
        %v6558 = vadd.f32 %v6548, %v6557
        %v6559 = vmul.f32 %v5389, %v6554
        %v6560 = vadd.f32 %v6550, %v6559
        %v6561 = vmul.f32 %v5459, %v6554
        %v6562 = vadd.f32 %v6552, %v6561
        %s6563 = sld [smem:[#allocation6 + $0x43]]
        %v6564 = vstv %s6563
        %v6565 = vmul.f32 %v5176, %v6564
        %v6566 = vadd.f32 %v6556, %v6565
        %v6567 = vmul.f32 %v5246, %v6564
        %v6568 = vadd.f32 %v6558, %v6567
        %v6569 = vmul.f32 %v5459, %v6564
        %v6570 = vadd.f32 %v6560, %v6569
        %v6571 = vmul.f32 %v5529, %v6564
        %v6572 = vadd.f32 %v6562, %v6571
        %s6573 = sld [smem:[#allocation6 + $0x44]]
        %v6574 = vstv %s6573
        %v6575 = vmul.f32 %v5246, %v6574
        %v6576 = vadd.f32 %v6566, %v6575
        %v6577 = vmul.f32 %v5316, %v6574
        %v6578 = vadd.f32 %v6568, %v6577
        %v6579 = vmul.f32 %v5529, %v6574
        %v6580 = vadd.f32 %v6570, %v6579
        %v6581 = vmul.f32 %v5599, %v6574
        %v6582 = vadd.f32 %v6572, %v6581
        %s6583 = sld [smem:[#allocation6 + $0x45]]
        %v6584 = vstv %s6583
        %v6585 = vmul.f32 %v5389, %v6584
        %v6586 = vadd.f32 %v6576, %v6585
        %v6587 = vmul.f32 %v5459, %v6584
        %v6588 = vadd.f32 %v6578, %v6587
        %v6589 = vmul.f32 %v5672, %v6584
        %v6590 = vadd.f32 %v6580, %v6589
        %v6591 = vmul.f32 %v5742, %v6584
        %v6592 = vadd.f32 %v6582, %v6591
        %s6593 = sld [smem:[#allocation6 + $0x46]]
        %v6594 = vstv %s6593
        %v6595 = vmul.f32 %v5459, %v6594
        %v6596 = vadd.f32 %v6586, %v6595
        %v6597 = vmul.f32 %v5529, %v6594
        %v6598 = vadd.f32 %v6588, %v6597
        %v6599 = vmul.f32 %v5742, %v6594
        %v6600 = vadd.f32 %v6590, %v6599
        %v6601 = vmul.f32 %v5812, %v6594
        %v6602 = vadd.f32 %v6592, %v6601
        %s6603 = sld [smem:[#allocation6 + $0x47]]
        %v6604 = vstv %s6603
        %v6605 = vmul.f32 %v5529, %v6604
        %v6606 = vadd.f32 %v6596, %v6605
        %v6607 = vmul.f32 %v5599, %v6604
        %v6608 = vadd.f32 %v6598, %v6607
        %v6609 = vmul.f32 %v5812, %v6604
        %v6610 = vadd.f32 %v6600, %v6609
        %v6611 = vmul.f32 %v5882, %v6604
        %v6612 = vadd.f32 %v6602, %v6611
        %s6613 = scalar_lea.vmem %s175, 32 [#allocation7]
        %6614 = vst.msk [vmem:[%s6613] sm:$0xff] %vm6245, %v6606
        %s6615 = scalar_lea.vmem %s175, 40 [#allocation7]
        %6616 = vst.msk [vmem:[%s6615] sm:$0xff] %vm6245, %v6608
        %s6617 = scalar_lea.vmem %s175, 48 [#allocation7]
        %6618 = vst.msk [vmem:[%s6617] sm:$0xff] %vm6245, %v6610
        %s6619 = scalar_lea.vmem %s175, 56 [#allocation7]
        %6620 = vst.msk [vmem:[%s6619] sm:$0xff] %vm6245, %v6612
        %s6621 = sand.u32 %s75, 1
        %s6622 = scalar_lea.sflag [#allocation4], %s6621
        %s6623 = sand.u32 %s75, 1
        %s6624 = smul.addr %s6623, 64
        %s6625 = scalar_lea.vmem [#allocation7], %s6624
        // Predicated region
        $region37: #{tpu_custom_call.1} parent=27 // pred_check
          %p6626 = pneg %p85
        $region38: #{tpu_custom_call.1} parent=27 // pred_check_branch
          %6628 = sbr.rel (%p6626) target = $region40
        $region39: #{tpu_custom_call.1} parent=27 // pred_region
          %s6630 = ssub.s32 1024, 1024
          %6631 = vsyncadd %s6622, %s6630
          %s6632 = smul.addr %s20, 8
          %s6633 = smul.addr %s6632, 128
          %s6634 = scalar_lea.hbm %s2, %s6633
          %s6635 = sshll.u32 %s6625, 4
          %s6636 = int_to_ptr.vmem [resolvable:$true] %s6635
          %6641 = dma.vmem_to_hbm [thread:$0]  %s6636, 1024, %s6634, %s6622, 128, 128, 8
        $region40: #{tpu_custom_call.1} parent=27 // pred_fallthru
          _
      $region28: #{tpu_custom_call.1} parent=5 // pred_fallthru
        _
      %p6642 = scmp.le.s32.totalorder 2, %s15
      // Predicated region
      $region41: #{tpu_custom_call.1} parent=5 // pred_check
        %p6643 = pneg %p6642
      $region42: #{tpu_custom_call.1} parent=5 // pred_check_branch
        %6645 = sbr.rel (%p6643) target = $region44
      $region43: #{tpu_custom_call.1} parent=5 // pred_region
        %s6646 = ssub.s32 %s15, 2
        // Predicated region
        $region45: #{tpu_custom_call.1} parent=43 // pred_check
          %p6647 = pneg %p91
        $region46: #{tpu_custom_call.1} parent=43 // pred_check_branch
          %6649 = sbr.rel (%p6647) target = $region48
        $region47: #{tpu_custom_call.1} parent=43 // pred_region
          %s6650 = sand.u32 %s76, 1
          %s6651 = scalar_lea.sflag [#allocation4], %s6650
          %s6652 = sand.u32 %s76, 1
          %s6653 = smul.addr %s6652, 64
          %s6654 = scalar_lea.vmem [#allocation7], %s6653
          %6655 = dma.done %s6651, 1024
        $region48: #{tpu_custom_call.1} parent=43 // pred_fallthru
          _
      $region44: #{tpu_custom_call.1} parent=5 // pred_fallthru
        _
    $region6: #{tpu_custom_call.1} parent=1 // loop_footer
      %s19 = sadd.s32 1, %s15
    $region7: #{tpu_custom_call.1} parent=1 // loop_footer_branch
      %14 = sbr.rel target = $region3
    $region8: #{tpu_custom_call.1} parent=1 // loop_exit
      _
    %6656 = vsyncpa [#allocation3], 1
    %s6657 = scalar_lea.sflag [#allocation3], 1
    %6658 = vsyncpa %s6657, 1
    %6659 = vsyncpa [#allocation4], 1
    %s6660 = scalar_lea.sflag [#allocation4], 1
    %6661 = vsyncpa %s6660, 1
    %6662 = vsyncpa [#allocation5], 1
    %s6663 = scalar_lea.sflag [#allocation5], 1
    %6664 = vsyncpa %s6663, 1

</llo_original>
